<compile_context>
chip_gen: v6e
topology: v6e:2x2x1
jax: 0.10.0
libtpu: 0.0.40
codegen_flags: <defaults>
</compile_context>

<pallas_src>
import functools

import numpy as np
import jax
import jax.numpy as jnp
from jax import lax
from jax.experimental import pallas as pl
from jax.experimental.pallas import tpu as pltpu

KSIZE = 3
CONV_STRIDES = (2, 2, 2, 1)
N_CONV = len(CONV_STRIDES)


# -----------------------------------------------------------------------------
# Fused Pallas kernel: full goal_Encoder forward in one invocation.
# -----------------------------------------------------------------------------
def _fused_encoder_kernel(*refs):
    # refs layout (all VMEM):
    #   [0]  x2d   (H0*B, W0*Cin0)                      prepared input image
    #   [1]  x_f   (B, F)                               extra features
    #   for conv layer l in 0..3:
    #     [2+3l] S_l (3, Ho*B, H*B)   row-tap selection matrices
    #     [3+3l] M_l (3, W*Cin, Wo*Cout) expanded conv weights
    #     [4+3l] b_l (1, Wo*Cout)     bias tiled over output width
    #   [14] sel_fc (H4, B, H4*B)     per-output-row selection for the flatten
    #   [15] w1h    (H4, W4*C4, D)    fc_connect weight, flatten-permuted
    #   [16] w1f    (F, D)            fc_connect weight rows for x_f
    #   [17] b1     (1, D)
    #   [18] w2     (D, state_dim)
    #   [19] b2     (1, state_dim)
    #   [20] out    (B, state_dim)
    x2d_ref, xf_ref = refs[0], refs[1]
    conv_refs = refs[2:2 + 3 * N_CONV]
    sel_fc_ref, w1h_ref, w1f_ref, b1_ref, w2_ref, b2_ref = refs[2 + 3 * N_CONV:-1]
    out_ref = refs[-1]

    # ---- conv stack (all activations live in VMEM as values) ----
    act = x2d_ref[...]                                   # (H*B, W*Cin) f32
    for l in range(N_CONV):
        s_ref = conv_refs[3 * l]
        m_ref = conv_refs[3 * l + 1]
        b_ref = conv_refs[3 * l + 2]
        acc = None
        for di in range(KSIZE):                          # 3 row taps
            g = jnp.dot(s_ref[di], act,
                        preferred_element_type=jnp.float32)   # (Ho*B, W*Cin)
            p = jnp.dot(g, m_ref[di],
                        preferred_element_type=jnp.float32)   # (Ho*B, Wo*Cout)
            acc = p if acc is None else acc + p
        act = jnp.maximum(acc + b_ref[...], 0.0)         # bias + ReLU

    # ---- fc_connect with NCHW flatten + x_f concat folded in ----
    h = jnp.dot(xf_ref[...], w1f_ref[...],
                preferred_element_type=jnp.float32) + b1_ref[...]        # (B, D)
    for hh in range(sel_fc_ref.shape[0]):                # H4 = 2 output rows
        g = jnp.dot(sel_fc_ref[hh], act,
                    preferred_element_type=jnp.float32)                  # (B, W4*C4)
        h = h + jnp.dot(g, w1h_ref[hh],
                        preferred_element_type=jnp.float32)

    # ---- final fc ----
    state = jnp.dot(h, w2_ref[...],
                    preferred_element_type=jnp.float32) + b2_ref[...]
    out_ref[...] = state.astype(out_ref.dtype)


# -----------------------------------------------------------------------------
# One-time weight preprocessing: build the constant matrices the kernel needs.
# -----------------------------------------------------------------------------
def precompute_goal_encoder(params, *, batch, image_hw, n_channels):
    B = batch
    H, W = image_hw
    Cin = n_channels

    const_inputs = []
    flops = 0
    for l, s in enumerate(CONV_STRIDES):
        w = params[f"conv{l}_w"]                 # (3, 3, Cin, Cout) HWIO
        bias = params[f"conv{l}_b"]
        Cout = int(w.shape[3])
        Ho = (H - KSIZE) // s + 1
        Wo = (W - KSIZE) // s + 1

        eye_b = np.eye(B, dtype=np.float32)
        S = np.zeros((KSIZE, Ho * B, H * B), np.float32)
        m_parts = []
        for di in range(KSIZE):
            # row selection: picks input row (s*i + di) for output row i, per batch
            selh = np.zeros((Ho, H), np.float32)
            selh[np.arange(Ho), s * np.arange(Ho) + di] = 1.0
            S[di] = np.kron(selh, eye_b)
            # expanded weight: M[(s*wo+dj)*Cin+ci, wo*Cout+co] = w[di,dj,ci,co]
            m = jnp.zeros((W * Cin, Wo * Cout), jnp.float32)
            for dj in range(KSIZE):
                selw = np.zeros((W, Wo), np.float32)
                selw[s * np.arange(Wo) + dj, np.arange(Wo)] = 1.0
                m = m + jnp.kron(jnp.asarray(selw), w[di, dj])
            m_parts.append(m)
        M = jnp.stack(m_parts, axis=0)                      # (3, W*Cin, Wo*Cout)
        brow = jnp.tile(bias, Wo).reshape(1, Wo * Cout)     # bias tiled over Wo
        const_inputs += [jnp.asarray(S), M, brow]

        flops += 2 * KSIZE * (Ho * B * H * B * W * Cin
                              + Ho * B * W * Cin * Wo * Cout)
        H, W, Cin = Ho, Wo, Cout

    H4, W4, C4 = H, W, Cin
    conv_out = H4 * W4 * C4                                 # 128
    W1 = params["fc_connect_w"]                             # (D, D), used as x @ W1
    D = int(W1.shape[0])
    F = D - conv_out
    W1_img, W1_f = W1[:conv_out, :], W1[conv_out:, :]

    # Fold the PyTorch NCHW flatten (k = c*H4*W4 + h*W4 + w) into W1_img.
    w1h_list = []
    for hh in range(H4):
        r = np.arange(W4 * C4)
        perm = (r % C4) * (H4 * W4) + hh * W4 + (r // C4)
        w1h_list.append(W1_img[perm, :])
    w1h = jnp.stack(w1h_list, axis=0)                       # (H4, W4*C4, D)

    sel_fc = np.zeros((H4, B, H4 * B), np.float32)
    for hh in range(H4):
        sel_fc[hh, np.arange(B), hh * B + np.arange(B)] = 1.0

    b1 = params["fc_connect_b"].reshape(1, D)
    w2 = params["fc_w"]
    b2 = params["fc_b"].reshape(1, -1)
    state_dim = int(w2.shape[1])
    const_inputs += [jnp.asarray(sel_fc), w1h, W1_f, b1, w2, b2]

    flops += 2 * (B * F * D
                  + H4 * (B * (H4 * B) * (W4 * C4) + B * (W4 * C4) * D)
                  + B * D * state_dim)
    bytes_accessed = sum(int(np.prod(a.shape)) * 4 for a in const_inputs)
    bytes_accessed += 4 * (B * image_hw[0] * image_hw[1] * n_channels
                           + B * F + B * state_dim)

    return dict(const_inputs=tuple(const_inputs), batch=B, image_hw=image_hw,
                n_channels=n_channels, n_features=F, state_dim=state_dim,
                flops=int(flops), bytes_accessed=int(bytes_accessed))


# -----------------------------------------------------------------------------
# Forward pass: layout glue + single fused pallas_call.
# -----------------------------------------------------------------------------
def goal_encoder_forward(packed, x_nchw, x_f):
    B = packed["batch"]
    H0, W0 = packed["image_hw"]
    C0 = packed["n_channels"]
    assert x_nchw.shape == (B, C0, H0, W0), x_nchw.shape
    assert x_f.shape == (B, packed["n_features"]), x_f.shape

    # act2d[h*B + b, w*C + c] = x[b, c, h, w]
    x2d = jnp.transpose(x_nchw.astype(jnp.float32),
                        (2, 0, 3, 1)).reshape(H0 * B, W0 * C0)
    xf = x_f.astype(jnp.float32)

    return pl.pallas_call(
        _fused_encoder_kernel,
        out_shape=jax.ShapeDtypeStruct((B, packed["state_dim"]), jnp.float32),
        # No grid: the whole network (~3 MB of constants + tiny activations)
        # fits comfortably in VMEM on v5e/v6e/v7x; a single invocation removes
        # all per-step pipelining / launch overhead.
        compiler_params=pltpu.CompilerParams(vmem_limit_bytes=32 * 1024 * 1024),
        cost_estimate=pl.CostEstimate(flops=packed["flops"],
                                      transcendentals=0,
                                      bytes_accessed=packed["bytes_accessed"]),
    )(x2d, xf, *packed["const_inputs"])


# -----------------------------------------------------------------------------
# Deterministic parameter init (mimics weights_init_encoder).
# -----------------------------------------------------------------------------
def _orthogonal(key, shape, gain=1.0):
    rows, cols = shape
    n, m = max(rows, cols), min(rows, cols)
    a = jax.random.normal(key, (n, m), dtype=jnp.float32)
    q, r = jnp.linalg.qr(a)
    q = q * jnp.sign(jnp.diagonal(r))        # torch-style sign correction
    if rows < cols:
        q = q.T
    return (gain * q[:rows, :cols]).astype(jnp.float32)


def init_params(key, adding_features_size=5, n_channels=1, state_dim=16):
    params = {}
    relu_gain = float(np.sqrt(2.0))
    conv_cfg = [(n_channels, 32), (32, 32), (32, 32), (32, 32)]
    keys = jax.random.split(key, len(conv_cfg) + 2)

    # Conv weights (HWIO): zero except the (semi-)orthogonal center tap.
    for i, (cin, cout) in enumerate(conv_cfg):
        w = jnp.zeros((3, 3, cin, cout), dtype=jnp.float32)
        w = w.at[1, 1].set(_orthogonal(keys[i], (cin, cout), gain=relu_gain))
        params[f"conv{i}_w"] = w
        params[f"conv{i}_b"] = jnp.zeros((cout,), dtype=jnp.float32)

    d = 128 + adding_features_size           # conv_output_size + extras
    params["fc_connect_w"] = _orthogonal(keys[-2], (d, d))
    params["fc_connect_b"] = jnp.zeros((d,), dtype=jnp.float32)
    params["fc_w"] = _orthogonal(keys[-1], (d, state_dim))
    params["fc_b"] = jnp.zeros((state_dim,), dtype=jnp.float32)
    return params


# -----------------------------------------------------------------------------
# Plain-JAX reference (mirrors goal_Encoder.forward) for a correctness check.
# -----------------------------------------------------------------------------
def reference_forward(params, x_nchw, x_f):
    x = jnp.transpose(x_nchw.astype(jnp.float32), (0, 2, 3, 1))
    for i, s in enumerate(CONV_STRIDES):
        x = lax.conv_general_dilated(
            x, params[f"conv{i}_w"], (s, s), "VALID",
            dimension_numbers=("NHWC", "HWIO", "NHWC"),
            precision=lax.Precision.HIGHEST)
        x = jnp.maximum(x + params[f"conv{i}_b"], 0.0)
    h_img = jnp.transpose(x, (0, 3, 1, 2)).reshape(x.shape[0], -1)  # NCHW flatten
    h_in = jnp.concatenate([h_img, x_f.astype(jnp.float32)], axis=1)
    h = jnp.dot(h_in, params["fc_connect_w"],
                precision=lax.Precision.HIGHEST) + params["fc_connect_b"]
    return jnp.dot(h, params["fc_w"],
                   precision=lax.Precision.HIGHEST) + params["fc_b"]


if __name__ == "__main__":
    key = jax.random.PRNGKey(0)
    k_param, k_x, k_f = jax.random.split(key, 3)

    # The module hardcodes conv_output_size = 128 => 40x40 input spatial size
    # (40 -> 19 -> 9 -> 4 -> 2; 32*2*2 = 128).
    B, n_channels, S = 2, 1, 40
    adding_features_size, state_dim = 5, 16

    params = init_params(k_param, adding_features_size, n_channels, state_dim)
    x = jax.random.normal(k_x, (B, n_channels, S, S), dtype=jnp.float32)
    x_f = jax.random.normal(k_f, (B, adding_features_size), dtype=jnp.float32)

    packed = precompute_goal_encoder(params, batch=B, image_hw=(S, S),
                                     n_channels=n_channels)
    fwd = jax.jit(functools.partial(goal_encoder_forward, packed))

    state = jax.block_until_ready(fwd(x, x_f))
    assert state.shape == (B, state_dim), state.shape

    ref = jax.block_until_ready(reference_forward(params, x, x_f))
    if not bool(jnp.allclose(state, ref, rtol=5e-2, atol=5e-2)):
        max_err = float(jnp.max(jnp.abs(state - ref)))
        raise AssertionError(f"fused kernel mismatch vs reference, max|err|={max_err}")

    print("KERNEL_OK")
</pallas_src>

<mosaic_0001>
module attributes {stable_mosaic.version = 11 : i64} {
  func.func @_fused_encoder_kernel(%arg0: memref<80x40xf32, #tpu.memory_space<vmem>>, %arg1: memref<2x5xf32, #tpu.memory_space<vmem>>, %arg2: memref<3x38x80xf32, #tpu.memory_space<vmem>>, %arg3: memref<3x40x608xf32, #tpu.memory_space<vmem>>, %arg4: memref<1x608xf32, #tpu.memory_space<vmem>>, %arg5: memref<3x18x38xf32, #tpu.memory_space<vmem>>, %arg6: memref<3x608x288xf32, #tpu.memory_space<vmem>>, %arg7: memref<1x288xf32, #tpu.memory_space<vmem>>, %arg8: memref<3x8x18xf32, #tpu.memory_space<vmem>>, %arg9: memref<3x288x128xf32, #tpu.memory_space<vmem>>, %arg10: memref<1x128xf32, #tpu.memory_space<vmem>>, %arg11: memref<3x4x8xf32, #tpu.memory_space<vmem>>, %arg12: memref<3x128x64xf32, #tpu.memory_space<vmem>>, %arg13: memref<1x64xf32, #tpu.memory_space<vmem>>, %arg14: memref<2x2x4xf32, #tpu.memory_space<vmem>>, %arg15: memref<2x64x133xf32, #tpu.memory_space<vmem>>, %arg16: memref<5x133xf32, #tpu.memory_space<vmem>>, %arg17: memref<1x133xf32, #tpu.memory_space<vmem>>, %arg18: memref<133x16xf32, #tpu.memory_space<vmem>>, %arg19: memref<1x16xf32, #tpu.memory_space<vmem>>, %arg20: memref<2x16xf32, #tpu.memory_space<vmem>>) attributes {dimension_semantics = [], scalar_prefetch = 0 : i64, scratch_operands = 0 : i64, tpu.core_type = #tpu.core_type<tc>} {
    %c0 = arith.constant 0 : index
    %c0_0 = arith.constant 0 : index
    %0 = vector.load %arg0[%c0, %c0_0] : memref<80x40xf32, #tpu.memory_space<vmem>>, vector<80x40xf32>
    %c0_1 = arith.constant 0 : index
    %c0_2 = arith.constant 0 : index
    %c0_3 = arith.constant 0 : index
    %1 = vector.load %arg2[%c0_1, %c0_2, %c0_3] : memref<3x38x80xf32, #tpu.memory_space<vmem>>, vector<1x38x80xf32>
    %2 = vector.shape_cast %1 : vector<1x38x80xf32> to vector<38x80xf32>
    %cst = arith.constant dense<0.000000e+00> : vector<38x40xf32>
    %3 = tpu.matmul %2, %0, %cst {dimension_numbers = #tpu.dot_dimension_numbers<[1], [0], [0], [1], [0, 0, 1, 1], [], []>} : vector<38x80xf32>, vector<80x40xf32>, vector<38x40xf32> -> vector<38x40xf32>
    %c0_4 = arith.constant 0 : index
    %c0_5 = arith.constant 0 : index
    %c0_6 = arith.constant 0 : index
    %4 = vector.load %arg3[%c0_4, %c0_5, %c0_6] : memref<3x40x608xf32, #tpu.memory_space<vmem>>, vector<1x40x608xf32>
    %5 = vector.shape_cast %4 : vector<1x40x608xf32> to vector<40x608xf32>
    %cst_7 = arith.constant dense<0.000000e+00> : vector<38x608xf32>
    %6 = tpu.matmul %3, %5, %cst_7 {dimension_numbers = #tpu.dot_dimension_numbers<[1], [0], [0], [1], [0, 0, 1, 1], [], []>} : vector<38x40xf32>, vector<40x608xf32>, vector<38x608xf32> -> vector<38x608xf32>
    %c1 = arith.constant 1 : index
    %c0_8 = arith.constant 0 : index
    %c0_9 = arith.constant 0 : index
    %7 = vector.load %arg2[%c1, %c0_8, %c0_9] : memref<3x38x80xf32, #tpu.memory_space<vmem>>, vector<1x38x80xf32>
    %8 = vector.shape_cast %7 : vector<1x38x80xf32> to vector<38x80xf32>
    %cst_10 = arith.constant dense<0.000000e+00> : vector<38x40xf32>
    %9 = tpu.matmul %8, %0, %cst_10 {dimension_numbers = #tpu.dot_dimension_numbers<[1], [0], [0], [1], [0, 0, 1, 1], [], []>} : vector<38x80xf32>, vector<80x40xf32>, vector<38x40xf32> -> vector<38x40xf32>
    %c1_11 = arith.constant 1 : index
    %c0_12 = arith.constant 0 : index
    %c0_13 = arith.constant 0 : index
    %10 = vector.load %arg3[%c1_11, %c0_12, %c0_13] : memref<3x40x608xf32, #tpu.memory_space<vmem>>, vector<1x40x608xf32>
    %11 = vector.shape_cast %10 : vector<1x40x608xf32> to vector<40x608xf32>
    %cst_14 = arith.constant dense<0.000000e+00> : vector<38x608xf32>
    %12 = tpu.matmul %9, %11, %cst_14 {dimension_numbers = #tpu.dot_dimension_numbers<[1], [0], [0], [1], [0, 0, 1, 1], [], []>} : vector<38x40xf32>, vector<40x608xf32>, vector<38x608xf32> -> vector<38x608xf32>
    %13 = arith.addf %6, %12 : vector<38x608xf32>
    %c2 = arith.constant 2 : index
    %c0_15 = arith.constant 0 : index
    %c0_16 = arith.constant 0 : index
    %14 = vector.load %arg2[%c2, %c0_15, %c0_16] : memref<3x38x80xf32, #tpu.memory_space<vmem>>, vector<1x38x80xf32>
    %15 = vector.shape_cast %14 : vector<1x38x80xf32> to vector<38x80xf32>
    %cst_17 = arith.constant dense<0.000000e+00> : vector<38x40xf32>
    %16 = tpu.matmul %15, %0, %cst_17 {dimension_numbers = #tpu.dot_dimension_numbers<[1], [0], [0], [1], [0, 0, 1, 1], [], []>} : vector<38x80xf32>, vector<80x40xf32>, vector<38x40xf32> -> vector<38x40xf32>
    %c2_18 = arith.constant 2 : index
    %c0_19 = arith.constant 0 : index
    %c0_20 = arith.constant 0 : index
    %17 = vector.load %arg3[%c2_18, %c0_19, %c0_20] : memref<3x40x608xf32, #tpu.memory_space<vmem>>, vector<1x40x608xf32>
    %18 = vector.shape_cast %17 : vector<1x40x608xf32> to vector<40x608xf32>
    %cst_21 = arith.constant dense<0.000000e+00> : vector<38x608xf32>
    %19 = tpu.matmul %16, %18, %cst_21 {dimension_numbers = #tpu.dot_dimension_numbers<[1], [0], [0], [1], [0, 0, 1, 1], [], []>} : vector<38x40xf32>, vector<40x608xf32>, vector<38x608xf32> -> vector<38x608xf32>
    %20 = arith.addf %13, %19 : vector<38x608xf32>
    %c0_22 = arith.constant 0 : index
    %c0_23 = arith.constant 0 : index
    %21 = vector.load %arg4[%c0_22, %c0_23] : memref<1x608xf32, #tpu.memory_space<vmem>>, vector<1x608xf32>
    %22 = vector.broadcast %21 : vector<1x608xf32> to vector<38x608xf32>
    %23 = arith.addf %20, %22 : vector<38x608xf32>
    %cst_24 = arith.constant 0.000000e+00 : f32
    %24 = vector.broadcast %cst_24 : f32 to vector<38x608xf32>
    %25 = arith.maximumf %23, %24 : vector<38x608xf32>
    %c0_25 = arith.constant 0 : index
    %c0_26 = arith.constant 0 : index
    %c0_27 = arith.constant 0 : index
    %26 = vector.load %arg5[%c0_25, %c0_26, %c0_27] : memref<3x18x38xf32, #tpu.memory_space<vmem>>, vector<1x18x38xf32>
    %27 = vector.shape_cast %26 : vector<1x18x38xf32> to vector<18x38xf32>
    %cst_28 = arith.constant dense<0.000000e+00> : vector<18x608xf32>
    %28 = tpu.matmul %27, %25, %cst_28 {dimension_numbers = #tpu.dot_dimension_numbers<[1], [0], [0], [1], [0, 0, 1, 1], [], []>} : vector<18x38xf32>, vector<38x608xf32>, vector<18x608xf32> -> vector<18x608xf32>
    %c0_29 = arith.constant 0 : index
    %c0_30 = arith.constant 0 : index
    %c0_31 = arith.constant 0 : index
    %29 = vector.load %arg6[%c0_29, %c0_30, %c0_31] : memref<3x608x288xf32, #tpu.memory_space<vmem>>, vector<1x608x288xf32>
    %30 = vector.shape_cast %29 : vector<1x608x288xf32> to vector<608x288xf32>
    %cst_32 = arith.constant dense<0.000000e+00> : vector<18x288xf32>
    %31 = tpu.matmul %28, %30, %cst_32 {dimension_numbers = #tpu.dot_dimension_numbers<[1], [0], [0], [1], [0, 0, 1, 1], [], []>} : vector<18x608xf32>, vector<608x288xf32>, vector<18x288xf32> -> vector<18x288xf32>
    %c1_33 = arith.constant 1 : index
    %c0_34 = arith.constant 0 : index
    %c0_35 = arith.constant 0 : index
    %32 = vector.load %arg5[%c1_33, %c0_34, %c0_35] : memref<3x18x38xf32, #tpu.memory_space<vmem>>, vector<1x18x38xf32>
    %33 = vector.shape_cast %32 : vector<1x18x38xf32> to vector<18x38xf32>
    %cst_36 = arith.constant dense<0.000000e+00> : vector<18x608xf32>
    %34 = tpu.matmul %33, %25, %cst_36 {dimension_numbers = #tpu.dot_dimension_numbers<[1], [0], [0], [1], [0, 0, 1, 1], [], []>} : vector<18x38xf32>, vector<38x608xf32>, vector<18x608xf32> -> vector<18x608xf32>
    %c1_37 = arith.constant 1 : index
    %c0_38 = arith.constant 0 : index
    %c0_39 = arith.constant 0 : index
    %35 = vector.load %arg6[%c1_37, %c0_38, %c0_39] : memref<3x608x288xf32, #tpu.memory_space<vmem>>, vector<1x608x288xf32>
    %36 = vector.shape_cast %35 : vector<1x608x288xf32> to vector<608x288xf32>
    %cst_40 = arith.constant dense<0.000000e+00> : vector<18x288xf32>
    %37 = tpu.matmul %34, %36, %cst_40 {dimension_numbers = #tpu.dot_dimension_numbers<[1], [0], [0], [1], [0, 0, 1, 1], [], []>} : vector<18x608xf32>, vector<608x288xf32>, vector<18x288xf32> -> vector<18x288xf32>
    %38 = arith.addf %31, %37 : vector<18x288xf32>
    %c2_41 = arith.constant 2 : index
    %c0_42 = arith.constant 0 : index
    %c0_43 = arith.constant 0 : index
    %39 = vector.load %arg5[%c2_41, %c0_42, %c0_43] : memref<3x18x38xf32, #tpu.memory_space<vmem>>, vector<1x18x38xf32>
    %40 = vector.shape_cast %39 : vector<1x18x38xf32> to vector<18x38xf32>
    %cst_44 = arith.constant dense<0.000000e+00> : vector<18x608xf32>
    %41 = tpu.matmul %40, %25, %cst_44 {dimension_numbers = #tpu.dot_dimension_numbers<[1], [0], [0], [1], [0, 0, 1, 1], [], []>} : vector<18x38xf32>, vector<38x608xf32>, vector<18x608xf32> -> vector<18x608xf32>
    %c2_45 = arith.constant 2 : index
    %c0_46 = arith.constant 0 : index
    %c0_47 = arith.constant 0 : index
    %42 = vector.load %arg6[%c2_45, %c0_46, %c0_47] : memref<3x608x288xf32, #tpu.memory_space<vmem>>, vector<1x608x288xf32>
    %43 = vector.shape_cast %42 : vector<1x608x288xf32> to vector<608x288xf32>
    %cst_48 = arith.constant dense<0.000000e+00> : vector<18x288xf32>
    %44 = tpu.matmul %41, %43, %cst_48 {dimension_numbers = #tpu.dot_dimension_numbers<[1], [0], [0], [1], [0, 0, 1, 1], [], []>} : vector<18x608xf32>, vector<608x288xf32>, vector<18x288xf32> -> vector<18x288xf32>
    %45 = arith.addf %38, %44 : vector<18x288xf32>
    %c0_49 = arith.constant 0 : index
    %c0_50 = arith.constant 0 : index
    %46 = vector.load %arg7[%c0_49, %c0_50] : memref<1x288xf32, #tpu.memory_space<vmem>>, vector<1x288xf32>
    %47 = vector.broadcast %46 : vector<1x288xf32> to vector<18x288xf32>
    %48 = arith.addf %45, %47 : vector<18x288xf32>
    %cst_51 = arith.constant 0.000000e+00 : f32
    %49 = vector.broadcast %cst_51 : f32 to vector<18x288xf32>
    %50 = arith.maximumf %48, %49 : vector<18x288xf32>
    %c0_52 = arith.constant 0 : index
    %c0_53 = arith.constant 0 : index
    %c0_54 = arith.constant 0 : index
    %51 = vector.load %arg8[%c0_52, %c0_53, %c0_54] : memref<3x8x18xf32, #tpu.memory_space<vmem>>, vector<1x8x18xf32>
    %52 = vector.shape_cast %51 : vector<1x8x18xf32> to vector<8x18xf32>
    %cst_55 = arith.constant dense<0.000000e+00> : vector<8x288xf32>
    %53 = tpu.matmul %52, %50, %cst_55 {dimension_numbers = #tpu.dot_dimension_numbers<[1], [0], [0], [1], [0, 0, 1, 1], [], []>} : vector<8x18xf32>, vector<18x288xf32>, vector<8x288xf32> -> vector<8x288xf32>
    %c0_56 = arith.constant 0 : index
    %c0_57 = arith.constant 0 : index
    %c0_58 = arith.constant 0 : index
    %54 = vector.load %arg9[%c0_56, %c0_57, %c0_58] : memref<3x288x128xf32, #tpu.memory_space<vmem>>, vector<1x288x128xf32>
    %55 = vector.shape_cast %54 : vector<1x288x128xf32> to vector<288x128xf32>
    %cst_59 = arith.constant dense<0.000000e+00> : vector<8x128xf32>
    %56 = tpu.matmul %53, %55, %cst_59 {dimension_numbers = #tpu.dot_dimension_numbers<[1], [0], [0], [1], [0, 0, 1, 1], [], []>} : vector<8x288xf32>, vector<288x128xf32>, vector<8x128xf32> -> vector<8x128xf32>
    %c1_60 = arith.constant 1 : index
    %c0_61 = arith.constant 0 : index
    %c0_62 = arith.constant 0 : index
    %57 = vector.load %arg8[%c1_60, %c0_61, %c0_62] : memref<3x8x18xf32, #tpu.memory_space<vmem>>, vector<1x8x18xf32>
    %58 = vector.shape_cast %57 : vector<1x8x18xf32> to vector<8x18xf32>
    %cst_63 = arith.constant dense<0.000000e+00> : vector<8x288xf32>
    %59 = tpu.matmul %58, %50, %cst_63 {dimension_numbers = #tpu.dot_dimension_numbers<[1], [0], [0], [1], [0, 0, 1, 1], [], []>} : vector<8x18xf32>, vector<18x288xf32>, vector<8x288xf32> -> vector<8x288xf32>
    %c1_64 = arith.constant 1 : index
    %c0_65 = arith.constant 0 : index
    %c0_66 = arith.constant 0 : index
    %60 = vector.load %arg9[%c1_64, %c0_65, %c0_66] : memref<3x288x128xf32, #tpu.memory_space<vmem>>, vector<1x288x128xf32>
    %61 = vector.shape_cast %60 : vector<1x288x128xf32> to vector<288x128xf32>
    %cst_67 = arith.constant dense<0.000000e+00> : vector<8x128xf32>
    %62 = tpu.matmul %59, %61, %cst_67 {dimension_numbers = #tpu.dot_dimension_numbers<[1], [0], [0], [1], [0, 0, 1, 1], [], []>} : vector<8x288xf32>, vector<288x128xf32>, vector<8x128xf32> -> vector<8x128xf32>
    %63 = arith.addf %56, %62 : vector<8x128xf32>
    %c2_68 = arith.constant 2 : index
    %c0_69 = arith.constant 0 : index
    %c0_70 = arith.constant 0 : index
    %64 = vector.load %arg8[%c2_68, %c0_69, %c0_70] : memref<3x8x18xf32, #tpu.memory_space<vmem>>, vector<1x8x18xf32>
    %65 = vector.shape_cast %64 : vector<1x8x18xf32> to vector<8x18xf32>
    %cst_71 = arith.constant dense<0.000000e+00> : vector<8x288xf32>
    %66 = tpu.matmul %65, %50, %cst_71 {dimension_numbers = #tpu.dot_dimension_numbers<[1], [0], [0], [1], [0, 0, 1, 1], [], []>} : vector<8x18xf32>, vector<18x288xf32>, vector<8x288xf32> -> vector<8x288xf32>
    %c2_72 = arith.constant 2 : index
    %c0_73 = arith.constant 0 : index
    %c0_74 = arith.constant 0 : index
    %67 = vector.load %arg9[%c2_72, %c0_73, %c0_74] : memref<3x288x128xf32, #tpu.memory_space<vmem>>, vector<1x288x128xf32>
    %68 = vector.shape_cast %67 : vector<1x288x128xf32> to vector<288x128xf32>
    %cst_75 = arith.constant dense<0.000000e+00> : vector<8x128xf32>
    %69 = tpu.matmul %66, %68, %cst_75 {dimension_numbers = #tpu.dot_dimension_numbers<[1], [0], [0], [1], [0, 0, 1, 1], [], []>} : vector<8x288xf32>, vector<288x128xf32>, vector<8x128xf32> -> vector<8x128xf32>
    %70 = arith.addf %63, %69 : vector<8x128xf32>
    %c0_76 = arith.constant 0 : index
    %c0_77 = arith.constant 0 : index
    %71 = vector.load %arg10[%c0_76, %c0_77] : memref<1x128xf32, #tpu.memory_space<vmem>>, vector<1x128xf32>
    %72 = vector.broadcast %71 : vector<1x128xf32> to vector<8x128xf32>
    %73 = arith.addf %70, %72 : vector<8x128xf32>
    %cst_78 = arith.constant 0.000000e+00 : f32
    %74 = vector.broadcast %cst_78 : f32 to vector<8x128xf32>
    %75 = arith.maximumf %73, %74 : vector<8x128xf32>
    %c0_79 = arith.constant 0 : index
    %c0_80 = arith.constant 0 : index
    %c0_81 = arith.constant 0 : index
    %76 = vector.load %arg11[%c0_79, %c0_80, %c0_81] : memref<3x4x8xf32, #tpu.memory_space<vmem>>, vector<1x4x8xf32>
    %77 = vector.shape_cast %76 : vector<1x4x8xf32> to vector<4x8xf32>
    %cst_82 = arith.constant dense<0.000000e+00> : vector<4x128xf32>
    %78 = tpu.matmul %77, %75, %cst_82 {dimension_numbers = #tpu.dot_dimension_numbers<[1], [0], [0], [1], [0, 0, 1, 1], [], []>} : vector<4x8xf32>, vector<8x128xf32>, vector<4x128xf32> -> vector<4x128xf32>
    %c0_83 = arith.constant 0 : index
    %c0_84 = arith.constant 0 : index
    %c0_85 = arith.constant 0 : index
    %79 = vector.load %arg12[%c0_83, %c0_84, %c0_85] : memref<3x128x64xf32, #tpu.memory_space<vmem>>, vector<1x128x64xf32>
    %80 = vector.shape_cast %79 : vector<1x128x64xf32> to vector<128x64xf32>
    %cst_86 = arith.constant dense<0.000000e+00> : vector<4x64xf32>
    %81 = tpu.matmul %78, %80, %cst_86 {dimension_numbers = #tpu.dot_dimension_numbers<[1], [0], [0], [1], [0, 0, 1, 1], [], []>} : vector<4x128xf32>, vector<128x64xf32>, vector<4x64xf32> -> vector<4x64xf32>
    %c1_87 = arith.constant 1 : index
    %c0_88 = arith.constant 0 : index
    %c0_89 = arith.constant 0 : index
    %82 = vector.load %arg11[%c1_87, %c0_88, %c0_89] : memref<3x4x8xf32, #tpu.memory_space<vmem>>, vector<1x4x8xf32>
    %83 = vector.shape_cast %82 : vector<1x4x8xf32> to vector<4x8xf32>
    %cst_90 = arith.constant dense<0.000000e+00> : vector<4x128xf32>
    %84 = tpu.matmul %83, %75, %cst_90 {dimension_numbers = #tpu.dot_dimension_numbers<[1], [0], [0], [1], [0, 0, 1, 1], [], []>} : vector<4x8xf32>, vector<8x128xf32>, vector<4x128xf32> -> vector<4x128xf32>
    %c1_91 = arith.constant 1 : index
    %c0_92 = arith.constant 0 : index
    %c0_93 = arith.constant 0 : index
    %85 = vector.load %arg12[%c1_91, %c0_92, %c0_93] : memref<3x128x64xf32, #tpu.memory_space<vmem>>, vector<1x128x64xf32>
    %86 = vector.shape_cast %85 : vector<1x128x64xf32> to vector<128x64xf32>
    %cst_94 = arith.constant dense<0.000000e+00> : vector<4x64xf32>
    %87 = tpu.matmul %84, %86, %cst_94 {dimension_numbers = #tpu.dot_dimension_numbers<[1], [0], [0], [1], [0, 0, 1, 1], [], []>} : vector<4x128xf32>, vector<128x64xf32>, vector<4x64xf32> -> vector<4x64xf32>
    %88 = arith.addf %81, %87 : vector<4x64xf32>
    %c2_95 = arith.constant 2 : index
    %c0_96 = arith.constant 0 : index
    %c0_97 = arith.constant 0 : index
    %89 = vector.load %arg11[%c2_95, %c0_96, %c0_97] : memref<3x4x8xf32, #tpu.memory_space<vmem>>, vector<1x4x8xf32>
    %90 = vector.shape_cast %89 : vector<1x4x8xf32> to vector<4x8xf32>
    %cst_98 = arith.constant dense<0.000000e+00> : vector<4x128xf32>
    %91 = tpu.matmul %90, %75, %cst_98 {dimension_numbers = #tpu.dot_dimension_numbers<[1], [0], [0], [1], [0, 0, 1, 1], [], []>} : vector<4x8xf32>, vector<8x128xf32>, vector<4x128xf32> -> vector<4x128xf32>
    %c2_99 = arith.constant 2 : index
    %c0_100 = arith.constant 0 : index
    %c0_101 = arith.constant 0 : index
    %92 = vector.load %arg12[%c2_99, %c0_100, %c0_101] : memref<3x128x64xf32, #tpu.memory_space<vmem>>, vector<1x128x64xf32>
    %93 = vector.shape_cast %92 : vector<1x128x64xf32> to vector<128x64xf32>
    %cst_102 = arith.constant dense<0.000000e+00> : vector<4x64xf32>
    %94 = tpu.matmul %91, %93, %cst_102 {dimension_numbers = #tpu.dot_dimension_numbers<[1], [0], [0], [1], [0, 0, 1, 1], [], []>} : vector<4x128xf32>, vector<128x64xf32>, vector<4x64xf32> -> vector<4x64xf32>
    %95 = arith.addf %88, %94 : vector<4x64xf32>
    %c0_103 = arith.constant 0 : index
    %c0_104 = arith.constant 0 : index
    %96 = vector.load %arg13[%c0_103, %c0_104] : memref<1x64xf32, #tpu.memory_space<vmem>>, vector<1x64xf32>
    %97 = vector.broadcast %96 : vector<1x64xf32> to vector<4x64xf32>
    %98 = arith.addf %95, %97 : vector<4x64xf32>
    %cst_105 = arith.constant 0.000000e+00 : f32
    %99 = vector.broadcast %cst_105 : f32 to vector<4x64xf32>
    %100 = arith.maximumf %98, %99 : vector<4x64xf32>
    %c0_106 = arith.constant 0 : index
    %c0_107 = arith.constant 0 : index
    %101 = vector.load %arg1[%c0_106, %c0_107] : memref<2x5xf32, #tpu.memory_space<vmem>>, vector<2x5xf32>
    %c0_108 = arith.constant 0 : index
    %c0_109 = arith.constant 0 : index
    %102 = vector.load %arg16[%c0_108, %c0_109] : memref<5x133xf32, #tpu.memory_space<vmem>>, vector<5x133xf32>
    %cst_110 = arith.constant dense<0.000000e+00> : vector<2x133xf32>
    %103 = tpu.matmul %101, %102, %cst_110 {dimension_numbers = #tpu.dot_dimension_numbers<[1], [0], [0], [1], [0, 0, 1, 1], [], []>} : vector<2x5xf32>, vector<5x133xf32>, vector<2x133xf32> -> vector<2x133xf32>
    %c0_111 = arith.constant 0 : index
    %c0_112 = arith.constant 0 : index
    %104 = vector.load %arg17[%c0_111, %c0_112] : memref<1x133xf32, #tpu.memory_space<vmem>>, vector<1x133xf32>
    %105 = vector.broadcast %104 : vector<1x133xf32> to vector<2x133xf32>
    %106 = arith.addf %103, %105 : vector<2x133xf32>
    %c0_113 = arith.constant 0 : index
    %c0_114 = arith.constant 0 : index
    %c0_115 = arith.constant 0 : index
    %107 = vector.load %arg14[%c0_113, %c0_114, %c0_115] : memref<2x2x4xf32, #tpu.memory_space<vmem>>, vector<1x2x4xf32>
    %108 = vector.shape_cast %107 : vector<1x2x4xf32> to vector<2x4xf32>
    %cst_116 = arith.constant dense<0.000000e+00> : vector<2x64xf32>
    %109 = tpu.matmul %108, %100, %cst_116 {dimension_numbers = #tpu.dot_dimension_numbers<[1], [0], [0], [1], [0, 0, 1, 1], [], []>} : vector<2x4xf32>, vector<4x64xf32>, vector<2x64xf32> -> vector<2x64xf32>
    %c0_117 = arith.constant 0 : index
    %c0_118 = arith.constant 0 : index
    %c0_119 = arith.constant 0 : index
    %110 = vector.load %arg15[%c0_117, %c0_118, %c0_119] : memref<2x64x133xf32, #tpu.memory_space<vmem>>, vector<1x64x133xf32>
    %111 = vector.shape_cast %110 : vector<1x64x133xf32> to vector<64x133xf32>
    %cst_120 = arith.constant dense<0.000000e+00> : vector<2x133xf32>
    %112 = tpu.matmul %109, %111, %cst_120 {dimension_numbers = #tpu.dot_dimension_numbers<[1], [0], [0], [1], [0, 0, 1, 1], [], []>} : vector<2x64xf32>, vector<64x133xf32>, vector<2x133xf32> -> vector<2x133xf32>
    %113 = arith.addf %106, %112 : vector<2x133xf32>
    %c1_121 = arith.constant 1 : index
    %c0_122 = arith.constant 0 : index
    %c0_123 = arith.constant 0 : index
    %114 = vector.load %arg14[%c1_121, %c0_122, %c0_123] : memref<2x2x4xf32, #tpu.memory_space<vmem>>, vector<1x2x4xf32>
    %115 = vector.shape_cast %114 : vector<1x2x4xf32> to vector<2x4xf32>
    %cst_124 = arith.constant dense<0.000000e+00> : vector<2x64xf32>
    %116 = tpu.matmul %115, %100, %cst_124 {dimension_numbers = #tpu.dot_dimension_numbers<[1], [0], [0], [1], [0, 0, 1, 1], [], []>} : vector<2x4xf32>, vector<4x64xf32>, vector<2x64xf32> -> vector<2x64xf32>
    %c1_125 = arith.constant 1 : index
    %c0_126 = arith.constant 0 : index
    %c0_127 = arith.constant 0 : index
    %117 = vector.load %arg15[%c1_125, %c0_126, %c0_127] : memref<2x64x133xf32, #tpu.memory_space<vmem>>, vector<1x64x133xf32>
    %118 = vector.shape_cast %117 : vector<1x64x133xf32> to vector<64x133xf32>
    %cst_128 = arith.constant dense<0.000000e+00> : vector<2x133xf32>
    %119 = tpu.matmul %116, %118, %cst_128 {dimension_numbers = #tpu.dot_dimension_numbers<[1], [0], [0], [1], [0, 0, 1, 1], [], []>} : vector<2x64xf32>, vector<64x133xf32>, vector<2x133xf32> -> vector<2x133xf32>
    %120 = arith.addf %113, %119 : vector<2x133xf32>
    %c0_129 = arith.constant 0 : index
    %c0_130 = arith.constant 0 : index
    %121 = vector.load %arg18[%c0_129, %c0_130] : memref<133x16xf32, #tpu.memory_space<vmem>>, vector<133x16xf32>
    %cst_131 = arith.constant dense<0.000000e+00> : vector<2x16xf32>
    %122 = tpu.matmul %120, %121, %cst_131 {dimension_numbers = #tpu.dot_dimension_numbers<[1], [0], [0], [1], [0, 0, 1, 1], [], []>} : vector<2x133xf32>, vector<133x16xf32>, vector<2x16xf32> -> vector<2x16xf32>
    %c0_132 = arith.constant 0 : index
    %c0_133 = arith.constant 0 : index
    %123 = vector.load %arg19[%c0_132, %c0_133] : memref<1x16xf32, #tpu.memory_space<vmem>>, vector<1x16xf32>
    %124 = vector.broadcast %123 : vector<1x16xf32> to vector<2x16xf32>
    %125 = arith.addf %122, %124 : vector<2x16xf32>
    %c0_134 = arith.constant 0 : index
    %c0_135 = arith.constant 0 : index
    %126 = vector.load %arg20[%c0_134, %c0_135] : memref<2x16xf32, #tpu.memory_space<vmem>>, vector<2x16xf32>
    tpu.vector_store %arg20[%c0_134, %c0_135], %125 {strides = array<i32>} : memref<2x16xf32, #tpu.memory_space<vmem>>, vector<2x16xf32>,
    return
  }
}

</mosaic_0001>

<llo_original>
// kernel: goal_encoder_forward.1
$region0: #{goal_encoder_forward.1}
  #allocation0 [shape = 'u32[]', space=smem, size = 0x4, offset = 0x4, fixed_abs, tag = 'smem constant byte address 0x4 - core index']
  #allocation1 [shape = 'u32[144,128]{1,0:T(1,128)}', space=vmem, size = 0x12000, scoped, tag = 'internal scratch']
  %s0 = inlined_call_operand.vmem [shape: f32[80,40], index: 0, kind: input, shape index: {}]
  %s1 = inlined_call_operand.hbm [shape: f32[2,5], index: 1, kind: input, shape index: {}]
  %s2 = inlined_call_operand.hbm [shape: f32[3,38,80], index: 2, kind: input, shape index: {}]
  %s3 = inlined_call_operand.hbm [shape: f32[3,40,608], index: 3, kind: input, shape index: {}]
  %s4 = inlined_call_operand.vmem [shape: f32[1,608], index: 4, kind: input, shape index: {}]
  %s5 = inlined_call_operand.hbm [shape: f32[3,18,38], index: 5, kind: input, shape index: {}]
  %s6 = inlined_call_operand.hbm [shape: f32[3,608,288], index: 6, kind: input, shape index: {}]
  %s7 = inlined_call_operand.vmem [shape: f32[1,288], index: 7, kind: input, shape index: {}]
  %s8 = inlined_call_operand.hbm [shape: f32[3,8,18], index: 8, kind: input, shape index: {}]
  %s9 = inlined_call_operand.hbm [shape: f32[3,288,128], index: 9, kind: input, shape index: {}]
  %s10 = inlined_call_operand.vmem [shape: f32[1,128], index: 10, kind: input, shape index: {}]
  %s11 = inlined_call_operand.hbm [shape: f32[3,4,8], index: 11, kind: input, shape index: {}]
  %s12 = inlined_call_operand.hbm [shape: f32[3,128,64], index: 12, kind: input, shape index: {}]
  %s13 = inlined_call_operand.vmem [shape: f32[1,64], index: 13, kind: input, shape index: {}]
  %s14 = inlined_call_operand.hbm [shape: f32[2,2,4], index: 14, kind: input, shape index: {}]
  %s15 = inlined_call_operand.hbm [shape: f32[2,64,133], index: 15, kind: input, shape index: {}]
  %s16 = inlined_call_operand.hbm [shape: f32[5,133], index: 16, kind: input, shape index: {}]
  %s17 = inlined_call_operand.vmem [shape: f32[1,133], index: 17, kind: input, shape index: {}]
  %s18 = inlined_call_operand.hbm [shape: f32[133,16], index: 18, kind: input, shape index: {}]
  %s19 = inlined_call_operand.vmem [shape: f32[1,16], index: 19, kind: input, shape index: {}]
  %s20 = inlined_call_operand.hbm [shape: f32[2,16], index: 20, kind: output, shape index: {}]
  %s21 = sld [smem:[#allocation0]]
  $region142: #{goal_encoder_forward.1} parent=0
    _
  %s23 = ssub.s32 1, %s21
  %s24 = scalar_select 0, %s23, %s21
  $region1: #{goal_encoder_forward.1} parent=0
    #allocation2 [shape = 'u8[1024]{0}', space=vmem, size = 0x400, scoped, tag = 'input window, operand 1, single buffered']
    #allocation3 [shape = 's32[1]{0}', space=sflag, size = 0x4, scoped, tag = 'scoped memory for goal_encoder_forward.1']
    #allocation4 [shape = 's32[1]{0}', space=sflag, size = 0x4, scoped, tag = 'scoped memory for goal_encoder_forward.1']
    #allocation5 [shape = 'u8[61440]{0}', space=vmem, size = 0xf000, scoped, tag = 'input window, operand 2, single buffered']
    #allocation6 [shape = 's32[1]{0}', space=sflag, size = 0x4, scoped, tag = 'scoped memory for goal_encoder_forward.1']
    #allocation7 [shape = 'u8[307200]{0}', space=vmem, size = 0x4b000, scoped, tag = 'input window, operand 3, single buffered']
    #allocation8 [shape = 'u8[36864]{0}', space=vmem, size = 0x9000, scoped, tag = 'input window, operand 5, single buffered']
    #allocation9 [shape = 's32[1]{0}', space=sflag, size = 0x4, scoped, tag = 'scoped memory for goal_encoder_forward.1']
    #allocation10 [shape = 'u8[2801664]{0}', space=vmem, size = 0x2ac000, scoped, tag = 'input window, operand 6, single buffered']
    #allocation11 [shape = 'u8[12288]{0}', space=vmem, size = 0x3000, scoped, tag = 'input window, operand 8, single buffered']
    #allocation12 [shape = 's32[1]{0}', space=sflag, size = 0x4, scoped, tag = 'scoped memory for goal_encoder_forward.1']
    #allocation13 [shape = 'u8[442368]{0}', space=vmem, size = 0x6c000, scoped, tag = 'input window, operand 9, single buffered']
    #allocation14 [shape = 'u8[6144]{0}', space=vmem, size = 0x1800, scoped, tag = 'input window, operand 11, single buffered']
    #allocation15 [shape = 's32[1]{0}', space=sflag, size = 0x4, scoped, tag = 'scoped memory for goal_encoder_forward.1']
    #allocation16 [shape = 'u8[196608]{0}', space=vmem, size = 0x30000, scoped, tag = 'input window, operand 12, single buffered']
    #allocation17 [shape = 'u8[2048]{0}', space=vmem, size = 0x800, scoped, tag = 'input window, operand 14, single buffered']
    #allocation18 [shape = 's32[1]{0}', space=sflag, size = 0x4, scoped, tag = 'scoped memory for goal_encoder_forward.1']
    #allocation19 [shape = 'u8[131072]{0}', space=vmem, size = 0x20000, scoped, tag = 'input window, operand 15, single buffered']
    #allocation20 [shape = 'u8[8192]{0}', space=vmem, size = 0x2000, scoped, tag = 'input window, operand 16, single buffered']
    #allocation21 [shape = 's32[1]{0}', space=sflag, size = 0x4, scoped, tag = 'scoped memory for goal_encoder_forward.1']
    #allocation22 [shape = 'u8[69632]{0}', space=vmem, size = 0x11000, scoped, tag = 'input window, operand 18, single buffered']
    #allocation23 [shape = 'u8[1024]{0}', space=vmem, size = 0x400, scoped, tag = 'output window, operand 0, single buffered']
    %25 = vsyncpa [#allocation3], 0
    %26 = vsyncpa [#allocation6], 0
    %27 = vsyncpa [#allocation9], 0
    %28 = vsyncpa [#allocation12], 0
    %29 = vsyncpa [#allocation15], 0
    %30 = vsyncpa [#allocation18], 0
    %31 = vsyncpa [#allocation21], 0
    %32 = vsyncpa [#allocation4], 0
    // Predicated region
    $region2: #{goal_encoder_forward.1} parent=1 // pred_check
      _
    $region3: #{goal_encoder_forward.1} parent=1 // pred_check_branch
      %34 = sbr.rel (0) target = $region5
    $region4: #{goal_encoder_forward.1} parent=1 // pred_region
      _
    $region5: #{goal_encoder_forward.1} parent=1 // pred_fallthru
      _
    // Predicated region
    $region6: #{goal_encoder_forward.1} parent=1 // pred_check
      _
    $region7: #{goal_encoder_forward.1} parent=1 // pred_check_branch
      %36 = sbr.rel (0) target = $region9
    $region8: #{goal_encoder_forward.1} parent=1 // pred_region
      %s38 = ssub.s32 32, 32
      %39 = vsyncadd [#allocation3], %s38
      %s41 = sshll.u32 [#allocation2], 4
      %s42 = int_to_ptr.vmem [resolvable:$true] %s41
      %44 = dma.hbm_to_vmem [thread:$0]  %s1, 32, %s42, [#allocation3]
    $region9: #{goal_encoder_forward.1} parent=1 // pred_fallthru
      _
    // Predicated region
    $region10: #{goal_encoder_forward.1} parent=1 // pred_check
      _
    $region11: #{goal_encoder_forward.1} parent=1 // pred_check_branch
      %46 = sbr.rel (0) target = $region13
    $region12: #{goal_encoder_forward.1} parent=1 // pred_region
      %s48 = ssub.s32 1920, 1920
      %49 = vsyncadd [#allocation6], %s48
      %s50 = sshll.u32 [#allocation5], 4
      %s51 = int_to_ptr.vmem [resolvable:$true] %s50
      %56 = dma.hbm_to_vmem [thread:$0]  %s2, 1920, %s51, [#allocation6], 128, 128, 8
    $region13: #{goal_encoder_forward.1} parent=1 // pred_fallthru
      _
    // Predicated region
    $region14: #{goal_encoder_forward.1} parent=1 // pred_check
      _
    $region15: #{goal_encoder_forward.1} parent=1 // pred_check_branch
      %58 = sbr.rel (0) target = $region17
    $region16: #{goal_encoder_forward.1} parent=1 // pred_region
      %s60 = ssub.s32 9600, 9600
      %61 = vsyncadd [#allocation6], %s60
      %s62 = sshll.u32 [#allocation7], 4
      %s63 = int_to_ptr.vmem [resolvable:$true] %s62
      %68 = dma.hbm_to_vmem [thread:$0]  %s3, 9600, %s63, [#allocation6], 640, 640, 40
    $region17: #{goal_encoder_forward.1} parent=1 // pred_fallthru
      _
    // Predicated region
    $region18: #{goal_encoder_forward.1} parent=1 // pred_check
      _
    $region19: #{goal_encoder_forward.1} parent=1 // pred_check_branch
      %70 = sbr.rel (0) target = $region21
    $region20: #{goal_encoder_forward.1} parent=1 // pred_region
      _
    $region21: #{goal_encoder_forward.1} parent=1 // pred_fallthru
      _
    // Predicated region
    $region22: #{goal_encoder_forward.1} parent=1 // pred_check
      _
    $region23: #{goal_encoder_forward.1} parent=1 // pred_check_branch
      %72 = sbr.rel (0) target = $region25
    $region24: #{goal_encoder_forward.1} parent=1 // pred_region
      %s74 = ssub.s32 1152, 1152
      %75 = vsyncadd [#allocation9], %s74
      %s76 = sshll.u32 [#allocation8], 4
      %s77 = int_to_ptr.vmem [resolvable:$true] %s76
      %82 = dma.hbm_to_vmem [thread:$0]  %s5, 1152, %s77, [#allocation9], 128, 128, 8
    $region25: #{goal_encoder_forward.1} parent=1 // pred_fallthru
      _
    // Predicated region
    $region26: #{goal_encoder_forward.1} parent=1 // pred_check
      _
    $region27: #{goal_encoder_forward.1} parent=1 // pred_check_branch
      %84 = sbr.rel (0) target = $region29
    $region28: #{goal_encoder_forward.1} parent=1 // pred_region
      %s86 = ssub.s32 87552, 87552
      %87 = vsyncadd [#allocation9], %s86
      %s88 = sshll.u32 [#allocation10], 4
      %s89 = int_to_ptr.vmem [resolvable:$true] %s88
      %94 = dma.hbm_to_vmem [thread:$0]  %s6, 87552, %s89, [#allocation9], 384, 384, 24
    $region29: #{goal_encoder_forward.1} parent=1 // pred_fallthru
      _
    // Predicated region
    $region30: #{goal_encoder_forward.1} parent=1 // pred_check
      _
    $region31: #{goal_encoder_forward.1} parent=1 // pred_check_branch
      %96 = sbr.rel (0) target = $region33
    $region32: #{goal_encoder_forward.1} parent=1 // pred_region
      _
    $region33: #{goal_encoder_forward.1} parent=1 // pred_fallthru
      _
    // Predicated region
    $region34: #{goal_encoder_forward.1} parent=1 // pred_check
      _
    $region35: #{goal_encoder_forward.1} parent=1 // pred_check_branch
      %98 = sbr.rel (0) target = $region37
    $region36: #{goal_encoder_forward.1} parent=1 // pred_region
      %s100 = ssub.s32 384, 384
      %101 = vsyncadd [#allocation12], %s100
      %s102 = sshll.u32 [#allocation11], 4
      %s103 = int_to_ptr.vmem [resolvable:$true] %s102
      %108 = dma.hbm_to_vmem [thread:$0]  %s8, 384, %s103, [#allocation12], 128, 128, 8
    $region37: #{goal_encoder_forward.1} parent=1 // pred_fallthru
      _
    // Predicated region
    $region38: #{goal_encoder_forward.1} parent=1 // pred_check
      _
    $region39: #{goal_encoder_forward.1} parent=1 // pred_check_branch
      %110 = sbr.rel (0) target = $region41
    $region40: #{goal_encoder_forward.1} parent=1 // pred_region
      %s112 = ssub.s32 13824, 13824
      %113 = vsyncadd [#allocation12], %s112
      %s114 = sshll.u32 [#allocation13], 4
      %s115 = int_to_ptr.vmem [resolvable:$true] %s114
      %120 = dma.hbm_to_vmem [thread:$0]  %s9, 13824, %s115, [#allocation12], 128, 128, 8
    $region41: #{goal_encoder_forward.1} parent=1 // pred_fallthru
      _
    // Predicated region
    $region42: #{goal_encoder_forward.1} parent=1 // pred_check
      _
    $region43: #{goal_encoder_forward.1} parent=1 // pred_check_branch
      %122 = sbr.rel (0) target = $region45
    $region44: #{goal_encoder_forward.1} parent=1 // pred_region
      _
    $region45: #{goal_encoder_forward.1} parent=1 // pred_fallthru
      _
    // Predicated region
    $region46: #{goal_encoder_forward.1} parent=1 // pred_check
      _
    $region47: #{goal_encoder_forward.1} parent=1 // pred_check_branch
      %124 = sbr.rel (0) target = $region49
    $region48: #{goal_encoder_forward.1} parent=1 // pred_region
      %s126 = ssub.s32 192, 192
      %127 = vsyncadd [#allocation15], %s126
      %s128 = sshll.u32 [#allocation14], 4
      %s129 = int_to_ptr.vmem [resolvable:$true] %s128
      %134 = dma.hbm_to_vmem [thread:$0]  %s11, 192, %s129, [#allocation15], 64, 64, 4
    $region49: #{goal_encoder_forward.1} parent=1 // pred_fallthru
      _
    // Predicated region
    $region50: #{goal_encoder_forward.1} parent=1 // pred_check
      _
    $region51: #{goal_encoder_forward.1} parent=1 // pred_check_branch
      %136 = sbr.rel (0) target = $region53
    $region52: #{goal_encoder_forward.1} parent=1 // pred_region
      %s138 = ssub.s32 6144, 6144
      %139 = vsyncadd [#allocation15], %s138
      %s140 = sshll.u32 [#allocation16], 4
      %s141 = int_to_ptr.vmem [resolvable:$true] %s140
      %146 = dma.hbm_to_vmem [thread:$0]  %s12, 6144, %s141, [#allocation15], 128, 128, 8
    $region53: #{goal_encoder_forward.1} parent=1 // pred_fallthru
      _
    // Predicated region
    $region54: #{goal_encoder_forward.1} parent=1 // pred_check
      _
    $region55: #{goal_encoder_forward.1} parent=1 // pred_check_branch
      %148 = sbr.rel (0) target = $region57
    $region56: #{goal_encoder_forward.1} parent=1 // pred_region
      _
    $region57: #{goal_encoder_forward.1} parent=1 // pred_fallthru
      _
    // Predicated region
    $region58: #{goal_encoder_forward.1} parent=1 // pred_check
      _
    $region59: #{goal_encoder_forward.1} parent=1 // pred_check_branch
      %150 = sbr.rel (0) target = $region61
    $region60: #{goal_encoder_forward.1} parent=1 // pred_region
      %s152 = ssub.s32 64, 64
      %153 = vsyncadd [#allocation18], %s152
      %s154 = sshll.u32 [#allocation17], 4
      %s155 = int_to_ptr.vmem [resolvable:$true] %s154
      %160 = dma.hbm_to_vmem [thread:$0]  %s14, 64, %s155, [#allocation18], 32, 32, 2
    $region61: #{goal_encoder_forward.1} parent=1 // pred_fallthru
      _
    // Predicated region
    $region62: #{goal_encoder_forward.1} parent=1 // pred_check
      _
    $region63: #{goal_encoder_forward.1} parent=1 // pred_check_branch
      %162 = sbr.rel (0) target = $region65
    $region64: #{goal_encoder_forward.1} parent=1 // pred_region
      %s164 = ssub.s32 4096, 4096
      %165 = vsyncadd [#allocation18], %s164
      %s166 = sshll.u32 [#allocation19], 4
      %s167 = int_to_ptr.vmem [resolvable:$true] %s166
      %172 = dma.hbm_to_vmem [thread:$0]  %s15, 4096, %s167, [#allocation18], 256, 256, 16
    $region65: #{goal_encoder_forward.1} parent=1 // pred_fallthru
      _
    // Predicated region
    $region66: #{goal_encoder_forward.1} parent=1 // pred_check
      _
    $region67: #{goal_encoder_forward.1} parent=1 // pred_check_branch
      %174 = sbr.rel (0) target = $region69
    $region68: #{goal_encoder_forward.1} parent=1 // pred_region
      %s176 = ssub.s32 256, 256
      %177 = vsyncadd [#allocation21], %s176
      %s179 = sshll.u32 [#allocation20], 4
      %s180 = int_to_ptr.vmem [resolvable:$true] %s179
      %182 = dma.hbm_to_vmem [thread:$0]  %s16, 256, %s180, [#allocation21]
    $region69: #{goal_encoder_forward.1} parent=1 // pred_fallthru
      _
    // Predicated region
    $region70: #{goal_encoder_forward.1} parent=1 // pred_check
      _
    $region71: #{goal_encoder_forward.1} parent=1 // pred_check_branch
      %184 = sbr.rel (0) target = $region73
    $region72: #{goal_encoder_forward.1} parent=1 // pred_region
      _
    $region73: #{goal_encoder_forward.1} parent=1 // pred_fallthru
      _
    // Predicated region
    $region74: #{goal_encoder_forward.1} parent=1 // pred_check
      _
    $region75: #{goal_encoder_forward.1} parent=1 // pred_check_branch
      %186 = sbr.rel (0) target = $region77
    $region76: #{goal_encoder_forward.1} parent=1 // pred_region
      %s188 = ssub.s32 2176, 2176
      %189 = vsyncadd [#allocation21], %s188
      %s190 = sshll.u32 [#allocation22], 4
      %s191 = int_to_ptr.vmem [resolvable:$true] %s190
      %196 = dma.hbm_to_vmem [thread:$0]  %s18, 2176, %s191, [#allocation21], 128, 128, 8
    $region77: #{goal_encoder_forward.1} parent=1 // pred_fallthru
      _
    // Predicated region
    $region78: #{goal_encoder_forward.1} parent=1 // pred_check
      _
    $region79: #{goal_encoder_forward.1} parent=1 // pred_check_branch
      %198 = sbr.rel (0) target = $region81
    $region80: #{goal_encoder_forward.1} parent=1 // pred_region
      _
    $region81: #{goal_encoder_forward.1} parent=1 // pred_fallthru
      _
    // Predicated region
    $region82: #{goal_encoder_forward.1} parent=1 // pred_check
      _
    $region83: #{goal_encoder_forward.1} parent=1 // pred_check_branch
      %200 = sbr.rel (0) target = $region85
    $region84: #{goal_encoder_forward.1} parent=1 // pred_region
      %201 = dma.done [#allocation3], 32
    $region85: #{goal_encoder_forward.1} parent=1 // pred_fallthru
      _
    // Predicated region
    $region86: #{goal_encoder_forward.1} parent=1 // pred_check
      _
    $region87: #{goal_encoder_forward.1} parent=1 // pred_check_branch
      %203 = sbr.rel (0) target = $region89
    $region88: #{goal_encoder_forward.1} parent=1 // pred_region
      %204 = dma.done [#allocation6], 1920
    $region89: #{goal_encoder_forward.1} parent=1 // pred_fallthru
      _
    // Predicated region
    $region90: #{goal_encoder_forward.1} parent=1 // pred_check
      _
    $region91: #{goal_encoder_forward.1} parent=1 // pred_check_branch
      %206 = sbr.rel (0) target = $region93
    $region92: #{goal_encoder_forward.1} parent=1 // pred_region
      %207 = dma.done [#allocation6], 9600
    $region93: #{goal_encoder_forward.1} parent=1 // pred_fallthru
      _
    // Predicated region
    $region94: #{goal_encoder_forward.1} parent=1 // pred_check
      _
    $region95: #{goal_encoder_forward.1} parent=1 // pred_check_branch
      %209 = sbr.rel (0) target = $region97
    $region96: #{goal_encoder_forward.1} parent=1 // pred_region
      %210 = dma.done [#allocation9], 1152
    $region97: #{goal_encoder_forward.1} parent=1 // pred_fallthru
      _
    // Predicated region
    $region98: #{goal_encoder_forward.1} parent=1 // pred_check
      _
    $region99: #{goal_encoder_forward.1} parent=1 // pred_check_branch
      %212 = sbr.rel (0) target = $region101
    $region100: #{goal_encoder_forward.1} parent=1 // pred_region
      %213 = dma.done [#allocation9], 87552
    $region101: #{goal_encoder_forward.1} parent=1 // pred_fallthru
      _
    // Predicated region
    $region102: #{goal_encoder_forward.1} parent=1 // pred_check
      _
    $region103: #{goal_encoder_forward.1} parent=1 // pred_check_branch
      %215 = sbr.rel (0) target = $region105
    $region104: #{goal_encoder_forward.1} parent=1 // pred_region
      %216 = dma.done [#allocation12], 384
    $region105: #{goal_encoder_forward.1} parent=1 // pred_fallthru
      _
    // Predicated region
    $region106: #{goal_encoder_forward.1} parent=1 // pred_check
      _
    $region107: #{goal_encoder_forward.1} parent=1 // pred_check_branch
      %218 = sbr.rel (0) target = $region109
    $region108: #{goal_encoder_forward.1} parent=1 // pred_region
      %219 = dma.done [#allocation12], 13824
    $region109: #{goal_encoder_forward.1} parent=1 // pred_fallthru
      _
    // Predicated region
    $region110: #{goal_encoder_forward.1} parent=1 // pred_check
      _
    $region111: #{goal_encoder_forward.1} parent=1 // pred_check_branch
      %221 = sbr.rel (0) target = $region113
    $region112: #{goal_encoder_forward.1} parent=1 // pred_region
      %222 = dma.done [#allocation15], 192
    $region113: #{goal_encoder_forward.1} parent=1 // pred_fallthru
      _
    // Predicated region
    $region114: #{goal_encoder_forward.1} parent=1 // pred_check
      _
    $region115: #{goal_encoder_forward.1} parent=1 // pred_check_branch
      %224 = sbr.rel (0) target = $region117
    $region116: #{goal_encoder_forward.1} parent=1 // pred_region
      %225 = dma.done [#allocation15], 6144
    $region117: #{goal_encoder_forward.1} parent=1 // pred_fallthru
      _
    // Predicated region
    $region118: #{goal_encoder_forward.1} parent=1 // pred_check
      _
    $region119: #{goal_encoder_forward.1} parent=1 // pred_check_branch
      %227 = sbr.rel (0) target = $region121
    $region120: #{goal_encoder_forward.1} parent=1 // pred_region
      %228 = dma.done [#allocation18], 64
    $region121: #{goal_encoder_forward.1} parent=1 // pred_fallthru
      _
    // Predicated region
    $region122: #{goal_encoder_forward.1} parent=1 // pred_check
      _
    $region123: #{goal_encoder_forward.1} parent=1 // pred_check_branch
      %230 = sbr.rel (0) target = $region125
    $region124: #{goal_encoder_forward.1} parent=1 // pred_region
      %231 = dma.done [#allocation18], 4096
    $region125: #{goal_encoder_forward.1} parent=1 // pred_fallthru
      _
    // Predicated region
    $region126: #{goal_encoder_forward.1} parent=1 // pred_check
      _
    $region127: #{goal_encoder_forward.1} parent=1 // pred_check_branch
      %233 = sbr.rel (0) target = $region129
    $region128: #{goal_encoder_forward.1} parent=1 // pred_region
      %234 = dma.done [#allocation21], 256
    $region129: #{goal_encoder_forward.1} parent=1 // pred_fallthru
      _
    // Predicated region
    $region130: #{goal_encoder_forward.1} parent=1 // pred_check
      _
    $region131: #{goal_encoder_forward.1} parent=1 // pred_check_branch
      %236 = sbr.rel (0) target = $region133
    $region132: #{goal_encoder_forward.1} parent=1 // pred_region
      %237 = dma.done [#allocation21], 2176
    $region133: #{goal_encoder_forward.1} parent=1 // pred_fallthru
      _
    %v238 = vld [vmem:[%s0] sm:$0xff]
    %v239 = vld [vmem:[%s0 + $0x8] sm:$0xff]
    %v240 = vld [vmem:[%s0 + $0x10] sm:$0xff]
    %v241 = vld [vmem:[%s0 + $0x18] sm:$0xff]
    %v242 = vld [vmem:[%s0 + $0x20] sm:$0xff]
    %v243 = vld [vmem:[%s0 + $0x28] sm:$0xff]
    %v244 = vld [vmem:[%s0 + $0x30] sm:$0xff]
    %v245 = vld [vmem:[%s0 + $0x38] sm:$0xff]
    %v246 = vld [vmem:[%s0 + $0x40] sm:$0xff]
    %v247 = vld [vmem:[%s0 + $0x48] sm:$0xff]
    %v248 = vld [vmem:[#allocation5] sm:$0xff]
    %v249 = vld [vmem:[#allocation5 + $0x8] sm:$0xff]
    %v250 = vld [vmem:[#allocation5 + $0x10] sm:$0xff]
    %v251 = vld [vmem:[#allocation5 + $0x18] sm:$0xff]
    %v252 = vld [vmem:[#allocation5 + $0x20] sm:$0x3f]
    %vm253 = vcmask 654336
    %v255 = vsel %vm253, %v248, 0
    %v258 = vsel %vm253, %v249, 0
    %v261 = vsel %vm253, %v250, 0
    %v264 = vsel %vm253, %v251, 0
    %v267 = vsel %vm253, %v252, 0
    %269 = vmatprep.subr.mxu0 0.0
    %270 = vmatpush1.msra.mxu0 0.0
    %271 = vmatprep.subr.mxu0 0.0
    %272 = vmatpush1.msra.mxu0 0.0
    %273 = vmatprep.subr.mxu0 0.0
    %274 = vmatpush1.msra.mxu0 0.0
    %275 = vmatprep.subr.mxu0 0.0
    %276 = vmatpush1.msra.mxu0 0.0
    %277 = vmatprep.subr.mxu0 0.0
    %278 = vmatpush1.msra.mxu0 0.0
    %279 = vmatprep.subr.mxu0 0.0
    %280 = vmatpush1.msra.mxu0 0.0
    %281 = vmatprep.subr.mxu0 0.0
    %282 = vmatpush1.msra.mxu0 %v247
    %283 = vmatprep.subr.mxu0 0.0
    %284 = vmatpush1.msra.mxu0 %v246
    %285 = vmatprep.subr.mxu0 0.0
    %286 = vmatpush1.msra.mxu0 %v245
    %287 = vmatprep.subr.mxu0 0.0
    %288 = vmatpush1.msra.mxu0 %v244
    %289 = vmatprep.subr.mxu0 0.0
    %290 = vmatpush1.msra.mxu0 %v243
    %291 = vmatprep.subr.mxu0 0.0
    %292 = vmatpush1.msra.mxu0 %v242
    %293 = vmatprep.subr.mxu0 0.0
    %294 = vmatpush1.msra.mxu0 %v241
    %295 = vmatprep.subr.mxu0 0.0
    %296 = vmatpush1.msra.mxu0 %v240
    %297 = vmatprep.subr.mxu0 0.0
    %298 = vmatpush1.msra.mxu0 %v239
    %299 = vmatprep.subr.mxu0 0.0
    %300 = vmatpush1.msra.mxu0 %v238
    %301 = vmatprep.subr.mxu0 0.0
    %302 = vmatpush2.msra.mxu0 0.0
    %303 = vmatprep.subr.mxu0 0.0
    %304 = vmatpush2.msra.mxu0 0.0
    %305 = vmatprep.subr.mxu0 0.0
    %306 = vmatpush2.msra.mxu0 0.0
    %307 = vmatprep.subr.mxu0 0.0
    %308 = vmatpush2.msra.mxu0 0.0
    %309 = vmatprep.subr.mxu0 0.0
    %310 = vmatpush2.msra.mxu0 0.0
    %311 = vmatprep.subr.mxu0 0.0
    %312 = vmatpush2.msra.mxu0 0.0
    %313 = vmatprep.subr.mxu0 0.0
    %314 = vmatpush2.msra.mxu0 0.0
    %315 = vmatprep.subr.mxu0 0.0
    %316 = vmatpush2.msra.mxu0 0.0
    %317 = vmatprep.subr.mxu0 0.0
    %318 = vmatpush2.msra.mxu0 0.0
    %319 = vmatprep.subr.mxu0 0.0
    %320 = vmatpush2.msra.mxu0 0.0
    %321 = vmatprep.subr.mxu0 0.0
    %322 = vmatpush2.msra.mxu0 0.0
    %323 = vmatprep.subr.mxu0 0.0
    %324 = vmatpush2.msra.mxu0 0.0
    %325 = vmatprep.subr.mxu0 0.0
    %326 = vmatpush2.msra.mxu0 0.0
    %327 = vmatprep.subr.mxu0 0.0
    %328 = vmatpush2.msra.mxu0 0.0
    %329 = vmatprep.subr.mxu0 0.0
    %330 = vmatpush2.msra.mxu0 0.0
    %331 = vmatprep.subr.mxu0 0.0
    %332 = vmatpush2.msra.mxu0 0.0
    %333 = vmatprep.mubr.f32.mxu0 0.0
    %334 = vmatmul.mubr.f32.gmra.mxu0 %v255
    %v335 = vpop.f32.mrf.mxu0
    %v336 = vadd.f32 0.0, %v335
    %v337 = vpop.f32.mrf.mxu0
    %338 = vmatprep.mubr.f32.mxu0 0.0
    %339 = vmatmul.mubr.f32.gmra.mxu0 %v258
    %v340 = vpop.f32.mrf.mxu0
    %v341 = vadd.f32 0.0, %v340
    %v342 = vpop.f32.mrf.mxu0
    %343 = vmatprep.mubr.f32.mxu0 0.0
    %344 = vmatmul.mubr.f32.gmra.mxu0 %v261
    %v345 = vpop.f32.mrf.mxu0
    %v346 = vadd.f32 0.0, %v345
    %v347 = vpop.f32.mrf.mxu0
    %348 = vmatprep.mubr.f32.mxu0 0.0
    %349 = vmatmul.mubr.f32.gmra.mxu0 %v264
    %v350 = vpop.f32.mrf.mxu0
    %v351 = vadd.f32 0.0, %v350
    %v352 = vpop.f32.mrf.mxu0
    %353 = vmatprep.mubr.f32.mxu0 0.0
    %354 = vmatmul.mubr.f32.gmra.mxu0 %v267
    %v355 = vpop.f32.mrf.mxu0
    %v356 = vadd.f32 0.0, %v355
    %v357 = vpop.f32.mrf.mxu0
    %358 = vdwg.mxu0
    %v359 = vld [vmem:[#allocation7] sm:$0xff]
    %v360 = vld [vmem:[#allocation7 + $0x8] sm:$0xff]
    %v361 = vld [vmem:[#allocation7 + $0x10] sm:$0xff]
    %v362 = vld [vmem:[#allocation7 + $0x18] sm:$0xff]
    %v363 = vld [vmem:[#allocation7 + $0x20] sm:$0xff]
    %v364 = vld [vmem:[#allocation7 + $0x28] sm:$0xff]
    %v365 = vld [vmem:[#allocation7 + $0x30] sm:$0xff]
    %v366 = vld [vmem:[#allocation7 + $0x38] sm:$0xff]
    %v367 = vld [vmem:[#allocation7 + $0x40] sm:$0xff]
    %v368 = vld [vmem:[#allocation7 + $0x48] sm:$0xff]
    %v369 = vld [vmem:[#allocation7 + $0x50] sm:$0xff]
    %v370 = vld [vmem:[#allocation7 + $0x58] sm:$0xff]
    %v371 = vld [vmem:[#allocation7 + $0x60] sm:$0xff]
    %v372 = vld [vmem:[#allocation7 + $0x68] sm:$0xff]
    %v373 = vld [vmem:[#allocation7 + $0x70] sm:$0xff]
    %v374 = vld [vmem:[#allocation7 + $0x78] sm:$0xff]
    %v375 = vld [vmem:[#allocation7 + $0x80] sm:$0xff]
    %v376 = vld [vmem:[#allocation7 + $0x88] sm:$0xff]
    %v377 = vld [vmem:[#allocation7 + $0x90] sm:$0xff]
    %v378 = vld [vmem:[#allocation7 + $0x98] sm:$0xff]
    %v379 = vld [vmem:[#allocation7 + $0xa0] sm:$0xff]
    %v380 = vld [vmem:[#allocation7 + $0xa8] sm:$0xff]
    %v381 = vld [vmem:[#allocation7 + $0xb0] sm:$0xff]
    %v382 = vld [vmem:[#allocation7 + $0xb8] sm:$0xff]
    %v383 = vld [vmem:[#allocation7 + $0xc0] sm:$0xff]
    %s384 = scalar_lea.vmem [#allocation5], 40
    %v385 = vld [vmem:[%s384] sm:$0xff]
    %v386 = vld [vmem:[%s384 + $0x8] sm:$0xff]
    %v387 = vld [vmem:[%s384 + $0x10] sm:$0xff]
    %v388 = vld [vmem:[%s384 + $0x18] sm:$0xff]
    %v389 = vld [vmem:[%s384 + $0x20] sm:$0x3f]
    %v391 = vsel %vm253, %v385, 0
    %v394 = vsel %vm253, %v386, 0
    %v397 = vsel %vm253, %v387, 0
    %v400 = vsel %vm253, %v388, 0
    %v403 = vsel %vm253, %v389, 0
    %405 = vmatprep.subr.mxu0 0.0
    %406 = vmatpush1.msra.mxu0 0.0
    %407 = vmatprep.subr.mxu0 0.0
    %408 = vmatpush1.msra.mxu0 0.0
    %409 = vmatprep.subr.mxu0 0.0
    %410 = vmatpush1.msra.mxu0 0.0
    %411 = vmatprep.subr.mxu0 0.0
    %412 = vmatpush1.msra.mxu0 0.0
    %413 = vmatprep.subr.mxu0 0.0
    %414 = vmatpush1.msra.mxu0 0.0
    %415 = vmatprep.subr.mxu0 0.0
    %416 = vmatpush1.msra.mxu0 0.0
    %417 = vmatprep.subr.mxu0 0.0
    %418 = vmatpush1.msra.mxu0 %v247
    %419 = vmatprep.subr.mxu0 0.0
    %420 = vmatpush1.msra.mxu0 %v246
    %421 = vmatprep.subr.mxu0 0.0
    %422 = vmatpush1.msra.mxu0 %v245
    %423 = vmatprep.subr.mxu0 0.0
    %424 = vmatpush1.msra.mxu0 %v244
    %425 = vmatprep.subr.mxu0 0.0
    %426 = vmatpush1.msra.mxu0 %v243
    %427 = vmatprep.subr.mxu0 0.0
    %428 = vmatpush1.msra.mxu0 %v242
    %429 = vmatprep.subr.mxu0 0.0
    %430 = vmatpush1.msra.mxu0 %v241
    %431 = vmatprep.subr.mxu0 0.0
    %432 = vmatpush1.msra.mxu0 %v240
    %433 = vmatprep.subr.mxu0 0.0
    %434 = vmatpush1.msra.mxu0 %v239
    %435 = vmatprep.subr.mxu0 0.0
    %436 = vmatpush1.msra.mxu0 %v238
    %437 = vmatprep.subr.mxu0 0.0
    %438 = vmatpush2.msra.mxu0 0.0
    %439 = vmatprep.subr.mxu0 0.0
    %440 = vmatpush2.msra.mxu0 0.0
    %441 = vmatprep.subr.mxu0 0.0
    %442 = vmatpush2.msra.mxu0 0.0
    %443 = vmatprep.subr.mxu0 0.0
    %444 = vmatpush2.msra.mxu0 0.0
    %445 = vmatprep.subr.mxu0 0.0
    %446 = vmatpush2.msra.mxu0 0.0
    %447 = vmatprep.subr.mxu0 0.0
    %448 = vmatpush2.msra.mxu0 0.0
    %449 = vmatprep.subr.mxu0 0.0
    %450 = vmatpush2.msra.mxu0 0.0
    %451 = vmatprep.subr.mxu0 0.0
    %452 = vmatpush2.msra.mxu0 0.0
    %453 = vmatprep.subr.mxu0 0.0
    %454 = vmatpush2.msra.mxu0 0.0
    %455 = vmatprep.subr.mxu0 0.0
    %456 = vmatpush2.msra.mxu0 0.0
    %457 = vmatprep.subr.mxu0 0.0
    %458 = vmatpush2.msra.mxu0 0.0
    %459 = vmatprep.subr.mxu0 0.0
    %460 = vmatpush2.msra.mxu0 0.0
    %461 = vmatprep.subr.mxu0 0.0
    %462 = vmatpush2.msra.mxu0 0.0
    %463 = vmatprep.subr.mxu0 0.0
    %464 = vmatpush2.msra.mxu0 0.0
    %465 = vmatprep.subr.mxu0 0.0
    %466 = vmatpush2.msra.mxu0 0.0
    %467 = vmatprep.subr.mxu0 0.0
    %468 = vmatpush2.msra.mxu0 0.0
    %469 = vmatprep.mubr.f32.mxu0 0.0
    %470 = vmatmul.mubr.f32.gmra.mxu0 %v391
    %v471 = vpop.f32.mrf.mxu0
    %v472 = vadd.f32 0.0, %v471
    %v473 = vpop.f32.mrf.mxu0
    %474 = vmatprep.mubr.f32.mxu0 0.0
    %475 = vmatmul.mubr.f32.gmra.mxu0 %v394
    %v476 = vpop.f32.mrf.mxu0
    %v477 = vadd.f32 0.0, %v476
    %v478 = vpop.f32.mrf.mxu0
    %479 = vmatprep.mubr.f32.mxu0 0.0
    %480 = vmatmul.mubr.f32.gmra.mxu0 %v397
    %v481 = vpop.f32.mrf.mxu0
    %v482 = vadd.f32 0.0, %v481
    %v483 = vpop.f32.mrf.mxu0
    %484 = vmatprep.mubr.f32.mxu0 0.0
    %485 = vmatmul.mubr.f32.gmra.mxu0 %v400
    %v486 = vpop.f32.mrf.mxu0
    %v487 = vadd.f32 0.0, %v486
    %v488 = vpop.f32.mrf.mxu0
    %489 = vmatprep.mubr.f32.mxu0 0.0
    %490 = vmatmul.mubr.f32.gmra.mxu0 %v403
    %v491 = vpop.f32.mrf.mxu0
    %v492 = vadd.f32 0.0, %v491
    %v493 = vpop.f32.mrf.mxu0
    %494 = vdwg.mxu0
    %s495 = scalar_lea.vmem [#allocation7], 200
    %v496 = vld [vmem:[%s495] sm:$0xff]
    %v497 = vld [vmem:[%s495 + $0x8] sm:$0xff]
    %v498 = vld [vmem:[%s495 + $0x10] sm:$0xff]
    %v499 = vld [vmem:[%s495 + $0x18] sm:$0xff]
    %v500 = vld [vmem:[%s495 + $0x20] sm:$0xff]
    %v501 = vld [vmem:[%s495 + $0x28] sm:$0xff]
    %v502 = vld [vmem:[%s495 + $0x30] sm:$0xff]
    %v503 = vld [vmem:[%s495 + $0x38] sm:$0xff]
    %v504 = vld [vmem:[%s495 + $0x40] sm:$0xff]
    %v505 = vld [vmem:[%s495 + $0x48] sm:$0xff]
    %v506 = vld [vmem:[%s495 + $0x50] sm:$0xff]
    %v507 = vld [vmem:[%s495 + $0x58] sm:$0xff]
    %v508 = vld [vmem:[%s495 + $0x60] sm:$0xff]
    %v509 = vld [vmem:[%s495 + $0x68] sm:$0xff]
    %v510 = vld [vmem:[%s495 + $0x70] sm:$0xff]
    %v511 = vld [vmem:[%s495 + $0x78] sm:$0xff]
    %v512 = vld [vmem:[%s495 + $0x80] sm:$0xff]
    %v513 = vld [vmem:[%s495 + $0x88] sm:$0xff]
    %v514 = vld [vmem:[%s495 + $0x90] sm:$0xff]
    %v515 = vld [vmem:[%s495 + $0x98] sm:$0xff]
    %v516 = vld [vmem:[%s495 + $0xa0] sm:$0xff]
    %v517 = vld [vmem:[%s495 + $0xa8] sm:$0xff]
    %v518 = vld [vmem:[%s495 + $0xb0] sm:$0xff]
    %v519 = vld [vmem:[%s495 + $0xb8] sm:$0xff]
    %v520 = vld [vmem:[%s495 + $0xc0] sm:$0xff]
    %vm521 = vcmask 326656
    %v523 = vsel %vm521, %v472, 0
    %v526 = vsel %vm521, %v477, 0
    %v529 = vsel %vm521, %v482, 0
    %v532 = vsel %vm521, %v487, 0
    %v535 = vsel %vm521, %v492, 0
    %537 = vmatprep.subr.mxu0 0.0
    %538 = vmatpush1.msra.mxu0 0.0
    %539 = vmatprep.subr.mxu0 0.0
    %540 = vmatpush1.msra.mxu0 0.0
    %541 = vmatprep.subr.mxu0 0.0
    %542 = vmatpush1.msra.mxu0 0.0
    %543 = vmatprep.subr.mxu0 0.0
    %544 = vmatpush1.msra.mxu0 0.0
    %545 = vmatprep.subr.mxu0 0.0
    %546 = vmatpush1.msra.mxu0 0.0
    %547 = vmatprep.subr.mxu0 0.0
    %548 = vmatpush1.msra.mxu0 0.0
    %549 = vmatprep.subr.mxu0 0.0
    %550 = vmatpush1.msra.mxu0 0.0
    %551 = vmatprep.subr.mxu0 0.0
    %552 = vmatpush1.msra.mxu0 0.0
    %553 = vmatprep.subr.mxu0 0.0
    %554 = vmatpush1.msra.mxu0 0.0
    %555 = vmatprep.subr.mxu0 0.0
    %556 = vmatpush1.msra.mxu0 0.0
    %557 = vmatprep.subr.mxu0 0.0
    %558 = vmatpush1.msra.mxu0 0.0
    %559 = vmatprep.subr.mxu0 %v517
    %560 = vmatpush1.msra.mxu0 %v516
    %561 = vmatprep.subr.mxu0 %v512
    %562 = vmatpush1.msra.mxu0 %v511
    %563 = vmatprep.subr.mxu0 %v507
    %564 = vmatpush1.msra.mxu0 %v506
    %565 = vmatprep.subr.mxu0 %v502
    %566 = vmatpush1.msra.mxu0 %v501
    %567 = vmatprep.subr.mxu0 %v497
    %568 = vmatpush1.msra.mxu0 %v496
    %569 = vmatprep.subr.mxu0 0.0
    %570 = vmatpush2.msra.mxu0 0.0
    %571 = vmatprep.subr.mxu0 0.0
    %572 = vmatpush2.msra.mxu0 0.0
    %573 = vmatprep.subr.mxu0 0.0
    %574 = vmatpush2.msra.mxu0 0.0
    %575 = vmatprep.subr.mxu0 0.0
    %576 = vmatpush2.msra.mxu0 0.0
    %577 = vmatprep.subr.mxu0 0.0
    %578 = vmatpush2.msra.mxu0 0.0
    %579 = vmatprep.subr.mxu0 0.0
    %580 = vmatpush2.msra.mxu0 0.0
    %581 = vmatprep.subr.mxu0 0.0
    %582 = vmatpush2.msra.mxu0 0.0
    %583 = vmatprep.subr.mxu0 0.0
    %584 = vmatpush2.msra.mxu0 0.0
    %585 = vmatprep.subr.mxu0 0.0
    %586 = vmatpush2.msra.mxu0 0.0
    %587 = vmatprep.subr.mxu0 0.0
    %588 = vmatpush2.msra.mxu0 0.0
    %589 = vmatprep.subr.mxu0 0.0
    %590 = vmatpush2.msra.mxu0 0.0
    %591 = vmatprep.subr.mxu0 0.0
    %592 = vmatpush2.msra.mxu0 0.0
    %593 = vmatprep.subr.mxu0 0.0
    %594 = vmatpush2.msra.mxu0 0.0
    %595 = vmatprep.subr.mxu0 0.0
    %596 = vmatpush2.msra.mxu0 0.0
    %597 = vmatprep.subr.mxu0 0.0
    %598 = vmatpush2.msra.mxu0 0.0
    %599 = vmatprep.subr.mxu0 0.0
    %600 = vmatpush2.msra.mxu0 0.0
    %601 = vmatprep.mubr.f32.mxu0 0.0
    %602 = vmatmul.mubr.f32.gmra.mxu0 %v523
    %v603 = vpop.f32.mrf.mxu0
    %v604 = vadd.f32 0.0, %v603
    %v605 = vpop.f32.mrf.mxu0
    %v606 = vadd.f32 0.0, %v605
    %607 = vmatprep.mubr.f32.mxu0 0.0
    %608 = vmatmul.mubr.f32.gmra.mxu0 %v526
    %v609 = vpop.f32.mrf.mxu0
    %v610 = vadd.f32 0.0, %v609
    %v611 = vpop.f32.mrf.mxu0
    %v612 = vadd.f32 0.0, %v611
    %613 = vmatprep.mubr.f32.mxu0 0.0
    %614 = vmatmul.mubr.f32.gmra.mxu0 %v529
    %v615 = vpop.f32.mrf.mxu0
    %v616 = vadd.f32 0.0, %v615
    %v617 = vpop.f32.mrf.mxu0
    %v618 = vadd.f32 0.0, %v617
    %619 = vmatprep.mubr.f32.mxu0 0.0
    %620 = vmatmul.mubr.f32.gmra.mxu0 %v532
    %v621 = vpop.f32.mrf.mxu0
    %v622 = vadd.f32 0.0, %v621
    %v623 = vpop.f32.mrf.mxu0
    %v624 = vadd.f32 0.0, %v623
    %625 = vmatprep.mubr.f32.mxu0 0.0
    %626 = vmatmul.mubr.f32.gmra.mxu0 %v535
    %v627 = vpop.f32.mrf.mxu0
    %v628 = vadd.f32 0.0, %v627
    %v629 = vpop.f32.mrf.mxu0
    %v630 = vadd.f32 0.0, %v629
    %631 = vdwg.mxu0
    %632 = vmatprep.subr.mxu0 0.0
    %633 = vmatpush1.msra.mxu0 0.0
    %634 = vmatprep.subr.mxu0 0.0
    %635 = vmatpush1.msra.mxu0 0.0
    %636 = vmatprep.subr.mxu0 0.0
    %637 = vmatpush1.msra.mxu0 0.0
    %638 = vmatprep.subr.mxu0 0.0
    %639 = vmatpush1.msra.mxu0 0.0
    %640 = vmatprep.subr.mxu0 0.0
    %641 = vmatpush1.msra.mxu0 0.0
    %642 = vmatprep.subr.mxu0 0.0
    %643 = vmatpush1.msra.mxu0 0.0
    %644 = vmatprep.subr.mxu0 0.0
    %645 = vmatpush1.msra.mxu0 0.0
    %646 = vmatprep.subr.mxu0 0.0
    %647 = vmatpush1.msra.mxu0 0.0
    %648 = vmatprep.subr.mxu0 0.0
    %649 = vmatpush1.msra.mxu0 0.0
    %650 = vmatprep.subr.mxu0 0.0
    %651 = vmatpush1.msra.mxu0 0.0
    %652 = vmatprep.subr.mxu0 0.0
    %653 = vmatpush1.msra.mxu0 0.0
    %654 = vmatprep.subr.mxu0 %v519
    %655 = vmatpush1.msra.mxu0 %v518
    %656 = vmatprep.subr.mxu0 %v514
    %657 = vmatpush1.msra.mxu0 %v513
    %658 = vmatprep.subr.mxu0 %v509
    %659 = vmatpush1.msra.mxu0 %v508
    %660 = vmatprep.subr.mxu0 %v504
    %661 = vmatpush1.msra.mxu0 %v503
    %662 = vmatprep.subr.mxu0 %v499
    %663 = vmatpush1.msra.mxu0 %v498
    %664 = vmatprep.subr.mxu0 0.0
    %665 = vmatpush2.msra.mxu0 0.0
    %666 = vmatprep.subr.mxu0 0.0
    %667 = vmatpush2.msra.mxu0 0.0
    %668 = vmatprep.subr.mxu0 0.0
    %669 = vmatpush2.msra.mxu0 0.0
    %670 = vmatprep.subr.mxu0 0.0
    %671 = vmatpush2.msra.mxu0 0.0
    %672 = vmatprep.subr.mxu0 0.0
    %673 = vmatpush2.msra.mxu0 0.0
    %674 = vmatprep.subr.mxu0 0.0
    %675 = vmatpush2.msra.mxu0 0.0
    %676 = vmatprep.subr.mxu0 0.0
    %677 = vmatpush2.msra.mxu0 0.0
    %678 = vmatprep.subr.mxu0 0.0
    %679 = vmatpush2.msra.mxu0 0.0
    %680 = vmatprep.subr.mxu0 0.0
    %681 = vmatpush2.msra.mxu0 0.0
    %682 = vmatprep.subr.mxu0 0.0
    %683 = vmatpush2.msra.mxu0 0.0
    %684 = vmatprep.subr.mxu0 0.0
    %685 = vmatpush2.msra.mxu0 0.0
    %686 = vmatprep.subr.mxu0 0.0
    %687 = vmatpush2.msra.mxu0 0.0
    %688 = vmatprep.subr.mxu0 0.0
    %689 = vmatpush2.msra.mxu0 0.0
    %690 = vmatprep.subr.mxu0 0.0
    %691 = vmatpush2.msra.mxu0 0.0
    %692 = vmatprep.subr.mxu0 0.0
    %693 = vmatpush2.msra.mxu0 0.0
    %694 = vmatprep.subr.mxu0 0.0
    %695 = vmatpush2.msra.mxu0 0.0
    %696 = vmatprep.mubr.f32.mxu0 0.0
    %697 = vmatmul.mubr.f32.gmra.mxu0 %v523
    %v698 = vpop.f32.mrf.mxu0
    %v699 = vadd.f32 0.0, %v698
    %v700 = vpop.f32.mrf.mxu0
    %v701 = vadd.f32 0.0, %v700
    %702 = vmatprep.mubr.f32.mxu0 0.0
    %703 = vmatmul.mubr.f32.gmra.mxu0 %v526
    %v704 = vpop.f32.mrf.mxu0
    %v705 = vadd.f32 0.0, %v704
    %v706 = vpop.f32.mrf.mxu0
    %v707 = vadd.f32 0.0, %v706
    %708 = vmatprep.mubr.f32.mxu0 0.0
    %709 = vmatmul.mubr.f32.gmra.mxu0 %v529
    %v710 = vpop.f32.mrf.mxu0
    %v711 = vadd.f32 0.0, %v710
    %v712 = vpop.f32.mrf.mxu0
    %v713 = vadd.f32 0.0, %v712
    %714 = vmatprep.mubr.f32.mxu0 0.0
    %715 = vmatmul.mubr.f32.gmra.mxu0 %v532
    %v716 = vpop.f32.mrf.mxu0
    %v717 = vadd.f32 0.0, %v716
    %v718 = vpop.f32.mrf.mxu0
    %v719 = vadd.f32 0.0, %v718
    %720 = vmatprep.mubr.f32.mxu0 0.0
    %721 = vmatmul.mubr.f32.gmra.mxu0 %v535
    %v722 = vpop.f32.mrf.mxu0
    %v723 = vadd.f32 0.0, %v722
    %v724 = vpop.f32.mrf.mxu0
    %v725 = vadd.f32 0.0, %v724
    %726 = vdwg.mxu0
    %727 = vmatprep.subr.mxu0 0.0
    %728 = vmatpush1.msra.mxu0 0.0
    %729 = vmatprep.subr.mxu0 0.0
    %730 = vmatpush1.msra.mxu0 0.0
    %731 = vmatprep.subr.mxu0 0.0
    %732 = vmatpush1.msra.mxu0 0.0
    %733 = vmatprep.subr.mxu0 0.0
    %734 = vmatpush1.msra.mxu0 0.0
    %735 = vmatprep.subr.mxu0 0.0
    %736 = vmatpush1.msra.mxu0 0.0
    %737 = vmatprep.subr.mxu0 0.0
    %738 = vmatpush1.msra.mxu0 0.0
    %739 = vmatprep.subr.mxu0 0.0
    %740 = vmatpush1.msra.mxu0 0.0
    %741 = vmatprep.subr.mxu0 0.0
    %742 = vmatpush1.msra.mxu0 0.0
    %743 = vmatprep.subr.mxu0 0.0
    %744 = vmatpush1.msra.mxu0 0.0
    %745 = vmatprep.subr.mxu0 0.0
    %746 = vmatpush1.msra.mxu0 0.0
    %747 = vmatprep.subr.mxu0 0.0
    %748 = vmatpush1.msra.mxu0 0.0
    %749 = vmatprep.subr.mxu0 0.0
    %750 = vmatpush1.msra.mxu0 %v520
    %751 = vmatprep.subr.mxu0 0.0
    %752 = vmatpush1.msra.mxu0 %v515
    %753 = vmatprep.subr.mxu0 0.0
    %754 = vmatpush1.msra.mxu0 %v510
    %755 = vmatprep.subr.mxu0 0.0
    %756 = vmatpush1.msra.mxu0 %v505
    %757 = vmatprep.subr.mxu0 0.0
    %758 = vmatpush1.msra.mxu0 %v500
    %759 = vmatprep.subr.mxu0 0.0
    %760 = vmatpush2.msra.mxu0 0.0
    %761 = vmatprep.subr.mxu0 0.0
    %762 = vmatpush2.msra.mxu0 0.0
    %763 = vmatprep.subr.mxu0 0.0
    %764 = vmatpush2.msra.mxu0 0.0
    %765 = vmatprep.subr.mxu0 0.0
    %766 = vmatpush2.msra.mxu0 0.0
    %767 = vmatprep.subr.mxu0 0.0
    %768 = vmatpush2.msra.mxu0 0.0
    %769 = vmatprep.subr.mxu0 0.0
    %770 = vmatpush2.msra.mxu0 0.0
    %771 = vmatprep.subr.mxu0 0.0
    %772 = vmatpush2.msra.mxu0 0.0
    %773 = vmatprep.subr.mxu0 0.0
    %774 = vmatpush2.msra.mxu0 0.0
    %775 = vmatprep.subr.mxu0 0.0
    %776 = vmatpush2.msra.mxu0 0.0
    %777 = vmatprep.subr.mxu0 0.0
    %778 = vmatpush2.msra.mxu0 0.0
    %779 = vmatprep.subr.mxu0 0.0
    %780 = vmatpush2.msra.mxu0 0.0
    %781 = vmatprep.subr.mxu0 0.0
    %782 = vmatpush2.msra.mxu0 0.0
    %783 = vmatprep.subr.mxu0 0.0
    %784 = vmatpush2.msra.mxu0 0.0
    %785 = vmatprep.subr.mxu0 0.0
    %786 = vmatpush2.msra.mxu0 0.0
    %787 = vmatprep.subr.mxu0 0.0
    %788 = vmatpush2.msra.mxu0 0.0
    %789 = vmatprep.subr.mxu0 0.0
    %790 = vmatpush2.msra.mxu0 0.0
    %791 = vmatprep.mubr.f32.mxu0 0.0
    %792 = vmatmul.mubr.f32.gmra.mxu0 %v523
    %v793 = vpop.f32.mrf.mxu0
    %v794 = vadd.f32 0.0, %v793
    %v795 = vpop.f32.mrf.mxu0
    %796 = vmatprep.mubr.f32.mxu0 0.0
    %797 = vmatmul.mubr.f32.gmra.mxu0 %v526
    %v798 = vpop.f32.mrf.mxu0
    %v799 = vadd.f32 0.0, %v798
    %v800 = vpop.f32.mrf.mxu0
    %801 = vmatprep.mubr.f32.mxu0 0.0
    %802 = vmatmul.mubr.f32.gmra.mxu0 %v529
    %v803 = vpop.f32.mrf.mxu0
    %v804 = vadd.f32 0.0, %v803
    %v805 = vpop.f32.mrf.mxu0
    %806 = vmatprep.mubr.f32.mxu0 0.0
    %807 = vmatmul.mubr.f32.gmra.mxu0 %v532
    %v808 = vpop.f32.mrf.mxu0
    %v809 = vadd.f32 0.0, %v808
    %v810 = vpop.f32.mrf.mxu0
    %811 = vmatprep.mubr.f32.mxu0 0.0
    %812 = vmatmul.mubr.f32.gmra.mxu0 %v535
    %v813 = vpop.f32.mrf.mxu0
    %v814 = vadd.f32 0.0, %v813
    %v815 = vpop.f32.mrf.mxu0
    %816 = vdwg.mxu0
    %v818 = vsel %vm521, %v336, 0
    %v821 = vsel %vm521, %v341, 0
    %v824 = vsel %vm521, %v346, 0
    %v827 = vsel %vm521, %v351, 0
    %v830 = vsel %vm521, %v356, 0
    %832 = vmatprep.subr.mxu0 0.0
    %833 = vmatpush1.msra.mxu0 0.0
    %834 = vmatprep.subr.mxu0 0.0
    %835 = vmatpush1.msra.mxu0 0.0
    %836 = vmatprep.subr.mxu0 0.0
    %837 = vmatpush1.msra.mxu0 0.0
    %838 = vmatprep.subr.mxu0 0.0
    %839 = vmatpush1.msra.mxu0 0.0
    %840 = vmatprep.subr.mxu0 0.0
    %841 = vmatpush1.msra.mxu0 0.0
    %842 = vmatprep.subr.mxu0 0.0
    %843 = vmatpush1.msra.mxu0 0.0
    %844 = vmatprep.subr.mxu0 0.0
    %845 = vmatpush1.msra.mxu0 0.0
    %846 = vmatprep.subr.mxu0 0.0
    %847 = vmatpush1.msra.mxu0 0.0
    %848 = vmatprep.subr.mxu0 0.0
    %849 = vmatpush1.msra.mxu0 0.0
    %850 = vmatprep.subr.mxu0 0.0
    %851 = vmatpush1.msra.mxu0 0.0
    %852 = vmatprep.subr.mxu0 0.0
    %853 = vmatpush1.msra.mxu0 0.0
    %854 = vmatprep.subr.mxu0 %v380
    %855 = vmatpush1.msra.mxu0 %v379
    %856 = vmatprep.subr.mxu0 %v375
    %857 = vmatpush1.msra.mxu0 %v374
    %858 = vmatprep.subr.mxu0 %v370
    %859 = vmatpush1.msra.mxu0 %v369
    %860 = vmatprep.subr.mxu0 %v365
    %861 = vmatpush1.msra.mxu0 %v364
    %862 = vmatprep.subr.mxu0 %v360
    %863 = vmatpush1.msra.mxu0 %v359
    %864 = vmatprep.subr.mxu0 0.0
    %865 = vmatpush2.msra.mxu0 0.0
    %866 = vmatprep.subr.mxu0 0.0
    %867 = vmatpush2.msra.mxu0 0.0
    %868 = vmatprep.subr.mxu0 0.0
    %869 = vmatpush2.msra.mxu0 0.0
    %870 = vmatprep.subr.mxu0 0.0
    %871 = vmatpush2.msra.mxu0 0.0
    %872 = vmatprep.subr.mxu0 0.0
    %873 = vmatpush2.msra.mxu0 0.0
    %874 = vmatprep.subr.mxu0 0.0
    %875 = vmatpush2.msra.mxu0 0.0
    %876 = vmatprep.subr.mxu0 0.0
    %877 = vmatpush2.msra.mxu0 0.0
    %878 = vmatprep.subr.mxu0 0.0
    %879 = vmatpush2.msra.mxu0 0.0
    %880 = vmatprep.subr.mxu0 0.0
    %881 = vmatpush2.msra.mxu0 0.0
    %882 = vmatprep.subr.mxu0 0.0
    %883 = vmatpush2.msra.mxu0 0.0
    %884 = vmatprep.subr.mxu0 0.0
    %885 = vmatpush2.msra.mxu0 0.0
    %886 = vmatprep.subr.mxu0 0.0
    %887 = vmatpush2.msra.mxu0 0.0
    %888 = vmatprep.subr.mxu0 0.0
    %889 = vmatpush2.msra.mxu0 0.0
    %890 = vmatprep.subr.mxu0 0.0
    %891 = vmatpush2.msra.mxu0 0.0
    %892 = vmatprep.subr.mxu0 0.0
    %893 = vmatpush2.msra.mxu0 0.0
    %894 = vmatprep.subr.mxu0 0.0
    %895 = vmatpush2.msra.mxu0 0.0
    %896 = vmatprep.mubr.f32.mxu0 0.0
    %897 = vmatmul.mubr.f32.gmra.mxu0 %v818
    %v898 = vpop.f32.mrf.mxu0
    %v899 = vadd.f32 %v604, %v898
    %v900 = vpop.f32.mrf.mxu0
    %v901 = vadd.f32 %v606, %v900
    %902 = vmatprep.mubr.f32.mxu0 0.0
    %903 = vmatmul.mubr.f32.gmra.mxu0 %v821
    %v904 = vpop.f32.mrf.mxu0
    %v905 = vadd.f32 %v610, %v904
    %v906 = vpop.f32.mrf.mxu0
    %v907 = vadd.f32 %v612, %v906
    %908 = vmatprep.mubr.f32.mxu0 0.0
    %909 = vmatmul.mubr.f32.gmra.mxu0 %v824
    %v910 = vpop.f32.mrf.mxu0
    %v911 = vadd.f32 %v616, %v910
    %v912 = vpop.f32.mrf.mxu0
    %v913 = vadd.f32 %v618, %v912
    %914 = vmatprep.mubr.f32.mxu0 0.0
    %915 = vmatmul.mubr.f32.gmra.mxu0 %v827
    %v916 = vpop.f32.mrf.mxu0
    %v917 = vadd.f32 %v622, %v916
    %v918 = vpop.f32.mrf.mxu0
    %v919 = vadd.f32 %v624, %v918
    %920 = vmatprep.mubr.f32.mxu0 0.0
    %921 = vmatmul.mubr.f32.gmra.mxu0 %v830
    %v922 = vpop.f32.mrf.mxu0
    %v923 = vadd.f32 %v628, %v922
    %v924 = vpop.f32.mrf.mxu0
    %v925 = vadd.f32 %v630, %v924
    %926 = vdwg.mxu0
    %927 = vmatprep.subr.mxu0 0.0
    %928 = vmatpush1.msra.mxu0 0.0
    %929 = vmatprep.subr.mxu0 0.0
    %930 = vmatpush1.msra.mxu0 0.0
    %931 = vmatprep.subr.mxu0 0.0
    %932 = vmatpush1.msra.mxu0 0.0
    %933 = vmatprep.subr.mxu0 0.0
    %934 = vmatpush1.msra.mxu0 0.0
    %935 = vmatprep.subr.mxu0 0.0
    %936 = vmatpush1.msra.mxu0 0.0
    %937 = vmatprep.subr.mxu0 0.0
    %938 = vmatpush1.msra.mxu0 0.0
    %939 = vmatprep.subr.mxu0 0.0
    %940 = vmatpush1.msra.mxu0 0.0
    %941 = vmatprep.subr.mxu0 0.0
    %942 = vmatpush1.msra.mxu0 0.0
    %943 = vmatprep.subr.mxu0 0.0
    %944 = vmatpush1.msra.mxu0 0.0
    %945 = vmatprep.subr.mxu0 0.0
    %946 = vmatpush1.msra.mxu0 0.0
    %947 = vmatprep.subr.mxu0 0.0
    %948 = vmatpush1.msra.mxu0 0.0
    %949 = vmatprep.subr.mxu0 %v382
    %950 = vmatpush1.msra.mxu0 %v381
    %951 = vmatprep.subr.mxu0 %v377
    %952 = vmatpush1.msra.mxu0 %v376
    %953 = vmatprep.subr.mxu0 %v372
    %954 = vmatpush1.msra.mxu0 %v371
    %955 = vmatprep.subr.mxu0 %v367
    %956 = vmatpush1.msra.mxu0 %v366
    %957 = vmatprep.subr.mxu0 %v362
    %958 = vmatpush1.msra.mxu0 %v361
    %959 = vmatprep.subr.mxu0 0.0
    %960 = vmatpush2.msra.mxu0 0.0
    %961 = vmatprep.subr.mxu0 0.0
    %962 = vmatpush2.msra.mxu0 0.0
    %963 = vmatprep.subr.mxu0 0.0
    %964 = vmatpush2.msra.mxu0 0.0
    %965 = vmatprep.subr.mxu0 0.0
    %966 = vmatpush2.msra.mxu0 0.0
    %967 = vmatprep.subr.mxu0 0.0
    %968 = vmatpush2.msra.mxu0 0.0
    %969 = vmatprep.subr.mxu0 0.0
    %970 = vmatpush2.msra.mxu0 0.0
    %971 = vmatprep.subr.mxu0 0.0
    %972 = vmatpush2.msra.mxu0 0.0
    %973 = vmatprep.subr.mxu0 0.0
    %974 = vmatpush2.msra.mxu0 0.0
    %975 = vmatprep.subr.mxu0 0.0
    %976 = vmatpush2.msra.mxu0 0.0
    %977 = vmatprep.subr.mxu0 0.0
    %978 = vmatpush2.msra.mxu0 0.0
    %979 = vmatprep.subr.mxu0 0.0
    %980 = vmatpush2.msra.mxu0 0.0
    %981 = vmatprep.subr.mxu0 0.0
    %982 = vmatpush2.msra.mxu0 0.0
    %983 = vmatprep.subr.mxu0 0.0
    %984 = vmatpush2.msra.mxu0 0.0
    %985 = vmatprep.subr.mxu0 0.0
    %986 = vmatpush2.msra.mxu0 0.0
    %987 = vmatprep.subr.mxu0 0.0
    %988 = vmatpush2.msra.mxu0 0.0
    %989 = vmatprep.subr.mxu0 0.0
    %990 = vmatpush2.msra.mxu0 0.0
    %991 = vmatprep.mubr.f32.mxu0 0.0
    %992 = vmatmul.mubr.f32.gmra.mxu0 %v818
    %v993 = vpop.f32.mrf.mxu0
    %v994 = vadd.f32 %v699, %v993
    %v995 = vpop.f32.mrf.mxu0
    %v996 = vadd.f32 %v701, %v995
    %997 = vmatprep.mubr.f32.mxu0 0.0
    %998 = vmatmul.mubr.f32.gmra.mxu0 %v821
    %v999 = vpop.f32.mrf.mxu0
    %v1000 = vadd.f32 %v705, %v999
    %v1001 = vpop.f32.mrf.mxu0
    %v1002 = vadd.f32 %v707, %v1001
    %1003 = vmatprep.mubr.f32.mxu0 0.0
    %1004 = vmatmul.mubr.f32.gmra.mxu0 %v824
    %v1005 = vpop.f32.mrf.mxu0
    %v1006 = vadd.f32 %v711, %v1005
    %v1007 = vpop.f32.mrf.mxu0
    %v1008 = vadd.f32 %v713, %v1007
    %1009 = vmatprep.mubr.f32.mxu0 0.0
    %1010 = vmatmul.mubr.f32.gmra.mxu0 %v827
    %v1011 = vpop.f32.mrf.mxu0
    %v1012 = vadd.f32 %v717, %v1011
    %v1013 = vpop.f32.mrf.mxu0
    %v1014 = vadd.f32 %v719, %v1013
    %1015 = vmatprep.mubr.f32.mxu0 0.0
    %1016 = vmatmul.mubr.f32.gmra.mxu0 %v830
    %v1017 = vpop.f32.mrf.mxu0
    %v1018 = vadd.f32 %v723, %v1017
    %v1019 = vpop.f32.mrf.mxu0
    %v1020 = vadd.f32 %v725, %v1019
    %1021 = vdwg.mxu0
    %1022 = vmatprep.subr.mxu0 0.0
    %1023 = vmatpush1.msra.mxu0 0.0
    %1024 = vmatprep.subr.mxu0 0.0
    %1025 = vmatpush1.msra.mxu0 0.0
    %1026 = vmatprep.subr.mxu0 0.0
    %1027 = vmatpush1.msra.mxu0 0.0
    %1028 = vmatprep.subr.mxu0 0.0
    %1029 = vmatpush1.msra.mxu0 0.0
    %1030 = vmatprep.subr.mxu0 0.0
    %1031 = vmatpush1.msra.mxu0 0.0
    %1032 = vmatprep.subr.mxu0 0.0
    %1033 = vmatpush1.msra.mxu0 0.0
    %1034 = vmatprep.subr.mxu0 0.0
    %1035 = vmatpush1.msra.mxu0 0.0
    %1036 = vmatprep.subr.mxu0 0.0
    %1037 = vmatpush1.msra.mxu0 0.0
    %1038 = vmatprep.subr.mxu0 0.0
    %1039 = vmatpush1.msra.mxu0 0.0
    %1040 = vmatprep.subr.mxu0 0.0
    %1041 = vmatpush1.msra.mxu0 0.0
    %1042 = vmatprep.subr.mxu0 0.0
    %1043 = vmatpush1.msra.mxu0 0.0
    %1044 = vmatprep.subr.mxu0 0.0
    %1045 = vmatpush1.msra.mxu0 %v383
    %1046 = vmatprep.subr.mxu0 0.0
    %1047 = vmatpush1.msra.mxu0 %v378
    %1048 = vmatprep.subr.mxu0 0.0
    %1049 = vmatpush1.msra.mxu0 %v373
    %1050 = vmatprep.subr.mxu0 0.0
    %1051 = vmatpush1.msra.mxu0 %v368
    %1052 = vmatprep.subr.mxu0 0.0
    %1053 = vmatpush1.msra.mxu0 %v363
    %1054 = vmatprep.subr.mxu0 0.0
    %1055 = vmatpush2.msra.mxu0 0.0
    %1056 = vmatprep.subr.mxu0 0.0
    %1057 = vmatpush2.msra.mxu0 0.0
    %1058 = vmatprep.subr.mxu0 0.0
    %1059 = vmatpush2.msra.mxu0 0.0
    %1060 = vmatprep.subr.mxu0 0.0
    %1061 = vmatpush2.msra.mxu0 0.0
    %1062 = vmatprep.subr.mxu0 0.0
    %1063 = vmatpush2.msra.mxu0 0.0
    %1064 = vmatprep.subr.mxu0 0.0
    %1065 = vmatpush2.msra.mxu0 0.0
    %1066 = vmatprep.subr.mxu0 0.0
    %1067 = vmatpush2.msra.mxu0 0.0
    %1068 = vmatprep.subr.mxu0 0.0
    %1069 = vmatpush2.msra.mxu0 0.0
    %1070 = vmatprep.subr.mxu0 0.0
    %1071 = vmatpush2.msra.mxu0 0.0
    %1072 = vmatprep.subr.mxu0 0.0
    %1073 = vmatpush2.msra.mxu0 0.0
    %1074 = vmatprep.subr.mxu0 0.0
    %1075 = vmatpush2.msra.mxu0 0.0
    %1076 = vmatprep.subr.mxu0 0.0
    %1077 = vmatpush2.msra.mxu0 0.0
    %1078 = vmatprep.subr.mxu0 0.0
    %1079 = vmatpush2.msra.mxu0 0.0
    %1080 = vmatprep.subr.mxu0 0.0
    %1081 = vmatpush2.msra.mxu0 0.0
    %1082 = vmatprep.subr.mxu0 0.0
    %1083 = vmatpush2.msra.mxu0 0.0
    %1084 = vmatprep.subr.mxu0 0.0
    %1085 = vmatpush2.msra.mxu0 0.0
    %1086 = vmatprep.mubr.f32.mxu0 0.0
    %1087 = vmatmul.mubr.f32.gmra.mxu0 %v818
    %v1088 = vpop.f32.mrf.mxu0
    %v1089 = vadd.f32 %v794, %v1088
    %v1090 = vpop.f32.mrf.mxu0
    %1091 = vmatprep.mubr.f32.mxu0 0.0
    %1092 = vmatmul.mubr.f32.gmra.mxu0 %v821
    %v1093 = vpop.f32.mrf.mxu0
    %v1094 = vadd.f32 %v799, %v1093
    %v1095 = vpop.f32.mrf.mxu0
    %1096 = vmatprep.mubr.f32.mxu0 0.0
    %1097 = vmatmul.mubr.f32.gmra.mxu0 %v824
    %v1098 = vpop.f32.mrf.mxu0
    %v1099 = vadd.f32 %v804, %v1098
    %v1100 = vpop.f32.mrf.mxu0
    %1101 = vmatprep.mubr.f32.mxu0 0.0
    %1102 = vmatmul.mubr.f32.gmra.mxu0 %v827
    %v1103 = vpop.f32.mrf.mxu0
    %v1104 = vadd.f32 %v809, %v1103
    %v1105 = vpop.f32.mrf.mxu0
    %1106 = vmatprep.mubr.f32.mxu0 0.0
    %1107 = vmatmul.mubr.f32.gmra.mxu0 %v830
    %v1108 = vpop.f32.mrf.mxu0
    %v1109 = vadd.f32 %v814, %v1108
    %v1110 = vpop.f32.mrf.mxu0
    %1111 = vdwg.mxu0
    %s1112 = scalar_lea.vmem [#allocation5], 80
    %v1113 = vld [vmem:[%s1112] sm:$0xff]
    %v1114 = vld [vmem:[%s1112 + $0x8] sm:$0xff]
    %v1115 = vld [vmem:[%s1112 + $0x10] sm:$0xff]
    %v1116 = vld [vmem:[%s1112 + $0x18] sm:$0xff]
    %v1117 = vld [vmem:[%s1112 + $0x20] sm:$0x3f]
    %v1119 = vsel %vm253, %v1113, 0
    %v1122 = vsel %vm253, %v1114, 0
    %v1125 = vsel %vm253, %v1115, 0
    %v1128 = vsel %vm253, %v1116, 0
    %v1131 = vsel %vm253, %v1117, 0
    %1133 = vmatprep.subr.mxu0 0.0
    %1134 = vmatpush1.msra.mxu0 0.0
    %1135 = vmatprep.subr.mxu0 0.0
    %1136 = vmatpush1.msra.mxu0 0.0
    %1137 = vmatprep.subr.mxu0 0.0
    %1138 = vmatpush1.msra.mxu0 0.0
    %1139 = vmatprep.subr.mxu0 0.0
    %1140 = vmatpush1.msra.mxu0 0.0
    %1141 = vmatprep.subr.mxu0 0.0
    %1142 = vmatpush1.msra.mxu0 0.0
    %1143 = vmatprep.subr.mxu0 0.0
    %1144 = vmatpush1.msra.mxu0 0.0
    %1145 = vmatprep.subr.mxu0 0.0
    %1146 = vmatpush1.msra.mxu0 %v247
    %1147 = vmatprep.subr.mxu0 0.0
    %1148 = vmatpush1.msra.mxu0 %v246
    %1149 = vmatprep.subr.mxu0 0.0
    %1150 = vmatpush1.msra.mxu0 %v245
    %1151 = vmatprep.subr.mxu0 0.0
    %1152 = vmatpush1.msra.mxu0 %v244
    %1153 = vmatprep.subr.mxu0 0.0
    %1154 = vmatpush1.msra.mxu0 %v243
    %1155 = vmatprep.subr.mxu0 0.0
    %1156 = vmatpush1.msra.mxu0 %v242
    %1157 = vmatprep.subr.mxu0 0.0
    %1158 = vmatpush1.msra.mxu0 %v241
    %1159 = vmatprep.subr.mxu0 0.0
    %1160 = vmatpush1.msra.mxu0 %v240
    %1161 = vmatprep.subr.mxu0 0.0
    %1162 = vmatpush1.msra.mxu0 %v239
    %1163 = vmatprep.subr.mxu0 0.0
    %1164 = vmatpush1.msra.mxu0 %v238
    %1165 = vmatprep.subr.mxu0 0.0
    %1166 = vmatpush2.msra.mxu0 0.0
    %1167 = vmatprep.subr.mxu0 0.0
    %1168 = vmatpush2.msra.mxu0 0.0
    %1169 = vmatprep.subr.mxu0 0.0
    %1170 = vmatpush2.msra.mxu0 0.0
    %1171 = vmatprep.subr.mxu0 0.0
    %1172 = vmatpush2.msra.mxu0 0.0
    %1173 = vmatprep.subr.mxu0 0.0
    %1174 = vmatpush2.msra.mxu0 0.0
    %1175 = vmatprep.subr.mxu0 0.0
    %1176 = vmatpush2.msra.mxu0 0.0
    %1177 = vmatprep.subr.mxu0 0.0
    %1178 = vmatpush2.msra.mxu0 0.0
    %1179 = vmatprep.subr.mxu0 0.0
    %1180 = vmatpush2.msra.mxu0 0.0
    %1181 = vmatprep.subr.mxu0 0.0
    %1182 = vmatpush2.msra.mxu0 0.0
    %1183 = vmatprep.subr.mxu0 0.0
    %1184 = vmatpush2.msra.mxu0 0.0
    %1185 = vmatprep.subr.mxu0 0.0
    %1186 = vmatpush2.msra.mxu0 0.0
    %1187 = vmatprep.subr.mxu0 0.0
    %1188 = vmatpush2.msra.mxu0 0.0
    %1189 = vmatprep.subr.mxu0 0.0
    %1190 = vmatpush2.msra.mxu0 0.0
    %1191 = vmatprep.subr.mxu0 0.0
    %1192 = vmatpush2.msra.mxu0 0.0
    %1193 = vmatprep.subr.mxu0 0.0
    %1194 = vmatpush2.msra.mxu0 0.0
    %1195 = vmatprep.subr.mxu0 0.0
    %1196 = vmatpush2.msra.mxu0 0.0
    %1197 = vmatprep.mubr.f32.mxu0 0.0
    %1198 = vmatmul.mubr.f32.gmra.mxu0 %v1119
    %v1199 = vpop.f32.mrf.mxu0
    %v1200 = vadd.f32 0.0, %v1199
    %v1201 = vpop.f32.mrf.mxu0
    %1202 = vmatprep.mubr.f32.mxu0 0.0
    %1203 = vmatmul.mubr.f32.gmra.mxu0 %v1122
    %v1204 = vpop.f32.mrf.mxu0
    %v1205 = vadd.f32 0.0, %v1204
    %v1206 = vpop.f32.mrf.mxu0
    %1207 = vmatprep.mubr.f32.mxu0 0.0
    %1208 = vmatmul.mubr.f32.gmra.mxu0 %v1125
    %v1209 = vpop.f32.mrf.mxu0
    %v1210 = vadd.f32 0.0, %v1209
    %v1211 = vpop.f32.mrf.mxu0
    %1212 = vmatprep.mubr.f32.mxu0 0.0
    %1213 = vmatmul.mubr.f32.gmra.mxu0 %v1128
    %v1214 = vpop.f32.mrf.mxu0
    %v1215 = vadd.f32 0.0, %v1214
    %v1216 = vpop.f32.mrf.mxu0
    %1217 = vmatprep.mubr.f32.mxu0 0.0
    %1218 = vmatmul.mubr.f32.gmra.mxu0 %v1131
    %v1219 = vpop.f32.mrf.mxu0
    %v1220 = vadd.f32 0.0, %v1219
    %v1221 = vpop.f32.mrf.mxu0
    %1222 = vdwg.mxu0
    %s1223 = scalar_lea.vmem [#allocation7], 400
    %v1224 = vld [vmem:[%s1223] sm:$0xff]
    %v1225 = vld [vmem:[%s1223 + $0x8] sm:$0xff]
    %v1226 = vld [vmem:[%s1223 + $0x10] sm:$0xff]
    %v1227 = vld [vmem:[%s1223 + $0x18] sm:$0xff]
    %v1228 = vld [vmem:[%s1223 + $0x20] sm:$0xff]
    %v1229 = vld [vmem:[%s1223 + $0x28] sm:$0xff]
    %v1230 = vld [vmem:[%s1223 + $0x30] sm:$0xff]
    %v1231 = vld [vmem:[%s1223 + $0x38] sm:$0xff]
    %v1232 = vld [vmem:[%s1223 + $0x40] sm:$0xff]
    %v1233 = vld [vmem:[%s1223 + $0x48] sm:$0xff]
    %v1234 = vld [vmem:[%s1223 + $0x50] sm:$0xff]
    %v1235 = vld [vmem:[%s1223 + $0x58] sm:$0xff]
    %v1236 = vld [vmem:[%s1223 + $0x60] sm:$0xff]
    %v1237 = vld [vmem:[%s1223 + $0x68] sm:$0xff]
    %v1238 = vld [vmem:[%s1223 + $0x70] sm:$0xff]
    %v1239 = vld [vmem:[%s1223 + $0x78] sm:$0xff]
    %v1240 = vld [vmem:[%s1223 + $0x80] sm:$0xff]
    %v1241 = vld [vmem:[%s1223 + $0x88] sm:$0xff]
    %v1242 = vld [vmem:[%s1223 + $0x90] sm:$0xff]
    %v1243 = vld [vmem:[%s1223 + $0x98] sm:$0xff]
    %v1244 = vld [vmem:[%s1223 + $0xa0] sm:$0xff]
    %v1245 = vld [vmem:[%s1223 + $0xa8] sm:$0xff]
    %v1246 = vld [vmem:[%s1223 + $0xb0] sm:$0xff]
    %v1247 = vld [vmem:[%s1223 + $0xb8] sm:$0xff]
    %v1248 = vld [vmem:[%s1223 + $0xc0] sm:$0xff]
    %v1250 = vsel %vm521, %v1200, 0
    %v1253 = vsel %vm521, %v1205, 0
    %v1256 = vsel %vm521, %v1210, 0
    %v1259 = vsel %vm521, %v1215, 0
    %v1262 = vsel %vm521, %v1220, 0
    %1264 = vmatprep.subr.mxu0 0.0
    %1265 = vmatpush1.msra.mxu0 0.0
    %1266 = vmatprep.subr.mxu0 0.0
    %1267 = vmatpush1.msra.mxu0 0.0
    %1268 = vmatprep.subr.mxu0 0.0
    %1269 = vmatpush1.msra.mxu0 0.0
    %1270 = vmatprep.subr.mxu0 0.0
    %1271 = vmatpush1.msra.mxu0 0.0
    %1272 = vmatprep.subr.mxu0 0.0
    %1273 = vmatpush1.msra.mxu0 0.0
    %1274 = vmatprep.subr.mxu0 0.0
    %1275 = vmatpush1.msra.mxu0 0.0
    %1276 = vmatprep.subr.mxu0 0.0
    %1277 = vmatpush1.msra.mxu0 0.0
    %1278 = vmatprep.subr.mxu0 0.0
    %1279 = vmatpush1.msra.mxu0 0.0
    %1280 = vmatprep.subr.mxu0 0.0
    %1281 = vmatpush1.msra.mxu0 0.0
    %1282 = vmatprep.subr.mxu0 0.0
    %1283 = vmatpush1.msra.mxu0 0.0
    %1284 = vmatprep.subr.mxu0 0.0
    %1285 = vmatpush1.msra.mxu0 0.0
    %1286 = vmatprep.subr.mxu0 %v1245
    %1287 = vmatpush1.msra.mxu0 %v1244
    %1288 = vmatprep.subr.mxu0 %v1240
    %1289 = vmatpush1.msra.mxu0 %v1239
    %1290 = vmatprep.subr.mxu0 %v1235
    %1291 = vmatpush1.msra.mxu0 %v1234
    %1292 = vmatprep.subr.mxu0 %v1230
    %1293 = vmatpush1.msra.mxu0 %v1229
    %1294 = vmatprep.subr.mxu0 %v1225
    %1295 = vmatpush1.msra.mxu0 %v1224
    %1296 = vmatprep.subr.mxu0 0.0
    %1297 = vmatpush2.msra.mxu0 0.0
    %1298 = vmatprep.subr.mxu0 0.0
    %1299 = vmatpush2.msra.mxu0 0.0
    %1300 = vmatprep.subr.mxu0 0.0
    %1301 = vmatpush2.msra.mxu0 0.0
    %1302 = vmatprep.subr.mxu0 0.0
    %1303 = vmatpush2.msra.mxu0 0.0
    %1304 = vmatprep.subr.mxu0 0.0
    %1305 = vmatpush2.msra.mxu0 0.0
    %1306 = vmatprep.subr.mxu0 0.0
    %1307 = vmatpush2.msra.mxu0 0.0
    %1308 = vmatprep.subr.mxu0 0.0
    %1309 = vmatpush2.msra.mxu0 0.0
    %1310 = vmatprep.subr.mxu0 0.0
    %1311 = vmatpush2.msra.mxu0 0.0
    %1312 = vmatprep.subr.mxu0 0.0
    %1313 = vmatpush2.msra.mxu0 0.0
    %1314 = vmatprep.subr.mxu0 0.0
    %1315 = vmatpush2.msra.mxu0 0.0
    %1316 = vmatprep.subr.mxu0 0.0
    %1317 = vmatpush2.msra.mxu0 0.0
    %1318 = vmatprep.subr.mxu0 0.0
    %1319 = vmatpush2.msra.mxu0 0.0
    %1320 = vmatprep.subr.mxu0 0.0
    %1321 = vmatpush2.msra.mxu0 0.0
    %1322 = vmatprep.subr.mxu0 0.0
    %1323 = vmatpush2.msra.mxu0 0.0
    %1324 = vmatprep.subr.mxu0 0.0
    %1325 = vmatpush2.msra.mxu0 0.0
    %1326 = vmatprep.subr.mxu0 0.0
    %1327 = vmatpush2.msra.mxu0 0.0
    %1328 = vmatprep.mubr.f32.mxu0 0.0
    %1329 = vmatmul.mubr.f32.gmra.mxu0 %v1250
    %v1330 = vpop.f32.mrf.mxu0
    %v1331 = vadd.f32 0.0, %v1330
    %v1332 = vpop.f32.mrf.mxu0
    %v1333 = vadd.f32 0.0, %v1332
    %1334 = vmatprep.mubr.f32.mxu0 0.0
    %1335 = vmatmul.mubr.f32.gmra.mxu0 %v1253
    %v1336 = vpop.f32.mrf.mxu0
    %v1337 = vadd.f32 0.0, %v1336
    %v1338 = vpop.f32.mrf.mxu0
    %v1339 = vadd.f32 0.0, %v1338
    %1340 = vmatprep.mubr.f32.mxu0 0.0
    %1341 = vmatmul.mubr.f32.gmra.mxu0 %v1256
    %v1342 = vpop.f32.mrf.mxu0
    %v1343 = vadd.f32 0.0, %v1342
    %v1344 = vpop.f32.mrf.mxu0
    %v1345 = vadd.f32 0.0, %v1344
    %1346 = vmatprep.mubr.f32.mxu0 0.0
    %1347 = vmatmul.mubr.f32.gmra.mxu0 %v1259
    %v1348 = vpop.f32.mrf.mxu0
    %v1349 = vadd.f32 0.0, %v1348
    %v1350 = vpop.f32.mrf.mxu0
    %v1351 = vadd.f32 0.0, %v1350
    %1352 = vmatprep.mubr.f32.mxu0 0.0
    %1353 = vmatmul.mubr.f32.gmra.mxu0 %v1262
    %v1354 = vpop.f32.mrf.mxu0
    %v1355 = vadd.f32 0.0, %v1354
    %v1356 = vpop.f32.mrf.mxu0
    %v1357 = vadd.f32 0.0, %v1356
    %1358 = vdwg.mxu0
    %1359 = vmatprep.subr.mxu0 0.0
    %1360 = vmatpush1.msra.mxu0 0.0
    %1361 = vmatprep.subr.mxu0 0.0
    %1362 = vmatpush1.msra.mxu0 0.0
    %1363 = vmatprep.subr.mxu0 0.0
    %1364 = vmatpush1.msra.mxu0 0.0
    %1365 = vmatprep.subr.mxu0 0.0
    %1366 = vmatpush1.msra.mxu0 0.0
    %1367 = vmatprep.subr.mxu0 0.0
    %1368 = vmatpush1.msra.mxu0 0.0
    %1369 = vmatprep.subr.mxu0 0.0
    %1370 = vmatpush1.msra.mxu0 0.0
    %1371 = vmatprep.subr.mxu0 0.0
    %1372 = vmatpush1.msra.mxu0 0.0
    %1373 = vmatprep.subr.mxu0 0.0
    %1374 = vmatpush1.msra.mxu0 0.0
    %1375 = vmatprep.subr.mxu0 0.0
    %1376 = vmatpush1.msra.mxu0 0.0
    %1377 = vmatprep.subr.mxu0 0.0
    %1378 = vmatpush1.msra.mxu0 0.0
    %1379 = vmatprep.subr.mxu0 0.0
    %1380 = vmatpush1.msra.mxu0 0.0
    %1381 = vmatprep.subr.mxu0 %v1247
    %1382 = vmatpush1.msra.mxu0 %v1246
    %1383 = vmatprep.subr.mxu0 %v1242
    %1384 = vmatpush1.msra.mxu0 %v1241
    %1385 = vmatprep.subr.mxu0 %v1237
    %1386 = vmatpush1.msra.mxu0 %v1236
    %1387 = vmatprep.subr.mxu0 %v1232
    %1388 = vmatpush1.msra.mxu0 %v1231
    %1389 = vmatprep.subr.mxu0 %v1227
    %1390 = vmatpush1.msra.mxu0 %v1226
    %1391 = vmatprep.subr.mxu0 0.0
    %1392 = vmatpush2.msra.mxu0 0.0
    %1393 = vmatprep.subr.mxu0 0.0
    %1394 = vmatpush2.msra.mxu0 0.0
    %1395 = vmatprep.subr.mxu0 0.0
    %1396 = vmatpush2.msra.mxu0 0.0
    %1397 = vmatprep.subr.mxu0 0.0
    %1398 = vmatpush2.msra.mxu0 0.0
    %1399 = vmatprep.subr.mxu0 0.0
    %1400 = vmatpush2.msra.mxu0 0.0
    %1401 = vmatprep.subr.mxu0 0.0
    %1402 = vmatpush2.msra.mxu0 0.0
    %1403 = vmatprep.subr.mxu0 0.0
    %1404 = vmatpush2.msra.mxu0 0.0
    %1405 = vmatprep.subr.mxu0 0.0
    %1406 = vmatpush2.msra.mxu0 0.0
    %1407 = vmatprep.subr.mxu0 0.0
    %1408 = vmatpush2.msra.mxu0 0.0
    %1409 = vmatprep.subr.mxu0 0.0
    %1410 = vmatpush2.msra.mxu0 0.0
    %1411 = vmatprep.subr.mxu0 0.0
    %1412 = vmatpush2.msra.mxu0 0.0
    %1413 = vmatprep.subr.mxu0 0.0
    %1414 = vmatpush2.msra.mxu0 0.0
    %1415 = vmatprep.subr.mxu0 0.0
    %1416 = vmatpush2.msra.mxu0 0.0
    %1417 = vmatprep.subr.mxu0 0.0
    %1418 = vmatpush2.msra.mxu0 0.0
    %1419 = vmatprep.subr.mxu0 0.0
    %1420 = vmatpush2.msra.mxu0 0.0
    %1421 = vmatprep.subr.mxu0 0.0
    %1422 = vmatpush2.msra.mxu0 0.0
    %1423 = vmatprep.mubr.f32.mxu0 0.0
    %1424 = vmatmul.mubr.f32.gmra.mxu0 %v1250
    %v1425 = vpop.f32.mrf.mxu0
    %v1426 = vadd.f32 0.0, %v1425
    %v1427 = vpop.f32.mrf.mxu0
    %v1428 = vadd.f32 0.0, %v1427
    %1429 = vmatprep.mubr.f32.mxu0 0.0
    %1430 = vmatmul.mubr.f32.gmra.mxu0 %v1253
    %v1431 = vpop.f32.mrf.mxu0
    %v1432 = vadd.f32 0.0, %v1431
    %v1433 = vpop.f32.mrf.mxu0
    %v1434 = vadd.f32 0.0, %v1433
    %1435 = vmatprep.mubr.f32.mxu0 0.0
    %1436 = vmatmul.mubr.f32.gmra.mxu0 %v1256
    %v1437 = vpop.f32.mrf.mxu0
    %v1438 = vadd.f32 0.0, %v1437
    %v1439 = vpop.f32.mrf.mxu0
    %v1440 = vadd.f32 0.0, %v1439
    %1441 = vmatprep.mubr.f32.mxu0 0.0
    %1442 = vmatmul.mubr.f32.gmra.mxu0 %v1259
    %v1443 = vpop.f32.mrf.mxu0
    %v1444 = vadd.f32 0.0, %v1443
    %v1445 = vpop.f32.mrf.mxu0
    %v1446 = vadd.f32 0.0, %v1445
    %1447 = vmatprep.mubr.f32.mxu0 0.0
    %1448 = vmatmul.mubr.f32.gmra.mxu0 %v1262
    %v1449 = vpop.f32.mrf.mxu0
    %v1450 = vadd.f32 0.0, %v1449
    %v1451 = vpop.f32.mrf.mxu0
    %v1452 = vadd.f32 0.0, %v1451
    %1453 = vdwg.mxu0
    %1454 = vmatprep.subr.mxu0 0.0
    %1455 = vmatpush1.msra.mxu0 0.0
    %1456 = vmatprep.subr.mxu0 0.0
    %1457 = vmatpush1.msra.mxu0 0.0
    %1458 = vmatprep.subr.mxu0 0.0
    %1459 = vmatpush1.msra.mxu0 0.0
    %1460 = vmatprep.subr.mxu0 0.0
    %1461 = vmatpush1.msra.mxu0 0.0
    %1462 = vmatprep.subr.mxu0 0.0
    %1463 = vmatpush1.msra.mxu0 0.0
    %1464 = vmatprep.subr.mxu0 0.0
    %1465 = vmatpush1.msra.mxu0 0.0
    %1466 = vmatprep.subr.mxu0 0.0
    %1467 = vmatpush1.msra.mxu0 0.0
    %1468 = vmatprep.subr.mxu0 0.0
    %1469 = vmatpush1.msra.mxu0 0.0
    %1470 = vmatprep.subr.mxu0 0.0
    %1471 = vmatpush1.msra.mxu0 0.0
    %1472 = vmatprep.subr.mxu0 0.0
    %1473 = vmatpush1.msra.mxu0 0.0
    %1474 = vmatprep.subr.mxu0 0.0
    %1475 = vmatpush1.msra.mxu0 0.0
    %1476 = vmatprep.subr.mxu0 0.0
    %1477 = vmatpush1.msra.mxu0 %v1248
    %1478 = vmatprep.subr.mxu0 0.0
    %1479 = vmatpush1.msra.mxu0 %v1243
    %1480 = vmatprep.subr.mxu0 0.0
    %1481 = vmatpush1.msra.mxu0 %v1238
    %1482 = vmatprep.subr.mxu0 0.0
    %1483 = vmatpush1.msra.mxu0 %v1233
    %1484 = vmatprep.subr.mxu0 0.0
    %1485 = vmatpush1.msra.mxu0 %v1228
    %1486 = vmatprep.subr.mxu0 0.0
    %1487 = vmatpush2.msra.mxu0 0.0
    %1488 = vmatprep.subr.mxu0 0.0
    %1489 = vmatpush2.msra.mxu0 0.0
    %1490 = vmatprep.subr.mxu0 0.0
    %1491 = vmatpush2.msra.mxu0 0.0
    %1492 = vmatprep.subr.mxu0 0.0
    %1493 = vmatpush2.msra.mxu0 0.0
    %1494 = vmatprep.subr.mxu0 0.0
    %1495 = vmatpush2.msra.mxu0 0.0
    %1496 = vmatprep.subr.mxu0 0.0
    %1497 = vmatpush2.msra.mxu0 0.0
    %1498 = vmatprep.subr.mxu0 0.0
    %1499 = vmatpush2.msra.mxu0 0.0
    %1500 = vmatprep.subr.mxu0 0.0
    %1501 = vmatpush2.msra.mxu0 0.0
    %1502 = vmatprep.subr.mxu0 0.0
    %1503 = vmatpush2.msra.mxu0 0.0
    %1504 = vmatprep.subr.mxu0 0.0
    %1505 = vmatpush2.msra.mxu0 0.0
    %1506 = vmatprep.subr.mxu0 0.0
    %1507 = vmatpush2.msra.mxu0 0.0
    %1508 = vmatprep.subr.mxu0 0.0
    %1509 = vmatpush2.msra.mxu0 0.0
    %1510 = vmatprep.subr.mxu0 0.0
    %1511 = vmatpush2.msra.mxu0 0.0
    %1512 = vmatprep.subr.mxu0 0.0
    %1513 = vmatpush2.msra.mxu0 0.0
    %1514 = vmatprep.subr.mxu0 0.0
    %1515 = vmatpush2.msra.mxu0 0.0
    %1516 = vmatprep.subr.mxu0 0.0
    %1517 = vmatpush2.msra.mxu0 0.0
    %1518 = vmatprep.mubr.f32.mxu0 0.0
    %1519 = vmatmul.mubr.f32.gmra.mxu0 %v1250
    %v1520 = vpop.f32.mrf.mxu0
    %v1521 = vadd.f32 0.0, %v1520
    %v1522 = vpop.f32.mrf.mxu0
    %1523 = vmatprep.mubr.f32.mxu0 0.0
    %1524 = vmatmul.mubr.f32.gmra.mxu0 %v1253
    %v1525 = vpop.f32.mrf.mxu0
    %v1526 = vadd.f32 0.0, %v1525
    %v1527 = vpop.f32.mrf.mxu0
    %1528 = vmatprep.mubr.f32.mxu0 0.0
    %1529 = vmatmul.mubr.f32.gmra.mxu0 %v1256
    %v1530 = vpop.f32.mrf.mxu0
    %v1531 = vadd.f32 0.0, %v1530
    %v1532 = vpop.f32.mrf.mxu0
    %1533 = vmatprep.mubr.f32.mxu0 0.0
    %1534 = vmatmul.mubr.f32.gmra.mxu0 %v1259
    %v1535 = vpop.f32.mrf.mxu0
    %v1536 = vadd.f32 0.0, %v1535
    %v1537 = vpop.f32.mrf.mxu0
    %1538 = vmatprep.mubr.f32.mxu0 0.0
    %1539 = vmatmul.mubr.f32.gmra.mxu0 %v1262
    %v1540 = vpop.f32.mrf.mxu0
    %v1541 = vadd.f32 0.0, %v1540
    %v1542 = vpop.f32.mrf.mxu0
    %1543 = vdwg.mxu0
    %v1544 = vadd.f32 %v899, %v1331
    %v1545 = vadd.f32 %v901, %v1333
    %v1546 = vadd.f32 %v994, %v1426
    %v1547 = vadd.f32 %v996, %v1428
    %v1548 = vadd.f32 %v1089, %v1521
    %v1549 = vadd.f32 %v905, %v1337
    %v1550 = vadd.f32 %v907, %v1339
    %v1551 = vadd.f32 %v1000, %v1432
    %v1552 = vadd.f32 %v1002, %v1434
    %v1553 = vadd.f32 %v1094, %v1526
    %v1554 = vadd.f32 %v911, %v1343
    %v1555 = vadd.f32 %v913, %v1345
    %v1556 = vadd.f32 %v1006, %v1438
    %v1557 = vadd.f32 %v1008, %v1440
    %v1558 = vadd.f32 %v1099, %v1531
    %v1559 = vadd.f32 %v917, %v1349
    %v1560 = vadd.f32 %v919, %v1351
    %v1561 = vadd.f32 %v1012, %v1444
    %v1562 = vadd.f32 %v1014, %v1446
    %v1563 = vadd.f32 %v1104, %v1536
    %v1564 = vadd.f32 %v923, %v1355
    %v1565 = vadd.f32 %v925, %v1357
    %v1566 = vadd.f32 %v1018, %v1450
    %v1567 = vadd.f32 %v1020, %v1452
    %v1568 = vadd.f32 %v1109, %v1541
    %v1569 = vld [vmem:[%s4] sm:$0x1f]
    %v1571 = vlaneseq
    %v1572 = vshrl.u32 %v1571, 7
    %v1573 = vsub.s32 0, %v1572
    %v1574 = vrot.slane %v1569, %v1573
    %v1575 = vlaneseq
    %v1576 = vshrl.u32 %v1575, 7
    %v1577 = vsub.s32 1, %v1576
    %v1578 = vrot.slane %v1569, %v1577
    %v1579 = vlaneseq
    %v1580 = vshrl.u32 %v1579, 7
    %v1581 = vsub.s32 2, %v1580
    %v1582 = vrot.slane %v1569, %v1581
    %v1583 = vlaneseq
    %v1584 = vshrl.u32 %v1583, 7
    %v1585 = vsub.s32 3, %v1584
    %v1586 = vrot.slane %v1569, %v1585
    %v1587 = vlaneseq
    %v1588 = vshrl.u32 %v1587, 7
    %v1589 = vsub.s32 4, %v1588
    %v1590 = vrot.slane %v1569, %v1589
    %v1596 = vadd.f32 %v1544, %v1574
    %v1597 = vadd.f32 %v1545, %v1578
    %v1598 = vadd.f32 %v1546, %v1582
    %v1599 = vadd.f32 %v1547, %v1586
    %v1600 = vadd.f32 %v1548, %v1590
    %v1601 = vadd.f32 %v1549, %v1574
    %v1602 = vadd.f32 %v1550, %v1578
    %v1603 = vadd.f32 %v1551, %v1582
    %v1604 = vadd.f32 %v1552, %v1586
    %v1605 = vadd.f32 %v1553, %v1590
    %v1606 = vadd.f32 %v1554, %v1574
    %v1607 = vadd.f32 %v1555, %v1578
    %v1608 = vadd.f32 %v1556, %v1582
    %v1609 = vadd.f32 %v1557, %v1586
    %v1610 = vadd.f32 %v1558, %v1590
    %v1611 = vadd.f32 %v1559, %v1574
    %v1612 = vadd.f32 %v1560, %v1578
    %v1613 = vadd.f32 %v1561, %v1582
    %v1614 = vadd.f32 %v1562, %v1586
    %v1615 = vadd.f32 %v1563, %v1590
    %v1616 = vadd.f32 %v1564, %v1574
    %v1617 = vadd.f32 %v1565, %v1578
    %v1618 = vadd.f32 %v1566, %v1582
    %v1619 = vadd.f32 %v1567, %v1586
    %v1620 = vadd.f32 %v1568, %v1590
    %v1621 = vmax.f32 %v1596, 0.0
    %v1622 = vmax.f32 %v1597, 0.0
    %v1623 = vmax.f32 %v1598, 0.0
    %v1624 = vmax.f32 %v1599, 0.0
    %v1625 = vmax.f32 %v1600, 0.0
    %v1626 = vmax.f32 %v1601, 0.0
    %v1627 = vmax.f32 %v1602, 0.0
    %v1628 = vmax.f32 %v1603, 0.0
    %v1629 = vmax.f32 %v1604, 0.0
    %v1630 = vmax.f32 %v1605, 0.0
    %v1631 = vmax.f32 %v1606, 0.0
    %v1632 = vmax.f32 %v1607, 0.0
    %v1633 = vmax.f32 %v1608, 0.0
    %v1634 = vmax.f32 %v1609, 0.0
    %v1635 = vmax.f32 %v1610, 0.0
    %v1636 = vmax.f32 %v1611, 0.0
    %v1637 = vmax.f32 %v1612, 0.0
    %v1638 = vmax.f32 %v1613, 0.0
    %v1639 = vmax.f32 %v1614, 0.0
    %v1640 = vmax.f32 %v1615, 0.0
    %v1641 = vmax.f32 %v1616, 0.0
    %v1642 = vmax.f32 %v1617, 0.0
    %v1643 = vmax.f32 %v1618, 0.0
    %v1644 = vmax.f32 %v1619, 0.0
    %v1645 = vmax.f32 %v1620, 0.0
    %v1646 = vld [vmem:[#allocation8] sm:$0xff]
    %v1647 = vld [vmem:[#allocation8 + $0x8] sm:$0xff]
    %v1648 = vld [vmem:[#allocation8 + $0x10] sm:$0x3]
    %vm1649 = vcmask 310272
    %v1651 = vsel %vm1649, %v1646, 0
    %v1654 = vsel %vm1649, %v1647, 0
    %v1657 = vsel %vm1649, %v1648, 0
    %vm1659 = vcmask 1045504
    %v1661 = vsel %vm1659, %v1641, 0
    %v1664 = vsel %vm1659, %v1642, 0
    %v1667 = vsel %vm1659, %v1643, 0
    %v1670 = vsel %vm1659, %v1644, 0
    %v1673 = vsel %vm1659, %v1645, 0
    %1675 = vmatprep.subr.mxu0 0.0
    %1676 = vmatpush1.msra.mxu0 0.0
    %1677 = vmatprep.subr.mxu0 0.0
    %1678 = vmatpush1.msra.mxu0 0.0
    %1679 = vmatprep.subr.mxu0 0.0
    %1680 = vmatpush1.msra.mxu0 0.0
    %1681 = vmatprep.subr.mxu0 0.0
    %1682 = vmatpush1.msra.mxu0 0.0
    %1683 = vmatprep.subr.mxu0 0.0
    %1684 = vmatpush1.msra.mxu0 0.0
    %1685 = vmatprep.subr.mxu0 0.0
    %1686 = vmatpush1.msra.mxu0 0.0
    %1687 = vmatprep.subr.mxu0 0.0
    %1688 = vmatpush1.msra.mxu0 0.0
    %1689 = vmatprep.subr.mxu0 0.0
    %1690 = vmatpush1.msra.mxu0 0.0
    %1691 = vmatprep.subr.mxu0 0.0
    %1692 = vmatpush1.msra.mxu0 0.0
    %1693 = vmatprep.subr.mxu0 0.0
    %1694 = vmatpush1.msra.mxu0 0.0
    %1695 = vmatprep.subr.mxu0 0.0
    %1696 = vmatpush1.msra.mxu0 0.0
    %1697 = vmatprep.subr.mxu0 %v1664
    %1698 = vmatpush1.msra.mxu0 %v1661
    %1699 = vmatprep.subr.mxu0 %v1637
    %1700 = vmatpush1.msra.mxu0 %v1636
    %1701 = vmatprep.subr.mxu0 %v1632
    %1702 = vmatpush1.msra.mxu0 %v1631
    %1703 = vmatprep.subr.mxu0 %v1627
    %1704 = vmatpush1.msra.mxu0 %v1626
    %1705 = vmatprep.subr.mxu0 %v1622
    %1706 = vmatpush1.msra.mxu0 %v1621
    %1707 = vmatprep.subr.mxu0 0.0
    %1708 = vmatpush2.msra.mxu0 0.0
    %1709 = vmatprep.subr.mxu0 0.0
    %1710 = vmatpush2.msra.mxu0 0.0
    %1711 = vmatprep.subr.mxu0 0.0
    %1712 = vmatpush2.msra.mxu0 0.0
    %1713 = vmatprep.subr.mxu0 0.0
    %1714 = vmatpush2.msra.mxu0 0.0
    %1715 = vmatprep.subr.mxu0 0.0
    %1716 = vmatpush2.msra.mxu0 0.0
    %1717 = vmatprep.subr.mxu0 0.0
    %1718 = vmatpush2.msra.mxu0 0.0
    %1719 = vmatprep.subr.mxu0 0.0
    %1720 = vmatpush2.msra.mxu0 0.0
    %1721 = vmatprep.subr.mxu0 0.0
    %1722 = vmatpush2.msra.mxu0 0.0
    %1723 = vmatprep.subr.mxu0 0.0
    %1724 = vmatpush2.msra.mxu0 0.0
    %1725 = vmatprep.subr.mxu0 0.0
    %1726 = vmatpush2.msra.mxu0 0.0
    %1727 = vmatprep.subr.mxu0 0.0
    %1728 = vmatpush2.msra.mxu0 0.0
    %1729 = vmatprep.subr.mxu0 0.0
    %1730 = vmatpush2.msra.mxu0 0.0
    %1731 = vmatprep.subr.mxu0 0.0
    %1732 = vmatpush2.msra.mxu0 0.0
    %1733 = vmatprep.subr.mxu0 0.0
    %1734 = vmatpush2.msra.mxu0 0.0
    %1735 = vmatprep.subr.mxu0 0.0
    %1736 = vmatpush2.msra.mxu0 0.0
    %1737 = vmatprep.subr.mxu0 0.0
    %1738 = vmatpush2.msra.mxu0 0.0
    %1739 = vmatprep.mubr.f32.mxu0 0.0
    %1740 = vmatmul.mubr.f32.gmra.mxu0 %v1651
    %v1741 = vpop.f32.mrf.mxu0
    %v1742 = vadd.f32 0.0, %v1741
    %v1743 = vpop.f32.mrf.mxu0
    %v1744 = vadd.f32 0.0, %v1743
    %1745 = vmatprep.mubr.f32.mxu0 0.0
    %1746 = vmatmul.mubr.f32.gmra.mxu0 %v1654
    %v1747 = vpop.f32.mrf.mxu0
    %v1748 = vadd.f32 0.0, %v1747
    %v1749 = vpop.f32.mrf.mxu0
    %v1750 = vadd.f32 0.0, %v1749
    %1751 = vmatprep.mubr.f32.mxu0 0.0
    %1752 = vmatmul.mubr.f32.gmra.mxu0 %v1657
    %v1753 = vpop.f32.mrf.mxu0
    %v1754 = vadd.f32 0.0, %v1753
    %v1755 = vpop.f32.mrf.mxu0
    %v1756 = vadd.f32 0.0, %v1755
    %1757 = vdwg.mxu0
    %1758 = vmatprep.subr.mxu0 0.0
    %1759 = vmatpush1.msra.mxu0 0.0
    %1760 = vmatprep.subr.mxu0 0.0
    %1761 = vmatpush1.msra.mxu0 0.0
    %1762 = vmatprep.subr.mxu0 0.0
    %1763 = vmatpush1.msra.mxu0 0.0
    %1764 = vmatprep.subr.mxu0 0.0
    %1765 = vmatpush1.msra.mxu0 0.0
    %1766 = vmatprep.subr.mxu0 0.0
    %1767 = vmatpush1.msra.mxu0 0.0
    %1768 = vmatprep.subr.mxu0 0.0
    %1769 = vmatpush1.msra.mxu0 0.0
    %1770 = vmatprep.subr.mxu0 0.0
    %1771 = vmatpush1.msra.mxu0 0.0
    %1772 = vmatprep.subr.mxu0 0.0
    %1773 = vmatpush1.msra.mxu0 0.0
    %1774 = vmatprep.subr.mxu0 0.0
    %1775 = vmatpush1.msra.mxu0 0.0
    %1776 = vmatprep.subr.mxu0 0.0
    %1777 = vmatpush1.msra.mxu0 0.0
    %1778 = vmatprep.subr.mxu0 0.0
    %1779 = vmatpush1.msra.mxu0 0.0
    %1780 = vmatprep.subr.mxu0 %v1670
    %1781 = vmatpush1.msra.mxu0 %v1667
    %1782 = vmatprep.subr.mxu0 %v1639
    %1783 = vmatpush1.msra.mxu0 %v1638
    %1784 = vmatprep.subr.mxu0 %v1634
    %1785 = vmatpush1.msra.mxu0 %v1633
    %1786 = vmatprep.subr.mxu0 %v1629
    %1787 = vmatpush1.msra.mxu0 %v1628
    %1788 = vmatprep.subr.mxu0 %v1624
    %1789 = vmatpush1.msra.mxu0 %v1623
    %1790 = vmatprep.subr.mxu0 0.0
    %1791 = vmatpush2.msra.mxu0 0.0
    %1792 = vmatprep.subr.mxu0 0.0
    %1793 = vmatpush2.msra.mxu0 0.0
    %1794 = vmatprep.subr.mxu0 0.0
    %1795 = vmatpush2.msra.mxu0 0.0
    %1796 = vmatprep.subr.mxu0 0.0
    %1797 = vmatpush2.msra.mxu0 0.0
    %1798 = vmatprep.subr.mxu0 0.0
    %1799 = vmatpush2.msra.mxu0 0.0
    %1800 = vmatprep.subr.mxu0 0.0
    %1801 = vmatpush2.msra.mxu0 0.0
    %1802 = vmatprep.subr.mxu0 0.0
    %1803 = vmatpush2.msra.mxu0 0.0
    %1804 = vmatprep.subr.mxu0 0.0
    %1805 = vmatpush2.msra.mxu0 0.0
    %1806 = vmatprep.subr.mxu0 0.0
    %1807 = vmatpush2.msra.mxu0 0.0
    %1808 = vmatprep.subr.mxu0 0.0
    %1809 = vmatpush2.msra.mxu0 0.0
    %1810 = vmatprep.subr.mxu0 0.0
    %1811 = vmatpush2.msra.mxu0 0.0
    %1812 = vmatprep.subr.mxu0 0.0
    %1813 = vmatpush2.msra.mxu0 0.0
    %1814 = vmatprep.subr.mxu0 0.0
    %1815 = vmatpush2.msra.mxu0 0.0
    %1816 = vmatprep.subr.mxu0 0.0
    %1817 = vmatpush2.msra.mxu0 0.0
    %1818 = vmatprep.subr.mxu0 0.0
    %1819 = vmatpush2.msra.mxu0 0.0
    %1820 = vmatprep.subr.mxu0 0.0
    %1821 = vmatpush2.msra.mxu0 0.0
    %1822 = vmatprep.mubr.f32.mxu0 0.0
    %1823 = vmatmul.mubr.f32.gmra.mxu0 %v1651
    %v1824 = vpop.f32.mrf.mxu0
    %v1825 = vadd.f32 0.0, %v1824
    %v1826 = vpop.f32.mrf.mxu0
    %v1827 = vadd.f32 0.0, %v1826
    %1828 = vmatprep.mubr.f32.mxu0 0.0
    %1829 = vmatmul.mubr.f32.gmra.mxu0 %v1654
    %v1830 = vpop.f32.mrf.mxu0
    %v1831 = vadd.f32 0.0, %v1830
    %v1832 = vpop.f32.mrf.mxu0
    %v1833 = vadd.f32 0.0, %v1832
    %1834 = vmatprep.mubr.f32.mxu0 0.0
    %1835 = vmatmul.mubr.f32.gmra.mxu0 %v1657
    %v1836 = vpop.f32.mrf.mxu0
    %v1837 = vadd.f32 0.0, %v1836
    %v1838 = vpop.f32.mrf.mxu0
    %v1839 = vadd.f32 0.0, %v1838
    %1840 = vdwg.mxu0
    %1841 = vmatprep.subr.mxu0 0.0
    %1842 = vmatpush1.msra.mxu0 0.0
    %1843 = vmatprep.subr.mxu0 0.0
    %1844 = vmatpush1.msra.mxu0 0.0
    %1845 = vmatprep.subr.mxu0 0.0
    %1846 = vmatpush1.msra.mxu0 0.0
    %1847 = vmatprep.subr.mxu0 0.0
    %1848 = vmatpush1.msra.mxu0 0.0
    %1849 = vmatprep.subr.mxu0 0.0
    %1850 = vmatpush1.msra.mxu0 0.0
    %1851 = vmatprep.subr.mxu0 0.0
    %1852 = vmatpush1.msra.mxu0 0.0
    %1853 = vmatprep.subr.mxu0 0.0
    %1854 = vmatpush1.msra.mxu0 0.0
    %1855 = vmatprep.subr.mxu0 0.0
    %1856 = vmatpush1.msra.mxu0 0.0
    %1857 = vmatprep.subr.mxu0 0.0
    %1858 = vmatpush1.msra.mxu0 0.0
    %1859 = vmatprep.subr.mxu0 0.0
    %1860 = vmatpush1.msra.mxu0 0.0
    %1861 = vmatprep.subr.mxu0 0.0
    %1862 = vmatpush1.msra.mxu0 0.0
    %1863 = vmatprep.subr.mxu0 0.0
    %1864 = vmatpush1.msra.mxu0 %v1673
    %1865 = vmatprep.subr.mxu0 0.0
    %1866 = vmatpush1.msra.mxu0 %v1640
    %1867 = vmatprep.subr.mxu0 0.0
    %1868 = vmatpush1.msra.mxu0 %v1635
    %1869 = vmatprep.subr.mxu0 0.0
    %1870 = vmatpush1.msra.mxu0 %v1630
    %1871 = vmatprep.subr.mxu0 0.0
    %1872 = vmatpush1.msra.mxu0 %v1625
    %1873 = vmatprep.subr.mxu0 0.0
    %1874 = vmatpush2.msra.mxu0 0.0
    %1875 = vmatprep.subr.mxu0 0.0
    %1876 = vmatpush2.msra.mxu0 0.0
    %1877 = vmatprep.subr.mxu0 0.0
    %1878 = vmatpush2.msra.mxu0 0.0
    %1879 = vmatprep.subr.mxu0 0.0
    %1880 = vmatpush2.msra.mxu0 0.0
    %1881 = vmatprep.subr.mxu0 0.0
    %1882 = vmatpush2.msra.mxu0 0.0
    %1883 = vmatprep.subr.mxu0 0.0
    %1884 = vmatpush2.msra.mxu0 0.0
    %1885 = vmatprep.subr.mxu0 0.0
    %1886 = vmatpush2.msra.mxu0 0.0
    %1887 = vmatprep.subr.mxu0 0.0
    %1888 = vmatpush2.msra.mxu0 0.0
    %1889 = vmatprep.subr.mxu0 0.0
    %1890 = vmatpush2.msra.mxu0 0.0
    %1891 = vmatprep.subr.mxu0 0.0
    %1892 = vmatpush2.msra.mxu0 0.0
    %1893 = vmatprep.subr.mxu0 0.0
    %1894 = vmatpush2.msra.mxu0 0.0
    %1895 = vmatprep.subr.mxu0 0.0
    %1896 = vmatpush2.msra.mxu0 0.0
    %1897 = vmatprep.subr.mxu0 0.0
    %1898 = vmatpush2.msra.mxu0 0.0
    %1899 = vmatprep.subr.mxu0 0.0
    %1900 = vmatpush2.msra.mxu0 0.0
    %1901 = vmatprep.subr.mxu0 0.0
    %1902 = vmatpush2.msra.mxu0 0.0
    %1903 = vmatprep.subr.mxu0 0.0
    %1904 = vmatpush2.msra.mxu0 0.0
    %1905 = vmatprep.mubr.f32.mxu0 0.0
    %1906 = vmatmul.mubr.f32.gmra.mxu0 %v1651
    %v1907 = vpop.f32.mrf.mxu0
    %v1908 = vadd.f32 0.0, %v1907
    %v1909 = vpop.f32.mrf.mxu0
    %1910 = vmatprep.mubr.f32.mxu0 0.0
    %1911 = vmatmul.mubr.f32.gmra.mxu0 %v1654
    %v1912 = vpop.f32.mrf.mxu0
    %v1913 = vadd.f32 0.0, %v1912
    %v1914 = vpop.f32.mrf.mxu0
    %1915 = vmatprep.mubr.f32.mxu0 0.0
    %1916 = vmatmul.mubr.f32.gmra.mxu0 %v1657
    %v1917 = vpop.f32.mrf.mxu0
    %v1918 = vadd.f32 0.0, %v1917
    %v1919 = vpop.f32.mrf.mxu0
    %1920 = vdwg.mxu0
    %v1921 = vld [vmem:[#allocation10] sm:$0xff]
    %v1922 = vld [vmem:[#allocation10 + $0x8] sm:$0xff]
    %v1923 = vld [vmem:[#allocation10 + $0x10] sm:$0xff]
    %v1924 = vld [vmem:[#allocation10 + $0x18] sm:$0xff]
    %v1925 = vld [vmem:[#allocation10 + $0x20] sm:$0xff]
    %v1926 = vld [vmem:[#allocation10 + $0x28] sm:$0xff]
    %v1927 = vld [vmem:[#allocation10 + $0x30] sm:$0xff]
    %v1928 = vld [vmem:[#allocation10 + $0x38] sm:$0xff]
    %v1929 = vld [vmem:[#allocation10 + $0x40] sm:$0xff]
    %v1930 = vld [vmem:[#allocation10 + $0x48] sm:$0xff]
    %v1931 = vld [vmem:[#allocation10 + $0x50] sm:$0xff]
    %v1932 = vld [vmem:[#allocation10 + $0x58] sm:$0xff]
    %v1933 = vld [vmem:[#allocation10 + $0x60] sm:$0xff]
    %v1934 = vld [vmem:[#allocation10 + $0x68] sm:$0xff]
    %v1935 = vld [vmem:[#allocation10 + $0x70] sm:$0xff]
    %v1936 = vld [vmem:[#allocation10 + $0x78] sm:$0xff]
    %v1937 = vld [vmem:[#allocation10 + $0x80] sm:$0xff]
    %v1938 = vld [vmem:[#allocation10 + $0x88] sm:$0xff]
    %v1939 = vld [vmem:[#allocation10 + $0x90] sm:$0xff]
    %v1940 = vld [vmem:[#allocation10 + $0x98] sm:$0xff]
    %v1941 = vld [vmem:[#allocation10 + $0xa0] sm:$0xff]
    %v1942 = vld [vmem:[#allocation10 + $0xa8] sm:$0xff]
    %v1943 = vld [vmem:[#allocation10 + $0xb0] sm:$0xff]
    %v1944 = vld [vmem:[#allocation10 + $0xb8] sm:$0xff]
    %v1945 = vld [vmem:[#allocation10 + $0xc0] sm:$0xff]
    %v1946 = vld [vmem:[#allocation10 + $0xc8] sm:$0xff]
    %v1947 = vld [vmem:[#allocation10 + $0xd0] sm:$0xff]
    %v1948 = vld [vmem:[#allocation10 + $0xd8] sm:$0xff]
    %v1949 = vld [vmem:[#allocation10 + $0xe0] sm:$0xff]
    %v1950 = vld [vmem:[#allocation10 + $0xe8] sm:$0xff]
    %v1951 = vld [vmem:[#allocation10 + $0xf0] sm:$0xff]
    %v1952 = vld [vmem:[#allocation10 + $0xf8] sm:$0xff]
    %v1953 = vld [vmem:[#allocation10 + $0x100] sm:$0xff]
    %v1954 = vld [vmem:[#allocation10 + $0x108] sm:$0xff]
    %v1955 = vld [vmem:[#allocation10 + $0x110] sm:$0xff]
    %v1956 = vld [vmem:[#allocation10 + $0x118] sm:$0xff]
    %v1957 = vld [vmem:[#allocation10 + $0x120] sm:$0xff]
    %v1958 = vld [vmem:[#allocation10 + $0x128] sm:$0xff]
    %v1959 = vld [vmem:[#allocation10 + $0x130] sm:$0xff]
    %v1960 = vld [vmem:[#allocation10 + $0x138] sm:$0xff]
    %v1961 = vld [vmem:[#allocation10 + $0x140] sm:$0xff]
    %v1962 = vld [vmem:[#allocation10 + $0x148] sm:$0xff]
    %v1963 = vld [vmem:[#allocation10 + $0x150] sm:$0xff]
    %v1964 = vld [vmem:[#allocation10 + $0x158] sm:$0xff]
    %v1965 = vld [vmem:[#allocation10 + $0x160] sm:$0xff]
    %v1966 = vld [vmem:[#allocation10 + $0x168] sm:$0xff]
    %v1967 = vld [vmem:[#allocation10 + $0x170] sm:$0xff]
    %v1968 = vld [vmem:[#allocation10 + $0x178] sm:$0xff]
    %v1969 = vld [vmem:[#allocation10 + $0x180] sm:$0xff]
    %v1970 = vld [vmem:[#allocation10 + $0x188] sm:$0xff]
    %v1971 = vld [vmem:[#allocation10 + $0x190] sm:$0xff]
    %v1972 = vld [vmem:[#allocation10 + $0x198] sm:$0xff]
    %v1973 = vld [vmem:[#allocation10 + $0x1a0] sm:$0xff]
    %v1974 = vld [vmem:[#allocation10 + $0x1a8] sm:$0xff]
    %v1975 = vld [vmem:[#allocation10 + $0x1b0] sm:$0xff]
    %v1976 = vld [vmem:[#allocation10 + $0x1b8] sm:$0xff]
    %v1977 = vld [vmem:[#allocation10 + $0x1c0] sm:$0xff]
    %v1978 = vld [vmem:[#allocation10 + $0x1c8] sm:$0xff]
    %v1979 = vld [vmem:[#allocation10 + $0x1d0] sm:$0xff]
    %v1980 = vld [vmem:[#allocation10 + $0x1d8] sm:$0xff]
    %v1981 = vld [vmem:[#allocation10 + $0x1e0] sm:$0xff]
    %v1982 = vld [vmem:[#allocation10 + $0x1e8] sm:$0xff]
    %v1983 = vld [vmem:[#allocation10 + $0x1f0] sm:$0xff]
    %v1984 = vld [vmem:[#allocation10 + $0x1f8] sm:$0xff]
    %v1985 = vld [vmem:[#allocation10 + $0x200] sm:$0xff]
    %v1986 = vld [vmem:[#allocation10 + $0x208] sm:$0xff]
    %v1987 = vld [vmem:[#allocation10 + $0x210] sm:$0xff]
    %v1988 = vld [vmem:[#allocation10 + $0x218] sm:$0xff]
    %v1989 = vld [vmem:[#allocation10 + $0x220] sm:$0xff]
    %v1990 = vld [vmem:[#allocation10 + $0x228] sm:$0xff]
    %v1991 = vld [vmem:[#allocation10 + $0x230] sm:$0xff]
    %v1992 = vld [vmem:[#allocation10 + $0x238] sm:$0xff]
    %v1993 = vld [vmem:[#allocation10 + $0x240] sm:$0xff]
    %v1994 = vld [vmem:[#allocation10 + $0x248] sm:$0xff]
    %v1995 = vld [vmem:[#allocation10 + $0x250] sm:$0xff]
    %v1996 = vld [vmem:[#allocation10 + $0x258] sm:$0xff]
    %v1997 = vld [vmem:[#allocation10 + $0x260] sm:$0xff]
    %v1998 = vld [vmem:[#allocation10 + $0x268] sm:$0xff]
    %v1999 = vld [vmem:[#allocation10 + $0x270] sm:$0xff]
    %v2000 = vld [vmem:[#allocation10 + $0x278] sm:$0xff]
    %v2001 = vld [vmem:[#allocation10 + $0x280] sm:$0xff]
    %v2002 = vld [vmem:[#allocation10 + $0x288] sm:$0xff]
    %v2003 = vld [vmem:[#allocation10 + $0x290] sm:$0xff]
    %v2004 = vld [vmem:[#allocation10 + $0x298] sm:$0xff]
    %v2005 = vld [vmem:[#allocation10 + $0x2a0] sm:$0xff]
    %v2006 = vld [vmem:[#allocation10 + $0x2a8] sm:$0xff]
    %v2007 = vld [vmem:[#allocation10 + $0x2b0] sm:$0xff]
    %v2008 = vld [vmem:[#allocation10 + $0x2b8] sm:$0xff]
    %v2009 = vld [vmem:[#allocation10 + $0x2c0] sm:$0xff]
    %v2010 = vld [vmem:[#allocation10 + $0x2c8] sm:$0xff]
    %v2011 = vld [vmem:[#allocation10 + $0x2d0] sm:$0xff]
    %v2012 = vld [vmem:[#allocation10 + $0x2d8] sm:$0xff]
    %v2013 = vld [vmem:[#allocation10 + $0x2e0] sm:$0xff]
    %v2014 = vld [vmem:[#allocation10 + $0x2e8] sm:$0xff]
    %v2015 = vld [vmem:[#allocation10 + $0x2f0] sm:$0xff]
    %v2016 = vld [vmem:[#allocation10 + $0x2f8] sm:$0xff]
    %v2017 = vld [vmem:[#allocation10 + $0x300] sm:$0xff]
    %v2018 = vld [vmem:[#allocation10 + $0x308] sm:$0xff]
    %v2019 = vld [vmem:[#allocation10 + $0x310] sm:$0xff]
    %v2020 = vld [vmem:[#allocation10 + $0x318] sm:$0xff]
    %v2021 = vld [vmem:[#allocation10 + $0x320] sm:$0xff]
    %v2022 = vld [vmem:[#allocation10 + $0x328] sm:$0xff]
    %v2023 = vld [vmem:[#allocation10 + $0x330] sm:$0xff]
    %v2024 = vld [vmem:[#allocation10 + $0x338] sm:$0xff]
    %v2025 = vld [vmem:[#allocation10 + $0x340] sm:$0xff]
    %v2026 = vld [vmem:[#allocation10 + $0x348] sm:$0xff]
    %v2027 = vld [vmem:[#allocation10 + $0x350] sm:$0xff]
    %v2028 = vld [vmem:[#allocation10 + $0x358] sm:$0xff]
    %v2029 = vld [vmem:[#allocation10 + $0x360] sm:$0xff]
    %v2030 = vld [vmem:[#allocation10 + $0x368] sm:$0xff]
    %v2031 = vld [vmem:[#allocation10 + $0x370] sm:$0xff]
    %v2032 = vld [vmem:[#allocation10 + $0x378] sm:$0xff]
    %v2033 = vld [vmem:[#allocation10 + $0x380] sm:$0xff]
    %v2034 = vld [vmem:[#allocation10 + $0x388] sm:$0xff]
    %v2035 = vld [vmem:[#allocation10 + $0x390] sm:$0xff]
    %v2036 = vld [vmem:[#allocation10 + $0x398] sm:$0xff]
    %v2037 = vld [vmem:[#allocation10 + $0x3a0] sm:$0xff]
    %v2038 = vld [vmem:[#allocation10 + $0x3a8] sm:$0xff]
    %v2039 = vld [vmem:[#allocation10 + $0x3b0] sm:$0xff]
    %v2040 = vld [vmem:[#allocation10 + $0x3b8] sm:$0xff]
    %v2041 = vld [vmem:[#allocation10 + $0x3c0] sm:$0xff]
    %v2042 = vld [vmem:[#allocation10 + $0x3c8] sm:$0xff]
    %v2043 = vld [vmem:[#allocation10 + $0x3d0] sm:$0xff]
    %v2044 = vld [vmem:[#allocation10 + $0x3d8] sm:$0xff]
    %v2045 = vld [vmem:[#allocation10 + $0x3e0] sm:$0xff]
    %v2046 = vld [vmem:[#allocation10 + $0x3e8] sm:$0xff]
    %v2047 = vld [vmem:[#allocation10 + $0x3f0] sm:$0xff]
    %v2048 = vld [vmem:[#allocation10 + $0x3f8] sm:$0xff]
    %v2049 = vld [vmem:[#allocation10 + $0x400] sm:$0xff]
    %v2050 = vld [vmem:[#allocation10 + $0x408] sm:$0xff]
    %v2051 = vld [vmem:[#allocation10 + $0x410] sm:$0xff]
    %v2052 = vld [vmem:[#allocation10 + $0x418] sm:$0xff]
    %v2053 = vld [vmem:[#allocation10 + $0x420] sm:$0xff]
    %v2054 = vld [vmem:[#allocation10 + $0x428] sm:$0xff]
    %v2055 = vld [vmem:[#allocation10 + $0x430] sm:$0xff]
    %v2056 = vld [vmem:[#allocation10 + $0x438] sm:$0xff]
    %v2057 = vld [vmem:[#allocation10 + $0x440] sm:$0xff]
    %v2058 = vld [vmem:[#allocation10 + $0x448] sm:$0xff]
    %v2059 = vld [vmem:[#allocation10 + $0x450] sm:$0xff]
    %v2060 = vld [vmem:[#allocation10 + $0x458] sm:$0xff]
    %v2061 = vld [vmem:[#allocation10 + $0x460] sm:$0xff]
    %v2062 = vld [vmem:[#allocation10 + $0x468] sm:$0xff]
    %v2063 = vld [vmem:[#allocation10 + $0x470] sm:$0xff]
    %v2064 = vld [vmem:[#allocation10 + $0x478] sm:$0xff]
    %v2065 = vld [vmem:[#allocation10 + $0x480] sm:$0xff]
    %v2066 = vld [vmem:[#allocation10 + $0x488] sm:$0xff]
    %v2067 = vld [vmem:[#allocation10 + $0x490] sm:$0xff]
    %v2068 = vld [vmem:[#allocation10 + $0x498] sm:$0xff]
    %v2069 = vld [vmem:[#allocation10 + $0x4a0] sm:$0xff]
    %v2070 = vld [vmem:[#allocation10 + $0x4a8] sm:$0xff]
    %v2071 = vld [vmem:[#allocation10 + $0x4b0] sm:$0xff]
    %v2072 = vld [vmem:[#allocation10 + $0x4b8] sm:$0xff]
    %v2073 = vld [vmem:[#allocation10 + $0x4c0] sm:$0xff]
    %v2074 = vld [vmem:[#allocation10 + $0x4c8] sm:$0xff]
    %v2075 = vld [vmem:[#allocation10 + $0x4d0] sm:$0xff]
    %v2076 = vld [vmem:[#allocation10 + $0x4d8] sm:$0xff]
    %v2077 = vld [vmem:[#allocation10 + $0x4e0] sm:$0xff]
    %v2078 = vld [vmem:[#allocation10 + $0x4e8] sm:$0xff]
    %v2079 = vld [vmem:[#allocation10 + $0x4f0] sm:$0xff]
    %v2080 = vld [vmem:[#allocation10 + $0x4f8] sm:$0xff]
    %v2081 = vld [vmem:[#allocation10 + $0x500] sm:$0xff]
    %v2082 = vld [vmem:[#allocation10 + $0x508] sm:$0xff]
    %v2083 = vld [vmem:[#allocation10 + $0x510] sm:$0xff]
    %v2084 = vld [vmem:[#allocation10 + $0x518] sm:$0xff]
    %v2085 = vld [vmem:[#allocation10 + $0x520] sm:$0xff]
    %v2086 = vld [vmem:[#allocation10 + $0x528] sm:$0xff]
    %v2087 = vld [vmem:[#allocation10 + $0x530] sm:$0xff]
    %v2088 = vld [vmem:[#allocation10 + $0x538] sm:$0xff]
    %v2089 = vld [vmem:[#allocation10 + $0x540] sm:$0xff]
    %v2090 = vld [vmem:[#allocation10 + $0x548] sm:$0xff]
    %v2091 = vld [vmem:[#allocation10 + $0x550] sm:$0xff]
    %v2092 = vld [vmem:[#allocation10 + $0x558] sm:$0xff]
    %v2093 = vld [vmem:[#allocation10 + $0x560] sm:$0xff]
    %v2094 = vld [vmem:[#allocation10 + $0x568] sm:$0xff]
    %v2095 = vld [vmem:[#allocation10 + $0x570] sm:$0xff]
    %v2096 = vld [vmem:[#allocation10 + $0x578] sm:$0xff]
    %v2097 = vld [vmem:[#allocation10 + $0x580] sm:$0xff]
    %v2098 = vld [vmem:[#allocation10 + $0x588] sm:$0xff]
    %v2099 = vld [vmem:[#allocation10 + $0x590] sm:$0xff]
    %v2100 = vld [vmem:[#allocation10 + $0x598] sm:$0xff]
    %v2101 = vld [vmem:[#allocation10 + $0x5a0] sm:$0xff]
    %v2102 = vld [vmem:[#allocation10 + $0x5a8] sm:$0xff]
    %v2103 = vld [vmem:[#allocation10 + $0x5b0] sm:$0xff]
    %v2104 = vld [vmem:[#allocation10 + $0x5b8] sm:$0xff]
    %v2105 = vld [vmem:[#allocation10 + $0x5c0] sm:$0xff]
    %v2106 = vld [vmem:[#allocation10 + $0x5c8] sm:$0xff]
    %v2107 = vld [vmem:[#allocation10 + $0x5d0] sm:$0xff]
    %v2108 = vld [vmem:[#allocation10 + $0x5d8] sm:$0xff]
    %v2109 = vld [vmem:[#allocation10 + $0x5e0] sm:$0xff]
    %v2110 = vld [vmem:[#allocation10 + $0x5e8] sm:$0xff]
    %v2111 = vld [vmem:[#allocation10 + $0x5f0] sm:$0xff]
    %v2112 = vld [vmem:[#allocation10 + $0x5f8] sm:$0xff]
    %v2113 = vld [vmem:[#allocation10 + $0x600] sm:$0xff]
    %v2114 = vld [vmem:[#allocation10 + $0x608] sm:$0xff]
    %v2115 = vld [vmem:[#allocation10 + $0x610] sm:$0xff]
    %v2116 = vld [vmem:[#allocation10 + $0x618] sm:$0xff]
    %v2117 = vld [vmem:[#allocation10 + $0x620] sm:$0xff]
    %v2118 = vld [vmem:[#allocation10 + $0x628] sm:$0xff]
    %v2119 = vld [vmem:[#allocation10 + $0x630] sm:$0xff]
    %v2120 = vld [vmem:[#allocation10 + $0x638] sm:$0xff]
    %v2121 = vld [vmem:[#allocation10 + $0x640] sm:$0xff]
    %v2122 = vld [vmem:[#allocation10 + $0x648] sm:$0xff]
    %v2123 = vld [vmem:[#allocation10 + $0x650] sm:$0xff]
    %v2124 = vld [vmem:[#allocation10 + $0x658] sm:$0xff]
    %v2125 = vld [vmem:[#allocation10 + $0x660] sm:$0xff]
    %v2126 = vld [vmem:[#allocation10 + $0x668] sm:$0xff]
    %v2127 = vld [vmem:[#allocation10 + $0x670] sm:$0xff]
    %v2128 = vld [vmem:[#allocation10 + $0x678] sm:$0xff]
    %v2129 = vld [vmem:[#allocation10 + $0x680] sm:$0xff]
    %v2130 = vld [vmem:[#allocation10 + $0x688] sm:$0xff]
    %v2131 = vld [vmem:[#allocation10 + $0x690] sm:$0xff]
    %v2132 = vld [vmem:[#allocation10 + $0x698] sm:$0xff]
    %v2133 = vld [vmem:[#allocation10 + $0x6a0] sm:$0xff]
    %v2134 = vld [vmem:[#allocation10 + $0x6a8] sm:$0xff]
    %v2135 = vld [vmem:[#allocation10 + $0x6b0] sm:$0xff]
    %v2136 = vld [vmem:[#allocation10 + $0x6b8] sm:$0xff]
    %v2137 = vld [vmem:[#allocation10 + $0x6c0] sm:$0xff]
    %v2138 = vld [vmem:[#allocation10 + $0x6c8] sm:$0xff]
    %v2139 = vld [vmem:[#allocation10 + $0x6d0] sm:$0xff]
    %v2140 = vld [vmem:[#allocation10 + $0x6d8] sm:$0xff]
    %v2141 = vld [vmem:[#allocation10 + $0x6e0] sm:$0xff]
    %v2142 = vld [vmem:[#allocation10 + $0x6e8] sm:$0xff]
    %v2143 = vld [vmem:[#allocation10 + $0x6f0] sm:$0xff]
    %v2144 = vld [vmem:[#allocation10 + $0x6f8] sm:$0xff]
    %v2145 = vld [vmem:[#allocation10 + $0x700] sm:$0xff]
    %v2146 = vld [vmem:[#allocation10 + $0x708] sm:$0xff]
    %v2147 = vld [vmem:[#allocation10 + $0x710] sm:$0xff]
    %v2148 = vld [vmem:[#allocation10 + $0x718] sm:$0xff]
    %s2149 = scalar_lea.vmem [#allocation8], 24
    %v2150 = vld [vmem:[%s2149] sm:$0xff]
    %v2151 = vld [vmem:[%s2149 + $0x8] sm:$0xff]
    %v2152 = vld [vmem:[%s2149 + $0x10] sm:$0x3]
    %v2154 = vsel %vm1649, %v2150, 0
    %v2157 = vsel %vm1649, %v2151, 0
    %v2160 = vsel %vm1649, %v2152, 0
    %2162 = vmatprep.subr.mxu0 0.0
    %2163 = vmatpush1.msra.mxu0 0.0
    %2164 = vmatprep.subr.mxu0 0.0
    %2165 = vmatpush1.msra.mxu0 0.0
    %2166 = vmatprep.subr.mxu0 0.0
    %2167 = vmatpush1.msra.mxu0 0.0
    %2168 = vmatprep.subr.mxu0 0.0
    %2169 = vmatpush1.msra.mxu0 0.0
    %2170 = vmatprep.subr.mxu0 0.0
    %2171 = vmatpush1.msra.mxu0 0.0
    %2172 = vmatprep.subr.mxu0 0.0
    %2173 = vmatpush1.msra.mxu0 0.0
    %2174 = vmatprep.subr.mxu0 0.0
    %2175 = vmatpush1.msra.mxu0 0.0
    %2176 = vmatprep.subr.mxu0 0.0
    %2177 = vmatpush1.msra.mxu0 0.0
    %2178 = vmatprep.subr.mxu0 0.0
    %2179 = vmatpush1.msra.mxu0 0.0
    %2180 = vmatprep.subr.mxu0 0.0
    %2181 = vmatpush1.msra.mxu0 0.0
    %2182 = vmatprep.subr.mxu0 0.0
    %2183 = vmatpush1.msra.mxu0 0.0
    %2184 = vmatprep.subr.mxu0 %v1664
    %2185 = vmatpush1.msra.mxu0 %v1661
    %2186 = vmatprep.subr.mxu0 %v1637
    %2187 = vmatpush1.msra.mxu0 %v1636
    %2188 = vmatprep.subr.mxu0 %v1632
    %2189 = vmatpush1.msra.mxu0 %v1631
    %2190 = vmatprep.subr.mxu0 %v1627
    %2191 = vmatpush1.msra.mxu0 %v1626
    %2192 = vmatprep.subr.mxu0 %v1622
    %2193 = vmatpush1.msra.mxu0 %v1621
    %2194 = vmatprep.subr.mxu0 0.0
    %2195 = vmatpush2.msra.mxu0 0.0
    %2196 = vmatprep.subr.mxu0 0.0
    %2197 = vmatpush2.msra.mxu0 0.0
    %2198 = vmatprep.subr.mxu0 0.0
    %2199 = vmatpush2.msra.mxu0 0.0
    %2200 = vmatprep.subr.mxu0 0.0
    %2201 = vmatpush2.msra.mxu0 0.0
    %2202 = vmatprep.subr.mxu0 0.0
    %2203 = vmatpush2.msra.mxu0 0.0
    %2204 = vmatprep.subr.mxu0 0.0
    %2205 = vmatpush2.msra.mxu0 0.0
    %2206 = vmatprep.subr.mxu0 0.0
    %2207 = vmatpush2.msra.mxu0 0.0
    %2208 = vmatprep.subr.mxu0 0.0
    %2209 = vmatpush2.msra.mxu0 0.0
    %2210 = vmatprep.subr.mxu0 0.0
    %2211 = vmatpush2.msra.mxu0 0.0
    %2212 = vmatprep.subr.mxu0 0.0
    %2213 = vmatpush2.msra.mxu0 0.0
    %2214 = vmatprep.subr.mxu0 0.0
    %2215 = vmatpush2.msra.mxu0 0.0
    %2216 = vmatprep.subr.mxu0 0.0
    %2217 = vmatpush2.msra.mxu0 0.0
    %2218 = vmatprep.subr.mxu0 0.0
    %2219 = vmatpush2.msra.mxu0 0.0
    %2220 = vmatprep.subr.mxu0 0.0
    %2221 = vmatpush2.msra.mxu0 0.0
    %2222 = vmatprep.subr.mxu0 0.0
    %2223 = vmatpush2.msra.mxu0 0.0
    %2224 = vmatprep.subr.mxu0 0.0
    %2225 = vmatpush2.msra.mxu0 0.0
    %2226 = vmatprep.mubr.f32.mxu0 0.0
    %2227 = vmatmul.mubr.f32.gmra.mxu0 %v2154
    %v2228 = vpop.f32.mrf.mxu0
    %v2229 = vadd.f32 0.0, %v2228
    %v2230 = vpop.f32.mrf.mxu0
    %v2231 = vadd.f32 0.0, %v2230
    %2232 = vmatprep.mubr.f32.mxu0 0.0
    %2233 = vmatmul.mubr.f32.gmra.mxu0 %v2157
    %v2234 = vpop.f32.mrf.mxu0
    %v2235 = vadd.f32 0.0, %v2234
    %v2236 = vpop.f32.mrf.mxu0
    %v2237 = vadd.f32 0.0, %v2236
    %2238 = vmatprep.mubr.f32.mxu0 0.0
    %2239 = vmatmul.mubr.f32.gmra.mxu0 %v2160
    %v2240 = vpop.f32.mrf.mxu0
    %v2241 = vadd.f32 0.0, %v2240
    %v2242 = vpop.f32.mrf.mxu0
    %v2243 = vadd.f32 0.0, %v2242
    %2244 = vdwg.mxu0
    %2245 = vmatprep.subr.mxu0 0.0
    %2246 = vmatpush1.msra.mxu0 0.0
    %2247 = vmatprep.subr.mxu0 0.0
    %2248 = vmatpush1.msra.mxu0 0.0
    %2249 = vmatprep.subr.mxu0 0.0
    %2250 = vmatpush1.msra.mxu0 0.0
    %2251 = vmatprep.subr.mxu0 0.0
    %2252 = vmatpush1.msra.mxu0 0.0
    %2253 = vmatprep.subr.mxu0 0.0
    %2254 = vmatpush1.msra.mxu0 0.0
    %2255 = vmatprep.subr.mxu0 0.0
    %2256 = vmatpush1.msra.mxu0 0.0
    %2257 = vmatprep.subr.mxu0 0.0
    %2258 = vmatpush1.msra.mxu0 0.0
    %2259 = vmatprep.subr.mxu0 0.0
    %2260 = vmatpush1.msra.mxu0 0.0
    %2261 = vmatprep.subr.mxu0 0.0
    %2262 = vmatpush1.msra.mxu0 0.0
    %2263 = vmatprep.subr.mxu0 0.0
    %2264 = vmatpush1.msra.mxu0 0.0
    %2265 = vmatprep.subr.mxu0 0.0
    %2266 = vmatpush1.msra.mxu0 0.0
    %2267 = vmatprep.subr.mxu0 %v1670
    %2268 = vmatpush1.msra.mxu0 %v1667
    %2269 = vmatprep.subr.mxu0 %v1639
    %2270 = vmatpush1.msra.mxu0 %v1638
    %2271 = vmatprep.subr.mxu0 %v1634
    %2272 = vmatpush1.msra.mxu0 %v1633
    %2273 = vmatprep.subr.mxu0 %v1629
    %2274 = vmatpush1.msra.mxu0 %v1628
    %2275 = vmatprep.subr.mxu0 %v1624
    %2276 = vmatpush1.msra.mxu0 %v1623
    %2277 = vmatprep.subr.mxu0 0.0
    %2278 = vmatpush2.msra.mxu0 0.0
    %2279 = vmatprep.subr.mxu0 0.0
    %2280 = vmatpush2.msra.mxu0 0.0
    %2281 = vmatprep.subr.mxu0 0.0
    %2282 = vmatpush2.msra.mxu0 0.0
    %2283 = vmatprep.subr.mxu0 0.0
    %2284 = vmatpush2.msra.mxu0 0.0
    %2285 = vmatprep.subr.mxu0 0.0
    %2286 = vmatpush2.msra.mxu0 0.0
    %2287 = vmatprep.subr.mxu0 0.0
    %2288 = vmatpush2.msra.mxu0 0.0
    %2289 = vmatprep.subr.mxu0 0.0
    %2290 = vmatpush2.msra.mxu0 0.0
    %2291 = vmatprep.subr.mxu0 0.0
    %2292 = vmatpush2.msra.mxu0 0.0
    %2293 = vmatprep.subr.mxu0 0.0
    %2294 = vmatpush2.msra.mxu0 0.0
    %2295 = vmatprep.subr.mxu0 0.0
    %2296 = vmatpush2.msra.mxu0 0.0
    %2297 = vmatprep.subr.mxu0 0.0
    %2298 = vmatpush2.msra.mxu0 0.0
    %2299 = vmatprep.subr.mxu0 0.0
    %2300 = vmatpush2.msra.mxu0 0.0
    %2301 = vmatprep.subr.mxu0 0.0
    %2302 = vmatpush2.msra.mxu0 0.0
    %2303 = vmatprep.subr.mxu0 0.0
    %2304 = vmatpush2.msra.mxu0 0.0
    %2305 = vmatprep.subr.mxu0 0.0
    %2306 = vmatpush2.msra.mxu0 0.0
    %2307 = vmatprep.subr.mxu0 0.0
    %2308 = vmatpush2.msra.mxu0 0.0
    %2309 = vmatprep.mubr.f32.mxu0 0.0
    %2310 = vmatmul.mubr.f32.gmra.mxu0 %v2154
    %v2311 = vpop.f32.mrf.mxu0
    %v2312 = vadd.f32 0.0, %v2311
    %v2313 = vpop.f32.mrf.mxu0
    %v2314 = vadd.f32 0.0, %v2313
    %2315 = vmatprep.mubr.f32.mxu0 0.0
    %2316 = vmatmul.mubr.f32.gmra.mxu0 %v2157
    %v2317 = vpop.f32.mrf.mxu0
    %v2318 = vadd.f32 0.0, %v2317
    %v2319 = vpop.f32.mrf.mxu0
    %v2320 = vadd.f32 0.0, %v2319
    %2321 = vmatprep.mubr.f32.mxu0 0.0
    %2322 = vmatmul.mubr.f32.gmra.mxu0 %v2160
    %v2323 = vpop.f32.mrf.mxu0
    %v2324 = vadd.f32 0.0, %v2323
    %v2325 = vpop.f32.mrf.mxu0
    %v2326 = vadd.f32 0.0, %v2325
    %2327 = vdwg.mxu0
    %2328 = vmatprep.subr.mxu0 0.0
    %2329 = vmatpush1.msra.mxu0 0.0
    %2330 = vmatprep.subr.mxu0 0.0
    %2331 = vmatpush1.msra.mxu0 0.0
    %2332 = vmatprep.subr.mxu0 0.0
    %2333 = vmatpush1.msra.mxu0 0.0
    %2334 = vmatprep.subr.mxu0 0.0
    %2335 = vmatpush1.msra.mxu0 0.0
    %2336 = vmatprep.subr.mxu0 0.0
    %2337 = vmatpush1.msra.mxu0 0.0
    %2338 = vmatprep.subr.mxu0 0.0
    %2339 = vmatpush1.msra.mxu0 0.0
    %2340 = vmatprep.subr.mxu0 0.0
    %2341 = vmatpush1.msra.mxu0 0.0
    %2342 = vmatprep.subr.mxu0 0.0
    %2343 = vmatpush1.msra.mxu0 0.0
    %2344 = vmatprep.subr.mxu0 0.0
    %2345 = vmatpush1.msra.mxu0 0.0
    %2346 = vmatprep.subr.mxu0 0.0
    %2347 = vmatpush1.msra.mxu0 0.0
    %2348 = vmatprep.subr.mxu0 0.0
    %2349 = vmatpush1.msra.mxu0 0.0
    %2350 = vmatprep.subr.mxu0 0.0
    %2351 = vmatpush1.msra.mxu0 %v1673
    %2352 = vmatprep.subr.mxu0 0.0
    %2353 = vmatpush1.msra.mxu0 %v1640
    %2354 = vmatprep.subr.mxu0 0.0
    %2355 = vmatpush1.msra.mxu0 %v1635
    %2356 = vmatprep.subr.mxu0 0.0
    %2357 = vmatpush1.msra.mxu0 %v1630
    %2358 = vmatprep.subr.mxu0 0.0
    %2359 = vmatpush1.msra.mxu0 %v1625
    %2360 = vmatprep.subr.mxu0 0.0
    %2361 = vmatpush2.msra.mxu0 0.0
    %2362 = vmatprep.subr.mxu0 0.0
    %2363 = vmatpush2.msra.mxu0 0.0
    %2364 = vmatprep.subr.mxu0 0.0
    %2365 = vmatpush2.msra.mxu0 0.0
    %2366 = vmatprep.subr.mxu0 0.0
    %2367 = vmatpush2.msra.mxu0 0.0
    %2368 = vmatprep.subr.mxu0 0.0
    %2369 = vmatpush2.msra.mxu0 0.0
    %2370 = vmatprep.subr.mxu0 0.0
    %2371 = vmatpush2.msra.mxu0 0.0
    %2372 = vmatprep.subr.mxu0 0.0
    %2373 = vmatpush2.msra.mxu0 0.0
    %2374 = vmatprep.subr.mxu0 0.0
    %2375 = vmatpush2.msra.mxu0 0.0
    %2376 = vmatprep.subr.mxu0 0.0
    %2377 = vmatpush2.msra.mxu0 0.0
    %2378 = vmatprep.subr.mxu0 0.0
    %2379 = vmatpush2.msra.mxu0 0.0
    %2380 = vmatprep.subr.mxu0 0.0
    %2381 = vmatpush2.msra.mxu0 0.0
    %2382 = vmatprep.subr.mxu0 0.0
    %2383 = vmatpush2.msra.mxu0 0.0
    %2384 = vmatprep.subr.mxu0 0.0
    %2385 = vmatpush2.msra.mxu0 0.0
    %2386 = vmatprep.subr.mxu0 0.0
    %2387 = vmatpush2.msra.mxu0 0.0
    %2388 = vmatprep.subr.mxu0 0.0
    %2389 = vmatpush2.msra.mxu0 0.0
    %2390 = vmatprep.subr.mxu0 0.0
    %2391 = vmatpush2.msra.mxu0 0.0
    %2392 = vmatprep.mubr.f32.mxu0 0.0
    %2393 = vmatmul.mubr.f32.gmra.mxu0 %v2154
    %v2394 = vpop.f32.mrf.mxu0
    %v2395 = vadd.f32 0.0, %v2394
    %v2396 = vpop.f32.mrf.mxu0
    %2397 = vmatprep.mubr.f32.mxu0 0.0
    %2398 = vmatmul.mubr.f32.gmra.mxu0 %v2157
    %v2399 = vpop.f32.mrf.mxu0
    %v2400 = vadd.f32 0.0, %v2399
    %v2401 = vpop.f32.mrf.mxu0
    %2402 = vmatprep.mubr.f32.mxu0 0.0
    %2403 = vmatmul.mubr.f32.gmra.mxu0 %v2160
    %v2404 = vpop.f32.mrf.mxu0
    %v2405 = vadd.f32 0.0, %v2404
    %v2406 = vpop.f32.mrf.mxu0
    %2407 = vdwg.mxu0
    %s2408 = scalar_lea.vmem [#allocation10], 1824
    %v2409 = vld [vmem:[%s2408] sm:$0xff]
    %v2410 = vld [vmem:[%s2408 + $0x8] sm:$0xff]
    %v2411 = vld [vmem:[%s2408 + $0x10] sm:$0xff]
    %v2412 = vld [vmem:[%s2408 + $0x18] sm:$0xff]
    %v2413 = vld [vmem:[%s2408 + $0x20] sm:$0xff]
    %v2414 = vld [vmem:[%s2408 + $0x28] sm:$0xff]
    %v2415 = vld [vmem:[%s2408 + $0x30] sm:$0xff]
    %v2416 = vld [vmem:[%s2408 + $0x38] sm:$0xff]
    %v2417 = vld [vmem:[%s2408 + $0x40] sm:$0xff]
    %v2418 = vld [vmem:[%s2408 + $0x48] sm:$0xff]
    %v2419 = vld [vmem:[%s2408 + $0x50] sm:$0xff]
    %v2420 = vld [vmem:[%s2408 + $0x58] sm:$0xff]
    %v2421 = vld [vmem:[%s2408 + $0x60] sm:$0xff]
    %v2422 = vld [vmem:[%s2408 + $0x68] sm:$0xff]
    %v2423 = vld [vmem:[%s2408 + $0x70] sm:$0xff]
    %v2424 = vld [vmem:[%s2408 + $0x78] sm:$0xff]
    %v2425 = vld [vmem:[%s2408 + $0x80] sm:$0xff]
    %v2426 = vld [vmem:[%s2408 + $0x88] sm:$0xff]
    %v2427 = vld [vmem:[%s2408 + $0x90] sm:$0xff]
    %v2428 = vld [vmem:[%s2408 + $0x98] sm:$0xff]
    %v2429 = vld [vmem:[%s2408 + $0xa0] sm:$0xff]
    %v2430 = vld [vmem:[%s2408 + $0xa8] sm:$0xff]
    %v2431 = vld [vmem:[%s2408 + $0xb0] sm:$0xff]
    %v2432 = vld [vmem:[%s2408 + $0xb8] sm:$0xff]
    %v2433 = vld [vmem:[%s2408 + $0xc0] sm:$0xff]
    %v2434 = vld [vmem:[%s2408 + $0xc8] sm:$0xff]
    %v2435 = vld [vmem:[%s2408 + $0xd0] sm:$0xff]
    %v2436 = vld [vmem:[%s2408 + $0xd8] sm:$0xff]
    %v2437 = vld [vmem:[%s2408 + $0xe0] sm:$0xff]
    %v2438 = vld [vmem:[%s2408 + $0xe8] sm:$0xff]
    %v2439 = vld [vmem:[%s2408 + $0xf0] sm:$0xff]
    %v2440 = vld [vmem:[%s2408 + $0xf8] sm:$0xff]
    %v2441 = vld [vmem:[%s2408 + $0x100] sm:$0xff]
    %v2442 = vld [vmem:[%s2408 + $0x108] sm:$0xff]
    %v2443 = vld [vmem:[%s2408 + $0x110] sm:$0xff]
    %v2444 = vld [vmem:[%s2408 + $0x118] sm:$0xff]
    %v2445 = vld [vmem:[%s2408 + $0x120] sm:$0xff]
    %v2446 = vld [vmem:[%s2408 + $0x128] sm:$0xff]
    %v2447 = vld [vmem:[%s2408 + $0x130] sm:$0xff]
    %v2448 = vld [vmem:[%s2408 + $0x138] sm:$0xff]
    %v2449 = vld [vmem:[%s2408 + $0x140] sm:$0xff]
    %v2450 = vld [vmem:[%s2408 + $0x148] sm:$0xff]
    %v2451 = vld [vmem:[%s2408 + $0x150] sm:$0xff]
    %v2452 = vld [vmem:[%s2408 + $0x158] sm:$0xff]
    %v2453 = vld [vmem:[%s2408 + $0x160] sm:$0xff]
    %v2454 = vld [vmem:[%s2408 + $0x168] sm:$0xff]
    %v2455 = vld [vmem:[%s2408 + $0x170] sm:$0xff]
    %v2456 = vld [vmem:[%s2408 + $0x178] sm:$0xff]
    %v2457 = vld [vmem:[%s2408 + $0x180] sm:$0xff]
    %v2458 = vld [vmem:[%s2408 + $0x188] sm:$0xff]
    %v2459 = vld [vmem:[%s2408 + $0x190] sm:$0xff]
    %v2460 = vld [vmem:[%s2408 + $0x198] sm:$0xff]
    %v2461 = vld [vmem:[%s2408 + $0x1a0] sm:$0xff]
    %v2462 = vld [vmem:[%s2408 + $0x1a8] sm:$0xff]
    %v2463 = vld [vmem:[%s2408 + $0x1b0] sm:$0xff]
    %v2464 = vld [vmem:[%s2408 + $0x1b8] sm:$0xff]
    %v2465 = vld [vmem:[%s2408 + $0x1c0] sm:$0xff]
    %v2466 = vld [vmem:[%s2408 + $0x1c8] sm:$0xff]
    %v2467 = vld [vmem:[%s2408 + $0x1d0] sm:$0xff]
    %v2468 = vld [vmem:[%s2408 + $0x1d8] sm:$0xff]
    %v2469 = vld [vmem:[%s2408 + $0x1e0] sm:$0xff]
    %v2470 = vld [vmem:[%s2408 + $0x1e8] sm:$0xff]
    %v2471 = vld [vmem:[%s2408 + $0x1f0] sm:$0xff]
    %v2472 = vld [vmem:[%s2408 + $0x1f8] sm:$0xff]
    %v2473 = vld [vmem:[%s2408 + $0x200] sm:$0xff]
    %v2474 = vld [vmem:[%s2408 + $0x208] sm:$0xff]
    %v2475 = vld [vmem:[%s2408 + $0x210] sm:$0xff]
    %v2476 = vld [vmem:[%s2408 + $0x218] sm:$0xff]
    %v2477 = vld [vmem:[%s2408 + $0x220] sm:$0xff]
    %v2478 = vld [vmem:[%s2408 + $0x228] sm:$0xff]
    %v2479 = vld [vmem:[%s2408 + $0x230] sm:$0xff]
    %v2480 = vld [vmem:[%s2408 + $0x238] sm:$0xff]
    %v2481 = vld [vmem:[%s2408 + $0x240] sm:$0xff]
    %v2482 = vld [vmem:[%s2408 + $0x248] sm:$0xff]
    %v2483 = vld [vmem:[%s2408 + $0x250] sm:$0xff]
    %v2484 = vld [vmem:[%s2408 + $0x258] sm:$0xff]
    %v2485 = vld [vmem:[%s2408 + $0x260] sm:$0xff]
    %v2486 = vld [vmem:[%s2408 + $0x268] sm:$0xff]
    %v2487 = vld [vmem:[%s2408 + $0x270] sm:$0xff]
    %v2488 = vld [vmem:[%s2408 + $0x278] sm:$0xff]
    %v2489 = vld [vmem:[%s2408 + $0x280] sm:$0xff]
    %v2490 = vld [vmem:[%s2408 + $0x288] sm:$0xff]
    %v2491 = vld [vmem:[%s2408 + $0x290] sm:$0xff]
    %v2492 = vld [vmem:[%s2408 + $0x298] sm:$0xff]
    %v2493 = vld [vmem:[%s2408 + $0x2a0] sm:$0xff]
    %v2494 = vld [vmem:[%s2408 + $0x2a8] sm:$0xff]
    %v2495 = vld [vmem:[%s2408 + $0x2b0] sm:$0xff]
    %v2496 = vld [vmem:[%s2408 + $0x2b8] sm:$0xff]
    %v2497 = vld [vmem:[%s2408 + $0x2c0] sm:$0xff]
    %v2498 = vld [vmem:[%s2408 + $0x2c8] sm:$0xff]
    %v2499 = vld [vmem:[%s2408 + $0x2d0] sm:$0xff]
    %v2500 = vld [vmem:[%s2408 + $0x2d8] sm:$0xff]
    %v2501 = vld [vmem:[%s2408 + $0x2e0] sm:$0xff]
    %v2502 = vld [vmem:[%s2408 + $0x2e8] sm:$0xff]
    %v2503 = vld [vmem:[%s2408 + $0x2f0] sm:$0xff]
    %v2504 = vld [vmem:[%s2408 + $0x2f8] sm:$0xff]
    %v2505 = vld [vmem:[%s2408 + $0x300] sm:$0xff]
    %v2506 = vld [vmem:[%s2408 + $0x308] sm:$0xff]
    %v2507 = vld [vmem:[%s2408 + $0x310] sm:$0xff]
    %v2508 = vld [vmem:[%s2408 + $0x318] sm:$0xff]
    %v2509 = vld [vmem:[%s2408 + $0x320] sm:$0xff]
    %v2510 = vld [vmem:[%s2408 + $0x328] sm:$0xff]
    %v2511 = vld [vmem:[%s2408 + $0x330] sm:$0xff]
    %v2512 = vld [vmem:[%s2408 + $0x338] sm:$0xff]
    %v2513 = vld [vmem:[%s2408 + $0x340] sm:$0xff]
    %v2514 = vld [vmem:[%s2408 + $0x348] sm:$0xff]
    %v2515 = vld [vmem:[%s2408 + $0x350] sm:$0xff]
    %v2516 = vld [vmem:[%s2408 + $0x358] sm:$0xff]
    %v2517 = vld [vmem:[%s2408 + $0x360] sm:$0xff]
    %v2518 = vld [vmem:[%s2408 + $0x368] sm:$0xff]
    %v2519 = vld [vmem:[%s2408 + $0x370] sm:$0xff]
    %v2520 = vld [vmem:[%s2408 + $0x378] sm:$0xff]
    %v2521 = vld [vmem:[%s2408 + $0x380] sm:$0xff]
    %v2522 = vld [vmem:[%s2408 + $0x388] sm:$0xff]
    %v2523 = vld [vmem:[%s2408 + $0x390] sm:$0xff]
    %v2524 = vld [vmem:[%s2408 + $0x398] sm:$0xff]
    %v2525 = vld [vmem:[%s2408 + $0x3a0] sm:$0xff]
    %v2526 = vld [vmem:[%s2408 + $0x3a8] sm:$0xff]
    %v2527 = vld [vmem:[%s2408 + $0x3b0] sm:$0xff]
    %v2528 = vld [vmem:[%s2408 + $0x3b8] sm:$0xff]
    %v2529 = vld [vmem:[%s2408 + $0x3c0] sm:$0xff]
    %v2530 = vld [vmem:[%s2408 + $0x3c8] sm:$0xff]
    %v2531 = vld [vmem:[%s2408 + $0x3d0] sm:$0xff]
    %v2532 = vld [vmem:[%s2408 + $0x3d8] sm:$0xff]
    %v2533 = vld [vmem:[%s2408 + $0x3e0] sm:$0xff]
    %v2534 = vld [vmem:[%s2408 + $0x3e8] sm:$0xff]
    %v2535 = vld [vmem:[%s2408 + $0x3f0] sm:$0xff]
    %v2536 = vld [vmem:[%s2408 + $0x3f8] sm:$0xff]
    %v2537 = vld [vmem:[%s2408 + $0x400] sm:$0xff]
    %v2538 = vld [vmem:[%s2408 + $0x408] sm:$0xff]
    %v2539 = vld [vmem:[%s2408 + $0x410] sm:$0xff]
    %v2540 = vld [vmem:[%s2408 + $0x418] sm:$0xff]
    %v2541 = vld [vmem:[%s2408 + $0x420] sm:$0xff]
    %v2542 = vld [vmem:[%s2408 + $0x428] sm:$0xff]
    %v2543 = vld [vmem:[%s2408 + $0x430] sm:$0xff]
    %v2544 = vld [vmem:[%s2408 + $0x438] sm:$0xff]
    %v2545 = vld [vmem:[%s2408 + $0x440] sm:$0xff]
    %v2546 = vld [vmem:[%s2408 + $0x448] sm:$0xff]
    %v2547 = vld [vmem:[%s2408 + $0x450] sm:$0xff]
    %v2548 = vld [vmem:[%s2408 + $0x458] sm:$0xff]
    %v2549 = vld [vmem:[%s2408 + $0x460] sm:$0xff]
    %v2550 = vld [vmem:[%s2408 + $0x468] sm:$0xff]
    %v2551 = vld [vmem:[%s2408 + $0x470] sm:$0xff]
    %v2552 = vld [vmem:[%s2408 + $0x478] sm:$0xff]
    %v2553 = vld [vmem:[%s2408 + $0x480] sm:$0xff]
    %v2554 = vld [vmem:[%s2408 + $0x488] sm:$0xff]
    %v2555 = vld [vmem:[%s2408 + $0x490] sm:$0xff]
    %v2556 = vld [vmem:[%s2408 + $0x498] sm:$0xff]
    %v2557 = vld [vmem:[%s2408 + $0x4a0] sm:$0xff]
    %v2558 = vld [vmem:[%s2408 + $0x4a8] sm:$0xff]
    %v2559 = vld [vmem:[%s2408 + $0x4b0] sm:$0xff]
    %v2560 = vld [vmem:[%s2408 + $0x4b8] sm:$0xff]
    %v2561 = vld [vmem:[%s2408 + $0x4c0] sm:$0xff]
    %v2562 = vld [vmem:[%s2408 + $0x4c8] sm:$0xff]
    %v2563 = vld [vmem:[%s2408 + $0x4d0] sm:$0xff]
    %v2564 = vld [vmem:[%s2408 + $0x4d8] sm:$0xff]
    %v2565 = vld [vmem:[%s2408 + $0x4e0] sm:$0xff]
    %v2566 = vld [vmem:[%s2408 + $0x4e8] sm:$0xff]
    %v2567 = vld [vmem:[%s2408 + $0x4f0] sm:$0xff]
    %v2568 = vld [vmem:[%s2408 + $0x4f8] sm:$0xff]
    %v2569 = vld [vmem:[%s2408 + $0x500] sm:$0xff]
    %v2570 = vld [vmem:[%s2408 + $0x508] sm:$0xff]
    %v2571 = vld [vmem:[%s2408 + $0x510] sm:$0xff]
    %v2572 = vld [vmem:[%s2408 + $0x518] sm:$0xff]
    %v2573 = vld [vmem:[%s2408 + $0x520] sm:$0xff]
    %v2574 = vld [vmem:[%s2408 + $0x528] sm:$0xff]
    %v2575 = vld [vmem:[%s2408 + $0x530] sm:$0xff]
    %v2576 = vld [vmem:[%s2408 + $0x538] sm:$0xff]
    %v2577 = vld [vmem:[%s2408 + $0x540] sm:$0xff]
    %v2578 = vld [vmem:[%s2408 + $0x548] sm:$0xff]
    %v2579 = vld [vmem:[%s2408 + $0x550] sm:$0xff]
    %v2580 = vld [vmem:[%s2408 + $0x558] sm:$0xff]
    %v2581 = vld [vmem:[%s2408 + $0x560] sm:$0xff]
    %v2582 = vld [vmem:[%s2408 + $0x568] sm:$0xff]
    %v2583 = vld [vmem:[%s2408 + $0x570] sm:$0xff]
    %v2584 = vld [vmem:[%s2408 + $0x578] sm:$0xff]
    %v2585 = vld [vmem:[%s2408 + $0x580] sm:$0xff]
    %v2586 = vld [vmem:[%s2408 + $0x588] sm:$0xff]
    %v2587 = vld [vmem:[%s2408 + $0x590] sm:$0xff]
    %v2588 = vld [vmem:[%s2408 + $0x598] sm:$0xff]
    %v2589 = vld [vmem:[%s2408 + $0x5a0] sm:$0xff]
    %v2590 = vld [vmem:[%s2408 + $0x5a8] sm:$0xff]
    %v2591 = vld [vmem:[%s2408 + $0x5b0] sm:$0xff]
    %v2592 = vld [vmem:[%s2408 + $0x5b8] sm:$0xff]
    %v2593 = vld [vmem:[%s2408 + $0x5c0] sm:$0xff]
    %v2594 = vld [vmem:[%s2408 + $0x5c8] sm:$0xff]
    %v2595 = vld [vmem:[%s2408 + $0x5d0] sm:$0xff]
    %v2596 = vld [vmem:[%s2408 + $0x5d8] sm:$0xff]
    %v2597 = vld [vmem:[%s2408 + $0x5e0] sm:$0xff]
    %v2598 = vld [vmem:[%s2408 + $0x5e8] sm:$0xff]
    %v2599 = vld [vmem:[%s2408 + $0x5f0] sm:$0xff]
    %v2600 = vld [vmem:[%s2408 + $0x5f8] sm:$0xff]
    %v2601 = vld [vmem:[%s2408 + $0x600] sm:$0xff]
    %v2602 = vld [vmem:[%s2408 + $0x608] sm:$0xff]
    %v2603 = vld [vmem:[%s2408 + $0x610] sm:$0xff]
    %v2604 = vld [vmem:[%s2408 + $0x618] sm:$0xff]
    %v2605 = vld [vmem:[%s2408 + $0x620] sm:$0xff]
    %v2606 = vld [vmem:[%s2408 + $0x628] sm:$0xff]
    %v2607 = vld [vmem:[%s2408 + $0x630] sm:$0xff]
    %v2608 = vld [vmem:[%s2408 + $0x638] sm:$0xff]
    %v2609 = vld [vmem:[%s2408 + $0x640] sm:$0xff]
    %v2610 = vld [vmem:[%s2408 + $0x648] sm:$0xff]
    %v2611 = vld [vmem:[%s2408 + $0x650] sm:$0xff]
    %v2612 = vld [vmem:[%s2408 + $0x658] sm:$0xff]
    %v2613 = vld [vmem:[%s2408 + $0x660] sm:$0xff]
    %v2614 = vld [vmem:[%s2408 + $0x668] sm:$0xff]
    %v2615 = vld [vmem:[%s2408 + $0x670] sm:$0xff]
    %v2616 = vld [vmem:[%s2408 + $0x678] sm:$0xff]
    %v2617 = vld [vmem:[%s2408 + $0x680] sm:$0xff]
    %v2618 = vld [vmem:[%s2408 + $0x688] sm:$0xff]
    %v2619 = vld [vmem:[%s2408 + $0x690] sm:$0xff]
    %v2620 = vld [vmem:[%s2408 + $0x698] sm:$0xff]
    %v2621 = vld [vmem:[%s2408 + $0x6a0] sm:$0xff]
    %v2622 = vld [vmem:[%s2408 + $0x6a8] sm:$0xff]
    %v2623 = vld [vmem:[%s2408 + $0x6b0] sm:$0xff]
    %v2624 = vld [vmem:[%s2408 + $0x6b8] sm:$0xff]
    %v2625 = vld [vmem:[%s2408 + $0x6c0] sm:$0xff]
    %v2626 = vld [vmem:[%s2408 + $0x6c8] sm:$0xff]
    %v2627 = vld [vmem:[%s2408 + $0x6d0] sm:$0xff]
    %v2628 = vld [vmem:[%s2408 + $0x6d8] sm:$0xff]
    %v2629 = vld [vmem:[%s2408 + $0x6e0] sm:$0xff]
    %v2630 = vld [vmem:[%s2408 + $0x6e8] sm:$0xff]
    %v2631 = vld [vmem:[%s2408 + $0x6f0] sm:$0xff]
    %v2632 = vld [vmem:[%s2408 + $0x6f8] sm:$0xff]
    %v2633 = vld [vmem:[%s2408 + $0x700] sm:$0xff]
    %v2634 = vld [vmem:[%s2408 + $0x708] sm:$0xff]
    %v2635 = vld [vmem:[%s2408 + $0x710] sm:$0xff]
    %v2636 = vld [vmem:[%s2408 + $0x718] sm:$0xff]
    %vm2637 = vcmask 785408
    %v2639 = vsel %vm2637, %v2395, 0
    %v2642 = vsel %vm2637, %v2400, 0
    %v2645 = vsel %vm2637, %v2405, 0
    %2647 = vmatprep.subr.mxu0 %v2455
    %2648 = vmatpush1.msra.mxu0 %v2454
    %2649 = vmatprep.subr.mxu0 %v2452
    %2650 = vmatpush1.msra.mxu0 %v2451
    %2651 = vmatprep.subr.mxu0 %v2449
    %2652 = vmatpush1.msra.mxu0 %v2448
    %2653 = vmatprep.subr.mxu0 %v2446
    %2654 = vmatpush1.msra.mxu0 %v2445
    %2655 = vmatprep.subr.mxu0 %v2443
    %2656 = vmatpush1.msra.mxu0 %v2442
    %2657 = vmatprep.subr.mxu0 %v2440
    %2658 = vmatpush1.msra.mxu0 %v2439
    %2659 = vmatprep.subr.mxu0 %v2437
    %2660 = vmatpush1.msra.mxu0 %v2436
    %2661 = vmatprep.subr.mxu0 %v2434
    %2662 = vmatpush1.msra.mxu0 %v2433
    %2663 = vmatprep.subr.mxu0 %v2431
    %2664 = vmatpush1.msra.mxu0 %v2430
    %2665 = vmatprep.subr.mxu0 %v2428
    %2666 = vmatpush1.msra.mxu0 %v2427
    %2667 = vmatprep.subr.mxu0 %v2425
    %2668 = vmatpush1.msra.mxu0 %v2424
    %2669 = vmatprep.subr.mxu0 %v2422
    %2670 = vmatpush1.msra.mxu0 %v2421
    %2671 = vmatprep.subr.mxu0 %v2419
    %2672 = vmatpush1.msra.mxu0 %v2418
    %2673 = vmatprep.subr.mxu0 %v2416
    %2674 = vmatpush1.msra.mxu0 %v2415
    %2675 = vmatprep.subr.mxu0 %v2413
    %2676 = vmatpush1.msra.mxu0 %v2412
    %2677 = vmatprep.subr.mxu0 %v2410
    %2678 = vmatpush1.msra.mxu0 %v2409
    %2679 = vmatprep.subr.mxu0 %v2503
    %2680 = vmatpush2.msra.mxu0 %v2502
    %2681 = vmatprep.subr.mxu0 %v2500
    %2682 = vmatpush2.msra.mxu0 %v2499
    %2683 = vmatprep.subr.mxu0 %v2497
    %2684 = vmatpush2.msra.mxu0 %v2496
    %2685 = vmatprep.subr.mxu0 %v2494
    %2686 = vmatpush2.msra.mxu0 %v2493
    %2687 = vmatprep.subr.mxu0 %v2491
    %2688 = vmatpush2.msra.mxu0 %v2490
    %2689 = vmatprep.subr.mxu0 %v2488
    %2690 = vmatpush2.msra.mxu0 %v2487
    %2691 = vmatprep.subr.mxu0 %v2485
    %2692 = vmatpush2.msra.mxu0 %v2484
    %2693 = vmatprep.subr.mxu0 %v2482
    %2694 = vmatpush2.msra.mxu0 %v2481
    %2695 = vmatprep.subr.mxu0 %v2479
    %2696 = vmatpush2.msra.mxu0 %v2478
    %2697 = vmatprep.subr.mxu0 %v2476
    %2698 = vmatpush2.msra.mxu0 %v2475
    %2699 = vmatprep.subr.mxu0 %v2473
    %2700 = vmatpush2.msra.mxu0 %v2472
    %2701 = vmatprep.subr.mxu0 %v2470
    %2702 = vmatpush2.msra.mxu0 %v2469
    %2703 = vmatprep.subr.mxu0 %v2467
    %2704 = vmatpush2.msra.mxu0 %v2466
    %2705 = vmatprep.subr.mxu0 %v2464
    %2706 = vmatpush2.msra.mxu0 %v2463
    %2707 = vmatprep.subr.mxu0 %v2461
    %2708 = vmatpush2.msra.mxu0 %v2460
    %2709 = vmatprep.subr.mxu0 %v2458
    %2710 = vmatpush2.msra.mxu0 %v2457
    %2711 = vmatprep.mubr.f32.mxu0 %v2231
    %2712 = vmatmul.mubr.f32.gmra.mxu0 %v2229
    %v2713 = vpop.f32.mrf.mxu0
    %v2714 = vadd.f32 0.0, %v2713
    %v2715 = vpop.f32.mrf.mxu0
    %v2716 = vadd.f32 0.0, %v2715
    %2717 = vmatprep.mubr.f32.mxu0 %v2237
    %2718 = vmatmul.mubr.f32.gmra.mxu0 %v2235
    %v2719 = vpop.f32.mrf.mxu0
    %v2720 = vadd.f32 0.0, %v2719
    %v2721 = vpop.f32.mrf.mxu0
    %v2722 = vadd.f32 0.0, %v2721
    %2723 = vmatprep.mubr.f32.mxu0 %v2243
    %2724 = vmatmul.mubr.f32.gmra.mxu0 %v2241
    %v2725 = vpop.f32.mrf.mxu0
    %v2726 = vadd.f32 0.0, %v2725
    %v2727 = vpop.f32.mrf.mxu0
    %v2728 = vadd.f32 0.0, %v2727
    %2729 = vdwg.mxu0
    %2730 = vmatprep.subr.mxu0 %v2551
    %2731 = vmatpush1.msra.mxu0 %v2550
    %2732 = vmatprep.subr.mxu0 %v2548
    %2733 = vmatpush1.msra.mxu0 %v2547
    %2734 = vmatprep.subr.mxu0 %v2545
    %2735 = vmatpush1.msra.mxu0 %v2544
    %2736 = vmatprep.subr.mxu0 %v2542
    %2737 = vmatpush1.msra.mxu0 %v2541
    %2738 = vmatprep.subr.mxu0 %v2539
    %2739 = vmatpush1.msra.mxu0 %v2538
    %2740 = vmatprep.subr.mxu0 %v2536
    %2741 = vmatpush1.msra.mxu0 %v2535
    %2742 = vmatprep.subr.mxu0 %v2533
    %2743 = vmatpush1.msra.mxu0 %v2532
    %2744 = vmatprep.subr.mxu0 %v2530
    %2745 = vmatpush1.msra.mxu0 %v2529
    %2746 = vmatprep.subr.mxu0 %v2527
    %2747 = vmatpush1.msra.mxu0 %v2526
    %2748 = vmatprep.subr.mxu0 %v2524
    %2749 = vmatpush1.msra.mxu0 %v2523
    %2750 = vmatprep.subr.mxu0 %v2521
    %2751 = vmatpush1.msra.mxu0 %v2520
    %2752 = vmatprep.subr.mxu0 %v2518
    %2753 = vmatpush1.msra.mxu0 %v2517
    %2754 = vmatprep.subr.mxu0 %v2515
    %2755 = vmatpush1.msra.mxu0 %v2514
    %2756 = vmatprep.subr.mxu0 %v2512
    %2757 = vmatpush1.msra.mxu0 %v2511
    %2758 = vmatprep.subr.mxu0 %v2509
    %2759 = vmatpush1.msra.mxu0 %v2508
    %2760 = vmatprep.subr.mxu0 %v2506
    %2761 = vmatpush1.msra.mxu0 %v2505
    %2762 = vmatprep.subr.mxu0 %v2599
    %2763 = vmatpush2.msra.mxu0 %v2598
    %2764 = vmatprep.subr.mxu0 %v2596
    %2765 = vmatpush2.msra.mxu0 %v2595
    %2766 = vmatprep.subr.mxu0 %v2593
    %2767 = vmatpush2.msra.mxu0 %v2592
    %2768 = vmatprep.subr.mxu0 %v2590
    %2769 = vmatpush2.msra.mxu0 %v2589
    %2770 = vmatprep.subr.mxu0 %v2587
    %2771 = vmatpush2.msra.mxu0 %v2586
    %2772 = vmatprep.subr.mxu0 %v2584
    %2773 = vmatpush2.msra.mxu0 %v2583
    %2774 = vmatprep.subr.mxu0 %v2581
    %2775 = vmatpush2.msra.mxu0 %v2580
    %2776 = vmatprep.subr.mxu0 %v2578
    %2777 = vmatpush2.msra.mxu0 %v2577
    %2778 = vmatprep.subr.mxu0 %v2575
    %2779 = vmatpush2.msra.mxu0 %v2574
    %2780 = vmatprep.subr.mxu0 %v2572
    %2781 = vmatpush2.msra.mxu0 %v2571
    %2782 = vmatprep.subr.mxu0 %v2569
    %2783 = vmatpush2.msra.mxu0 %v2568
    %2784 = vmatprep.subr.mxu0 %v2566
    %2785 = vmatpush2.msra.mxu0 %v2565
    %2786 = vmatprep.subr.mxu0 %v2563
    %2787 = vmatpush2.msra.mxu0 %v2562
    %2788 = vmatprep.subr.mxu0 %v2560
    %2789 = vmatpush2.msra.mxu0 %v2559
    %2790 = vmatprep.subr.mxu0 %v2557
    %2791 = vmatpush2.msra.mxu0 %v2556
    %2792 = vmatprep.subr.mxu0 %v2554
    %2793 = vmatpush2.msra.mxu0 %v2553
    %2794 = vmatprep.mubr.f32.mxu0 %v2314
    %2795 = vmatmul.mubr.f32.gmra.mxu0 %v2312
    %v2796 = vpop.f32.mrf.mxu0
    %v2797 = vadd.f32 %v2714, %v2796
    %v2798 = vpop.f32.mrf.mxu0
    %v2799 = vadd.f32 %v2716, %v2798
    %2800 = vmatprep.mubr.f32.mxu0 %v2320
    %2801 = vmatmul.mubr.f32.gmra.mxu0 %v2318
    %v2802 = vpop.f32.mrf.mxu0
    %v2803 = vadd.f32 %v2720, %v2802
    %v2804 = vpop.f32.mrf.mxu0
    %v2805 = vadd.f32 %v2722, %v2804
    %2806 = vmatprep.mubr.f32.mxu0 %v2326
    %2807 = vmatmul.mubr.f32.gmra.mxu0 %v2324
    %v2808 = vpop.f32.mrf.mxu0
    %v2809 = vadd.f32 %v2726, %v2808
    %v2810 = vpop.f32.mrf.mxu0
    %v2811 = vadd.f32 %v2728, %v2810
    %2812 = vdwg.mxu0
    %2813 = vmatprep.subr.mxu0 0.0
    %2814 = vmatpush1.msra.mxu0 0.0
    %2815 = vmatprep.subr.mxu0 0.0
    %2816 = vmatpush1.msra.mxu0 0.0
    %2817 = vmatprep.subr.mxu0 0.0
    %2818 = vmatpush1.msra.mxu0 0.0
    %2819 = vmatprep.subr.mxu0 0.0
    %2820 = vmatpush1.msra.mxu0 0.0
    %2821 = vmatprep.subr.mxu0 %v2635
    %2822 = vmatpush1.msra.mxu0 %v2634
    %2823 = vmatprep.subr.mxu0 %v2632
    %2824 = vmatpush1.msra.mxu0 %v2631
    %2825 = vmatprep.subr.mxu0 %v2629
    %2826 = vmatpush1.msra.mxu0 %v2628
    %2827 = vmatprep.subr.mxu0 %v2626
    %2828 = vmatpush1.msra.mxu0 %v2625
    %2829 = vmatprep.subr.mxu0 %v2623
    %2830 = vmatpush1.msra.mxu0 %v2622
    %2831 = vmatprep.subr.mxu0 %v2620
    %2832 = vmatpush1.msra.mxu0 %v2619
    %2833 = vmatprep.subr.mxu0 %v2617
    %2834 = vmatpush1.msra.mxu0 %v2616
    %2835 = vmatprep.subr.mxu0 %v2614
    %2836 = vmatpush1.msra.mxu0 %v2613
    %2837 = vmatprep.subr.mxu0 %v2611
    %2838 = vmatpush1.msra.mxu0 %v2610
    %2839 = vmatprep.subr.mxu0 %v2608
    %2840 = vmatpush1.msra.mxu0 %v2607
    %2841 = vmatprep.subr.mxu0 %v2605
    %2842 = vmatpush1.msra.mxu0 %v2604
    %2843 = vmatprep.subr.mxu0 %v2602
    %2844 = vmatpush1.msra.mxu0 %v2601
    %2845 = vmatprep.subr.mxu0 0.0
    %2846 = vmatpush2.msra.mxu0 0.0
    %2847 = vmatprep.subr.mxu0 0.0
    %2848 = vmatpush2.msra.mxu0 0.0
    %2849 = vmatprep.subr.mxu0 0.0
    %2850 = vmatpush2.msra.mxu0 0.0
    %2851 = vmatprep.subr.mxu0 0.0
    %2852 = vmatpush2.msra.mxu0 0.0
    %2853 = vmatprep.subr.mxu0 0.0
    %2854 = vmatpush2.msra.mxu0 0.0
    %2855 = vmatprep.subr.mxu0 0.0
    %2856 = vmatpush2.msra.mxu0 0.0
    %2857 = vmatprep.subr.mxu0 0.0
    %2858 = vmatpush2.msra.mxu0 0.0
    %2859 = vmatprep.subr.mxu0 0.0
    %2860 = vmatpush2.msra.mxu0 0.0
    %2861 = vmatprep.subr.mxu0 0.0
    %2862 = vmatpush2.msra.mxu0 0.0
    %2863 = vmatprep.subr.mxu0 0.0
    %2864 = vmatpush2.msra.mxu0 0.0
    %2865 = vmatprep.subr.mxu0 0.0
    %2866 = vmatpush2.msra.mxu0 0.0
    %2867 = vmatprep.subr.mxu0 0.0
    %2868 = vmatpush2.msra.mxu0 0.0
    %2869 = vmatprep.subr.mxu0 0.0
    %2870 = vmatpush2.msra.mxu0 0.0
    %2871 = vmatprep.subr.mxu0 0.0
    %2872 = vmatpush2.msra.mxu0 0.0
    %2873 = vmatprep.subr.mxu0 0.0
    %2874 = vmatpush2.msra.mxu0 0.0
    %2875 = vmatprep.subr.mxu0 0.0
    %2876 = vmatpush2.msra.mxu0 0.0
    %2877 = vmatprep.mubr.f32.mxu0 0.0
    %2878 = vmatmul.mubr.f32.gmra.mxu0 %v2639
    %v2879 = vpop.f32.mrf.mxu0
    %v2880 = vadd.f32 %v2797, %v2879
    %v2881 = vpop.f32.mrf.mxu0
    %v2882 = vadd.f32 %v2799, %v2881
    %2883 = vmatprep.mubr.f32.mxu0 0.0
    %2884 = vmatmul.mubr.f32.gmra.mxu0 %v2642
    %v2885 = vpop.f32.mrf.mxu0
    %v2886 = vadd.f32 %v2803, %v2885
    %v2887 = vpop.f32.mrf.mxu0
    %v2888 = vadd.f32 %v2805, %v2887
    %2889 = vmatprep.mubr.f32.mxu0 0.0
    %2890 = vmatmul.mubr.f32.gmra.mxu0 %v2645
    %v2891 = vpop.f32.mrf.mxu0
    %v2892 = vadd.f32 %v2809, %v2891
    %v2893 = vpop.f32.mrf.mxu0
    %v2894 = vadd.f32 %v2811, %v2893
    %2895 = vdwg.mxu0
    %2896 = vmatprep.subr.mxu0 0.0
    %2897 = vmatpush1.msra.mxu0 %v2456
    %2898 = vmatprep.subr.mxu0 0.0
    %2899 = vmatpush1.msra.mxu0 %v2453
    %2900 = vmatprep.subr.mxu0 0.0
    %2901 = vmatpush1.msra.mxu0 %v2450
    %2902 = vmatprep.subr.mxu0 0.0
    %2903 = vmatpush1.msra.mxu0 %v2447
    %2904 = vmatprep.subr.mxu0 0.0
    %2905 = vmatpush1.msra.mxu0 %v2444
    %2906 = vmatprep.subr.mxu0 0.0
    %2907 = vmatpush1.msra.mxu0 %v2441
    %2908 = vmatprep.subr.mxu0 0.0
    %2909 = vmatpush1.msra.mxu0 %v2438
    %2910 = vmatprep.subr.mxu0 0.0
    %2911 = vmatpush1.msra.mxu0 %v2435
    %2912 = vmatprep.subr.mxu0 0.0
    %2913 = vmatpush1.msra.mxu0 %v2432
    %2914 = vmatprep.subr.mxu0 0.0
    %2915 = vmatpush1.msra.mxu0 %v2429
    %2916 = vmatprep.subr.mxu0 0.0
    %2917 = vmatpush1.msra.mxu0 %v2426
    %2918 = vmatprep.subr.mxu0 0.0
    %2919 = vmatpush1.msra.mxu0 %v2423
    %2920 = vmatprep.subr.mxu0 0.0
    %2921 = vmatpush1.msra.mxu0 %v2420
    %2922 = vmatprep.subr.mxu0 0.0
    %2923 = vmatpush1.msra.mxu0 %v2417
    %2924 = vmatprep.subr.mxu0 0.0
    %2925 = vmatpush1.msra.mxu0 %v2414
    %2926 = vmatprep.subr.mxu0 0.0
    %2927 = vmatpush1.msra.mxu0 %v2411
    %2928 = vmatprep.subr.mxu0 0.0
    %2929 = vmatpush2.msra.mxu0 %v2504
    %2930 = vmatprep.subr.mxu0 0.0
    %2931 = vmatpush2.msra.mxu0 %v2501
    %2932 = vmatprep.subr.mxu0 0.0
    %2933 = vmatpush2.msra.mxu0 %v2498
    %2934 = vmatprep.subr.mxu0 0.0
    %2935 = vmatpush2.msra.mxu0 %v2495
    %2936 = vmatprep.subr.mxu0 0.0
    %2937 = vmatpush2.msra.mxu0 %v2492
    %2938 = vmatprep.subr.mxu0 0.0
    %2939 = vmatpush2.msra.mxu0 %v2489
    %2940 = vmatprep.subr.mxu0 0.0
    %2941 = vmatpush2.msra.mxu0 %v2486
    %2942 = vmatprep.subr.mxu0 0.0
    %2943 = vmatpush2.msra.mxu0 %v2483
    %2944 = vmatprep.subr.mxu0 0.0
    %2945 = vmatpush2.msra.mxu0 %v2480
    %2946 = vmatprep.subr.mxu0 0.0
    %2947 = vmatpush2.msra.mxu0 %v2477
    %2948 = vmatprep.subr.mxu0 0.0
    %2949 = vmatpush2.msra.mxu0 %v2474
    %2950 = vmatprep.subr.mxu0 0.0
    %2951 = vmatpush2.msra.mxu0 %v2471
    %2952 = vmatprep.subr.mxu0 0.0
    %2953 = vmatpush2.msra.mxu0 %v2468
    %2954 = vmatprep.subr.mxu0 0.0
    %2955 = vmatpush2.msra.mxu0 %v2465
    %2956 = vmatprep.subr.mxu0 0.0
    %2957 = vmatpush2.msra.mxu0 %v2462
    %2958 = vmatprep.subr.mxu0 0.0
    %2959 = vmatpush2.msra.mxu0 %v2459
    %2960 = vmatprep.mubr.f32.mxu0 %v2231
    %2961 = vmatmul.mubr.f32.gmra.mxu0 %v2229
    %v2962 = vpop.f32.mrf.mxu0
    %v2963 = vadd.f32 0.0, %v2962
    %v2964 = vpop.f32.mrf.mxu0
    %2965 = vmatprep.mubr.f32.mxu0 %v2237
    %2966 = vmatmul.mubr.f32.gmra.mxu0 %v2235
    %v2967 = vpop.f32.mrf.mxu0
    %v2968 = vadd.f32 0.0, %v2967
    %v2969 = vpop.f32.mrf.mxu0
    %2970 = vmatprep.mubr.f32.mxu0 %v2243
    %2971 = vmatmul.mubr.f32.gmra.mxu0 %v2241
    %v2972 = vpop.f32.mrf.mxu0
    %v2973 = vadd.f32 0.0, %v2972
    %v2974 = vpop.f32.mrf.mxu0
    %2975 = vdwg.mxu0
    %2976 = vmatprep.subr.mxu0 0.0
    %2977 = vmatpush1.msra.mxu0 %v2552
    %2978 = vmatprep.subr.mxu0 0.0
    %2979 = vmatpush1.msra.mxu0 %v2549
    %2980 = vmatprep.subr.mxu0 0.0
    %2981 = vmatpush1.msra.mxu0 %v2546
    %2982 = vmatprep.subr.mxu0 0.0
    %2983 = vmatpush1.msra.mxu0 %v2543
    %2984 = vmatprep.subr.mxu0 0.0
    %2985 = vmatpush1.msra.mxu0 %v2540
    %2986 = vmatprep.subr.mxu0 0.0
    %2987 = vmatpush1.msra.mxu0 %v2537
    %2988 = vmatprep.subr.mxu0 0.0
    %2989 = vmatpush1.msra.mxu0 %v2534
    %2990 = vmatprep.subr.mxu0 0.0
    %2991 = vmatpush1.msra.mxu0 %v2531
    %2992 = vmatprep.subr.mxu0 0.0
    %2993 = vmatpush1.msra.mxu0 %v2528
    %2994 = vmatprep.subr.mxu0 0.0
    %2995 = vmatpush1.msra.mxu0 %v2525
    %2996 = vmatprep.subr.mxu0 0.0
    %2997 = vmatpush1.msra.mxu0 %v2522
    %2998 = vmatprep.subr.mxu0 0.0
    %2999 = vmatpush1.msra.mxu0 %v2519
    %3000 = vmatprep.subr.mxu0 0.0
    %3001 = vmatpush1.msra.mxu0 %v2516
    %3002 = vmatprep.subr.mxu0 0.0
    %3003 = vmatpush1.msra.mxu0 %v2513
    %3004 = vmatprep.subr.mxu0 0.0
    %3005 = vmatpush1.msra.mxu0 %v2510
    %3006 = vmatprep.subr.mxu0 0.0
    %3007 = vmatpush1.msra.mxu0 %v2507
    %3008 = vmatprep.subr.mxu0 0.0
    %3009 = vmatpush2.msra.mxu0 %v2600
    %3010 = vmatprep.subr.mxu0 0.0
    %3011 = vmatpush2.msra.mxu0 %v2597
    %3012 = vmatprep.subr.mxu0 0.0
    %3013 = vmatpush2.msra.mxu0 %v2594
    %3014 = vmatprep.subr.mxu0 0.0
    %3015 = vmatpush2.msra.mxu0 %v2591
    %3016 = vmatprep.subr.mxu0 0.0
    %3017 = vmatpush2.msra.mxu0 %v2588
    %3018 = vmatprep.subr.mxu0 0.0
    %3019 = vmatpush2.msra.mxu0 %v2585
    %3020 = vmatprep.subr.mxu0 0.0
    %3021 = vmatpush2.msra.mxu0 %v2582
    %3022 = vmatprep.subr.mxu0 0.0
    %3023 = vmatpush2.msra.mxu0 %v2579
    %3024 = vmatprep.subr.mxu0 0.0
    %3025 = vmatpush2.msra.mxu0 %v2576
    %3026 = vmatprep.subr.mxu0 0.0
    %3027 = vmatpush2.msra.mxu0 %v2573
    %3028 = vmatprep.subr.mxu0 0.0
    %3029 = vmatpush2.msra.mxu0 %v2570
    %3030 = vmatprep.subr.mxu0 0.0
    %3031 = vmatpush2.msra.mxu0 %v2567
    %3032 = vmatprep.subr.mxu0 0.0
    %3033 = vmatpush2.msra.mxu0 %v2564
    %3034 = vmatprep.subr.mxu0 0.0
    %3035 = vmatpush2.msra.mxu0 %v2561
    %3036 = vmatprep.subr.mxu0 0.0
    %3037 = vmatpush2.msra.mxu0 %v2558
    %3038 = vmatprep.subr.mxu0 0.0
    %3039 = vmatpush2.msra.mxu0 %v2555
    %3040 = vmatprep.mubr.f32.mxu0 %v2314
    %3041 = vmatmul.mubr.f32.gmra.mxu0 %v2312
    %v3042 = vpop.f32.mrf.mxu0
    %v3043 = vadd.f32 %v2963, %v3042
    %v3044 = vpop.f32.mrf.mxu0
    %3045 = vmatprep.mubr.f32.mxu0 %v2320
    %3046 = vmatmul.mubr.f32.gmra.mxu0 %v2318
    %v3047 = vpop.f32.mrf.mxu0
    %v3048 = vadd.f32 %v2968, %v3047
    %v3049 = vpop.f32.mrf.mxu0
    %3050 = vmatprep.mubr.f32.mxu0 %v2326
    %3051 = vmatmul.mubr.f32.gmra.mxu0 %v2324
    %v3052 = vpop.f32.mrf.mxu0
    %v3053 = vadd.f32 %v2973, %v3052
    %v3054 = vpop.f32.mrf.mxu0
    %3055 = vdwg.mxu0
    %3056 = vmatprep.subr.mxu0 0.0
    %3057 = vmatpush1.msra.mxu0 0.0
    %3058 = vmatprep.subr.mxu0 0.0
    %3059 = vmatpush1.msra.mxu0 0.0
    %3060 = vmatprep.subr.mxu0 0.0
    %3061 = vmatpush1.msra.mxu0 0.0
    %3062 = vmatprep.subr.mxu0 0.0
    %3063 = vmatpush1.msra.mxu0 0.0
    %3064 = vmatprep.subr.mxu0 0.0
    %3065 = vmatpush1.msra.mxu0 %v2636
    %3066 = vmatprep.subr.mxu0 0.0
    %3067 = vmatpush1.msra.mxu0 %v2633
    %3068 = vmatprep.subr.mxu0 0.0
    %3069 = vmatpush1.msra.mxu0 %v2630
    %3070 = vmatprep.subr.mxu0 0.0
    %3071 = vmatpush1.msra.mxu0 %v2627
    %3072 = vmatprep.subr.mxu0 0.0
    %3073 = vmatpush1.msra.mxu0 %v2624
    %3074 = vmatprep.subr.mxu0 0.0
    %3075 = vmatpush1.msra.mxu0 %v2621
    %3076 = vmatprep.subr.mxu0 0.0
    %3077 = vmatpush1.msra.mxu0 %v2618
    %3078 = vmatprep.subr.mxu0 0.0
    %3079 = vmatpush1.msra.mxu0 %v2615
    %3080 = vmatprep.subr.mxu0 0.0
    %3081 = vmatpush1.msra.mxu0 %v2612
    %3082 = vmatprep.subr.mxu0 0.0
    %3083 = vmatpush1.msra.mxu0 %v2609
    %3084 = vmatprep.subr.mxu0 0.0
    %3085 = vmatpush1.msra.mxu0 %v2606
    %3086 = vmatprep.subr.mxu0 0.0
    %3087 = vmatpush1.msra.mxu0 %v2603
    %3088 = vmatprep.subr.mxu0 0.0
    %3089 = vmatpush2.msra.mxu0 0.0
    %3090 = vmatprep.subr.mxu0 0.0
    %3091 = vmatpush2.msra.mxu0 0.0
    %3092 = vmatprep.subr.mxu0 0.0
    %3093 = vmatpush2.msra.mxu0 0.0
    %3094 = vmatprep.subr.mxu0 0.0
    %3095 = vmatpush2.msra.mxu0 0.0
    %3096 = vmatprep.subr.mxu0 0.0
    %3097 = vmatpush2.msra.mxu0 0.0
    %3098 = vmatprep.subr.mxu0 0.0
    %3099 = vmatpush2.msra.mxu0 0.0
    %3100 = vmatprep.subr.mxu0 0.0
    %3101 = vmatpush2.msra.mxu0 0.0
    %3102 = vmatprep.subr.mxu0 0.0
    %3103 = vmatpush2.msra.mxu0 0.0
    %3104 = vmatprep.subr.mxu0 0.0
    %3105 = vmatpush2.msra.mxu0 0.0
    %3106 = vmatprep.subr.mxu0 0.0
    %3107 = vmatpush2.msra.mxu0 0.0
    %3108 = vmatprep.subr.mxu0 0.0
    %3109 = vmatpush2.msra.mxu0 0.0
    %3110 = vmatprep.subr.mxu0 0.0
    %3111 = vmatpush2.msra.mxu0 0.0
    %3112 = vmatprep.subr.mxu0 0.0
    %3113 = vmatpush2.msra.mxu0 0.0
    %3114 = vmatprep.subr.mxu0 0.0
    %3115 = vmatpush2.msra.mxu0 0.0
    %3116 = vmatprep.subr.mxu0 0.0
    %3117 = vmatpush2.msra.mxu0 0.0
    %3118 = vmatprep.subr.mxu0 0.0
    %3119 = vmatpush2.msra.mxu0 0.0
    %3120 = vmatprep.mubr.f32.mxu0 0.0
    %3121 = vmatmul.mubr.f32.gmra.mxu0 %v2639
    %v3122 = vpop.f32.mrf.mxu0
    %v3123 = vadd.f32 %v3043, %v3122
    %v3124 = vpop.f32.mrf.mxu0
    %3125 = vmatprep.mubr.f32.mxu0 0.0
    %3126 = vmatmul.mubr.f32.gmra.mxu0 %v2642
    %v3127 = vpop.f32.mrf.mxu0
    %v3128 = vadd.f32 %v3048, %v3127
    %v3129 = vpop.f32.mrf.mxu0
    %3130 = vmatprep.mubr.f32.mxu0 0.0
    %3131 = vmatmul.mubr.f32.gmra.mxu0 %v2645
    %v3132 = vpop.f32.mrf.mxu0
    %v3133 = vadd.f32 %v3053, %v3132
    %v3134 = vpop.f32.mrf.mxu0
    %3135 = vdwg.mxu0
    %v3137 = vsel %vm2637, %v1908, 0
    %v3140 = vsel %vm2637, %v1913, 0
    %v3143 = vsel %vm2637, %v1918, 0
    %3145 = vmatprep.subr.mxu0 %v1967
    %3146 = vmatpush1.msra.mxu0 %v1966
    %3147 = vmatprep.subr.mxu0 %v1964
    %3148 = vmatpush1.msra.mxu0 %v1963
    %3149 = vmatprep.subr.mxu0 %v1961
    %3150 = vmatpush1.msra.mxu0 %v1960
    %3151 = vmatprep.subr.mxu0 %v1958
    %3152 = vmatpush1.msra.mxu0 %v1957
    %3153 = vmatprep.subr.mxu0 %v1955
    %3154 = vmatpush1.msra.mxu0 %v1954
    %3155 = vmatprep.subr.mxu0 %v1952
    %3156 = vmatpush1.msra.mxu0 %v1951
    %3157 = vmatprep.subr.mxu0 %v1949
    %3158 = vmatpush1.msra.mxu0 %v1948
    %3159 = vmatprep.subr.mxu0 %v1946
    %3160 = vmatpush1.msra.mxu0 %v1945
    %3161 = vmatprep.subr.mxu0 %v1943
    %3162 = vmatpush1.msra.mxu0 %v1942
    %3163 = vmatprep.subr.mxu0 %v1940
    %3164 = vmatpush1.msra.mxu0 %v1939
    %3165 = vmatprep.subr.mxu0 %v1937
    %3166 = vmatpush1.msra.mxu0 %v1936
    %3167 = vmatprep.subr.mxu0 %v1934
    %3168 = vmatpush1.msra.mxu0 %v1933
    %3169 = vmatprep.subr.mxu0 %v1931
    %3170 = vmatpush1.msra.mxu0 %v1930
    %3171 = vmatprep.subr.mxu0 %v1928
    %3172 = vmatpush1.msra.mxu0 %v1927
    %3173 = vmatprep.subr.mxu0 %v1925
    %3174 = vmatpush1.msra.mxu0 %v1924
    %3175 = vmatprep.subr.mxu0 %v1922
    %3176 = vmatpush1.msra.mxu0 %v1921
    %3177 = vmatprep.subr.mxu0 %v2015
    %3178 = vmatpush2.msra.mxu0 %v2014
    %3179 = vmatprep.subr.mxu0 %v2012
    %3180 = vmatpush2.msra.mxu0 %v2011
    %3181 = vmatprep.subr.mxu0 %v2009
    %3182 = vmatpush2.msra.mxu0 %v2008
    %3183 = vmatprep.subr.mxu0 %v2006
    %3184 = vmatpush2.msra.mxu0 %v2005
    %3185 = vmatprep.subr.mxu0 %v2003
    %3186 = vmatpush2.msra.mxu0 %v2002
    %3187 = vmatprep.subr.mxu0 %v2000
    %3188 = vmatpush2.msra.mxu0 %v1999
    %3189 = vmatprep.subr.mxu0 %v1997
    %3190 = vmatpush2.msra.mxu0 %v1996
    %3191 = vmatprep.subr.mxu0 %v1994
    %3192 = vmatpush2.msra.mxu0 %v1993
    %3193 = vmatprep.subr.mxu0 %v1991
    %3194 = vmatpush2.msra.mxu0 %v1990
    %3195 = vmatprep.subr.mxu0 %v1988
    %3196 = vmatpush2.msra.mxu0 %v1987
    %3197 = vmatprep.subr.mxu0 %v1985
    %3198 = vmatpush2.msra.mxu0 %v1984
    %3199 = vmatprep.subr.mxu0 %v1982
    %3200 = vmatpush2.msra.mxu0 %v1981
    %3201 = vmatprep.subr.mxu0 %v1979
    %3202 = vmatpush2.msra.mxu0 %v1978
    %3203 = vmatprep.subr.mxu0 %v1976
    %3204 = vmatpush2.msra.mxu0 %v1975
    %3205 = vmatprep.subr.mxu0 %v1973
    %3206 = vmatpush2.msra.mxu0 %v1972
    %3207 = vmatprep.subr.mxu0 %v1970
    %3208 = vmatpush2.msra.mxu0 %v1969
    %3209 = vmatprep.mubr.f32.mxu0 %v1744
    %3210 = vmatmul.mubr.f32.gmra.mxu0 %v1742
    %v3211 = vpop.f32.mrf.mxu0
    %v3212 = vadd.f32 %v2880, %v3211
    %v3213 = vpop.f32.mrf.mxu0
    %v3214 = vadd.f32 %v2882, %v3213
    %3215 = vmatprep.mubr.f32.mxu0 %v1750
    %3216 = vmatmul.mubr.f32.gmra.mxu0 %v1748
    %v3217 = vpop.f32.mrf.mxu0
    %v3218 = vadd.f32 %v2886, %v3217
    %v3219 = vpop.f32.mrf.mxu0
    %v3220 = vadd.f32 %v2888, %v3219
    %3221 = vmatprep.mubr.f32.mxu0 %v1756
    %3222 = vmatmul.mubr.f32.gmra.mxu0 %v1754
    %v3223 = vpop.f32.mrf.mxu0
    %v3224 = vadd.f32 %v2892, %v3223
    %v3225 = vpop.f32.mrf.mxu0
    %v3226 = vadd.f32 %v2894, %v3225
    %3227 = vdwg.mxu0
    %3228 = vmatprep.subr.mxu0 %v2063
    %3229 = vmatpush1.msra.mxu0 %v2062
    %3230 = vmatprep.subr.mxu0 %v2060
    %3231 = vmatpush1.msra.mxu0 %v2059
    %3232 = vmatprep.subr.mxu0 %v2057
    %3233 = vmatpush1.msra.mxu0 %v2056
    %3234 = vmatprep.subr.mxu0 %v2054
    %3235 = vmatpush1.msra.mxu0 %v2053
    %3236 = vmatprep.subr.mxu0 %v2051
    %3237 = vmatpush1.msra.mxu0 %v2050
    %3238 = vmatprep.subr.mxu0 %v2048
    %3239 = vmatpush1.msra.mxu0 %v2047
    %3240 = vmatprep.subr.mxu0 %v2045
    %3241 = vmatpush1.msra.mxu0 %v2044
    %3242 = vmatprep.subr.mxu0 %v2042
    %3243 = vmatpush1.msra.mxu0 %v2041
    %3244 = vmatprep.subr.mxu0 %v2039
    %3245 = vmatpush1.msra.mxu0 %v2038
    %3246 = vmatprep.subr.mxu0 %v2036
    %3247 = vmatpush1.msra.mxu0 %v2035
    %3248 = vmatprep.subr.mxu0 %v2033
    %3249 = vmatpush1.msra.mxu0 %v2032
    %3250 = vmatprep.subr.mxu0 %v2030
    %3251 = vmatpush1.msra.mxu0 %v2029
    %3252 = vmatprep.subr.mxu0 %v2027
    %3253 = vmatpush1.msra.mxu0 %v2026
    %3254 = vmatprep.subr.mxu0 %v2024
    %3255 = vmatpush1.msra.mxu0 %v2023
    %3256 = vmatprep.subr.mxu0 %v2021
    %3257 = vmatpush1.msra.mxu0 %v2020
    %3258 = vmatprep.subr.mxu0 %v2018
    %3259 = vmatpush1.msra.mxu0 %v2017
    %3260 = vmatprep.subr.mxu0 %v2111
    %3261 = vmatpush2.msra.mxu0 %v2110
    %3262 = vmatprep.subr.mxu0 %v2108
    %3263 = vmatpush2.msra.mxu0 %v2107
    %3264 = vmatprep.subr.mxu0 %v2105
    %3265 = vmatpush2.msra.mxu0 %v2104
    %3266 = vmatprep.subr.mxu0 %v2102
    %3267 = vmatpush2.msra.mxu0 %v2101
    %3268 = vmatprep.subr.mxu0 %v2099
    %3269 = vmatpush2.msra.mxu0 %v2098
    %3270 = vmatprep.subr.mxu0 %v2096
    %3271 = vmatpush2.msra.mxu0 %v2095
    %3272 = vmatprep.subr.mxu0 %v2093
    %3273 = vmatpush2.msra.mxu0 %v2092
    %3274 = vmatprep.subr.mxu0 %v2090
    %3275 = vmatpush2.msra.mxu0 %v2089
    %3276 = vmatprep.subr.mxu0 %v2087
    %3277 = vmatpush2.msra.mxu0 %v2086
    %3278 = vmatprep.subr.mxu0 %v2084
    %3279 = vmatpush2.msra.mxu0 %v2083
    %3280 = vmatprep.subr.mxu0 %v2081
    %3281 = vmatpush2.msra.mxu0 %v2080
    %3282 = vmatprep.subr.mxu0 %v2078
    %3283 = vmatpush2.msra.mxu0 %v2077
    %3284 = vmatprep.subr.mxu0 %v2075
    %3285 = vmatpush2.msra.mxu0 %v2074
    %3286 = vmatprep.subr.mxu0 %v2072
    %3287 = vmatpush2.msra.mxu0 %v2071
    %3288 = vmatprep.subr.mxu0 %v2069
    %3289 = vmatpush2.msra.mxu0 %v2068
    %3290 = vmatprep.subr.mxu0 %v2066
    %3291 = vmatpush2.msra.mxu0 %v2065
    %3292 = vmatprep.mubr.f32.mxu0 %v1827
    %3293 = vmatmul.mubr.f32.gmra.mxu0 %v1825
    %v3294 = vpop.f32.mrf.mxu0
    %v3295 = vadd.f32 %v3212, %v3294
    %v3296 = vpop.f32.mrf.mxu0
    %v3297 = vadd.f32 %v3214, %v3296
    %3298 = vmatprep.mubr.f32.mxu0 %v1833
    %3299 = vmatmul.mubr.f32.gmra.mxu0 %v1831
    %v3300 = vpop.f32.mrf.mxu0
    %v3301 = vadd.f32 %v3218, %v3300
    %v3302 = vpop.f32.mrf.mxu0
    %v3303 = vadd.f32 %v3220, %v3302
    %3304 = vmatprep.mubr.f32.mxu0 %v1839
    %3305 = vmatmul.mubr.f32.gmra.mxu0 %v1837
    %v3306 = vpop.f32.mrf.mxu0
    %v3307 = vadd.f32 %v3224, %v3306
    %v3308 = vpop.f32.mrf.mxu0
    %v3309 = vadd.f32 %v3226, %v3308
    %3310 = vdwg.mxu0
    %3311 = vmatprep.subr.mxu0 0.0
    %3312 = vmatpush1.msra.mxu0 0.0
    %3313 = vmatprep.subr.mxu0 0.0
    %3314 = vmatpush1.msra.mxu0 0.0
    %3315 = vmatprep.subr.mxu0 0.0
    %3316 = vmatpush1.msra.mxu0 0.0
    %3317 = vmatprep.subr.mxu0 0.0
    %3318 = vmatpush1.msra.mxu0 0.0
    %3319 = vmatprep.subr.mxu0 %v2147
    %3320 = vmatpush1.msra.mxu0 %v2146
    %3321 = vmatprep.subr.mxu0 %v2144
    %3322 = vmatpush1.msra.mxu0 %v2143
    %3323 = vmatprep.subr.mxu0 %v2141
    %3324 = vmatpush1.msra.mxu0 %v2140
    %3325 = vmatprep.subr.mxu0 %v2138
    %3326 = vmatpush1.msra.mxu0 %v2137
    %3327 = vmatprep.subr.mxu0 %v2135
    %3328 = vmatpush1.msra.mxu0 %v2134
    %3329 = vmatprep.subr.mxu0 %v2132
    %3330 = vmatpush1.msra.mxu0 %v2131
    %3331 = vmatprep.subr.mxu0 %v2129
    %3332 = vmatpush1.msra.mxu0 %v2128
    %3333 = vmatprep.subr.mxu0 %v2126
    %3334 = vmatpush1.msra.mxu0 %v2125
    %3335 = vmatprep.subr.mxu0 %v2123
    %3336 = vmatpush1.msra.mxu0 %v2122
    %3337 = vmatprep.subr.mxu0 %v2120
    %3338 = vmatpush1.msra.mxu0 %v2119
    %3339 = vmatprep.subr.mxu0 %v2117
    %3340 = vmatpush1.msra.mxu0 %v2116
    %3341 = vmatprep.subr.mxu0 %v2114
    %3342 = vmatpush1.msra.mxu0 %v2113
    %3343 = vmatprep.subr.mxu0 0.0
    %3344 = vmatpush2.msra.mxu0 0.0
    %3345 = vmatprep.subr.mxu0 0.0
    %3346 = vmatpush2.msra.mxu0 0.0
    %3347 = vmatprep.subr.mxu0 0.0
    %3348 = vmatpush2.msra.mxu0 0.0
    %3349 = vmatprep.subr.mxu0 0.0
    %3350 = vmatpush2.msra.mxu0 0.0
    %3351 = vmatprep.subr.mxu0 0.0
    %3352 = vmatpush2.msra.mxu0 0.0
    %3353 = vmatprep.subr.mxu0 0.0
    %3354 = vmatpush2.msra.mxu0 0.0
    %3355 = vmatprep.subr.mxu0 0.0
    %3356 = vmatpush2.msra.mxu0 0.0
    %3357 = vmatprep.subr.mxu0 0.0
    %3358 = vmatpush2.msra.mxu0 0.0
    %3359 = vmatprep.subr.mxu0 0.0
    %3360 = vmatpush2.msra.mxu0 0.0
    %3361 = vmatprep.subr.mxu0 0.0
    %3362 = vmatpush2.msra.mxu0 0.0
    %3363 = vmatprep.subr.mxu0 0.0
    %3364 = vmatpush2.msra.mxu0 0.0
    %3365 = vmatprep.subr.mxu0 0.0
    %3366 = vmatpush2.msra.mxu0 0.0
    %3367 = vmatprep.subr.mxu0 0.0
    %3368 = vmatpush2.msra.mxu0 0.0
    %3369 = vmatprep.subr.mxu0 0.0
    %3370 = vmatpush2.msra.mxu0 0.0
    %3371 = vmatprep.subr.mxu0 0.0
    %3372 = vmatpush2.msra.mxu0 0.0
    %3373 = vmatprep.subr.mxu0 0.0
    %3374 = vmatpush2.msra.mxu0 0.0
    %3375 = vmatprep.mubr.f32.mxu0 0.0
    %3376 = vmatmul.mubr.f32.gmra.mxu0 %v3137
    %v3377 = vpop.f32.mrf.mxu0
    %v3378 = vadd.f32 %v3295, %v3377
    %v3379 = vpop.f32.mrf.mxu0
    %v3380 = vadd.f32 %v3297, %v3379
    %3381 = vmatprep.mubr.f32.mxu0 0.0
    %3382 = vmatmul.mubr.f32.gmra.mxu0 %v3140
    %v3383 = vpop.f32.mrf.mxu0
    %v3384 = vadd.f32 %v3301, %v3383
    %v3385 = vpop.f32.mrf.mxu0
    %v3386 = vadd.f32 %v3303, %v3385
    %3387 = vmatprep.mubr.f32.mxu0 0.0
    %3388 = vmatmul.mubr.f32.gmra.mxu0 %v3143
    %v3389 = vpop.f32.mrf.mxu0
    %v3390 = vadd.f32 %v3307, %v3389
    %v3391 = vpop.f32.mrf.mxu0
    %v3392 = vadd.f32 %v3309, %v3391
    %3393 = vdwg.mxu0
    %3394 = vmatprep.subr.mxu0 0.0
    %3395 = vmatpush1.msra.mxu0 %v1968
    %3396 = vmatprep.subr.mxu0 0.0
    %3397 = vmatpush1.msra.mxu0 %v1965
    %3398 = vmatprep.subr.mxu0 0.0
    %3399 = vmatpush1.msra.mxu0 %v1962
    %3400 = vmatprep.subr.mxu0 0.0
    %3401 = vmatpush1.msra.mxu0 %v1959
    %3402 = vmatprep.subr.mxu0 0.0
    %3403 = vmatpush1.msra.mxu0 %v1956
    %3404 = vmatprep.subr.mxu0 0.0
    %3405 = vmatpush1.msra.mxu0 %v1953
    %3406 = vmatprep.subr.mxu0 0.0
    %3407 = vmatpush1.msra.mxu0 %v1950
    %3408 = vmatprep.subr.mxu0 0.0
    %3409 = vmatpush1.msra.mxu0 %v1947
    %3410 = vmatprep.subr.mxu0 0.0
    %3411 = vmatpush1.msra.mxu0 %v1944
    %3412 = vmatprep.subr.mxu0 0.0
    %3413 = vmatpush1.msra.mxu0 %v1941
    %3414 = vmatprep.subr.mxu0 0.0
    %3415 = vmatpush1.msra.mxu0 %v1938
    %3416 = vmatprep.subr.mxu0 0.0
    %3417 = vmatpush1.msra.mxu0 %v1935
    %3418 = vmatprep.subr.mxu0 0.0
    %3419 = vmatpush1.msra.mxu0 %v1932
    %3420 = vmatprep.subr.mxu0 0.0
    %3421 = vmatpush1.msra.mxu0 %v1929
    %3422 = vmatprep.subr.mxu0 0.0
    %3423 = vmatpush1.msra.mxu0 %v1926
    %3424 = vmatprep.subr.mxu0 0.0
    %3425 = vmatpush1.msra.mxu0 %v1923
    %3426 = vmatprep.subr.mxu0 0.0
    %3427 = vmatpush2.msra.mxu0 %v2016
    %3428 = vmatprep.subr.mxu0 0.0
    %3429 = vmatpush2.msra.mxu0 %v2013
    %3430 = vmatprep.subr.mxu0 0.0
    %3431 = vmatpush2.msra.mxu0 %v2010
    %3432 = vmatprep.subr.mxu0 0.0
    %3433 = vmatpush2.msra.mxu0 %v2007
    %3434 = vmatprep.subr.mxu0 0.0
    %3435 = vmatpush2.msra.mxu0 %v2004
    %3436 = vmatprep.subr.mxu0 0.0
    %3437 = vmatpush2.msra.mxu0 %v2001
    %3438 = vmatprep.subr.mxu0 0.0
    %3439 = vmatpush2.msra.mxu0 %v1998
    %3440 = vmatprep.subr.mxu0 0.0
    %3441 = vmatpush2.msra.mxu0 %v1995
    %3442 = vmatprep.subr.mxu0 0.0
    %3443 = vmatpush2.msra.mxu0 %v1992
    %3444 = vmatprep.subr.mxu0 0.0
    %3445 = vmatpush2.msra.mxu0 %v1989
    %3446 = vmatprep.subr.mxu0 0.0
    %3447 = vmatpush2.msra.mxu0 %v1986
    %3448 = vmatprep.subr.mxu0 0.0
    %3449 = vmatpush2.msra.mxu0 %v1983
    %3450 = vmatprep.subr.mxu0 0.0
    %3451 = vmatpush2.msra.mxu0 %v1980
    %3452 = vmatprep.subr.mxu0 0.0
    %3453 = vmatpush2.msra.mxu0 %v1977
    %3454 = vmatprep.subr.mxu0 0.0
    %3455 = vmatpush2.msra.mxu0 %v1974
    %3456 = vmatprep.subr.mxu0 0.0
    %3457 = vmatpush2.msra.mxu0 %v1971
    %3458 = vmatprep.mubr.f32.mxu0 %v1744
    %3459 = vmatmul.mubr.f32.gmra.mxu0 %v1742
    %v3460 = vpop.f32.mrf.mxu0
    %v3461 = vadd.f32 %v3123, %v3460
    %v3462 = vpop.f32.mrf.mxu0
    %3463 = vmatprep.mubr.f32.mxu0 %v1750
    %3464 = vmatmul.mubr.f32.gmra.mxu0 %v1748
    %v3465 = vpop.f32.mrf.mxu0
    %v3466 = vadd.f32 %v3128, %v3465
    %v3467 = vpop.f32.mrf.mxu0
    %3468 = vmatprep.mubr.f32.mxu0 %v1756
    %3469 = vmatmul.mubr.f32.gmra.mxu0 %v1754
    %v3470 = vpop.f32.mrf.mxu0
    %v3471 = vadd.f32 %v3133, %v3470
    %v3472 = vpop.f32.mrf.mxu0
    %3473 = vdwg.mxu0
    %3474 = vmatprep.subr.mxu0 0.0
    %3475 = vmatpush1.msra.mxu0 %v2064
    %3476 = vmatprep.subr.mxu0 0.0
    %3477 = vmatpush1.msra.mxu0 %v2061
    %3478 = vmatprep.subr.mxu0 0.0
    %3479 = vmatpush1.msra.mxu0 %v2058
    %3480 = vmatprep.subr.mxu0 0.0
    %3481 = vmatpush1.msra.mxu0 %v2055
    %3482 = vmatprep.subr.mxu0 0.0
    %3483 = vmatpush1.msra.mxu0 %v2052
    %3484 = vmatprep.subr.mxu0 0.0
    %3485 = vmatpush1.msra.mxu0 %v2049
    %3486 = vmatprep.subr.mxu0 0.0
    %3487 = vmatpush1.msra.mxu0 %v2046
    %3488 = vmatprep.subr.mxu0 0.0
    %3489 = vmatpush1.msra.mxu0 %v2043
    %3490 = vmatprep.subr.mxu0 0.0
    %3491 = vmatpush1.msra.mxu0 %v2040
    %3492 = vmatprep.subr.mxu0 0.0
    %3493 = vmatpush1.msra.mxu0 %v2037
    %3494 = vmatprep.subr.mxu0 0.0
    %3495 = vmatpush1.msra.mxu0 %v2034
    %3496 = vmatprep.subr.mxu0 0.0
    %3497 = vmatpush1.msra.mxu0 %v2031
    %3498 = vmatprep.subr.mxu0 0.0
    %3499 = vmatpush1.msra.mxu0 %v2028
    %3500 = vmatprep.subr.mxu0 0.0
    %3501 = vmatpush1.msra.mxu0 %v2025
    %3502 = vmatprep.subr.mxu0 0.0
    %3503 = vmatpush1.msra.mxu0 %v2022
    %3504 = vmatprep.subr.mxu0 0.0
    %3505 = vmatpush1.msra.mxu0 %v2019
    %3506 = vmatprep.subr.mxu0 0.0
    %3507 = vmatpush2.msra.mxu0 %v2112
    %3508 = vmatprep.subr.mxu0 0.0
    %3509 = vmatpush2.msra.mxu0 %v2109
    %3510 = vmatprep.subr.mxu0 0.0
    %3511 = vmatpush2.msra.mxu0 %v2106
    %3512 = vmatprep.subr.mxu0 0.0
    %3513 = vmatpush2.msra.mxu0 %v2103
    %3514 = vmatprep.subr.mxu0 0.0
    %3515 = vmatpush2.msra.mxu0 %v2100
    %3516 = vmatprep.subr.mxu0 0.0
    %3517 = vmatpush2.msra.mxu0 %v2097
    %3518 = vmatprep.subr.mxu0 0.0
    %3519 = vmatpush2.msra.mxu0 %v2094
    %3520 = vmatprep.subr.mxu0 0.0
    %3521 = vmatpush2.msra.mxu0 %v2091
    %3522 = vmatprep.subr.mxu0 0.0
    %3523 = vmatpush2.msra.mxu0 %v2088
    %3524 = vmatprep.subr.mxu0 0.0
    %3525 = vmatpush2.msra.mxu0 %v2085
    %3526 = vmatprep.subr.mxu0 0.0
    %3527 = vmatpush2.msra.mxu0 %v2082
    %3528 = vmatprep.subr.mxu0 0.0
    %3529 = vmatpush2.msra.mxu0 %v2079
    %3530 = vmatprep.subr.mxu0 0.0
    %3531 = vmatpush2.msra.mxu0 %v2076
    %3532 = vmatprep.subr.mxu0 0.0
    %3533 = vmatpush2.msra.mxu0 %v2073
    %3534 = vmatprep.subr.mxu0 0.0
    %3535 = vmatpush2.msra.mxu0 %v2070
    %3536 = vmatprep.subr.mxu0 0.0
    %3537 = vmatpush2.msra.mxu0 %v2067
    %3538 = vmatprep.mubr.f32.mxu0 %v1827
    %3539 = vmatmul.mubr.f32.gmra.mxu0 %v1825
    %v3540 = vpop.f32.mrf.mxu0
    %v3541 = vadd.f32 %v3461, %v3540
    %v3542 = vpop.f32.mrf.mxu0
    %3543 = vmatprep.mubr.f32.mxu0 %v1833
    %3544 = vmatmul.mubr.f32.gmra.mxu0 %v1831
    %v3545 = vpop.f32.mrf.mxu0
    %v3546 = vadd.f32 %v3466, %v3545
    %v3547 = vpop.f32.mrf.mxu0
    %3548 = vmatprep.mubr.f32.mxu0 %v1839
    %3549 = vmatmul.mubr.f32.gmra.mxu0 %v1837
    %v3550 = vpop.f32.mrf.mxu0
    %v3551 = vadd.f32 %v3471, %v3550
    %v3552 = vpop.f32.mrf.mxu0
    %3553 = vdwg.mxu0
    %3554 = vmatprep.subr.mxu0 0.0
    %3555 = vmatpush1.msra.mxu0 0.0
    %3556 = vmatprep.subr.mxu0 0.0
    %3557 = vmatpush1.msra.mxu0 0.0
    %3558 = vmatprep.subr.mxu0 0.0
    %3559 = vmatpush1.msra.mxu0 0.0
    %3560 = vmatprep.subr.mxu0 0.0
    %3561 = vmatpush1.msra.mxu0 0.0
    %3562 = vmatprep.subr.mxu0 0.0
    %3563 = vmatpush1.msra.mxu0 %v2148
    %3564 = vmatprep.subr.mxu0 0.0
    %3565 = vmatpush1.msra.mxu0 %v2145
    %3566 = vmatprep.subr.mxu0 0.0
    %3567 = vmatpush1.msra.mxu0 %v2142
    %3568 = vmatprep.subr.mxu0 0.0
    %3569 = vmatpush1.msra.mxu0 %v2139
    %3570 = vmatprep.subr.mxu0 0.0
    %3571 = vmatpush1.msra.mxu0 %v2136
    %3572 = vmatprep.subr.mxu0 0.0
    %3573 = vmatpush1.msra.mxu0 %v2133
    %3574 = vmatprep.subr.mxu0 0.0
    %3575 = vmatpush1.msra.mxu0 %v2130
    %3576 = vmatprep.subr.mxu0 0.0
    %3577 = vmatpush1.msra.mxu0 %v2127
    %3578 = vmatprep.subr.mxu0 0.0
    %3579 = vmatpush1.msra.mxu0 %v2124
    %3580 = vmatprep.subr.mxu0 0.0
    %3581 = vmatpush1.msra.mxu0 %v2121
    %3582 = vmatprep.subr.mxu0 0.0
    %3583 = vmatpush1.msra.mxu0 %v2118
    %3584 = vmatprep.subr.mxu0 0.0
    %3585 = vmatpush1.msra.mxu0 %v2115
    %3586 = vmatprep.subr.mxu0 0.0
    %3587 = vmatpush2.msra.mxu0 0.0
    %3588 = vmatprep.subr.mxu0 0.0
    %3589 = vmatpush2.msra.mxu0 0.0
    %3590 = vmatprep.subr.mxu0 0.0
    %3591 = vmatpush2.msra.mxu0 0.0
    %3592 = vmatprep.subr.mxu0 0.0
    %3593 = vmatpush2.msra.mxu0 0.0
    %3594 = vmatprep.subr.mxu0 0.0
    %3595 = vmatpush2.msra.mxu0 0.0
    %3596 = vmatprep.subr.mxu0 0.0
    %3597 = vmatpush2.msra.mxu0 0.0
    %3598 = vmatprep.subr.mxu0 0.0
    %3599 = vmatpush2.msra.mxu0 0.0
    %3600 = vmatprep.subr.mxu0 0.0
    %3601 = vmatpush2.msra.mxu0 0.0
    %3602 = vmatprep.subr.mxu0 0.0
    %3603 = vmatpush2.msra.mxu0 0.0
    %3604 = vmatprep.subr.mxu0 0.0
    %3605 = vmatpush2.msra.mxu0 0.0
    %3606 = vmatprep.subr.mxu0 0.0
    %3607 = vmatpush2.msra.mxu0 0.0
    %3608 = vmatprep.subr.mxu0 0.0
    %3609 = vmatpush2.msra.mxu0 0.0
    %3610 = vmatprep.subr.mxu0 0.0
    %3611 = vmatpush2.msra.mxu0 0.0
    %3612 = vmatprep.subr.mxu0 0.0
    %3613 = vmatpush2.msra.mxu0 0.0
    %3614 = vmatprep.subr.mxu0 0.0
    %3615 = vmatpush2.msra.mxu0 0.0
    %3616 = vmatprep.subr.mxu0 0.0
    %3617 = vmatpush2.msra.mxu0 0.0
    %3618 = vmatprep.mubr.f32.mxu0 0.0
    %3619 = vmatmul.mubr.f32.gmra.mxu0 %v3137
    %v3620 = vpop.f32.mrf.mxu0
    %v3621 = vadd.f32 %v3541, %v3620
    %v3622 = vpop.f32.mrf.mxu0
    %3623 = vmatprep.mubr.f32.mxu0 0.0
    %3624 = vmatmul.mubr.f32.gmra.mxu0 %v3140
    %v3625 = vpop.f32.mrf.mxu0
    %v3626 = vadd.f32 %v3546, %v3625
    %v3627 = vpop.f32.mrf.mxu0
    %3628 = vmatprep.mubr.f32.mxu0 0.0
    %3629 = vmatmul.mubr.f32.gmra.mxu0 %v3143
    %v3630 = vpop.f32.mrf.mxu0
    %v3631 = vadd.f32 %v3551, %v3630
    %v3632 = vpop.f32.mrf.mxu0
    %3633 = vdwg.mxu0
    %s3634 = scalar_lea.vmem [#allocation8], 48
    %v3635 = vld [vmem:[%s3634] sm:$0xff]
    %v3636 = vld [vmem:[%s3634 + $0x8] sm:$0xff]
    %v3637 = vld [vmem:[%s3634 + $0x10] sm:$0x3]
    %v3639 = vsel %vm1649, %v3635, 0
    %v3642 = vsel %vm1649, %v3636, 0
    %v3645 = vsel %vm1649, %v3637, 0
    %3647 = vmatprep.subr.mxu0 0.0
    %3648 = vmatpush1.msra.mxu0 0.0
    %3649 = vmatprep.subr.mxu0 0.0
    %3650 = vmatpush1.msra.mxu0 0.0
    %3651 = vmatprep.subr.mxu0 0.0
    %3652 = vmatpush1.msra.mxu0 0.0
    %3653 = vmatprep.subr.mxu0 0.0
    %3654 = vmatpush1.msra.mxu0 0.0
    %3655 = vmatprep.subr.mxu0 0.0
    %3656 = vmatpush1.msra.mxu0 0.0
    %3657 = vmatprep.subr.mxu0 0.0
    %3658 = vmatpush1.msra.mxu0 0.0
    %3659 = vmatprep.subr.mxu0 0.0
    %3660 = vmatpush1.msra.mxu0 0.0
    %3661 = vmatprep.subr.mxu0 0.0
    %3662 = vmatpush1.msra.mxu0 0.0
    %3663 = vmatprep.subr.mxu0 0.0
    %3664 = vmatpush1.msra.mxu0 0.0
    %3665 = vmatprep.subr.mxu0 0.0
    %3666 = vmatpush1.msra.mxu0 0.0
    %3667 = vmatprep.subr.mxu0 0.0
    %3668 = vmatpush1.msra.mxu0 0.0
    %3669 = vmatprep.subr.mxu0 %v1664
    %3670 = vmatpush1.msra.mxu0 %v1661
    %3671 = vmatprep.subr.mxu0 %v1637
    %3672 = vmatpush1.msra.mxu0 %v1636
    %3673 = vmatprep.subr.mxu0 %v1632
    %3674 = vmatpush1.msra.mxu0 %v1631
    %3675 = vmatprep.subr.mxu0 %v1627
    %3676 = vmatpush1.msra.mxu0 %v1626
    %3677 = vmatprep.subr.mxu0 %v1622
    %3678 = vmatpush1.msra.mxu0 %v1621
    %3679 = vmatprep.subr.mxu0 0.0
    %3680 = vmatpush2.msra.mxu0 0.0
    %3681 = vmatprep.subr.mxu0 0.0
    %3682 = vmatpush2.msra.mxu0 0.0
    %3683 = vmatprep.subr.mxu0 0.0
    %3684 = vmatpush2.msra.mxu0 0.0
    %3685 = vmatprep.subr.mxu0 0.0
    %3686 = vmatpush2.msra.mxu0 0.0
    %3687 = vmatprep.subr.mxu0 0.0
    %3688 = vmatpush2.msra.mxu0 0.0
    %3689 = vmatprep.subr.mxu0 0.0
    %3690 = vmatpush2.msra.mxu0 0.0
    %3691 = vmatprep.subr.mxu0 0.0
    %3692 = vmatpush2.msra.mxu0 0.0
    %3693 = vmatprep.subr.mxu0 0.0
    %3694 = vmatpush2.msra.mxu0 0.0
    %3695 = vmatprep.subr.mxu0 0.0
    %3696 = vmatpush2.msra.mxu0 0.0
    %3697 = vmatprep.subr.mxu0 0.0
    %3698 = vmatpush2.msra.mxu0 0.0
    %3699 = vmatprep.subr.mxu0 0.0
    %3700 = vmatpush2.msra.mxu0 0.0
    %3701 = vmatprep.subr.mxu0 0.0
    %3702 = vmatpush2.msra.mxu0 0.0
    %3703 = vmatprep.subr.mxu0 0.0
    %3704 = vmatpush2.msra.mxu0 0.0
    %3705 = vmatprep.subr.mxu0 0.0
    %3706 = vmatpush2.msra.mxu0 0.0
    %3707 = vmatprep.subr.mxu0 0.0
    %3708 = vmatpush2.msra.mxu0 0.0
    %3709 = vmatprep.subr.mxu0 0.0
    %3710 = vmatpush2.msra.mxu0 0.0
    %3711 = vmatprep.mubr.f32.mxu0 0.0
    %3712 = vmatmul.mubr.f32.gmra.mxu0 %v3639
    %v3713 = vpop.f32.mrf.mxu0
    %v3714 = vadd.f32 0.0, %v3713
    %v3715 = vpop.f32.mrf.mxu0
    %v3716 = vadd.f32 0.0, %v3715
    %3717 = vmatprep.mubr.f32.mxu0 0.0
    %3718 = vmatmul.mubr.f32.gmra.mxu0 %v3642
    %v3719 = vpop.f32.mrf.mxu0
    %v3720 = vadd.f32 0.0, %v3719
    %v3721 = vpop.f32.mrf.mxu0
    %v3722 = vadd.f32 0.0, %v3721
    %3723 = vmatprep.mubr.f32.mxu0 0.0
    %3724 = vmatmul.mubr.f32.gmra.mxu0 %v3645
    %v3725 = vpop.f32.mrf.mxu0
    %v3726 = vadd.f32 0.0, %v3725
    %v3727 = vpop.f32.mrf.mxu0
    %v3728 = vadd.f32 0.0, %v3727
    %3729 = vdwg.mxu0
    %3730 = vmatprep.subr.mxu0 0.0
    %3731 = vmatpush1.msra.mxu0 0.0
    %3732 = vmatprep.subr.mxu0 0.0
    %3733 = vmatpush1.msra.mxu0 0.0
    %3734 = vmatprep.subr.mxu0 0.0
    %3735 = vmatpush1.msra.mxu0 0.0
    %3736 = vmatprep.subr.mxu0 0.0
    %3737 = vmatpush1.msra.mxu0 0.0
    %3738 = vmatprep.subr.mxu0 0.0
    %3739 = vmatpush1.msra.mxu0 0.0
    %3740 = vmatprep.subr.mxu0 0.0
    %3741 = vmatpush1.msra.mxu0 0.0
    %3742 = vmatprep.subr.mxu0 0.0
    %3743 = vmatpush1.msra.mxu0 0.0
    %3744 = vmatprep.subr.mxu0 0.0
    %3745 = vmatpush1.msra.mxu0 0.0
    %3746 = vmatprep.subr.mxu0 0.0
    %3747 = vmatpush1.msra.mxu0 0.0
    %3748 = vmatprep.subr.mxu0 0.0
    %3749 = vmatpush1.msra.mxu0 0.0
    %3750 = vmatprep.subr.mxu0 0.0
    %3751 = vmatpush1.msra.mxu0 0.0
    %3752 = vmatprep.subr.mxu0 %v1670
    %3753 = vmatpush1.msra.mxu0 %v1667
    %3754 = vmatprep.subr.mxu0 %v1639
    %3755 = vmatpush1.msra.mxu0 %v1638
    %3756 = vmatprep.subr.mxu0 %v1634
    %3757 = vmatpush1.msra.mxu0 %v1633
    %3758 = vmatprep.subr.mxu0 %v1629
    %3759 = vmatpush1.msra.mxu0 %v1628
    %3760 = vmatprep.subr.mxu0 %v1624
    %3761 = vmatpush1.msra.mxu0 %v1623
    %3762 = vmatprep.subr.mxu0 0.0
    %3763 = vmatpush2.msra.mxu0 0.0
    %3764 = vmatprep.subr.mxu0 0.0
    %3765 = vmatpush2.msra.mxu0 0.0
    %3766 = vmatprep.subr.mxu0 0.0
    %3767 = vmatpush2.msra.mxu0 0.0
    %3768 = vmatprep.subr.mxu0 0.0
    %3769 = vmatpush2.msra.mxu0 0.0
    %3770 = vmatprep.subr.mxu0 0.0
    %3771 = vmatpush2.msra.mxu0 0.0
    %3772 = vmatprep.subr.mxu0 0.0
    %3773 = vmatpush2.msra.mxu0 0.0
    %3774 = vmatprep.subr.mxu0 0.0
    %3775 = vmatpush2.msra.mxu0 0.0
    %3776 = vmatprep.subr.mxu0 0.0
    %3777 = vmatpush2.msra.mxu0 0.0
    %3778 = vmatprep.subr.mxu0 0.0
    %3779 = vmatpush2.msra.mxu0 0.0
    %3780 = vmatprep.subr.mxu0 0.0
    %3781 = vmatpush2.msra.mxu0 0.0
    %3782 = vmatprep.subr.mxu0 0.0
    %3783 = vmatpush2.msra.mxu0 0.0
    %3784 = vmatprep.subr.mxu0 0.0
    %3785 = vmatpush2.msra.mxu0 0.0
    %3786 = vmatprep.subr.mxu0 0.0
    %3787 = vmatpush2.msra.mxu0 0.0
    %3788 = vmatprep.subr.mxu0 0.0
    %3789 = vmatpush2.msra.mxu0 0.0
    %3790 = vmatprep.subr.mxu0 0.0
    %3791 = vmatpush2.msra.mxu0 0.0
    %3792 = vmatprep.subr.mxu0 0.0
    %3793 = vmatpush2.msra.mxu0 0.0
    %3794 = vmatprep.mubr.f32.mxu0 0.0
    %3795 = vmatmul.mubr.f32.gmra.mxu0 %v3639
    %v3796 = vpop.f32.mrf.mxu0
    %v3797 = vadd.f32 0.0, %v3796
    %v3798 = vpop.f32.mrf.mxu0
    %v3799 = vadd.f32 0.0, %v3798
    %3800 = vmatprep.mubr.f32.mxu0 0.0
    %3801 = vmatmul.mubr.f32.gmra.mxu0 %v3642
    %v3802 = vpop.f32.mrf.mxu0
    %v3803 = vadd.f32 0.0, %v3802
    %v3804 = vpop.f32.mrf.mxu0
    %v3805 = vadd.f32 0.0, %v3804
    %3806 = vmatprep.mubr.f32.mxu0 0.0
    %3807 = vmatmul.mubr.f32.gmra.mxu0 %v3645
    %v3808 = vpop.f32.mrf.mxu0
    %v3809 = vadd.f32 0.0, %v3808
    %v3810 = vpop.f32.mrf.mxu0
    %v3811 = vadd.f32 0.0, %v3810
    %3812 = vdwg.mxu0
    %3813 = vmatprep.subr.mxu0 0.0
    %3814 = vmatpush1.msra.mxu0 0.0
    %3815 = vmatprep.subr.mxu0 0.0
    %3816 = vmatpush1.msra.mxu0 0.0
    %3817 = vmatprep.subr.mxu0 0.0
    %3818 = vmatpush1.msra.mxu0 0.0
    %3819 = vmatprep.subr.mxu0 0.0
    %3820 = vmatpush1.msra.mxu0 0.0
    %3821 = vmatprep.subr.mxu0 0.0
    %3822 = vmatpush1.msra.mxu0 0.0
    %3823 = vmatprep.subr.mxu0 0.0
    %3824 = vmatpush1.msra.mxu0 0.0
    %3825 = vmatprep.subr.mxu0 0.0
    %3826 = vmatpush1.msra.mxu0 0.0
    %3827 = vmatprep.subr.mxu0 0.0
    %3828 = vmatpush1.msra.mxu0 0.0
    %3829 = vmatprep.subr.mxu0 0.0
    %3830 = vmatpush1.msra.mxu0 0.0
    %3831 = vmatprep.subr.mxu0 0.0
    %3832 = vmatpush1.msra.mxu0 0.0
    %3833 = vmatprep.subr.mxu0 0.0
    %3834 = vmatpush1.msra.mxu0 0.0
    %3835 = vmatprep.subr.mxu0 0.0
    %3836 = vmatpush1.msra.mxu0 %v1673
    %3837 = vmatprep.subr.mxu0 0.0
    %3838 = vmatpush1.msra.mxu0 %v1640
    %3839 = vmatprep.subr.mxu0 0.0
    %3840 = vmatpush1.msra.mxu0 %v1635
    %3841 = vmatprep.subr.mxu0 0.0
    %3842 = vmatpush1.msra.mxu0 %v1630
    %3843 = vmatprep.subr.mxu0 0.0
    %3844 = vmatpush1.msra.mxu0 %v1625
    %3845 = vmatprep.subr.mxu0 0.0
    %3846 = vmatpush2.msra.mxu0 0.0
    %3847 = vmatprep.subr.mxu0 0.0
    %3848 = vmatpush2.msra.mxu0 0.0
    %3849 = vmatprep.subr.mxu0 0.0
    %3850 = vmatpush2.msra.mxu0 0.0
    %3851 = vmatprep.subr.mxu0 0.0
    %3852 = vmatpush2.msra.mxu0 0.0
    %3853 = vmatprep.subr.mxu0 0.0
    %3854 = vmatpush2.msra.mxu0 0.0
    %3855 = vmatprep.subr.mxu0 0.0
    %3856 = vmatpush2.msra.mxu0 0.0
    %3857 = vmatprep.subr.mxu0 0.0
    %3858 = vmatpush2.msra.mxu0 0.0
    %3859 = vmatprep.subr.mxu0 0.0
    %3860 = vmatpush2.msra.mxu0 0.0
    %3861 = vmatprep.subr.mxu0 0.0
    %3862 = vmatpush2.msra.mxu0 0.0
    %3863 = vmatprep.subr.mxu0 0.0
    %3864 = vmatpush2.msra.mxu0 0.0
    %3865 = vmatprep.subr.mxu0 0.0
    %3866 = vmatpush2.msra.mxu0 0.0
    %3867 = vmatprep.subr.mxu0 0.0
    %3868 = vmatpush2.msra.mxu0 0.0
    %3869 = vmatprep.subr.mxu0 0.0
    %3870 = vmatpush2.msra.mxu0 0.0
    %3871 = vmatprep.subr.mxu0 0.0
    %3872 = vmatpush2.msra.mxu0 0.0
    %3873 = vmatprep.subr.mxu0 0.0
    %3874 = vmatpush2.msra.mxu0 0.0
    %3875 = vmatprep.subr.mxu0 0.0
    %3876 = vmatpush2.msra.mxu0 0.0
    %3877 = vmatprep.mubr.f32.mxu0 0.0
    %3878 = vmatmul.mubr.f32.gmra.mxu0 %v3639
    %v3879 = vpop.f32.mrf.mxu0
    %v3880 = vadd.f32 0.0, %v3879
    %v3881 = vpop.f32.mrf.mxu0
    %3882 = vmatprep.mubr.f32.mxu0 0.0
    %3883 = vmatmul.mubr.f32.gmra.mxu0 %v3642
    %v3884 = vpop.f32.mrf.mxu0
    %v3885 = vadd.f32 0.0, %v3884
    %v3886 = vpop.f32.mrf.mxu0
    %3887 = vmatprep.mubr.f32.mxu0 0.0
    %3888 = vmatmul.mubr.f32.gmra.mxu0 %v3645
    %v3889 = vpop.f32.mrf.mxu0
    %v3890 = vadd.f32 0.0, %v3889
    %v3891 = vpop.f32.mrf.mxu0
    %3892 = vdwg.mxu0
    %s3893 = scalar_lea.vmem [#allocation10], 3648
    %v3894 = vld [vmem:[%s3893] sm:$0xff]
    %v3895 = vld [vmem:[%s3893 + $0x8] sm:$0xff]
    %v3896 = vld [vmem:[%s3893 + $0x10] sm:$0xff]
    %v3897 = vld [vmem:[%s3893 + $0x18] sm:$0xff]
    %v3898 = vld [vmem:[%s3893 + $0x20] sm:$0xff]
    %v3899 = vld [vmem:[%s3893 + $0x28] sm:$0xff]
    %v3900 = vld [vmem:[%s3893 + $0x30] sm:$0xff]
    %v3901 = vld [vmem:[%s3893 + $0x38] sm:$0xff]
    %v3902 = vld [vmem:[%s3893 + $0x40] sm:$0xff]
    %v3903 = vld [vmem:[%s3893 + $0x48] sm:$0xff]
    %v3904 = vld [vmem:[%s3893 + $0x50] sm:$0xff]
    %v3905 = vld [vmem:[%s3893 + $0x58] sm:$0xff]
    %v3906 = vld [vmem:[%s3893 + $0x60] sm:$0xff]
    %v3907 = vld [vmem:[%s3893 + $0x68] sm:$0xff]
    %v3908 = vld [vmem:[%s3893 + $0x70] sm:$0xff]
    %v3909 = vld [vmem:[%s3893 + $0x78] sm:$0xff]
    %v3910 = vld [vmem:[%s3893 + $0x80] sm:$0xff]
    %v3911 = vld [vmem:[%s3893 + $0x88] sm:$0xff]
    %v3912 = vld [vmem:[%s3893 + $0x90] sm:$0xff]
    %v3913 = vld [vmem:[%s3893 + $0x98] sm:$0xff]
    %v3914 = vld [vmem:[%s3893 + $0xa0] sm:$0xff]
    %v3915 = vld [vmem:[%s3893 + $0xa8] sm:$0xff]
    %v3916 = vld [vmem:[%s3893 + $0xb0] sm:$0xff]
    %v3917 = vld [vmem:[%s3893 + $0xb8] sm:$0xff]
    %v3918 = vld [vmem:[%s3893 + $0xc0] sm:$0xff]
    %v3919 = vld [vmem:[%s3893 + $0xc8] sm:$0xff]
    %v3920 = vld [vmem:[%s3893 + $0xd0] sm:$0xff]
    %v3921 = vld [vmem:[%s3893 + $0xd8] sm:$0xff]
    %v3922 = vld [vmem:[%s3893 + $0xe0] sm:$0xff]
    %v3923 = vld [vmem:[%s3893 + $0xe8] sm:$0xff]
    %v3924 = vld [vmem:[%s3893 + $0xf0] sm:$0xff]
    %v3925 = vld [vmem:[%s3893 + $0xf8] sm:$0xff]
    %v3926 = vld [vmem:[%s3893 + $0x100] sm:$0xff]
    %v3927 = vld [vmem:[%s3893 + $0x108] sm:$0xff]
    %v3928 = vld [vmem:[%s3893 + $0x110] sm:$0xff]
    %v3929 = vld [vmem:[%s3893 + $0x118] sm:$0xff]
    %v3930 = vld [vmem:[%s3893 + $0x120] sm:$0xff]
    %v3931 = vld [vmem:[%s3893 + $0x128] sm:$0xff]
    %v3932 = vld [vmem:[%s3893 + $0x130] sm:$0xff]
    %v3933 = vld [vmem:[%s3893 + $0x138] sm:$0xff]
    %v3934 = vld [vmem:[%s3893 + $0x140] sm:$0xff]
    %v3935 = vld [vmem:[%s3893 + $0x148] sm:$0xff]
    %v3936 = vld [vmem:[%s3893 + $0x150] sm:$0xff]
    %v3937 = vld [vmem:[%s3893 + $0x158] sm:$0xff]
    %v3938 = vld [vmem:[%s3893 + $0x160] sm:$0xff]
    %v3939 = vld [vmem:[%s3893 + $0x168] sm:$0xff]
    %v3940 = vld [vmem:[%s3893 + $0x170] sm:$0xff]
    %v3941 = vld [vmem:[%s3893 + $0x178] sm:$0xff]
    %v3942 = vld [vmem:[%s3893 + $0x180] sm:$0xff]
    %v3943 = vld [vmem:[%s3893 + $0x188] sm:$0xff]
    %v3944 = vld [vmem:[%s3893 + $0x190] sm:$0xff]
    %v3945 = vld [vmem:[%s3893 + $0x198] sm:$0xff]
    %v3946 = vld [vmem:[%s3893 + $0x1a0] sm:$0xff]
    %v3947 = vld [vmem:[%s3893 + $0x1a8] sm:$0xff]
    %v3948 = vld [vmem:[%s3893 + $0x1b0] sm:$0xff]
    %v3949 = vld [vmem:[%s3893 + $0x1b8] sm:$0xff]
    %v3950 = vld [vmem:[%s3893 + $0x1c0] sm:$0xff]
    %v3951 = vld [vmem:[%s3893 + $0x1c8] sm:$0xff]
    %v3952 = vld [vmem:[%s3893 + $0x1d0] sm:$0xff]
    %v3953 = vld [vmem:[%s3893 + $0x1d8] sm:$0xff]
    %v3954 = vld [vmem:[%s3893 + $0x1e0] sm:$0xff]
    %v3955 = vld [vmem:[%s3893 + $0x1e8] sm:$0xff]
    %v3956 = vld [vmem:[%s3893 + $0x1f0] sm:$0xff]
    %v3957 = vld [vmem:[%s3893 + $0x1f8] sm:$0xff]
    %v3958 = vld [vmem:[%s3893 + $0x200] sm:$0xff]
    %v3959 = vld [vmem:[%s3893 + $0x208] sm:$0xff]
    %v3960 = vld [vmem:[%s3893 + $0x210] sm:$0xff]
    %v3961 = vld [vmem:[%s3893 + $0x218] sm:$0xff]
    %v3962 = vld [vmem:[%s3893 + $0x220] sm:$0xff]
    %v3963 = vld [vmem:[%s3893 + $0x228] sm:$0xff]
    %v3964 = vld [vmem:[%s3893 + $0x230] sm:$0xff]
    %v3965 = vld [vmem:[%s3893 + $0x238] sm:$0xff]
    %v3966 = vld [vmem:[%s3893 + $0x240] sm:$0xff]
    %v3967 = vld [vmem:[%s3893 + $0x248] sm:$0xff]
    %v3968 = vld [vmem:[%s3893 + $0x250] sm:$0xff]
    %v3969 = vld [vmem:[%s3893 + $0x258] sm:$0xff]
    %v3970 = vld [vmem:[%s3893 + $0x260] sm:$0xff]
    %v3971 = vld [vmem:[%s3893 + $0x268] sm:$0xff]
    %v3972 = vld [vmem:[%s3893 + $0x270] sm:$0xff]
    %v3973 = vld [vmem:[%s3893 + $0x278] sm:$0xff]
    %v3974 = vld [vmem:[%s3893 + $0x280] sm:$0xff]
    %v3975 = vld [vmem:[%s3893 + $0x288] sm:$0xff]
    %v3976 = vld [vmem:[%s3893 + $0x290] sm:$0xff]
    %v3977 = vld [vmem:[%s3893 + $0x298] sm:$0xff]
    %v3978 = vld [vmem:[%s3893 + $0x2a0] sm:$0xff]
    %v3979 = vld [vmem:[%s3893 + $0x2a8] sm:$0xff]
    %v3980 = vld [vmem:[%s3893 + $0x2b0] sm:$0xff]
    %v3981 = vld [vmem:[%s3893 + $0x2b8] sm:$0xff]
    %v3982 = vld [vmem:[%s3893 + $0x2c0] sm:$0xff]
    %v3983 = vld [vmem:[%s3893 + $0x2c8] sm:$0xff]
    %v3984 = vld [vmem:[%s3893 + $0x2d0] sm:$0xff]
    %v3985 = vld [vmem:[%s3893 + $0x2d8] sm:$0xff]
    %v3986 = vld [vmem:[%s3893 + $0x2e0] sm:$0xff]
    %v3987 = vld [vmem:[%s3893 + $0x2e8] sm:$0xff]
    %v3988 = vld [vmem:[%s3893 + $0x2f0] sm:$0xff]
    %v3989 = vld [vmem:[%s3893 + $0x2f8] sm:$0xff]
    %v3990 = vld [vmem:[%s3893 + $0x300] sm:$0xff]
    %v3991 = vld [vmem:[%s3893 + $0x308] sm:$0xff]
    %v3992 = vld [vmem:[%s3893 + $0x310] sm:$0xff]
    %v3993 = vld [vmem:[%s3893 + $0x318] sm:$0xff]
    %v3994 = vld [vmem:[%s3893 + $0x320] sm:$0xff]
    %v3995 = vld [vmem:[%s3893 + $0x328] sm:$0xff]
    %v3996 = vld [vmem:[%s3893 + $0x330] sm:$0xff]
    %v3997 = vld [vmem:[%s3893 + $0x338] sm:$0xff]
    %v3998 = vld [vmem:[%s3893 + $0x340] sm:$0xff]
    %v3999 = vld [vmem:[%s3893 + $0x348] sm:$0xff]
    %v4000 = vld [vmem:[%s3893 + $0x350] sm:$0xff]
    %v4001 = vld [vmem:[%s3893 + $0x358] sm:$0xff]
    %v4002 = vld [vmem:[%s3893 + $0x360] sm:$0xff]
    %v4003 = vld [vmem:[%s3893 + $0x368] sm:$0xff]
    %v4004 = vld [vmem:[%s3893 + $0x370] sm:$0xff]
    %v4005 = vld [vmem:[%s3893 + $0x378] sm:$0xff]
    %v4006 = vld [vmem:[%s3893 + $0x380] sm:$0xff]
    %v4007 = vld [vmem:[%s3893 + $0x388] sm:$0xff]
    %v4008 = vld [vmem:[%s3893 + $0x390] sm:$0xff]
    %v4009 = vld [vmem:[%s3893 + $0x398] sm:$0xff]
    %v4010 = vld [vmem:[%s3893 + $0x3a0] sm:$0xff]
    %v4011 = vld [vmem:[%s3893 + $0x3a8] sm:$0xff]
    %v4012 = vld [vmem:[%s3893 + $0x3b0] sm:$0xff]
    %v4013 = vld [vmem:[%s3893 + $0x3b8] sm:$0xff]
    %v4014 = vld [vmem:[%s3893 + $0x3c0] sm:$0xff]
    %v4015 = vld [vmem:[%s3893 + $0x3c8] sm:$0xff]
    %v4016 = vld [vmem:[%s3893 + $0x3d0] sm:$0xff]
    %v4017 = vld [vmem:[%s3893 + $0x3d8] sm:$0xff]
    %v4018 = vld [vmem:[%s3893 + $0x3e0] sm:$0xff]
    %v4019 = vld [vmem:[%s3893 + $0x3e8] sm:$0xff]
    %v4020 = vld [vmem:[%s3893 + $0x3f0] sm:$0xff]
    %v4021 = vld [vmem:[%s3893 + $0x3f8] sm:$0xff]
    %v4022 = vld [vmem:[%s3893 + $0x400] sm:$0xff]
    %v4023 = vld [vmem:[%s3893 + $0x408] sm:$0xff]
    %v4024 = vld [vmem:[%s3893 + $0x410] sm:$0xff]
    %v4025 = vld [vmem:[%s3893 + $0x418] sm:$0xff]
    %v4026 = vld [vmem:[%s3893 + $0x420] sm:$0xff]
    %v4027 = vld [vmem:[%s3893 + $0x428] sm:$0xff]
    %v4028 = vld [vmem:[%s3893 + $0x430] sm:$0xff]
    %v4029 = vld [vmem:[%s3893 + $0x438] sm:$0xff]
    %v4030 = vld [vmem:[%s3893 + $0x440] sm:$0xff]
    %v4031 = vld [vmem:[%s3893 + $0x448] sm:$0xff]
    %v4032 = vld [vmem:[%s3893 + $0x450] sm:$0xff]
    %v4033 = vld [vmem:[%s3893 + $0x458] sm:$0xff]
    %v4034 = vld [vmem:[%s3893 + $0x460] sm:$0xff]
    %v4035 = vld [vmem:[%s3893 + $0x468] sm:$0xff]
    %v4036 = vld [vmem:[%s3893 + $0x470] sm:$0xff]
    %v4037 = vld [vmem:[%s3893 + $0x478] sm:$0xff]
    %v4038 = vld [vmem:[%s3893 + $0x480] sm:$0xff]
    %v4039 = vld [vmem:[%s3893 + $0x488] sm:$0xff]
    %v4040 = vld [vmem:[%s3893 + $0x490] sm:$0xff]
    %v4041 = vld [vmem:[%s3893 + $0x498] sm:$0xff]
    %v4042 = vld [vmem:[%s3893 + $0x4a0] sm:$0xff]
    %v4043 = vld [vmem:[%s3893 + $0x4a8] sm:$0xff]
    %v4044 = vld [vmem:[%s3893 + $0x4b0] sm:$0xff]
    %v4045 = vld [vmem:[%s3893 + $0x4b8] sm:$0xff]
    %v4046 = vld [vmem:[%s3893 + $0x4c0] sm:$0xff]
    %v4047 = vld [vmem:[%s3893 + $0x4c8] sm:$0xff]
    %v4048 = vld [vmem:[%s3893 + $0x4d0] sm:$0xff]
    %v4049 = vld [vmem:[%s3893 + $0x4d8] sm:$0xff]
    %v4050 = vld [vmem:[%s3893 + $0x4e0] sm:$0xff]
    %v4051 = vld [vmem:[%s3893 + $0x4e8] sm:$0xff]
    %v4052 = vld [vmem:[%s3893 + $0x4f0] sm:$0xff]
    %v4053 = vld [vmem:[%s3893 + $0x4f8] sm:$0xff]
    %v4054 = vld [vmem:[%s3893 + $0x500] sm:$0xff]
    %v4055 = vld [vmem:[%s3893 + $0x508] sm:$0xff]
    %v4056 = vld [vmem:[%s3893 + $0x510] sm:$0xff]
    %v4057 = vld [vmem:[%s3893 + $0x518] sm:$0xff]
    %v4058 = vld [vmem:[%s3893 + $0x520] sm:$0xff]
    %v4059 = vld [vmem:[%s3893 + $0x528] sm:$0xff]
    %v4060 = vld [vmem:[%s3893 + $0x530] sm:$0xff]
    %v4061 = vld [vmem:[%s3893 + $0x538] sm:$0xff]
    %v4062 = vld [vmem:[%s3893 + $0x540] sm:$0xff]
    %v4063 = vld [vmem:[%s3893 + $0x548] sm:$0xff]
    %v4064 = vld [vmem:[%s3893 + $0x550] sm:$0xff]
    %v4065 = vld [vmem:[%s3893 + $0x558] sm:$0xff]
    %v4066 = vld [vmem:[%s3893 + $0x560] sm:$0xff]
    %v4067 = vld [vmem:[%s3893 + $0x568] sm:$0xff]
    %v4068 = vld [vmem:[%s3893 + $0x570] sm:$0xff]
    %v4069 = vld [vmem:[%s3893 + $0x578] sm:$0xff]
    %v4070 = vld [vmem:[%s3893 + $0x580] sm:$0xff]
    %v4071 = vld [vmem:[%s3893 + $0x588] sm:$0xff]
    %v4072 = vld [vmem:[%s3893 + $0x590] sm:$0xff]
    %v4073 = vld [vmem:[%s3893 + $0x598] sm:$0xff]
    %v4074 = vld [vmem:[%s3893 + $0x5a0] sm:$0xff]
    %v4075 = vld [vmem:[%s3893 + $0x5a8] sm:$0xff]
    %v4076 = vld [vmem:[%s3893 + $0x5b0] sm:$0xff]
    %v4077 = vld [vmem:[%s3893 + $0x5b8] sm:$0xff]
    %v4078 = vld [vmem:[%s3893 + $0x5c0] sm:$0xff]
    %v4079 = vld [vmem:[%s3893 + $0x5c8] sm:$0xff]
    %v4080 = vld [vmem:[%s3893 + $0x5d0] sm:$0xff]
    %v4081 = vld [vmem:[%s3893 + $0x5d8] sm:$0xff]
    %v4082 = vld [vmem:[%s3893 + $0x5e0] sm:$0xff]
    %v4083 = vld [vmem:[%s3893 + $0x5e8] sm:$0xff]
    %v4084 = vld [vmem:[%s3893 + $0x5f0] sm:$0xff]
    %v4085 = vld [vmem:[%s3893 + $0x5f8] sm:$0xff]
    %v4086 = vld [vmem:[%s3893 + $0x600] sm:$0xff]
    %v4087 = vld [vmem:[%s3893 + $0x608] sm:$0xff]
    %v4088 = vld [vmem:[%s3893 + $0x610] sm:$0xff]
    %v4089 = vld [vmem:[%s3893 + $0x618] sm:$0xff]
    %v4090 = vld [vmem:[%s3893 + $0x620] sm:$0xff]
    %v4091 = vld [vmem:[%s3893 + $0x628] sm:$0xff]
    %v4092 = vld [vmem:[%s3893 + $0x630] sm:$0xff]
    %v4093 = vld [vmem:[%s3893 + $0x638] sm:$0xff]
    %v4094 = vld [vmem:[%s3893 + $0x640] sm:$0xff]
    %v4095 = vld [vmem:[%s3893 + $0x648] sm:$0xff]
    %v4096 = vld [vmem:[%s3893 + $0x650] sm:$0xff]
    %v4097 = vld [vmem:[%s3893 + $0x658] sm:$0xff]
    %v4098 = vld [vmem:[%s3893 + $0x660] sm:$0xff]
    %v4099 = vld [vmem:[%s3893 + $0x668] sm:$0xff]
    %v4100 = vld [vmem:[%s3893 + $0x670] sm:$0xff]
    %v4101 = vld [vmem:[%s3893 + $0x678] sm:$0xff]
    %v4102 = vld [vmem:[%s3893 + $0x680] sm:$0xff]
    %v4103 = vld [vmem:[%s3893 + $0x688] sm:$0xff]
    %v4104 = vld [vmem:[%s3893 + $0x690] sm:$0xff]
    %v4105 = vld [vmem:[%s3893 + $0x698] sm:$0xff]
    %v4106 = vld [vmem:[%s3893 + $0x6a0] sm:$0xff]
    %v4107 = vld [vmem:[%s3893 + $0x6a8] sm:$0xff]
    %v4108 = vld [vmem:[%s3893 + $0x6b0] sm:$0xff]
    %v4109 = vld [vmem:[%s3893 + $0x6b8] sm:$0xff]
    %v4110 = vld [vmem:[%s3893 + $0x6c0] sm:$0xff]
    %v4111 = vld [vmem:[%s3893 + $0x6c8] sm:$0xff]
    %v4112 = vld [vmem:[%s3893 + $0x6d0] sm:$0xff]
    %v4113 = vld [vmem:[%s3893 + $0x6d8] sm:$0xff]
    %v4114 = vld [vmem:[%s3893 + $0x6e0] sm:$0xff]
    %v4115 = vld [vmem:[%s3893 + $0x6e8] sm:$0xff]
    %v4116 = vld [vmem:[%s3893 + $0x6f0] sm:$0xff]
    %v4117 = vld [vmem:[%s3893 + $0x6f8] sm:$0xff]
    %v4118 = vld [vmem:[%s3893 + $0x700] sm:$0xff]
    %v4119 = vld [vmem:[%s3893 + $0x708] sm:$0xff]
    %v4120 = vld [vmem:[%s3893 + $0x710] sm:$0xff]
    %v4121 = vld [vmem:[%s3893 + $0x718] sm:$0xff]
    %v4123 = vsel %vm2637, %v3880, 0
    %v4126 = vsel %vm2637, %v3885, 0
    %v4129 = vsel %vm2637, %v3890, 0
    %4131 = vmatprep.subr.mxu0 %v3940
    %4132 = vmatpush1.msra.mxu0 %v3939
    %4133 = vmatprep.subr.mxu0 %v3937
    %4134 = vmatpush1.msra.mxu0 %v3936
    %4135 = vmatprep.subr.mxu0 %v3934
    %4136 = vmatpush1.msra.mxu0 %v3933
    %4137 = vmatprep.subr.mxu0 %v3931
    %4138 = vmatpush1.msra.mxu0 %v3930
    %4139 = vmatprep.subr.mxu0 %v3928
    %4140 = vmatpush1.msra.mxu0 %v3927
    %4141 = vmatprep.subr.mxu0 %v3925
    %4142 = vmatpush1.msra.mxu0 %v3924
    %4143 = vmatprep.subr.mxu0 %v3922
    %4144 = vmatpush1.msra.mxu0 %v3921
    %4145 = vmatprep.subr.mxu0 %v3919
    %4146 = vmatpush1.msra.mxu0 %v3918
    %4147 = vmatprep.subr.mxu0 %v3916
    %4148 = vmatpush1.msra.mxu0 %v3915
    %4149 = vmatprep.subr.mxu0 %v3913
    %4150 = vmatpush1.msra.mxu0 %v3912
    %4151 = vmatprep.subr.mxu0 %v3910
    %4152 = vmatpush1.msra.mxu0 %v3909
    %4153 = vmatprep.subr.mxu0 %v3907
    %4154 = vmatpush1.msra.mxu0 %v3906
    %4155 = vmatprep.subr.mxu0 %v3904
    %4156 = vmatpush1.msra.mxu0 %v3903
    %4157 = vmatprep.subr.mxu0 %v3901
    %4158 = vmatpush1.msra.mxu0 %v3900
    %4159 = vmatprep.subr.mxu0 %v3898
    %4160 = vmatpush1.msra.mxu0 %v3897
    %4161 = vmatprep.subr.mxu0 %v3895
    %4162 = vmatpush1.msra.mxu0 %v3894
    %4163 = vmatprep.subr.mxu0 %v3988
    %4164 = vmatpush2.msra.mxu0 %v3987
    %4165 = vmatprep.subr.mxu0 %v3985
    %4166 = vmatpush2.msra.mxu0 %v3984
    %4167 = vmatprep.subr.mxu0 %v3982
    %4168 = vmatpush2.msra.mxu0 %v3981
    %4169 = vmatprep.subr.mxu0 %v3979
    %4170 = vmatpush2.msra.mxu0 %v3978
    %4171 = vmatprep.subr.mxu0 %v3976
    %4172 = vmatpush2.msra.mxu0 %v3975
    %4173 = vmatprep.subr.mxu0 %v3973
    %4174 = vmatpush2.msra.mxu0 %v3972
    %4175 = vmatprep.subr.mxu0 %v3970
    %4176 = vmatpush2.msra.mxu0 %v3969
    %4177 = vmatprep.subr.mxu0 %v3967
    %4178 = vmatpush2.msra.mxu0 %v3966
    %4179 = vmatprep.subr.mxu0 %v3964
    %4180 = vmatpush2.msra.mxu0 %v3963
    %4181 = vmatprep.subr.mxu0 %v3961
    %4182 = vmatpush2.msra.mxu0 %v3960
    %4183 = vmatprep.subr.mxu0 %v3958
    %4184 = vmatpush2.msra.mxu0 %v3957
    %4185 = vmatprep.subr.mxu0 %v3955
    %4186 = vmatpush2.msra.mxu0 %v3954
    %4187 = vmatprep.subr.mxu0 %v3952
    %4188 = vmatpush2.msra.mxu0 %v3951
    %4189 = vmatprep.subr.mxu0 %v3949
    %4190 = vmatpush2.msra.mxu0 %v3948
    %4191 = vmatprep.subr.mxu0 %v3946
    %4192 = vmatpush2.msra.mxu0 %v3945
    %4193 = vmatprep.subr.mxu0 %v3943
    %4194 = vmatpush2.msra.mxu0 %v3942
    %4195 = vmatprep.mubr.f32.mxu0 %v3716
    %4196 = vmatmul.mubr.f32.gmra.mxu0 %v3714
    %v4197 = vpop.f32.mrf.mxu0
    %v4198 = vadd.f32 0.0, %v4197
    %v4199 = vpop.f32.mrf.mxu0
    %v4200 = vadd.f32 0.0, %v4199
    %4201 = vmatprep.mubr.f32.mxu0 %v3722
    %4202 = vmatmul.mubr.f32.gmra.mxu0 %v3720
    %v4203 = vpop.f32.mrf.mxu0
    %v4204 = vadd.f32 0.0, %v4203
    %v4205 = vpop.f32.mrf.mxu0
    %v4206 = vadd.f32 0.0, %v4205
    %4207 = vmatprep.mubr.f32.mxu0 %v3728
    %4208 = vmatmul.mubr.f32.gmra.mxu0 %v3726
    %v4209 = vpop.f32.mrf.mxu0
    %v4210 = vadd.f32 0.0, %v4209
    %v4211 = vpop.f32.mrf.mxu0
    %v4212 = vadd.f32 0.0, %v4211
    %4213 = vdwg.mxu0
    %4214 = vmatprep.subr.mxu0 %v4036
    %4215 = vmatpush1.msra.mxu0 %v4035
    %4216 = vmatprep.subr.mxu0 %v4033
    %4217 = vmatpush1.msra.mxu0 %v4032
    %4218 = vmatprep.subr.mxu0 %v4030
    %4219 = vmatpush1.msra.mxu0 %v4029
    %4220 = vmatprep.subr.mxu0 %v4027
    %4221 = vmatpush1.msra.mxu0 %v4026
    %4222 = vmatprep.subr.mxu0 %v4024
    %4223 = vmatpush1.msra.mxu0 %v4023
    %4224 = vmatprep.subr.mxu0 %v4021
    %4225 = vmatpush1.msra.mxu0 %v4020
    %4226 = vmatprep.subr.mxu0 %v4018
    %4227 = vmatpush1.msra.mxu0 %v4017
    %4228 = vmatprep.subr.mxu0 %v4015
    %4229 = vmatpush1.msra.mxu0 %v4014
    %4230 = vmatprep.subr.mxu0 %v4012
    %4231 = vmatpush1.msra.mxu0 %v4011
    %4232 = vmatprep.subr.mxu0 %v4009
    %4233 = vmatpush1.msra.mxu0 %v4008
    %4234 = vmatprep.subr.mxu0 %v4006
    %4235 = vmatpush1.msra.mxu0 %v4005
    %4236 = vmatprep.subr.mxu0 %v4003
    %4237 = vmatpush1.msra.mxu0 %v4002
    %4238 = vmatprep.subr.mxu0 %v4000
    %4239 = vmatpush1.msra.mxu0 %v3999
    %4240 = vmatprep.subr.mxu0 %v3997
    %4241 = vmatpush1.msra.mxu0 %v3996
    %4242 = vmatprep.subr.mxu0 %v3994
    %4243 = vmatpush1.msra.mxu0 %v3993
    %4244 = vmatprep.subr.mxu0 %v3991
    %4245 = vmatpush1.msra.mxu0 %v3990
    %4246 = vmatprep.subr.mxu0 %v4084
    %4247 = vmatpush2.msra.mxu0 %v4083
    %4248 = vmatprep.subr.mxu0 %v4081
    %4249 = vmatpush2.msra.mxu0 %v4080
    %4250 = vmatprep.subr.mxu0 %v4078
    %4251 = vmatpush2.msra.mxu0 %v4077
    %4252 = vmatprep.subr.mxu0 %v4075
    %4253 = vmatpush2.msra.mxu0 %v4074
    %4254 = vmatprep.subr.mxu0 %v4072
    %4255 = vmatpush2.msra.mxu0 %v4071
    %4256 = vmatprep.subr.mxu0 %v4069
    %4257 = vmatpush2.msra.mxu0 %v4068
    %4258 = vmatprep.subr.mxu0 %v4066
    %4259 = vmatpush2.msra.mxu0 %v4065
    %4260 = vmatprep.subr.mxu0 %v4063
    %4261 = vmatpush2.msra.mxu0 %v4062
    %4262 = vmatprep.subr.mxu0 %v4060
    %4263 = vmatpush2.msra.mxu0 %v4059
    %4264 = vmatprep.subr.mxu0 %v4057
    %4265 = vmatpush2.msra.mxu0 %v4056
    %4266 = vmatprep.subr.mxu0 %v4054
    %4267 = vmatpush2.msra.mxu0 %v4053
    %4268 = vmatprep.subr.mxu0 %v4051
    %4269 = vmatpush2.msra.mxu0 %v4050
    %4270 = vmatprep.subr.mxu0 %v4048
    %4271 = vmatpush2.msra.mxu0 %v4047
    %4272 = vmatprep.subr.mxu0 %v4045
    %4273 = vmatpush2.msra.mxu0 %v4044
    %4274 = vmatprep.subr.mxu0 %v4042
    %4275 = vmatpush2.msra.mxu0 %v4041
    %4276 = vmatprep.subr.mxu0 %v4039
    %4277 = vmatpush2.msra.mxu0 %v4038
    %4278 = vmatprep.mubr.f32.mxu0 %v3799
    %4279 = vmatmul.mubr.f32.gmra.mxu0 %v3797
    %v4280 = vpop.f32.mrf.mxu0
    %v4281 = vadd.f32 %v4198, %v4280
    %v4282 = vpop.f32.mrf.mxu0
    %v4283 = vadd.f32 %v4200, %v4282
    %4284 = vmatprep.mubr.f32.mxu0 %v3805
    %4285 = vmatmul.mubr.f32.gmra.mxu0 %v3803
    %v4286 = vpop.f32.mrf.mxu0
    %v4287 = vadd.f32 %v4204, %v4286
    %v4288 = vpop.f32.mrf.mxu0
    %v4289 = vadd.f32 %v4206, %v4288
    %4290 = vmatprep.mubr.f32.mxu0 %v3811
    %4291 = vmatmul.mubr.f32.gmra.mxu0 %v3809
    %v4292 = vpop.f32.mrf.mxu0
    %v4293 = vadd.f32 %v4210, %v4292
    %v4294 = vpop.f32.mrf.mxu0
    %v4295 = vadd.f32 %v4212, %v4294
    %4296 = vdwg.mxu0
    %4297 = vmatprep.subr.mxu0 0.0
    %4298 = vmatpush1.msra.mxu0 0.0
    %4299 = vmatprep.subr.mxu0 0.0
    %4300 = vmatpush1.msra.mxu0 0.0
    %4301 = vmatprep.subr.mxu0 0.0
    %4302 = vmatpush1.msra.mxu0 0.0
    %4303 = vmatprep.subr.mxu0 0.0
    %4304 = vmatpush1.msra.mxu0 0.0
    %4305 = vmatprep.subr.mxu0 %v4120
    %4306 = vmatpush1.msra.mxu0 %v4119
    %4307 = vmatprep.subr.mxu0 %v4117
    %4308 = vmatpush1.msra.mxu0 %v4116
    %4309 = vmatprep.subr.mxu0 %v4114
    %4310 = vmatpush1.msra.mxu0 %v4113
    %4311 = vmatprep.subr.mxu0 %v4111
    %4312 = vmatpush1.msra.mxu0 %v4110
    %4313 = vmatprep.subr.mxu0 %v4108
    %4314 = vmatpush1.msra.mxu0 %v4107
    %4315 = vmatprep.subr.mxu0 %v4105
    %4316 = vmatpush1.msra.mxu0 %v4104
    %4317 = vmatprep.subr.mxu0 %v4102
    %4318 = vmatpush1.msra.mxu0 %v4101
    %4319 = vmatprep.subr.mxu0 %v4099
    %4320 = vmatpush1.msra.mxu0 %v4098
    %4321 = vmatprep.subr.mxu0 %v4096
    %4322 = vmatpush1.msra.mxu0 %v4095
    %4323 = vmatprep.subr.mxu0 %v4093
    %4324 = vmatpush1.msra.mxu0 %v4092
    %4325 = vmatprep.subr.mxu0 %v4090
    %4326 = vmatpush1.msra.mxu0 %v4089
    %4327 = vmatprep.subr.mxu0 %v4087
    %4328 = vmatpush1.msra.mxu0 %v4086
    %4329 = vmatprep.subr.mxu0 0.0
    %4330 = vmatpush2.msra.mxu0 0.0
    %4331 = vmatprep.subr.mxu0 0.0
    %4332 = vmatpush2.msra.mxu0 0.0
    %4333 = vmatprep.subr.mxu0 0.0
    %4334 = vmatpush2.msra.mxu0 0.0
    %4335 = vmatprep.subr.mxu0 0.0
    %4336 = vmatpush2.msra.mxu0 0.0
    %4337 = vmatprep.subr.mxu0 0.0
    %4338 = vmatpush2.msra.mxu0 0.0
    %4339 = vmatprep.subr.mxu0 0.0
    %4340 = vmatpush2.msra.mxu0 0.0
    %4341 = vmatprep.subr.mxu0 0.0
    %4342 = vmatpush2.msra.mxu0 0.0
    %4343 = vmatprep.subr.mxu0 0.0
    %4344 = vmatpush2.msra.mxu0 0.0
    %4345 = vmatprep.subr.mxu0 0.0
    %4346 = vmatpush2.msra.mxu0 0.0
    %4347 = vmatprep.subr.mxu0 0.0
    %4348 = vmatpush2.msra.mxu0 0.0
    %4349 = vmatprep.subr.mxu0 0.0
    %4350 = vmatpush2.msra.mxu0 0.0
    %4351 = vmatprep.subr.mxu0 0.0
    %4352 = vmatpush2.msra.mxu0 0.0
    %4353 = vmatprep.subr.mxu0 0.0
    %4354 = vmatpush2.msra.mxu0 0.0
    %4355 = vmatprep.subr.mxu0 0.0
    %4356 = vmatpush2.msra.mxu0 0.0
    %4357 = vmatprep.subr.mxu0 0.0
    %4358 = vmatpush2.msra.mxu0 0.0
    %4359 = vmatprep.subr.mxu0 0.0
    %4360 = vmatpush2.msra.mxu0 0.0
    %4361 = vmatprep.mubr.f32.mxu0 0.0
    %4362 = vmatmul.mubr.f32.gmra.mxu0 %v4123
    %v4363 = vpop.f32.mrf.mxu0
    %v4364 = vadd.f32 %v4281, %v4363
    %v4365 = vpop.f32.mrf.mxu0
    %v4366 = vadd.f32 %v4283, %v4365
    %4367 = vmatprep.mubr.f32.mxu0 0.0
    %4368 = vmatmul.mubr.f32.gmra.mxu0 %v4126
    %v4369 = vpop.f32.mrf.mxu0
    %v4370 = vadd.f32 %v4287, %v4369
    %v4371 = vpop.f32.mrf.mxu0
    %v4372 = vadd.f32 %v4289, %v4371
    %4373 = vmatprep.mubr.f32.mxu0 0.0
    %4374 = vmatmul.mubr.f32.gmra.mxu0 %v4129
    %v4375 = vpop.f32.mrf.mxu0
    %v4376 = vadd.f32 %v4293, %v4375
    %v4377 = vpop.f32.mrf.mxu0
    %v4378 = vadd.f32 %v4295, %v4377
    %4379 = vdwg.mxu0
    %4380 = vmatprep.subr.mxu0 0.0
    %4381 = vmatpush1.msra.mxu0 %v3941
    %4382 = vmatprep.subr.mxu0 0.0
    %4383 = vmatpush1.msra.mxu0 %v3938
    %4384 = vmatprep.subr.mxu0 0.0
    %4385 = vmatpush1.msra.mxu0 %v3935
    %4386 = vmatprep.subr.mxu0 0.0
    %4387 = vmatpush1.msra.mxu0 %v3932
    %4388 = vmatprep.subr.mxu0 0.0
    %4389 = vmatpush1.msra.mxu0 %v3929
    %4390 = vmatprep.subr.mxu0 0.0
    %4391 = vmatpush1.msra.mxu0 %v3926
    %4392 = vmatprep.subr.mxu0 0.0
    %4393 = vmatpush1.msra.mxu0 %v3923
    %4394 = vmatprep.subr.mxu0 0.0
    %4395 = vmatpush1.msra.mxu0 %v3920
    %4396 = vmatprep.subr.mxu0 0.0
    %4397 = vmatpush1.msra.mxu0 %v3917
    %4398 = vmatprep.subr.mxu0 0.0
    %4399 = vmatpush1.msra.mxu0 %v3914
    %4400 = vmatprep.subr.mxu0 0.0
    %4401 = vmatpush1.msra.mxu0 %v3911
    %4402 = vmatprep.subr.mxu0 0.0
    %4403 = vmatpush1.msra.mxu0 %v3908
    %4404 = vmatprep.subr.mxu0 0.0
    %4405 = vmatpush1.msra.mxu0 %v3905
    %4406 = vmatprep.subr.mxu0 0.0
    %4407 = vmatpush1.msra.mxu0 %v3902
    %4408 = vmatprep.subr.mxu0 0.0
    %4409 = vmatpush1.msra.mxu0 %v3899
    %4410 = vmatprep.subr.mxu0 0.0
    %4411 = vmatpush1.msra.mxu0 %v3896
    %4412 = vmatprep.subr.mxu0 0.0
    %4413 = vmatpush2.msra.mxu0 %v3989
    %4414 = vmatprep.subr.mxu0 0.0
    %4415 = vmatpush2.msra.mxu0 %v3986
    %4416 = vmatprep.subr.mxu0 0.0
    %4417 = vmatpush2.msra.mxu0 %v3983
    %4418 = vmatprep.subr.mxu0 0.0
    %4419 = vmatpush2.msra.mxu0 %v3980
    %4420 = vmatprep.subr.mxu0 0.0
    %4421 = vmatpush2.msra.mxu0 %v3977
    %4422 = vmatprep.subr.mxu0 0.0
    %4423 = vmatpush2.msra.mxu0 %v3974
    %4424 = vmatprep.subr.mxu0 0.0
    %4425 = vmatpush2.msra.mxu0 %v3971
    %4426 = vmatprep.subr.mxu0 0.0
    %4427 = vmatpush2.msra.mxu0 %v3968
    %4428 = vmatprep.subr.mxu0 0.0
    %4429 = vmatpush2.msra.mxu0 %v3965
    %4430 = vmatprep.subr.mxu0 0.0
    %4431 = vmatpush2.msra.mxu0 %v3962
    %4432 = vmatprep.subr.mxu0 0.0
    %4433 = vmatpush2.msra.mxu0 %v3959
    %4434 = vmatprep.subr.mxu0 0.0
    %4435 = vmatpush2.msra.mxu0 %v3956
    %4436 = vmatprep.subr.mxu0 0.0
    %4437 = vmatpush2.msra.mxu0 %v3953
    %4438 = vmatprep.subr.mxu0 0.0
    %4439 = vmatpush2.msra.mxu0 %v3950
    %4440 = vmatprep.subr.mxu0 0.0
    %4441 = vmatpush2.msra.mxu0 %v3947
    %4442 = vmatprep.subr.mxu0 0.0
    %4443 = vmatpush2.msra.mxu0 %v3944
    %4444 = vmatprep.mubr.f32.mxu0 %v3716
    %4445 = vmatmul.mubr.f32.gmra.mxu0 %v3714
    %v4446 = vpop.f32.mrf.mxu0
    %v4447 = vadd.f32 0.0, %v4446
    %v4448 = vpop.f32.mrf.mxu0
    %4449 = vmatprep.mubr.f32.mxu0 %v3722
    %4450 = vmatmul.mubr.f32.gmra.mxu0 %v3720
    %v4451 = vpop.f32.mrf.mxu0
    %v4452 = vadd.f32 0.0, %v4451
    %v4453 = vpop.f32.mrf.mxu0
    %4454 = vmatprep.mubr.f32.mxu0 %v3728
    %4455 = vmatmul.mubr.f32.gmra.mxu0 %v3726
    %v4456 = vpop.f32.mrf.mxu0
    %v4457 = vadd.f32 0.0, %v4456
    %v4458 = vpop.f32.mrf.mxu0
    %4459 = vdwg.mxu0
    %4460 = vmatprep.subr.mxu0 0.0
    %4461 = vmatpush1.msra.mxu0 %v4037
    %4462 = vmatprep.subr.mxu0 0.0
    %4463 = vmatpush1.msra.mxu0 %v4034
    %4464 = vmatprep.subr.mxu0 0.0
    %4465 = vmatpush1.msra.mxu0 %v4031
    %4466 = vmatprep.subr.mxu0 0.0
    %4467 = vmatpush1.msra.mxu0 %v4028
    %4468 = vmatprep.subr.mxu0 0.0
    %4469 = vmatpush1.msra.mxu0 %v4025
    %4470 = vmatprep.subr.mxu0 0.0
    %4471 = vmatpush1.msra.mxu0 %v4022
    %4472 = vmatprep.subr.mxu0 0.0
    %4473 = vmatpush1.msra.mxu0 %v4019
    %4474 = vmatprep.subr.mxu0 0.0
    %4475 = vmatpush1.msra.mxu0 %v4016
    %4476 = vmatprep.subr.mxu0 0.0
    %4477 = vmatpush1.msra.mxu0 %v4013
    %4478 = vmatprep.subr.mxu0 0.0
    %4479 = vmatpush1.msra.mxu0 %v4010
    %4480 = vmatprep.subr.mxu0 0.0
    %4481 = vmatpush1.msra.mxu0 %v4007
    %4482 = vmatprep.subr.mxu0 0.0
    %4483 = vmatpush1.msra.mxu0 %v4004
    %4484 = vmatprep.subr.mxu0 0.0
    %4485 = vmatpush1.msra.mxu0 %v4001
    %4486 = vmatprep.subr.mxu0 0.0
    %4487 = vmatpush1.msra.mxu0 %v3998
    %4488 = vmatprep.subr.mxu0 0.0
    %4489 = vmatpush1.msra.mxu0 %v3995
    %4490 = vmatprep.subr.mxu0 0.0
    %4491 = vmatpush1.msra.mxu0 %v3992
    %4492 = vmatprep.subr.mxu0 0.0
    %4493 = vmatpush2.msra.mxu0 %v4085
    %4494 = vmatprep.subr.mxu0 0.0
    %4495 = vmatpush2.msra.mxu0 %v4082
    %4496 = vmatprep.subr.mxu0 0.0
    %4497 = vmatpush2.msra.mxu0 %v4079
    %4498 = vmatprep.subr.mxu0 0.0
    %4499 = vmatpush2.msra.mxu0 %v4076
    %4500 = vmatprep.subr.mxu0 0.0
    %4501 = vmatpush2.msra.mxu0 %v4073
    %4502 = vmatprep.subr.mxu0 0.0
    %4503 = vmatpush2.msra.mxu0 %v4070
    %4504 = vmatprep.subr.mxu0 0.0
    %4505 = vmatpush2.msra.mxu0 %v4067
    %4506 = vmatprep.subr.mxu0 0.0
    %4507 = vmatpush2.msra.mxu0 %v4064
    %4508 = vmatprep.subr.mxu0 0.0
    %4509 = vmatpush2.msra.mxu0 %v4061
    %4510 = vmatprep.subr.mxu0 0.0
    %4511 = vmatpush2.msra.mxu0 %v4058
    %4512 = vmatprep.subr.mxu0 0.0
    %4513 = vmatpush2.msra.mxu0 %v4055
    %4514 = vmatprep.subr.mxu0 0.0
    %4515 = vmatpush2.msra.mxu0 %v4052
    %4516 = vmatprep.subr.mxu0 0.0
    %4517 = vmatpush2.msra.mxu0 %v4049
    %4518 = vmatprep.subr.mxu0 0.0
    %4519 = vmatpush2.msra.mxu0 %v4046
    %4520 = vmatprep.subr.mxu0 0.0
    %4521 = vmatpush2.msra.mxu0 %v4043
    %4522 = vmatprep.subr.mxu0 0.0
    %4523 = vmatpush2.msra.mxu0 %v4040
    %4524 = vmatprep.mubr.f32.mxu0 %v3799
    %4525 = vmatmul.mubr.f32.gmra.mxu0 %v3797
    %v4526 = vpop.f32.mrf.mxu0
    %v4527 = vadd.f32 %v4447, %v4526
    %v4528 = vpop.f32.mrf.mxu0
    %4529 = vmatprep.mubr.f32.mxu0 %v3805
    %4530 = vmatmul.mubr.f32.gmra.mxu0 %v3803
    %v4531 = vpop.f32.mrf.mxu0
    %v4532 = vadd.f32 %v4452, %v4531
    %v4533 = vpop.f32.mrf.mxu0
    %4534 = vmatprep.mubr.f32.mxu0 %v3811
    %4535 = vmatmul.mubr.f32.gmra.mxu0 %v3809
    %v4536 = vpop.f32.mrf.mxu0
    %v4537 = vadd.f32 %v4457, %v4536
    %v4538 = vpop.f32.mrf.mxu0
    %4539 = vdwg.mxu0
    %4540 = vmatprep.subr.mxu0 0.0
    %4541 = vmatpush1.msra.mxu0 0.0
    %4542 = vmatprep.subr.mxu0 0.0
    %4543 = vmatpush1.msra.mxu0 0.0
    %4544 = vmatprep.subr.mxu0 0.0
    %4545 = vmatpush1.msra.mxu0 0.0
    %4546 = vmatprep.subr.mxu0 0.0
    %4547 = vmatpush1.msra.mxu0 0.0
    %4548 = vmatprep.subr.mxu0 0.0
    %4549 = vmatpush1.msra.mxu0 %v4121
    %4550 = vmatprep.subr.mxu0 0.0
    %4551 = vmatpush1.msra.mxu0 %v4118
    %4552 = vmatprep.subr.mxu0 0.0
    %4553 = vmatpush1.msra.mxu0 %v4115
    %4554 = vmatprep.subr.mxu0 0.0
    %4555 = vmatpush1.msra.mxu0 %v4112
    %4556 = vmatprep.subr.mxu0 0.0
    %4557 = vmatpush1.msra.mxu0 %v4109
    %4558 = vmatprep.subr.mxu0 0.0
    %4559 = vmatpush1.msra.mxu0 %v4106
    %4560 = vmatprep.subr.mxu0 0.0
    %4561 = vmatpush1.msra.mxu0 %v4103
    %4562 = vmatprep.subr.mxu0 0.0
    %4563 = vmatpush1.msra.mxu0 %v4100
    %4564 = vmatprep.subr.mxu0 0.0
    %4565 = vmatpush1.msra.mxu0 %v4097
    %4566 = vmatprep.subr.mxu0 0.0
    %4567 = vmatpush1.msra.mxu0 %v4094
    %4568 = vmatprep.subr.mxu0 0.0
    %4569 = vmatpush1.msra.mxu0 %v4091
    %4570 = vmatprep.subr.mxu0 0.0
    %4571 = vmatpush1.msra.mxu0 %v4088
    %4572 = vmatprep.subr.mxu0 0.0
    %4573 = vmatpush2.msra.mxu0 0.0
    %4574 = vmatprep.subr.mxu0 0.0
    %4575 = vmatpush2.msra.mxu0 0.0
    %4576 = vmatprep.subr.mxu0 0.0
    %4577 = vmatpush2.msra.mxu0 0.0
    %4578 = vmatprep.subr.mxu0 0.0
    %4579 = vmatpush2.msra.mxu0 0.0
    %4580 = vmatprep.subr.mxu0 0.0
    %4581 = vmatpush2.msra.mxu0 0.0
    %4582 = vmatprep.subr.mxu0 0.0
    %4583 = vmatpush2.msra.mxu0 0.0
    %4584 = vmatprep.subr.mxu0 0.0
    %4585 = vmatpush2.msra.mxu0 0.0
    %4586 = vmatprep.subr.mxu0 0.0
    %4587 = vmatpush2.msra.mxu0 0.0
    %4588 = vmatprep.subr.mxu0 0.0
    %4589 = vmatpush2.msra.mxu0 0.0
    %4590 = vmatprep.subr.mxu0 0.0
    %4591 = vmatpush2.msra.mxu0 0.0
    %4592 = vmatprep.subr.mxu0 0.0
    %4593 = vmatpush2.msra.mxu0 0.0
    %4594 = vmatprep.subr.mxu0 0.0
    %4595 = vmatpush2.msra.mxu0 0.0
    %4596 = vmatprep.subr.mxu0 0.0
    %4597 = vmatpush2.msra.mxu0 0.0
    %4598 = vmatprep.subr.mxu0 0.0
    %4599 = vmatpush2.msra.mxu0 0.0
    %4600 = vmatprep.subr.mxu0 0.0
    %4601 = vmatpush2.msra.mxu0 0.0
    %4602 = vmatprep.subr.mxu0 0.0
    %4603 = vmatpush2.msra.mxu0 0.0
    %4604 = vmatprep.mubr.f32.mxu0 0.0
    %4605 = vmatmul.mubr.f32.gmra.mxu0 %v4123
    %v4606 = vpop.f32.mrf.mxu0
    %v4607 = vadd.f32 %v4527, %v4606
    %v4608 = vpop.f32.mrf.mxu0
    %4609 = vmatprep.mubr.f32.mxu0 0.0
    %4610 = vmatmul.mubr.f32.gmra.mxu0 %v4126
    %v4611 = vpop.f32.mrf.mxu0
    %v4612 = vadd.f32 %v4532, %v4611
    %v4613 = vpop.f32.mrf.mxu0
    %4614 = vmatprep.mubr.f32.mxu0 0.0
    %4615 = vmatmul.mubr.f32.gmra.mxu0 %v4129
    %v4616 = vpop.f32.mrf.mxu0
    %v4617 = vadd.f32 %v4537, %v4616
    %v4618 = vpop.f32.mrf.mxu0
    %4619 = vdwg.mxu0
    %v4620 = vadd.f32 %v3378, %v4364
    %v4621 = vadd.f32 %v3380, %v4366
    %v4622 = vadd.f32 %v3621, %v4607
    %v4623 = vadd.f32 %v3384, %v4370
    %v4624 = vadd.f32 %v3386, %v4372
    %v4625 = vadd.f32 %v3626, %v4612
    %v4626 = vadd.f32 %v3390, %v4376
    %v4627 = vadd.f32 %v3392, %v4378
    %v4628 = vadd.f32 %v3631, %v4617
    %v4629 = vld [vmem:[%s7] sm:$0x7]
    %v4631 = vlaneseq
    %v4632 = vshrl.u32 %v4631, 7
    %v4633 = vsub.s32 0, %v4632
    %v4634 = vrot.slane %v4629, %v4633
    %v4635 = vlaneseq
    %v4636 = vshrl.u32 %v4635, 7
    %v4637 = vsub.s32 1, %v4636
    %v4638 = vrot.slane %v4629, %v4637
    %v4639 = vlaneseq
    %v4640 = vshrl.u32 %v4639, 7
    %v4641 = vsub.s32 2, %v4640
    %v4642 = vrot.slane %v4629, %v4641
    %v4646 = vadd.f32 %v4620, %v4634
    %v4647 = vadd.f32 %v4621, %v4638
    %v4648 = vadd.f32 %v4622, %v4642
    %v4649 = vadd.f32 %v4623, %v4634
    %v4650 = vadd.f32 %v4624, %v4638
    %v4651 = vadd.f32 %v4625, %v4642
    %v4652 = vadd.f32 %v4626, %v4634
    %v4653 = vadd.f32 %v4627, %v4638
    %v4654 = vadd.f32 %v4628, %v4642
    %v4655 = vmax.f32 %v4646, 0.0
    %v4656 = vmax.f32 %v4647, 0.0
    %v4657 = vmax.f32 %v4648, 0.0
    %v4658 = vmax.f32 %v4649, 0.0
    %v4659 = vmax.f32 %v4650, 0.0
    %v4660 = vmax.f32 %v4651, 0.0
    %v4661 = vmax.f32 %v4652, 0.0
    %v4662 = vmax.f32 %v4653, 0.0
    %v4663 = vmax.f32 %v4654, 0.0
    %v4664 = vld [vmem:[#allocation11] sm:$0xff]
    %vm4665 = vcmask 146432
    %v4667 = vsel %vm4665, %v4664, 0
    %vm4669 = vcmask 1041408
    %v4671 = vsel %vm4669, %v4661, 0
    %v4674 = vsel %vm4669, %v4662, 0
    %v4677 = vsel %vm4669, %v4663, 0
    %4679 = vmatprep.subr.mxu0 0.0
    %4680 = vmatpush1.msra.mxu0 0.0
    %4681 = vmatprep.subr.mxu0 0.0
    %4682 = vmatpush1.msra.mxu0 0.0
    %4683 = vmatprep.subr.mxu0 0.0
    %4684 = vmatpush1.msra.mxu0 0.0
    %4685 = vmatprep.subr.mxu0 0.0
    %4686 = vmatpush1.msra.mxu0 0.0
    %4687 = vmatprep.subr.mxu0 0.0
    %4688 = vmatpush1.msra.mxu0 0.0
    %4689 = vmatprep.subr.mxu0 0.0
    %4690 = vmatpush1.msra.mxu0 0.0
    %4691 = vmatprep.subr.mxu0 0.0
    %4692 = vmatpush1.msra.mxu0 0.0
    %4693 = vmatprep.subr.mxu0 0.0
    %4694 = vmatpush1.msra.mxu0 0.0
    %4695 = vmatprep.subr.mxu0 0.0
    %4696 = vmatpush1.msra.mxu0 0.0
    %4697 = vmatprep.subr.mxu0 0.0
    %4698 = vmatpush1.msra.mxu0 0.0
    %4699 = vmatprep.subr.mxu0 0.0
    %4700 = vmatpush1.msra.mxu0 0.0
    %4701 = vmatprep.subr.mxu0 0.0
    %4702 = vmatpush1.msra.mxu0 0.0
    %4703 = vmatprep.subr.mxu0 0.0
    %4704 = vmatpush1.msra.mxu0 0.0
    %4705 = vmatprep.subr.mxu0 %v4674
    %4706 = vmatpush1.msra.mxu0 %v4671
    %4707 = vmatprep.subr.mxu0 %v4659
    %4708 = vmatpush1.msra.mxu0 %v4658
    %4709 = vmatprep.subr.mxu0 %v4656
    %4710 = vmatpush1.msra.mxu0 %v4655
    %4711 = vmatprep.subr.mxu0 0.0
    %4712 = vmatpush2.msra.mxu0 0.0
    %4713 = vmatprep.subr.mxu0 0.0
    %4714 = vmatpush2.msra.mxu0 0.0
    %4715 = vmatprep.subr.mxu0 0.0
    %4716 = vmatpush2.msra.mxu0 0.0
    %4717 = vmatprep.subr.mxu0 0.0
    %4718 = vmatpush2.msra.mxu0 0.0
    %4719 = vmatprep.subr.mxu0 0.0
    %4720 = vmatpush2.msra.mxu0 0.0
    %4721 = vmatprep.subr.mxu0 0.0
    %4722 = vmatpush2.msra.mxu0 0.0
    %4723 = vmatprep.subr.mxu0 0.0
    %4724 = vmatpush2.msra.mxu0 0.0
    %4725 = vmatprep.subr.mxu0 0.0
    %4726 = vmatpush2.msra.mxu0 0.0
    %4727 = vmatprep.subr.mxu0 0.0
    %4728 = vmatpush2.msra.mxu0 0.0
    %4729 = vmatprep.subr.mxu0 0.0
    %4730 = vmatpush2.msra.mxu0 0.0
    %4731 = vmatprep.subr.mxu0 0.0
    %4732 = vmatpush2.msra.mxu0 0.0
    %4733 = vmatprep.subr.mxu0 0.0
    %4734 = vmatpush2.msra.mxu0 0.0
    %4735 = vmatprep.subr.mxu0 0.0
    %4736 = vmatpush2.msra.mxu0 0.0
    %4737 = vmatprep.subr.mxu0 0.0
    %4738 = vmatpush2.msra.mxu0 0.0
    %4739 = vmatprep.subr.mxu0 0.0
    %4740 = vmatpush2.msra.mxu0 0.0
    %4741 = vmatprep.subr.mxu0 0.0
    %4742 = vmatpush2.msra.mxu0 0.0
    %4743 = vmatprep.mubr.f32.mxu0 0.0
    %4744 = vmatmul.mubr.f32.gmra.mxu0 %v4667
    %v4745 = vpop.f32.mrf.mxu0
    %v4746 = vadd.f32 0.0, %v4745
    %v4747 = vpop.f32.mrf.mxu0
    %v4748 = vadd.f32 0.0, %v4747
    %4749 = vdwg.mxu0
    %4750 = vmatprep.subr.mxu0 0.0
    %4751 = vmatpush1.msra.mxu0 0.0
    %4752 = vmatprep.subr.mxu0 0.0
    %4753 = vmatpush1.msra.mxu0 0.0
    %4754 = vmatprep.subr.mxu0 0.0
    %4755 = vmatpush1.msra.mxu0 0.0
    %4756 = vmatprep.subr.mxu0 0.0
    %4757 = vmatpush1.msra.mxu0 0.0
    %4758 = vmatprep.subr.mxu0 0.0
    %4759 = vmatpush1.msra.mxu0 0.0
    %4760 = vmatprep.subr.mxu0 0.0
    %4761 = vmatpush1.msra.mxu0 0.0
    %4762 = vmatprep.subr.mxu0 0.0
    %4763 = vmatpush1.msra.mxu0 0.0
    %4764 = vmatprep.subr.mxu0 0.0
    %4765 = vmatpush1.msra.mxu0 0.0
    %4766 = vmatprep.subr.mxu0 0.0
    %4767 = vmatpush1.msra.mxu0 0.0
    %4768 = vmatprep.subr.mxu0 0.0
    %4769 = vmatpush1.msra.mxu0 0.0
    %4770 = vmatprep.subr.mxu0 0.0
    %4771 = vmatpush1.msra.mxu0 0.0
    %4772 = vmatprep.subr.mxu0 0.0
    %4773 = vmatpush1.msra.mxu0 0.0
    %4774 = vmatprep.subr.mxu0 0.0
    %4775 = vmatpush1.msra.mxu0 0.0
    %4776 = vmatprep.subr.mxu0 0.0
    %4777 = vmatpush1.msra.mxu0 %v4677
    %4778 = vmatprep.subr.mxu0 0.0
    %4779 = vmatpush1.msra.mxu0 %v4660
    %4780 = vmatprep.subr.mxu0 0.0
    %4781 = vmatpush1.msra.mxu0 %v4657
    %4782 = vmatprep.subr.mxu0 0.0
    %4783 = vmatpush2.msra.mxu0 0.0
    %4784 = vmatprep.subr.mxu0 0.0
    %4785 = vmatpush2.msra.mxu0 0.0
    %4786 = vmatprep.subr.mxu0 0.0
    %4787 = vmatpush2.msra.mxu0 0.0
    %4788 = vmatprep.subr.mxu0 0.0
    %4789 = vmatpush2.msra.mxu0 0.0
    %4790 = vmatprep.subr.mxu0 0.0
    %4791 = vmatpush2.msra.mxu0 0.0
    %4792 = vmatprep.subr.mxu0 0.0
    %4793 = vmatpush2.msra.mxu0 0.0
    %4794 = vmatprep.subr.mxu0 0.0
    %4795 = vmatpush2.msra.mxu0 0.0
    %4796 = vmatprep.subr.mxu0 0.0
    %4797 = vmatpush2.msra.mxu0 0.0
    %4798 = vmatprep.subr.mxu0 0.0
    %4799 = vmatpush2.msra.mxu0 0.0
    %4800 = vmatprep.subr.mxu0 0.0
    %4801 = vmatpush2.msra.mxu0 0.0
    %4802 = vmatprep.subr.mxu0 0.0
    %4803 = vmatpush2.msra.mxu0 0.0
    %4804 = vmatprep.subr.mxu0 0.0
    %4805 = vmatpush2.msra.mxu0 0.0
    %4806 = vmatprep.subr.mxu0 0.0
    %4807 = vmatpush2.msra.mxu0 0.0
    %4808 = vmatprep.subr.mxu0 0.0
    %4809 = vmatpush2.msra.mxu0 0.0
    %4810 = vmatprep.subr.mxu0 0.0
    %4811 = vmatpush2.msra.mxu0 0.0
    %4812 = vmatprep.subr.mxu0 0.0
    %4813 = vmatpush2.msra.mxu0 0.0
    %4814 = vmatprep.mubr.f32.mxu0 0.0
    %4815 = vmatmul.mubr.f32.gmra.mxu0 %v4667
    %v4816 = vpop.f32.mrf.mxu0
    %v4817 = vadd.f32 0.0, %v4816
    %v4818 = vpop.f32.mrf.mxu0
    %4819 = vdwg.mxu0
    %v4820 = vld [vmem:[#allocation13] sm:$0xff]
    %v4821 = vld [vmem:[#allocation13 + $0x8] sm:$0xff]
    %v4822 = vld [vmem:[#allocation13 + $0x10] sm:$0xff]
    %v4823 = vld [vmem:[#allocation13 + $0x18] sm:$0xff]
    %v4824 = vld [vmem:[#allocation13 + $0x20] sm:$0xff]
    %v4825 = vld [vmem:[#allocation13 + $0x28] sm:$0xff]
    %v4826 = vld [vmem:[#allocation13 + $0x30] sm:$0xff]
    %v4827 = vld [vmem:[#allocation13 + $0x38] sm:$0xff]
    %v4828 = vld [vmem:[#allocation13 + $0x40] sm:$0xff]
    %v4829 = vld [vmem:[#allocation13 + $0x48] sm:$0xff]
    %v4830 = vld [vmem:[#allocation13 + $0x50] sm:$0xff]
    %v4831 = vld [vmem:[#allocation13 + $0x58] sm:$0xff]
    %v4832 = vld [vmem:[#allocation13 + $0x60] sm:$0xff]
    %v4833 = vld [vmem:[#allocation13 + $0x68] sm:$0xff]
    %v4834 = vld [vmem:[#allocation13 + $0x70] sm:$0xff]
    %v4835 = vld [vmem:[#allocation13 + $0x78] sm:$0xff]
    %v4836 = vld [vmem:[#allocation13 + $0x80] sm:$0xff]
    %v4837 = vld [vmem:[#allocation13 + $0x88] sm:$0xff]
    %v4838 = vld [vmem:[#allocation13 + $0x90] sm:$0xff]
    %v4839 = vld [vmem:[#allocation13 + $0x98] sm:$0xff]
    %v4840 = vld [vmem:[#allocation13 + $0xa0] sm:$0xff]
    %v4841 = vld [vmem:[#allocation13 + $0xa8] sm:$0xff]
    %v4842 = vld [vmem:[#allocation13 + $0xb0] sm:$0xff]
    %v4843 = vld [vmem:[#allocation13 + $0xb8] sm:$0xff]
    %v4844 = vld [vmem:[#allocation13 + $0xc0] sm:$0xff]
    %v4845 = vld [vmem:[#allocation13 + $0xc8] sm:$0xff]
    %v4846 = vld [vmem:[#allocation13 + $0xd0] sm:$0xff]
    %v4847 = vld [vmem:[#allocation13 + $0xd8] sm:$0xff]
    %v4848 = vld [vmem:[#allocation13 + $0xe0] sm:$0xff]
    %v4849 = vld [vmem:[#allocation13 + $0xe8] sm:$0xff]
    %v4850 = vld [vmem:[#allocation13 + $0xf0] sm:$0xff]
    %v4851 = vld [vmem:[#allocation13 + $0xf8] sm:$0xff]
    %v4852 = vld [vmem:[#allocation13 + $0x100] sm:$0xff]
    %v4853 = vld [vmem:[#allocation13 + $0x108] sm:$0xff]
    %v4854 = vld [vmem:[#allocation13 + $0x110] sm:$0xff]
    %v4855 = vld [vmem:[#allocation13 + $0x118] sm:$0xff]
    %s4856 = scalar_lea.vmem [#allocation11], 8
    %v4857 = vld [vmem:[%s4856] sm:$0xff]
    %v4859 = vsel %vm4665, %v4857, 0
    %4861 = vmatprep.subr.mxu0 0.0
    %4862 = vmatpush1.msra.mxu0 0.0
    %4863 = vmatprep.subr.mxu0 0.0
    %4864 = vmatpush1.msra.mxu0 0.0
    %4865 = vmatprep.subr.mxu0 0.0
    %4866 = vmatpush1.msra.mxu0 0.0
    %4867 = vmatprep.subr.mxu0 0.0
    %4868 = vmatpush1.msra.mxu0 0.0
    %4869 = vmatprep.subr.mxu0 0.0
    %4870 = vmatpush1.msra.mxu0 0.0
    %4871 = vmatprep.subr.mxu0 0.0
    %4872 = vmatpush1.msra.mxu0 0.0
    %4873 = vmatprep.subr.mxu0 0.0
    %4874 = vmatpush1.msra.mxu0 0.0
    %4875 = vmatprep.subr.mxu0 0.0
    %4876 = vmatpush1.msra.mxu0 0.0
    %4877 = vmatprep.subr.mxu0 0.0
    %4878 = vmatpush1.msra.mxu0 0.0
    %4879 = vmatprep.subr.mxu0 0.0
    %4880 = vmatpush1.msra.mxu0 0.0
    %4881 = vmatprep.subr.mxu0 0.0
    %4882 = vmatpush1.msra.mxu0 0.0
    %4883 = vmatprep.subr.mxu0 0.0
    %4884 = vmatpush1.msra.mxu0 0.0
    %4885 = vmatprep.subr.mxu0 0.0
    %4886 = vmatpush1.msra.mxu0 0.0
    %4887 = vmatprep.subr.mxu0 %v4674
    %4888 = vmatpush1.msra.mxu0 %v4671
    %4889 = vmatprep.subr.mxu0 %v4659
    %4890 = vmatpush1.msra.mxu0 %v4658
    %4891 = vmatprep.subr.mxu0 %v4656
    %4892 = vmatpush1.msra.mxu0 %v4655
    %4893 = vmatprep.subr.mxu0 0.0
    %4894 = vmatpush2.msra.mxu0 0.0
    %4895 = vmatprep.subr.mxu0 0.0
    %4896 = vmatpush2.msra.mxu0 0.0
    %4897 = vmatprep.subr.mxu0 0.0
    %4898 = vmatpush2.msra.mxu0 0.0
    %4899 = vmatprep.subr.mxu0 0.0
    %4900 = vmatpush2.msra.mxu0 0.0
    %4901 = vmatprep.subr.mxu0 0.0
    %4902 = vmatpush2.msra.mxu0 0.0
    %4903 = vmatprep.subr.mxu0 0.0
    %4904 = vmatpush2.msra.mxu0 0.0
    %4905 = vmatprep.subr.mxu0 0.0
    %4906 = vmatpush2.msra.mxu0 0.0
    %4907 = vmatprep.subr.mxu0 0.0
    %4908 = vmatpush2.msra.mxu0 0.0
    %4909 = vmatprep.subr.mxu0 0.0
    %4910 = vmatpush2.msra.mxu0 0.0
    %4911 = vmatprep.subr.mxu0 0.0
    %4912 = vmatpush2.msra.mxu0 0.0
    %4913 = vmatprep.subr.mxu0 0.0
    %4914 = vmatpush2.msra.mxu0 0.0
    %4915 = vmatprep.subr.mxu0 0.0
    %4916 = vmatpush2.msra.mxu0 0.0
    %4917 = vmatprep.subr.mxu0 0.0
    %4918 = vmatpush2.msra.mxu0 0.0
    %4919 = vmatprep.subr.mxu0 0.0
    %4920 = vmatpush2.msra.mxu0 0.0
    %4921 = vmatprep.subr.mxu0 0.0
    %4922 = vmatpush2.msra.mxu0 0.0
    %4923 = vmatprep.subr.mxu0 0.0
    %4924 = vmatpush2.msra.mxu0 0.0
    %4925 = vmatprep.mubr.f32.mxu0 0.0
    %4926 = vmatmul.mubr.f32.gmra.mxu0 %v4859
    %v4927 = vpop.f32.mrf.mxu0
    %v4928 = vadd.f32 0.0, %v4927
    %v4929 = vpop.f32.mrf.mxu0
    %v4930 = vadd.f32 0.0, %v4929
    %4931 = vdwg.mxu0
    %4932 = vmatprep.subr.mxu0 0.0
    %4933 = vmatpush1.msra.mxu0 0.0
    %4934 = vmatprep.subr.mxu0 0.0
    %4935 = vmatpush1.msra.mxu0 0.0
    %4936 = vmatprep.subr.mxu0 0.0
    %4937 = vmatpush1.msra.mxu0 0.0
    %4938 = vmatprep.subr.mxu0 0.0
    %4939 = vmatpush1.msra.mxu0 0.0
    %4940 = vmatprep.subr.mxu0 0.0
    %4941 = vmatpush1.msra.mxu0 0.0
    %4942 = vmatprep.subr.mxu0 0.0
    %4943 = vmatpush1.msra.mxu0 0.0
    %4944 = vmatprep.subr.mxu0 0.0
    %4945 = vmatpush1.msra.mxu0 0.0
    %4946 = vmatprep.subr.mxu0 0.0
    %4947 = vmatpush1.msra.mxu0 0.0
    %4948 = vmatprep.subr.mxu0 0.0
    %4949 = vmatpush1.msra.mxu0 0.0
    %4950 = vmatprep.subr.mxu0 0.0
    %4951 = vmatpush1.msra.mxu0 0.0
    %4952 = vmatprep.subr.mxu0 0.0
    %4953 = vmatpush1.msra.mxu0 0.0
    %4954 = vmatprep.subr.mxu0 0.0
    %4955 = vmatpush1.msra.mxu0 0.0
    %4956 = vmatprep.subr.mxu0 0.0
    %4957 = vmatpush1.msra.mxu0 0.0
    %4958 = vmatprep.subr.mxu0 0.0
    %4959 = vmatpush1.msra.mxu0 %v4677
    %4960 = vmatprep.subr.mxu0 0.0
    %4961 = vmatpush1.msra.mxu0 %v4660
    %4962 = vmatprep.subr.mxu0 0.0
    %4963 = vmatpush1.msra.mxu0 %v4657
    %4964 = vmatprep.subr.mxu0 0.0
    %4965 = vmatpush2.msra.mxu0 0.0
    %4966 = vmatprep.subr.mxu0 0.0
    %4967 = vmatpush2.msra.mxu0 0.0
    %4968 = vmatprep.subr.mxu0 0.0
    %4969 = vmatpush2.msra.mxu0 0.0
    %4970 = vmatprep.subr.mxu0 0.0
    %4971 = vmatpush2.msra.mxu0 0.0
    %4972 = vmatprep.subr.mxu0 0.0
    %4973 = vmatpush2.msra.mxu0 0.0
    %4974 = vmatprep.subr.mxu0 0.0
    %4975 = vmatpush2.msra.mxu0 0.0
    %4976 = vmatprep.subr.mxu0 0.0
    %4977 = vmatpush2.msra.mxu0 0.0
    %4978 = vmatprep.subr.mxu0 0.0
    %4979 = vmatpush2.msra.mxu0 0.0
    %4980 = vmatprep.subr.mxu0 0.0
    %4981 = vmatpush2.msra.mxu0 0.0
    %4982 = vmatprep.subr.mxu0 0.0
    %4983 = vmatpush2.msra.mxu0 0.0
    %4984 = vmatprep.subr.mxu0 0.0
    %4985 = vmatpush2.msra.mxu0 0.0
    %4986 = vmatprep.subr.mxu0 0.0
    %4987 = vmatpush2.msra.mxu0 0.0
    %4988 = vmatprep.subr.mxu0 0.0
    %4989 = vmatpush2.msra.mxu0 0.0
    %4990 = vmatprep.subr.mxu0 0.0
    %4991 = vmatpush2.msra.mxu0 0.0
    %4992 = vmatprep.subr.mxu0 0.0
    %4993 = vmatpush2.msra.mxu0 0.0
    %4994 = vmatprep.subr.mxu0 0.0
    %4995 = vmatpush2.msra.mxu0 0.0
    %4996 = vmatprep.mubr.f32.mxu0 0.0
    %4997 = vmatmul.mubr.f32.gmra.mxu0 %v4859
    %v4998 = vpop.f32.mrf.mxu0
    %v4999 = vadd.f32 0.0, %v4998
    %v5000 = vpop.f32.mrf.mxu0
    %5001 = vdwg.mxu0
    %s5002 = scalar_lea.vmem [#allocation13], 288
    %v5003 = vld [vmem:[%s5002] sm:$0xff]
    %v5004 = vld [vmem:[%s5002 + $0x8] sm:$0xff]
    %v5005 = vld [vmem:[%s5002 + $0x10] sm:$0xff]
    %v5006 = vld [vmem:[%s5002 + $0x18] sm:$0xff]
    %v5007 = vld [vmem:[%s5002 + $0x20] sm:$0xff]
    %v5008 = vld [vmem:[%s5002 + $0x28] sm:$0xff]
    %v5009 = vld [vmem:[%s5002 + $0x30] sm:$0xff]
    %v5010 = vld [vmem:[%s5002 + $0x38] sm:$0xff]
    %v5011 = vld [vmem:[%s5002 + $0x40] sm:$0xff]
    %v5012 = vld [vmem:[%s5002 + $0x48] sm:$0xff]
    %v5013 = vld [vmem:[%s5002 + $0x50] sm:$0xff]
    %v5014 = vld [vmem:[%s5002 + $0x58] sm:$0xff]
    %v5015 = vld [vmem:[%s5002 + $0x60] sm:$0xff]
    %v5016 = vld [vmem:[%s5002 + $0x68] sm:$0xff]
    %v5017 = vld [vmem:[%s5002 + $0x70] sm:$0xff]
    %v5018 = vld [vmem:[%s5002 + $0x78] sm:$0xff]
    %v5019 = vld [vmem:[%s5002 + $0x80] sm:$0xff]
    %v5020 = vld [vmem:[%s5002 + $0x88] sm:$0xff]
    %v5021 = vld [vmem:[%s5002 + $0x90] sm:$0xff]
    %v5022 = vld [vmem:[%s5002 + $0x98] sm:$0xff]
    %v5023 = vld [vmem:[%s5002 + $0xa0] sm:$0xff]
    %v5024 = vld [vmem:[%s5002 + $0xa8] sm:$0xff]
    %v5025 = vld [vmem:[%s5002 + $0xb0] sm:$0xff]
    %v5026 = vld [vmem:[%s5002 + $0xb8] sm:$0xff]
    %v5027 = vld [vmem:[%s5002 + $0xc0] sm:$0xff]
    %v5028 = vld [vmem:[%s5002 + $0xc8] sm:$0xff]
    %v5029 = vld [vmem:[%s5002 + $0xd0] sm:$0xff]
    %v5030 = vld [vmem:[%s5002 + $0xd8] sm:$0xff]
    %v5031 = vld [vmem:[%s5002 + $0xe0] sm:$0xff]
    %v5032 = vld [vmem:[%s5002 + $0xe8] sm:$0xff]
    %v5033 = vld [vmem:[%s5002 + $0xf0] sm:$0xff]
    %v5034 = vld [vmem:[%s5002 + $0xf8] sm:$0xff]
    %v5035 = vld [vmem:[%s5002 + $0x100] sm:$0xff]
    %v5036 = vld [vmem:[%s5002 + $0x108] sm:$0xff]
    %v5037 = vld [vmem:[%s5002 + $0x110] sm:$0xff]
    %v5038 = vld [vmem:[%s5002 + $0x118] sm:$0xff]
    %vm5039 = vcmask 261120
    %v5041 = vsel %vm5039, %v4999, 0
    %5043 = vmatprep.subr.mxu0 0.0
    %5044 = vmatpush1.msra.mxu0 %v5018
    %5045 = vmatprep.subr.mxu0 0.0
    %5046 = vmatpush1.msra.mxu0 %v5017
    %5047 = vmatprep.subr.mxu0 0.0
    %5048 = vmatpush1.msra.mxu0 %v5016
    %5049 = vmatprep.subr.mxu0 0.0
    %5050 = vmatpush1.msra.mxu0 %v5015
    %5051 = vmatprep.subr.mxu0 0.0
    %5052 = vmatpush1.msra.mxu0 %v5014
    %5053 = vmatprep.subr.mxu0 0.0
    %5054 = vmatpush1.msra.mxu0 %v5013
    %5055 = vmatprep.subr.mxu0 0.0
    %5056 = vmatpush1.msra.mxu0 %v5012
    %5057 = vmatprep.subr.mxu0 0.0
    %5058 = vmatpush1.msra.mxu0 %v5011
    %5059 = vmatprep.subr.mxu0 0.0
    %5060 = vmatpush1.msra.mxu0 %v5010
    %5061 = vmatprep.subr.mxu0 0.0
    %5062 = vmatpush1.msra.mxu0 %v5009
    %5063 = vmatprep.subr.mxu0 0.0
    %5064 = vmatpush1.msra.mxu0 %v5008
    %5065 = vmatprep.subr.mxu0 0.0
    %5066 = vmatpush1.msra.mxu0 %v5007
    %5067 = vmatprep.subr.mxu0 0.0
    %5068 = vmatpush1.msra.mxu0 %v5006
    %5069 = vmatprep.subr.mxu0 0.0
    %5070 = vmatpush1.msra.mxu0 %v5005
    %5071 = vmatprep.subr.mxu0 0.0
    %5072 = vmatpush1.msra.mxu0 %v5004
    %5073 = vmatprep.subr.mxu0 0.0
    %5074 = vmatpush1.msra.mxu0 %v5003
    %5075 = vmatprep.subr.mxu0 0.0
    %5076 = vmatpush2.msra.mxu0 %v5034
    %5077 = vmatprep.subr.mxu0 0.0
    %5078 = vmatpush2.msra.mxu0 %v5033
    %5079 = vmatprep.subr.mxu0 0.0
    %5080 = vmatpush2.msra.mxu0 %v5032
    %5081 = vmatprep.subr.mxu0 0.0
    %5082 = vmatpush2.msra.mxu0 %v5031
    %5083 = vmatprep.subr.mxu0 0.0
    %5084 = vmatpush2.msra.mxu0 %v5030
    %5085 = vmatprep.subr.mxu0 0.0
    %5086 = vmatpush2.msra.mxu0 %v5029
    %5087 = vmatprep.subr.mxu0 0.0
    %5088 = vmatpush2.msra.mxu0 %v5028
    %5089 = vmatprep.subr.mxu0 0.0
    %5090 = vmatpush2.msra.mxu0 %v5027
    %5091 = vmatprep.subr.mxu0 0.0
    %5092 = vmatpush2.msra.mxu0 %v5026
    %5093 = vmatprep.subr.mxu0 0.0
    %5094 = vmatpush2.msra.mxu0 %v5025
    %5095 = vmatprep.subr.mxu0 0.0
    %5096 = vmatpush2.msra.mxu0 %v5024
    %5097 = vmatprep.subr.mxu0 0.0
    %5098 = vmatpush2.msra.mxu0 %v5023
    %5099 = vmatprep.subr.mxu0 0.0
    %5100 = vmatpush2.msra.mxu0 %v5022
    %5101 = vmatprep.subr.mxu0 0.0
    %5102 = vmatpush2.msra.mxu0 %v5021
    %5103 = vmatprep.subr.mxu0 0.0
    %5104 = vmatpush2.msra.mxu0 %v5020
    %5105 = vmatprep.subr.mxu0 0.0
    %5106 = vmatpush2.msra.mxu0 %v5019
    %5107 = vmatprep.mubr.f32.mxu0 %v4930
    %5108 = vmatmul.mubr.f32.gmra.mxu0 %v4928
    %v5109 = vpop.f32.mrf.mxu0
    %v5110 = vadd.f32 0.0, %v5109
    %v5111 = vpop.f32.mrf.mxu0
    %5112 = vdwg.mxu0
    %5113 = vmatprep.subr.mxu0 0.0
    %5114 = vmatpush1.msra.mxu0 0.0
    %5115 = vmatprep.subr.mxu0 0.0
    %5116 = vmatpush1.msra.mxu0 0.0
    %5117 = vmatprep.subr.mxu0 0.0
    %5118 = vmatpush1.msra.mxu0 0.0
    %5119 = vmatprep.subr.mxu0 0.0
    %5120 = vmatpush1.msra.mxu0 0.0
    %5121 = vmatprep.subr.mxu0 0.0
    %5122 = vmatpush1.msra.mxu0 0.0
    %5123 = vmatprep.subr.mxu0 0.0
    %5124 = vmatpush1.msra.mxu0 0.0
    %5125 = vmatprep.subr.mxu0 0.0
    %5126 = vmatpush1.msra.mxu0 0.0
    %5127 = vmatprep.subr.mxu0 0.0
    %5128 = vmatpush1.msra.mxu0 0.0
    %5129 = vmatprep.subr.mxu0 0.0
    %5130 = vmatpush1.msra.mxu0 0.0
    %5131 = vmatprep.subr.mxu0 0.0
    %5132 = vmatpush1.msra.mxu0 0.0
    %5133 = vmatprep.subr.mxu0 0.0
    %5134 = vmatpush1.msra.mxu0 0.0
    %5135 = vmatprep.subr.mxu0 0.0
    %5136 = vmatpush1.msra.mxu0 0.0
    %5137 = vmatprep.subr.mxu0 0.0
    %5138 = vmatpush1.msra.mxu0 %v5038
    %5139 = vmatprep.subr.mxu0 0.0
    %5140 = vmatpush1.msra.mxu0 %v5037
    %5141 = vmatprep.subr.mxu0 0.0
    %5142 = vmatpush1.msra.mxu0 %v5036
    %5143 = vmatprep.subr.mxu0 0.0
    %5144 = vmatpush1.msra.mxu0 %v5035
    %5145 = vmatprep.subr.mxu0 0.0
    %5146 = vmatpush2.msra.mxu0 0.0
    %5147 = vmatprep.subr.mxu0 0.0
    %5148 = vmatpush2.msra.mxu0 0.0
    %5149 = vmatprep.subr.mxu0 0.0
    %5150 = vmatpush2.msra.mxu0 0.0
    %5151 = vmatprep.subr.mxu0 0.0
    %5152 = vmatpush2.msra.mxu0 0.0
    %5153 = vmatprep.subr.mxu0 0.0
    %5154 = vmatpush2.msra.mxu0 0.0
    %5155 = vmatprep.subr.mxu0 0.0
    %5156 = vmatpush2.msra.mxu0 0.0
    %5157 = vmatprep.subr.mxu0 0.0
    %5158 = vmatpush2.msra.mxu0 0.0
    %5159 = vmatprep.subr.mxu0 0.0
    %5160 = vmatpush2.msra.mxu0 0.0
    %5161 = vmatprep.subr.mxu0 0.0
    %5162 = vmatpush2.msra.mxu0 0.0
    %5163 = vmatprep.subr.mxu0 0.0
    %5164 = vmatpush2.msra.mxu0 0.0
    %5165 = vmatprep.subr.mxu0 0.0
    %5166 = vmatpush2.msra.mxu0 0.0
    %5167 = vmatprep.subr.mxu0 0.0
    %5168 = vmatpush2.msra.mxu0 0.0
    %5169 = vmatprep.subr.mxu0 0.0
    %5170 = vmatpush2.msra.mxu0 0.0
    %5171 = vmatprep.subr.mxu0 0.0
    %5172 = vmatpush2.msra.mxu0 0.0
    %5173 = vmatprep.subr.mxu0 0.0
    %5174 = vmatpush2.msra.mxu0 0.0
    %5175 = vmatprep.subr.mxu0 0.0
    %5176 = vmatpush2.msra.mxu0 0.0
    %5177 = vmatprep.mubr.f32.mxu0 0.0
    %5178 = vmatmul.mubr.f32.gmra.mxu0 %v5041
    %v5179 = vpop.f32.mrf.mxu0
    %v5180 = vadd.f32 %v5110, %v5179
    %v5181 = vpop.f32.mrf.mxu0
    %5182 = vdwg.mxu0
    %v5184 = vsel %vm5039, %v4817, 0
    %5186 = vmatprep.subr.mxu0 0.0
    %5187 = vmatpush1.msra.mxu0 %v4835
    %5188 = vmatprep.subr.mxu0 0.0
    %5189 = vmatpush1.msra.mxu0 %v4834
    %5190 = vmatprep.subr.mxu0 0.0
    %5191 = vmatpush1.msra.mxu0 %v4833
    %5192 = vmatprep.subr.mxu0 0.0
    %5193 = vmatpush1.msra.mxu0 %v4832
    %5194 = vmatprep.subr.mxu0 0.0
    %5195 = vmatpush1.msra.mxu0 %v4831
    %5196 = vmatprep.subr.mxu0 0.0
    %5197 = vmatpush1.msra.mxu0 %v4830
    %5198 = vmatprep.subr.mxu0 0.0
    %5199 = vmatpush1.msra.mxu0 %v4829
    %5200 = vmatprep.subr.mxu0 0.0
    %5201 = vmatpush1.msra.mxu0 %v4828
    %5202 = vmatprep.subr.mxu0 0.0
    %5203 = vmatpush1.msra.mxu0 %v4827
    %5204 = vmatprep.subr.mxu0 0.0
    %5205 = vmatpush1.msra.mxu0 %v4826
    %5206 = vmatprep.subr.mxu0 0.0
    %5207 = vmatpush1.msra.mxu0 %v4825
    %5208 = vmatprep.subr.mxu0 0.0
    %5209 = vmatpush1.msra.mxu0 %v4824
    %5210 = vmatprep.subr.mxu0 0.0
    %5211 = vmatpush1.msra.mxu0 %v4823
    %5212 = vmatprep.subr.mxu0 0.0
    %5213 = vmatpush1.msra.mxu0 %v4822
    %5214 = vmatprep.subr.mxu0 0.0
    %5215 = vmatpush1.msra.mxu0 %v4821
    %5216 = vmatprep.subr.mxu0 0.0
    %5217 = vmatpush1.msra.mxu0 %v4820
    %5218 = vmatprep.subr.mxu0 0.0
    %5219 = vmatpush2.msra.mxu0 %v4851
    %5220 = vmatprep.subr.mxu0 0.0
    %5221 = vmatpush2.msra.mxu0 %v4850
    %5222 = vmatprep.subr.mxu0 0.0
    %5223 = vmatpush2.msra.mxu0 %v4849
    %5224 = vmatprep.subr.mxu0 0.0
    %5225 = vmatpush2.msra.mxu0 %v4848
    %5226 = vmatprep.subr.mxu0 0.0
    %5227 = vmatpush2.msra.mxu0 %v4847
    %5228 = vmatprep.subr.mxu0 0.0
    %5229 = vmatpush2.msra.mxu0 %v4846
    %5230 = vmatprep.subr.mxu0 0.0
    %5231 = vmatpush2.msra.mxu0 %v4845
    %5232 = vmatprep.subr.mxu0 0.0
    %5233 = vmatpush2.msra.mxu0 %v4844
    %5234 = vmatprep.subr.mxu0 0.0
    %5235 = vmatpush2.msra.mxu0 %v4843
    %5236 = vmatprep.subr.mxu0 0.0
    %5237 = vmatpush2.msra.mxu0 %v4842
    %5238 = vmatprep.subr.mxu0 0.0
    %5239 = vmatpush2.msra.mxu0 %v4841
    %5240 = vmatprep.subr.mxu0 0.0
    %5241 = vmatpush2.msra.mxu0 %v4840
    %5242 = vmatprep.subr.mxu0 0.0
    %5243 = vmatpush2.msra.mxu0 %v4839
    %5244 = vmatprep.subr.mxu0 0.0
    %5245 = vmatpush2.msra.mxu0 %v4838
    %5246 = vmatprep.subr.mxu0 0.0
    %5247 = vmatpush2.msra.mxu0 %v4837
    %5248 = vmatprep.subr.mxu0 0.0
    %5249 = vmatpush2.msra.mxu0 %v4836
    %5250 = vmatprep.mubr.f32.mxu0 %v4748
    %5251 = vmatmul.mubr.f32.gmra.mxu0 %v4746
    %v5252 = vpop.f32.mrf.mxu0
    %v5253 = vadd.f32 %v5180, %v5252
    %v5254 = vpop.f32.mrf.mxu0
    %5255 = vdwg.mxu0
    %5256 = vmatprep.subr.mxu0 0.0
    %5257 = vmatpush1.msra.mxu0 0.0
    %5258 = vmatprep.subr.mxu0 0.0
    %5259 = vmatpush1.msra.mxu0 0.0
    %5260 = vmatprep.subr.mxu0 0.0
    %5261 = vmatpush1.msra.mxu0 0.0
    %5262 = vmatprep.subr.mxu0 0.0
    %5263 = vmatpush1.msra.mxu0 0.0
    %5264 = vmatprep.subr.mxu0 0.0
    %5265 = vmatpush1.msra.mxu0 0.0
    %5266 = vmatprep.subr.mxu0 0.0
    %5267 = vmatpush1.msra.mxu0 0.0
    %5268 = vmatprep.subr.mxu0 0.0
    %5269 = vmatpush1.msra.mxu0 0.0
    %5270 = vmatprep.subr.mxu0 0.0
    %5271 = vmatpush1.msra.mxu0 0.0
    %5272 = vmatprep.subr.mxu0 0.0
    %5273 = vmatpush1.msra.mxu0 0.0
    %5274 = vmatprep.subr.mxu0 0.0
    %5275 = vmatpush1.msra.mxu0 0.0
    %5276 = vmatprep.subr.mxu0 0.0
    %5277 = vmatpush1.msra.mxu0 0.0
    %5278 = vmatprep.subr.mxu0 0.0
    %5279 = vmatpush1.msra.mxu0 0.0
    %5280 = vmatprep.subr.mxu0 0.0
    %5281 = vmatpush1.msra.mxu0 %v4855
    %5282 = vmatprep.subr.mxu0 0.0
    %5283 = vmatpush1.msra.mxu0 %v4854
    %5284 = vmatprep.subr.mxu0 0.0
    %5285 = vmatpush1.msra.mxu0 %v4853
    %5286 = vmatprep.subr.mxu0 0.0
    %5287 = vmatpush1.msra.mxu0 %v4852
    %5288 = vmatprep.subr.mxu0 0.0
    %5289 = vmatpush2.msra.mxu0 0.0
    %5290 = vmatprep.subr.mxu0 0.0
    %5291 = vmatpush2.msra.mxu0 0.0
    %5292 = vmatprep.subr.mxu0 0.0
    %5293 = vmatpush2.msra.mxu0 0.0
    %5294 = vmatprep.subr.mxu0 0.0
    %5295 = vmatpush2.msra.mxu0 0.0
    %5296 = vmatprep.subr.mxu0 0.0
    %5297 = vmatpush2.msra.mxu0 0.0
    %5298 = vmatprep.subr.mxu0 0.0
    %5299 = vmatpush2.msra.mxu0 0.0
    %5300 = vmatprep.subr.mxu0 0.0
    %5301 = vmatpush2.msra.mxu0 0.0
    %5302 = vmatprep.subr.mxu0 0.0
    %5303 = vmatpush2.msra.mxu0 0.0
    %5304 = vmatprep.subr.mxu0 0.0
    %5305 = vmatpush2.msra.mxu0 0.0
    %5306 = vmatprep.subr.mxu0 0.0
    %5307 = vmatpush2.msra.mxu0 0.0
    %5308 = vmatprep.subr.mxu0 0.0
    %5309 = vmatpush2.msra.mxu0 0.0
    %5310 = vmatprep.subr.mxu0 0.0
    %5311 = vmatpush2.msra.mxu0 0.0
    %5312 = vmatprep.subr.mxu0 0.0
    %5313 = vmatpush2.msra.mxu0 0.0
    %5314 = vmatprep.subr.mxu0 0.0
    %5315 = vmatpush2.msra.mxu0 0.0
    %5316 = vmatprep.subr.mxu0 0.0
    %5317 = vmatpush2.msra.mxu0 0.0
    %5318 = vmatprep.subr.mxu0 0.0
    %5319 = vmatpush2.msra.mxu0 0.0
    %5320 = vmatprep.mubr.f32.mxu0 0.0
    %5321 = vmatmul.mubr.f32.gmra.mxu0 %v5184
    %v5322 = vpop.f32.mrf.mxu0
    %v5323 = vadd.f32 %v5253, %v5322
    %v5324 = vpop.f32.mrf.mxu0
    %5325 = vdwg.mxu0
    %s5326 = scalar_lea.vmem [#allocation11], 16
    %v5327 = vld [vmem:[%s5326] sm:$0xff]
    %v5329 = vsel %vm4665, %v5327, 0
    %5331 = vmatprep.subr.mxu0 0.0
    %5332 = vmatpush1.msra.mxu0 0.0
    %5333 = vmatprep.subr.mxu0 0.0
    %5334 = vmatpush1.msra.mxu0 0.0
    %5335 = vmatprep.subr.mxu0 0.0
    %5336 = vmatpush1.msra.mxu0 0.0
    %5337 = vmatprep.subr.mxu0 0.0
    %5338 = vmatpush1.msra.mxu0 0.0
    %5339 = vmatprep.subr.mxu0 0.0
    %5340 = vmatpush1.msra.mxu0 0.0
    %5341 = vmatprep.subr.mxu0 0.0
    %5342 = vmatpush1.msra.mxu0 0.0
    %5343 = vmatprep.subr.mxu0 0.0
    %5344 = vmatpush1.msra.mxu0 0.0
    %5345 = vmatprep.subr.mxu0 0.0
    %5346 = vmatpush1.msra.mxu0 0.0
    %5347 = vmatprep.subr.mxu0 0.0
    %5348 = vmatpush1.msra.mxu0 0.0
    %5349 = vmatprep.subr.mxu0 0.0
    %5350 = vmatpush1.msra.mxu0 0.0
    %5351 = vmatprep.subr.mxu0 0.0
    %5352 = vmatpush1.msra.mxu0 0.0
    %5353 = vmatprep.subr.mxu0 0.0
    %5354 = vmatpush1.msra.mxu0 0.0
    %5355 = vmatprep.subr.mxu0 0.0
    %5356 = vmatpush1.msra.mxu0 0.0
    %5357 = vmatprep.subr.mxu0 %v4674
    %5358 = vmatpush1.msra.mxu0 %v4671
    %5359 = vmatprep.subr.mxu0 %v4659
    %5360 = vmatpush1.msra.mxu0 %v4658
    %5361 = vmatprep.subr.mxu0 %v4656
    %5362 = vmatpush1.msra.mxu0 %v4655
    %5363 = vmatprep.subr.mxu0 0.0
    %5364 = vmatpush2.msra.mxu0 0.0
    %5365 = vmatprep.subr.mxu0 0.0
    %5366 = vmatpush2.msra.mxu0 0.0
    %5367 = vmatprep.subr.mxu0 0.0
    %5368 = vmatpush2.msra.mxu0 0.0
    %5369 = vmatprep.subr.mxu0 0.0
    %5370 = vmatpush2.msra.mxu0 0.0
    %5371 = vmatprep.subr.mxu0 0.0
    %5372 = vmatpush2.msra.mxu0 0.0
    %5373 = vmatprep.subr.mxu0 0.0
    %5374 = vmatpush2.msra.mxu0 0.0
    %5375 = vmatprep.subr.mxu0 0.0
    %5376 = vmatpush2.msra.mxu0 0.0
    %5377 = vmatprep.subr.mxu0 0.0
    %5378 = vmatpush2.msra.mxu0 0.0
    %5379 = vmatprep.subr.mxu0 0.0
    %5380 = vmatpush2.msra.mxu0 0.0
    %5381 = vmatprep.subr.mxu0 0.0
    %5382 = vmatpush2.msra.mxu0 0.0
    %5383 = vmatprep.subr.mxu0 0.0
    %5384 = vmatpush2.msra.mxu0 0.0
    %5385 = vmatprep.subr.mxu0 0.0
    %5386 = vmatpush2.msra.mxu0 0.0
    %5387 = vmatprep.subr.mxu0 0.0
    %5388 = vmatpush2.msra.mxu0 0.0
    %5389 = vmatprep.subr.mxu0 0.0
    %5390 = vmatpush2.msra.mxu0 0.0
    %5391 = vmatprep.subr.mxu0 0.0
    %5392 = vmatpush2.msra.mxu0 0.0
    %5393 = vmatprep.subr.mxu0 0.0
    %5394 = vmatpush2.msra.mxu0 0.0
    %5395 = vmatprep.mubr.f32.mxu0 0.0
    %5396 = vmatmul.mubr.f32.gmra.mxu0 %v5329
    %v5397 = vpop.f32.mrf.mxu0
    %v5398 = vadd.f32 0.0, %v5397
    %v5399 = vpop.f32.mrf.mxu0
    %v5400 = vadd.f32 0.0, %v5399
    %5401 = vdwg.mxu0
    %5402 = vmatprep.subr.mxu0 0.0
    %5403 = vmatpush1.msra.mxu0 0.0
    %5404 = vmatprep.subr.mxu0 0.0
    %5405 = vmatpush1.msra.mxu0 0.0
    %5406 = vmatprep.subr.mxu0 0.0
    %5407 = vmatpush1.msra.mxu0 0.0
    %5408 = vmatprep.subr.mxu0 0.0
    %5409 = vmatpush1.msra.mxu0 0.0
    %5410 = vmatprep.subr.mxu0 0.0
    %5411 = vmatpush1.msra.mxu0 0.0
    %5412 = vmatprep.subr.mxu0 0.0
    %5413 = vmatpush1.msra.mxu0 0.0
    %5414 = vmatprep.subr.mxu0 0.0
    %5415 = vmatpush1.msra.mxu0 0.0
    %5416 = vmatprep.subr.mxu0 0.0
    %5417 = vmatpush1.msra.mxu0 0.0
    %5418 = vmatprep.subr.mxu0 0.0
    %5419 = vmatpush1.msra.mxu0 0.0
    %5420 = vmatprep.subr.mxu0 0.0
    %5421 = vmatpush1.msra.mxu0 0.0
    %5422 = vmatprep.subr.mxu0 0.0
    %5423 = vmatpush1.msra.mxu0 0.0
    %5424 = vmatprep.subr.mxu0 0.0
    %5425 = vmatpush1.msra.mxu0 0.0
    %5426 = vmatprep.subr.mxu0 0.0
    %5427 = vmatpush1.msra.mxu0 0.0
    %5428 = vmatprep.subr.mxu0 0.0
    %5429 = vmatpush1.msra.mxu0 %v4677
    %5430 = vmatprep.subr.mxu0 0.0
    %5431 = vmatpush1.msra.mxu0 %v4660
    %5432 = vmatprep.subr.mxu0 0.0
    %5433 = vmatpush1.msra.mxu0 %v4657
    %5434 = vmatprep.subr.mxu0 0.0
    %5435 = vmatpush2.msra.mxu0 0.0
    %5436 = vmatprep.subr.mxu0 0.0
    %5437 = vmatpush2.msra.mxu0 0.0
    %5438 = vmatprep.subr.mxu0 0.0
    %5439 = vmatpush2.msra.mxu0 0.0
    %5440 = vmatprep.subr.mxu0 0.0
    %5441 = vmatpush2.msra.mxu0 0.0
    %5442 = vmatprep.subr.mxu0 0.0
    %5443 = vmatpush2.msra.mxu0 0.0
    %5444 = vmatprep.subr.mxu0 0.0
    %5445 = vmatpush2.msra.mxu0 0.0
    %5446 = vmatprep.subr.mxu0 0.0
    %5447 = vmatpush2.msra.mxu0 0.0
    %5448 = vmatprep.subr.mxu0 0.0
    %5449 = vmatpush2.msra.mxu0 0.0
    %5450 = vmatprep.subr.mxu0 0.0
    %5451 = vmatpush2.msra.mxu0 0.0
    %5452 = vmatprep.subr.mxu0 0.0
    %5453 = vmatpush2.msra.mxu0 0.0
    %5454 = vmatprep.subr.mxu0 0.0
    %5455 = vmatpush2.msra.mxu0 0.0
    %5456 = vmatprep.subr.mxu0 0.0
    %5457 = vmatpush2.msra.mxu0 0.0
    %5458 = vmatprep.subr.mxu0 0.0
    %5459 = vmatpush2.msra.mxu0 0.0
    %5460 = vmatprep.subr.mxu0 0.0
    %5461 = vmatpush2.msra.mxu0 0.0
    %5462 = vmatprep.subr.mxu0 0.0
    %5463 = vmatpush2.msra.mxu0 0.0
    %5464 = vmatprep.subr.mxu0 0.0
    %5465 = vmatpush2.msra.mxu0 0.0
    %5466 = vmatprep.mubr.f32.mxu0 0.0
    %5467 = vmatmul.mubr.f32.gmra.mxu0 %v5329
    %v5468 = vpop.f32.mrf.mxu0
    %v5469 = vadd.f32 0.0, %v5468
    %v5470 = vpop.f32.mrf.mxu0
    %5471 = vdwg.mxu0
    %s5472 = scalar_lea.vmem [#allocation13], 576
    %v5473 = vld [vmem:[%s5472] sm:$0xff]
    %v5474 = vld [vmem:[%s5472 + $0x8] sm:$0xff]
    %v5475 = vld [vmem:[%s5472 + $0x10] sm:$0xff]
    %v5476 = vld [vmem:[%s5472 + $0x18] sm:$0xff]
    %v5477 = vld [vmem:[%s5472 + $0x20] sm:$0xff]
    %v5478 = vld [vmem:[%s5472 + $0x28] sm:$0xff]
    %v5479 = vld [vmem:[%s5472 + $0x30] sm:$0xff]
    %v5480 = vld [vmem:[%s5472 + $0x38] sm:$0xff]
    %v5481 = vld [vmem:[%s5472 + $0x40] sm:$0xff]
    %v5482 = vld [vmem:[%s5472 + $0x48] sm:$0xff]
    %v5483 = vld [vmem:[%s5472 + $0x50] sm:$0xff]
    %v5484 = vld [vmem:[%s5472 + $0x58] sm:$0xff]
    %v5485 = vld [vmem:[%s5472 + $0x60] sm:$0xff]
    %v5486 = vld [vmem:[%s5472 + $0x68] sm:$0xff]
    %v5487 = vld [vmem:[%s5472 + $0x70] sm:$0xff]
    %v5488 = vld [vmem:[%s5472 + $0x78] sm:$0xff]
    %v5489 = vld [vmem:[%s5472 + $0x80] sm:$0xff]
    %v5490 = vld [vmem:[%s5472 + $0x88] sm:$0xff]
    %v5491 = vld [vmem:[%s5472 + $0x90] sm:$0xff]
    %v5492 = vld [vmem:[%s5472 + $0x98] sm:$0xff]
    %v5493 = vld [vmem:[%s5472 + $0xa0] sm:$0xff]
    %v5494 = vld [vmem:[%s5472 + $0xa8] sm:$0xff]
    %v5495 = vld [vmem:[%s5472 + $0xb0] sm:$0xff]
    %v5496 = vld [vmem:[%s5472 + $0xb8] sm:$0xff]
    %v5497 = vld [vmem:[%s5472 + $0xc0] sm:$0xff]
    %v5498 = vld [vmem:[%s5472 + $0xc8] sm:$0xff]
    %v5499 = vld [vmem:[%s5472 + $0xd0] sm:$0xff]
    %v5500 = vld [vmem:[%s5472 + $0xd8] sm:$0xff]
    %v5501 = vld [vmem:[%s5472 + $0xe0] sm:$0xff]
    %v5502 = vld [vmem:[%s5472 + $0xe8] sm:$0xff]
    %v5503 = vld [vmem:[%s5472 + $0xf0] sm:$0xff]
    %v5504 = vld [vmem:[%s5472 + $0xf8] sm:$0xff]
    %v5505 = vld [vmem:[%s5472 + $0x100] sm:$0xff]
    %v5506 = vld [vmem:[%s5472 + $0x108] sm:$0xff]
    %v5507 = vld [vmem:[%s5472 + $0x110] sm:$0xff]
    %v5508 = vld [vmem:[%s5472 + $0x118] sm:$0xff]
    %v5510 = vsel %vm5039, %v5469, 0
    %5512 = vmatprep.subr.mxu0 0.0
    %5513 = vmatpush1.msra.mxu0 %v5488
    %5514 = vmatprep.subr.mxu0 0.0
    %5515 = vmatpush1.msra.mxu0 %v5487
    %5516 = vmatprep.subr.mxu0 0.0
    %5517 = vmatpush1.msra.mxu0 %v5486
    %5518 = vmatprep.subr.mxu0 0.0
    %5519 = vmatpush1.msra.mxu0 %v5485
    %5520 = vmatprep.subr.mxu0 0.0
    %5521 = vmatpush1.msra.mxu0 %v5484
    %5522 = vmatprep.subr.mxu0 0.0
    %5523 = vmatpush1.msra.mxu0 %v5483
    %5524 = vmatprep.subr.mxu0 0.0
    %5525 = vmatpush1.msra.mxu0 %v5482
    %5526 = vmatprep.subr.mxu0 0.0
    %5527 = vmatpush1.msra.mxu0 %v5481
    %5528 = vmatprep.subr.mxu0 0.0
    %5529 = vmatpush1.msra.mxu0 %v5480
    %5530 = vmatprep.subr.mxu0 0.0
    %5531 = vmatpush1.msra.mxu0 %v5479
    %5532 = vmatprep.subr.mxu0 0.0
    %5533 = vmatpush1.msra.mxu0 %v5478
    %5534 = vmatprep.subr.mxu0 0.0
    %5535 = vmatpush1.msra.mxu0 %v5477
    %5536 = vmatprep.subr.mxu0 0.0
    %5537 = vmatpush1.msra.mxu0 %v5476
    %5538 = vmatprep.subr.mxu0 0.0
    %5539 = vmatpush1.msra.mxu0 %v5475
    %5540 = vmatprep.subr.mxu0 0.0
    %5541 = vmatpush1.msra.mxu0 %v5474
    %5542 = vmatprep.subr.mxu0 0.0
    %5543 = vmatpush1.msra.mxu0 %v5473
    %5544 = vmatprep.subr.mxu0 0.0
    %5545 = vmatpush2.msra.mxu0 %v5504
    %5546 = vmatprep.subr.mxu0 0.0
    %5547 = vmatpush2.msra.mxu0 %v5503
    %5548 = vmatprep.subr.mxu0 0.0
    %5549 = vmatpush2.msra.mxu0 %v5502
    %5550 = vmatprep.subr.mxu0 0.0
    %5551 = vmatpush2.msra.mxu0 %v5501
    %5552 = vmatprep.subr.mxu0 0.0
    %5553 = vmatpush2.msra.mxu0 %v5500
    %5554 = vmatprep.subr.mxu0 0.0
    %5555 = vmatpush2.msra.mxu0 %v5499
    %5556 = vmatprep.subr.mxu0 0.0
    %5557 = vmatpush2.msra.mxu0 %v5498
    %5558 = vmatprep.subr.mxu0 0.0
    %5559 = vmatpush2.msra.mxu0 %v5497
    %5560 = vmatprep.subr.mxu0 0.0
    %5561 = vmatpush2.msra.mxu0 %v5496
    %5562 = vmatprep.subr.mxu0 0.0
    %5563 = vmatpush2.msra.mxu0 %v5495
    %5564 = vmatprep.subr.mxu0 0.0
    %5565 = vmatpush2.msra.mxu0 %v5494
    %5566 = vmatprep.subr.mxu0 0.0
    %5567 = vmatpush2.msra.mxu0 %v5493
    %5568 = vmatprep.subr.mxu0 0.0
    %5569 = vmatpush2.msra.mxu0 %v5492
    %5570 = vmatprep.subr.mxu0 0.0
    %5571 = vmatpush2.msra.mxu0 %v5491
    %5572 = vmatprep.subr.mxu0 0.0
    %5573 = vmatpush2.msra.mxu0 %v5490
    %5574 = vmatprep.subr.mxu0 0.0
    %5575 = vmatpush2.msra.mxu0 %v5489
    %5576 = vmatprep.mubr.f32.mxu0 %v5400
    %5577 = vmatmul.mubr.f32.gmra.mxu0 %v5398
    %v5578 = vpop.f32.mrf.mxu0
    %v5579 = vadd.f32 0.0, %v5578
    %v5580 = vpop.f32.mrf.mxu0
    %5581 = vdwg.mxu0
    %5582 = vmatprep.subr.mxu0 0.0
    %5583 = vmatpush1.msra.mxu0 0.0
    %5584 = vmatprep.subr.mxu0 0.0
    %5585 = vmatpush1.msra.mxu0 0.0
    %5586 = vmatprep.subr.mxu0 0.0
    %5587 = vmatpush1.msra.mxu0 0.0
    %5588 = vmatprep.subr.mxu0 0.0
    %5589 = vmatpush1.msra.mxu0 0.0
    %5590 = vmatprep.subr.mxu0 0.0
    %5591 = vmatpush1.msra.mxu0 0.0
    %5592 = vmatprep.subr.mxu0 0.0
    %5593 = vmatpush1.msra.mxu0 0.0
    %5594 = vmatprep.subr.mxu0 0.0
    %5595 = vmatpush1.msra.mxu0 0.0
    %5596 = vmatprep.subr.mxu0 0.0
    %5597 = vmatpush1.msra.mxu0 0.0
    %5598 = vmatprep.subr.mxu0 0.0
    %5599 = vmatpush1.msra.mxu0 0.0
    %5600 = vmatprep.subr.mxu0 0.0
    %5601 = vmatpush1.msra.mxu0 0.0
    %5602 = vmatprep.subr.mxu0 0.0
    %5603 = vmatpush1.msra.mxu0 0.0
    %5604 = vmatprep.subr.mxu0 0.0
    %5605 = vmatpush1.msra.mxu0 0.0
    %5606 = vmatprep.subr.mxu0 0.0
    %5607 = vmatpush1.msra.mxu0 %v5508
    %5608 = vmatprep.subr.mxu0 0.0
    %5609 = vmatpush1.msra.mxu0 %v5507
    %5610 = vmatprep.subr.mxu0 0.0
    %5611 = vmatpush1.msra.mxu0 %v5506
    %5612 = vmatprep.subr.mxu0 0.0
    %5613 = vmatpush1.msra.mxu0 %v5505
    %5614 = vmatprep.subr.mxu0 0.0
    %5615 = vmatpush2.msra.mxu0 0.0
    %5616 = vmatprep.subr.mxu0 0.0
    %5617 = vmatpush2.msra.mxu0 0.0
    %5618 = vmatprep.subr.mxu0 0.0
    %5619 = vmatpush2.msra.mxu0 0.0
    %5620 = vmatprep.subr.mxu0 0.0
    %5621 = vmatpush2.msra.mxu0 0.0
    %5622 = vmatprep.subr.mxu0 0.0
    %5623 = vmatpush2.msra.mxu0 0.0
    %5624 = vmatprep.subr.mxu0 0.0
    %5625 = vmatpush2.msra.mxu0 0.0
    %5626 = vmatprep.subr.mxu0 0.0
    %5627 = vmatpush2.msra.mxu0 0.0
    %5628 = vmatprep.subr.mxu0 0.0
    %5629 = vmatpush2.msra.mxu0 0.0
    %5630 = vmatprep.subr.mxu0 0.0
    %5631 = vmatpush2.msra.mxu0 0.0
    %5632 = vmatprep.subr.mxu0 0.0
    %5633 = vmatpush2.msra.mxu0 0.0
    %5634 = vmatprep.subr.mxu0 0.0
    %5635 = vmatpush2.msra.mxu0 0.0
    %5636 = vmatprep.subr.mxu0 0.0
    %5637 = vmatpush2.msra.mxu0 0.0
    %5638 = vmatprep.subr.mxu0 0.0
    %5639 = vmatpush2.msra.mxu0 0.0
    %5640 = vmatprep.subr.mxu0 0.0
    %5641 = vmatpush2.msra.mxu0 0.0
    %5642 = vmatprep.subr.mxu0 0.0
    %5643 = vmatpush2.msra.mxu0 0.0
    %5644 = vmatprep.subr.mxu0 0.0
    %5645 = vmatpush2.msra.mxu0 0.0
    %5646 = vmatprep.mubr.f32.mxu0 0.0
    %5647 = vmatmul.mubr.f32.gmra.mxu0 %v5510
    %v5648 = vpop.f32.mrf.mxu0
    %v5649 = vadd.f32 %v5579, %v5648
    %v5650 = vpop.f32.mrf.mxu0
    %5651 = vdwg.mxu0
    %v5652 = vadd.f32 %v5323, %v5649
    %v5653 = vld [vmem:[%s10] sm:$0x1]
    %v5655 = vlaneseq
    %v5656 = vshrl.u32 %v5655, 7
    %v5657 = vsub.s32 0, %v5656
    %v5658 = vrot.slane %v5653, %v5657
    %v5660 = vadd.f32 %v5652, %v5658
    %v5661 = vmax.f32 %v5660, 0.0
    %v5662 = vld [vmem:[#allocation14] sm:$0xf]
    %vm5663 = vcmask 64512
    %v5665 = vsel %vm5663, %v5662, 0
    %5667 = vmatprep.subr.mxu0 0.0
    %5668 = vmatpush1.msra.mxu0 0.0
    %5669 = vmatprep.subr.mxu0 0.0
    %5670 = vmatpush1.msra.mxu0 0.0
    %5671 = vmatprep.subr.mxu0 0.0
    %5672 = vmatpush1.msra.mxu0 0.0
    %5673 = vmatprep.subr.mxu0 0.0
    %5674 = vmatpush1.msra.mxu0 0.0
    %5675 = vmatprep.subr.mxu0 0.0
    %5676 = vmatpush1.msra.mxu0 0.0
    %5677 = vmatprep.subr.mxu0 0.0
    %5678 = vmatpush1.msra.mxu0 0.0
    %5679 = vmatprep.subr.mxu0 0.0
    %5680 = vmatpush1.msra.mxu0 0.0
    %5681 = vmatprep.subr.mxu0 0.0
    %5682 = vmatpush1.msra.mxu0 0.0
    %5683 = vmatprep.subr.mxu0 0.0
    %5684 = vmatpush1.msra.mxu0 0.0
    %5685 = vmatprep.subr.mxu0 0.0
    %5686 = vmatpush1.msra.mxu0 0.0
    %5687 = vmatprep.subr.mxu0 0.0
    %5688 = vmatpush1.msra.mxu0 0.0
    %5689 = vmatprep.subr.mxu0 0.0
    %5690 = vmatpush1.msra.mxu0 0.0
    %5691 = vmatprep.subr.mxu0 0.0
    %5692 = vmatpush1.msra.mxu0 0.0
    %5693 = vmatprep.subr.mxu0 0.0
    %5694 = vmatpush1.msra.mxu0 0.0
    %5695 = vmatprep.subr.mxu0 0.0
    %5696 = vmatpush1.msra.mxu0 0.0
    %5697 = vmatprep.subr.mxu0 0.0
    %5698 = vmatpush1.msra.mxu0 %v5661
    %5699 = vmatprep.subr.mxu0 0.0
    %5700 = vmatpush2.msra.mxu0 0.0
    %5701 = vmatprep.subr.mxu0 0.0
    %5702 = vmatpush2.msra.mxu0 0.0
    %5703 = vmatprep.subr.mxu0 0.0
    %5704 = vmatpush2.msra.mxu0 0.0
    %5705 = vmatprep.subr.mxu0 0.0
    %5706 = vmatpush2.msra.mxu0 0.0
    %5707 = vmatprep.subr.mxu0 0.0
    %5708 = vmatpush2.msra.mxu0 0.0
    %5709 = vmatprep.subr.mxu0 0.0
    %5710 = vmatpush2.msra.mxu0 0.0
    %5711 = vmatprep.subr.mxu0 0.0
    %5712 = vmatpush2.msra.mxu0 0.0
    %5713 = vmatprep.subr.mxu0 0.0
    %5714 = vmatpush2.msra.mxu0 0.0
    %5715 = vmatprep.subr.mxu0 0.0
    %5716 = vmatpush2.msra.mxu0 0.0
    %5717 = vmatprep.subr.mxu0 0.0
    %5718 = vmatpush2.msra.mxu0 0.0
    %5719 = vmatprep.subr.mxu0 0.0
    %5720 = vmatpush2.msra.mxu0 0.0
    %5721 = vmatprep.subr.mxu0 0.0
    %5722 = vmatpush2.msra.mxu0 0.0
    %5723 = vmatprep.subr.mxu0 0.0
    %5724 = vmatpush2.msra.mxu0 0.0
    %5725 = vmatprep.subr.mxu0 0.0
    %5726 = vmatpush2.msra.mxu0 0.0
    %5727 = vmatprep.subr.mxu0 0.0
    %5728 = vmatpush2.msra.mxu0 0.0
    %5729 = vmatprep.subr.mxu0 0.0
    %5730 = vmatpush2.msra.mxu0 0.0
    %5731 = vmatprep.mubr.f32.mxu0 0.0
    %5732 = vmatmul.mubr.f32.gmra.mxu0 %v5665
    %v5733 = vpop.f32.mrf.mxu0
    %v5734 = vadd.f32 0.0, %v5733
    %v5735 = vpop.f32.mrf.mxu0
    %5736 = vdwg.mxu0
    %v5737 = vld [vmem:[#allocation16] sm:$0xff]
    %v5738 = vld [vmem:[#allocation16 + $0x8] sm:$0xff]
    %v5739 = vld [vmem:[#allocation16 + $0x10] sm:$0xff]
    %v5740 = vld [vmem:[#allocation16 + $0x18] sm:$0xff]
    %v5741 = vld [vmem:[#allocation16 + $0x20] sm:$0xff]
    %v5742 = vld [vmem:[#allocation16 + $0x28] sm:$0xff]
    %v5743 = vld [vmem:[#allocation16 + $0x30] sm:$0xff]
    %v5744 = vld [vmem:[#allocation16 + $0x38] sm:$0xff]
    %v5745 = vld [vmem:[#allocation16 + $0x40] sm:$0xff]
    %v5746 = vld [vmem:[#allocation16 + $0x48] sm:$0xff]
    %v5747 = vld [vmem:[#allocation16 + $0x50] sm:$0xff]
    %v5748 = vld [vmem:[#allocation16 + $0x58] sm:$0xff]
    %v5749 = vld [vmem:[#allocation16 + $0x60] sm:$0xff]
    %v5750 = vld [vmem:[#allocation16 + $0x68] sm:$0xff]
    %v5751 = vld [vmem:[#allocation16 + $0x70] sm:$0xff]
    %v5752 = vld [vmem:[#allocation16 + $0x78] sm:$0xff]
    %s5753 = scalar_lea.vmem [#allocation14], 4
    %v5754 = vld [vmem:[%s5753] sm:$0xf]
    %v5756 = vsel %vm5663, %v5754, 0
    %5758 = vmatprep.subr.mxu0 0.0
    %5759 = vmatpush1.msra.mxu0 0.0
    %5760 = vmatprep.subr.mxu0 0.0
    %5761 = vmatpush1.msra.mxu0 0.0
    %5762 = vmatprep.subr.mxu0 0.0
    %5763 = vmatpush1.msra.mxu0 0.0
    %5764 = vmatprep.subr.mxu0 0.0
    %5765 = vmatpush1.msra.mxu0 0.0
    %5766 = vmatprep.subr.mxu0 0.0
    %5767 = vmatpush1.msra.mxu0 0.0
    %5768 = vmatprep.subr.mxu0 0.0
    %5769 = vmatpush1.msra.mxu0 0.0
    %5770 = vmatprep.subr.mxu0 0.0
    %5771 = vmatpush1.msra.mxu0 0.0
    %5772 = vmatprep.subr.mxu0 0.0
    %5773 = vmatpush1.msra.mxu0 0.0
    %5774 = vmatprep.subr.mxu0 0.0
    %5775 = vmatpush1.msra.mxu0 0.0
    %5776 = vmatprep.subr.mxu0 0.0
    %5777 = vmatpush1.msra.mxu0 0.0
    %5778 = vmatprep.subr.mxu0 0.0
    %5779 = vmatpush1.msra.mxu0 0.0
    %5780 = vmatprep.subr.mxu0 0.0
    %5781 = vmatpush1.msra.mxu0 0.0
    %5782 = vmatprep.subr.mxu0 0.0
    %5783 = vmatpush1.msra.mxu0 0.0
    %5784 = vmatprep.subr.mxu0 0.0
    %5785 = vmatpush1.msra.mxu0 0.0
    %5786 = vmatprep.subr.mxu0 0.0
    %5787 = vmatpush1.msra.mxu0 0.0
    %5788 = vmatprep.subr.mxu0 0.0
    %5789 = vmatpush1.msra.mxu0 %v5661
    %5790 = vmatprep.subr.mxu0 0.0
    %5791 = vmatpush2.msra.mxu0 0.0
    %5792 = vmatprep.subr.mxu0 0.0
    %5793 = vmatpush2.msra.mxu0 0.0
    %5794 = vmatprep.subr.mxu0 0.0
    %5795 = vmatpush2.msra.mxu0 0.0
    %5796 = vmatprep.subr.mxu0 0.0
    %5797 = vmatpush2.msra.mxu0 0.0
    %5798 = vmatprep.subr.mxu0 0.0
    %5799 = vmatpush2.msra.mxu0 0.0
    %5800 = vmatprep.subr.mxu0 0.0
    %5801 = vmatpush2.msra.mxu0 0.0
    %5802 = vmatprep.subr.mxu0 0.0
    %5803 = vmatpush2.msra.mxu0 0.0
    %5804 = vmatprep.subr.mxu0 0.0
    %5805 = vmatpush2.msra.mxu0 0.0
    %5806 = vmatprep.subr.mxu0 0.0
    %5807 = vmatpush2.msra.mxu0 0.0
    %5808 = vmatprep.subr.mxu0 0.0
    %5809 = vmatpush2.msra.mxu0 0.0
    %5810 = vmatprep.subr.mxu0 0.0
    %5811 = vmatpush2.msra.mxu0 0.0
    %5812 = vmatprep.subr.mxu0 0.0
    %5813 = vmatpush2.msra.mxu0 0.0
    %5814 = vmatprep.subr.mxu0 0.0
    %5815 = vmatpush2.msra.mxu0 0.0
    %5816 = vmatprep.subr.mxu0 0.0
    %5817 = vmatpush2.msra.mxu0 0.0
    %5818 = vmatprep.subr.mxu0 0.0
    %5819 = vmatpush2.msra.mxu0 0.0
    %5820 = vmatprep.subr.mxu0 0.0
    %5821 = vmatpush2.msra.mxu0 0.0
    %5822 = vmatprep.mubr.f32.mxu0 0.0
    %5823 = vmatmul.mubr.f32.gmra.mxu0 %v5756
    %v5824 = vpop.f32.mrf.mxu0
    %v5825 = vadd.f32 0.0, %v5824
    %v5826 = vpop.f32.mrf.mxu0
    %5827 = vdwg.mxu0
    %s5828 = scalar_lea.vmem [#allocation16], 128
    %v5829 = vld [vmem:[%s5828] sm:$0xff]
    %v5830 = vld [vmem:[%s5828 + $0x8] sm:$0xff]
    %v5831 = vld [vmem:[%s5828 + $0x10] sm:$0xff]
    %v5832 = vld [vmem:[%s5828 + $0x18] sm:$0xff]
    %v5833 = vld [vmem:[%s5828 + $0x20] sm:$0xff]
    %v5834 = vld [vmem:[%s5828 + $0x28] sm:$0xff]
    %v5835 = vld [vmem:[%s5828 + $0x30] sm:$0xff]
    %v5836 = vld [vmem:[%s5828 + $0x38] sm:$0xff]
    %v5837 = vld [vmem:[%s5828 + $0x40] sm:$0xff]
    %v5838 = vld [vmem:[%s5828 + $0x48] sm:$0xff]
    %v5839 = vld [vmem:[%s5828 + $0x50] sm:$0xff]
    %v5840 = vld [vmem:[%s5828 + $0x58] sm:$0xff]
    %v5841 = vld [vmem:[%s5828 + $0x60] sm:$0xff]
    %v5842 = vld [vmem:[%s5828 + $0x68] sm:$0xff]
    %v5843 = vld [vmem:[%s5828 + $0x70] sm:$0xff]
    %v5844 = vld [vmem:[%s5828 + $0x78] sm:$0xff]
    %5845 = vmatprep.subr.mxu0 0.0
    %5846 = vmatpush1.msra.mxu0 %v5844
    %5847 = vmatprep.subr.mxu0 0.0
    %5848 = vmatpush1.msra.mxu0 %v5843
    %5849 = vmatprep.subr.mxu0 0.0
    %5850 = vmatpush1.msra.mxu0 %v5842
    %5851 = vmatprep.subr.mxu0 0.0
    %5852 = vmatpush1.msra.mxu0 %v5841
    %5853 = vmatprep.subr.mxu0 0.0
    %5854 = vmatpush1.msra.mxu0 %v5840
    %5855 = vmatprep.subr.mxu0 0.0
    %5856 = vmatpush1.msra.mxu0 %v5839
    %5857 = vmatprep.subr.mxu0 0.0
    %5858 = vmatpush1.msra.mxu0 %v5838
    %5859 = vmatprep.subr.mxu0 0.0
    %5860 = vmatpush1.msra.mxu0 %v5837
    %5861 = vmatprep.subr.mxu0 0.0
    %5862 = vmatpush1.msra.mxu0 %v5836
    %5863 = vmatprep.subr.mxu0 0.0
    %5864 = vmatpush1.msra.mxu0 %v5835
    %5865 = vmatprep.subr.mxu0 0.0
    %5866 = vmatpush1.msra.mxu0 %v5834
    %5867 = vmatprep.subr.mxu0 0.0
    %5868 = vmatpush1.msra.mxu0 %v5833
    %5869 = vmatprep.subr.mxu0 0.0
    %5870 = vmatpush1.msra.mxu0 %v5832
    %5871 = vmatprep.subr.mxu0 0.0
    %5872 = vmatpush1.msra.mxu0 %v5831
    %5873 = vmatprep.subr.mxu0 0.0
    %5874 = vmatpush1.msra.mxu0 %v5830
    %5875 = vmatprep.subr.mxu0 0.0
    %5876 = vmatpush1.msra.mxu0 %v5829
    %5877 = vmatprep.subr.mxu0 0.0
    %5878 = vmatpush2.msra.mxu0 0.0
    %5879 = vmatprep.subr.mxu0 0.0
    %5880 = vmatpush2.msra.mxu0 0.0
    %5881 = vmatprep.subr.mxu0 0.0
    %5882 = vmatpush2.msra.mxu0 0.0
    %5883 = vmatprep.subr.mxu0 0.0
    %5884 = vmatpush2.msra.mxu0 0.0
    %5885 = vmatprep.subr.mxu0 0.0
    %5886 = vmatpush2.msra.mxu0 0.0
    %5887 = vmatprep.subr.mxu0 0.0
    %5888 = vmatpush2.msra.mxu0 0.0
    %5889 = vmatprep.subr.mxu0 0.0
    %5890 = vmatpush2.msra.mxu0 0.0
    %5891 = vmatprep.subr.mxu0 0.0
    %5892 = vmatpush2.msra.mxu0 0.0
    %5893 = vmatprep.subr.mxu0 0.0
    %5894 = vmatpush2.msra.mxu0 0.0
    %5895 = vmatprep.subr.mxu0 0.0
    %5896 = vmatpush2.msra.mxu0 0.0
    %5897 = vmatprep.subr.mxu0 0.0
    %5898 = vmatpush2.msra.mxu0 0.0
    %5899 = vmatprep.subr.mxu0 0.0
    %5900 = vmatpush2.msra.mxu0 0.0
    %5901 = vmatprep.subr.mxu0 0.0
    %5902 = vmatpush2.msra.mxu0 0.0
    %5903 = vmatprep.subr.mxu0 0.0
    %5904 = vmatpush2.msra.mxu0 0.0
    %5905 = vmatprep.subr.mxu0 0.0
    %5906 = vmatpush2.msra.mxu0 0.0
    %5907 = vmatprep.subr.mxu0 0.0
    %5908 = vmatpush2.msra.mxu0 0.0
    %5909 = vmatprep.mubr.f32.mxu0 0.0
    %5910 = vmatmul.mubr.f32.gmra.mxu0 %v5825
    %v5911 = vpop.f32.mrf.mxu0
    %v5912 = vadd.f32 0.0, %v5911
    %v5913 = vpop.f32.mrf.mxu0
    %5914 = vdwg.mxu0
    %5915 = vmatprep.subr.mxu0 0.0
    %5916 = vmatpush1.msra.mxu0 %v5752
    %5917 = vmatprep.subr.mxu0 0.0
    %5918 = vmatpush1.msra.mxu0 %v5751
    %5919 = vmatprep.subr.mxu0 0.0
    %5920 = vmatpush1.msra.mxu0 %v5750
    %5921 = vmatprep.subr.mxu0 0.0
    %5922 = vmatpush1.msra.mxu0 %v5749
    %5923 = vmatprep.subr.mxu0 0.0
    %5924 = vmatpush1.msra.mxu0 %v5748
    %5925 = vmatprep.subr.mxu0 0.0
    %5926 = vmatpush1.msra.mxu0 %v5747
    %5927 = vmatprep.subr.mxu0 0.0
    %5928 = vmatpush1.msra.mxu0 %v5746
    %5929 = vmatprep.subr.mxu0 0.0
    %5930 = vmatpush1.msra.mxu0 %v5745
    %5931 = vmatprep.subr.mxu0 0.0
    %5932 = vmatpush1.msra.mxu0 %v5744
    %5933 = vmatprep.subr.mxu0 0.0
    %5934 = vmatpush1.msra.mxu0 %v5743
    %5935 = vmatprep.subr.mxu0 0.0
    %5936 = vmatpush1.msra.mxu0 %v5742
    %5937 = vmatprep.subr.mxu0 0.0
    %5938 = vmatpush1.msra.mxu0 %v5741
    %5939 = vmatprep.subr.mxu0 0.0
    %5940 = vmatpush1.msra.mxu0 %v5740
    %5941 = vmatprep.subr.mxu0 0.0
    %5942 = vmatpush1.msra.mxu0 %v5739
    %5943 = vmatprep.subr.mxu0 0.0
    %5944 = vmatpush1.msra.mxu0 %v5738
    %5945 = vmatprep.subr.mxu0 0.0
    %5946 = vmatpush1.msra.mxu0 %v5737
    %5947 = vmatprep.subr.mxu0 0.0
    %5948 = vmatpush2.msra.mxu0 0.0
    %5949 = vmatprep.subr.mxu0 0.0
    %5950 = vmatpush2.msra.mxu0 0.0
    %5951 = vmatprep.subr.mxu0 0.0
    %5952 = vmatpush2.msra.mxu0 0.0
    %5953 = vmatprep.subr.mxu0 0.0
    %5954 = vmatpush2.msra.mxu0 0.0
    %5955 = vmatprep.subr.mxu0 0.0
    %5956 = vmatpush2.msra.mxu0 0.0
    %5957 = vmatprep.subr.mxu0 0.0
    %5958 = vmatpush2.msra.mxu0 0.0
    %5959 = vmatprep.subr.mxu0 0.0
    %5960 = vmatpush2.msra.mxu0 0.0
    %5961 = vmatprep.subr.mxu0 0.0
    %5962 = vmatpush2.msra.mxu0 0.0
    %5963 = vmatprep.subr.mxu0 0.0
    %5964 = vmatpush2.msra.mxu0 0.0
    %5965 = vmatprep.subr.mxu0 0.0
    %5966 = vmatpush2.msra.mxu0 0.0
    %5967 = vmatprep.subr.mxu0 0.0
    %5968 = vmatpush2.msra.mxu0 0.0
    %5969 = vmatprep.subr.mxu0 0.0
    %5970 = vmatpush2.msra.mxu0 0.0
    %5971 = vmatprep.subr.mxu0 0.0
    %5972 = vmatpush2.msra.mxu0 0.0
    %5973 = vmatprep.subr.mxu0 0.0
    %5974 = vmatpush2.msra.mxu0 0.0
    %5975 = vmatprep.subr.mxu0 0.0
    %5976 = vmatpush2.msra.mxu0 0.0
    %5977 = vmatprep.subr.mxu0 0.0
    %5978 = vmatpush2.msra.mxu0 0.0
    %5979 = vmatprep.mubr.f32.mxu0 0.0
    %5980 = vmatmul.mubr.f32.gmra.mxu0 %v5734
    %v5981 = vpop.f32.mrf.mxu0
    %v5982 = vadd.f32 %v5912, %v5981
    %v5983 = vpop.f32.mrf.mxu0
    %5984 = vdwg.mxu0
    %s5985 = scalar_lea.vmem [#allocation14], 8
    %v5986 = vld [vmem:[%s5985] sm:$0xf]
    %v5988 = vsel %vm5663, %v5986, 0
    %5990 = vmatprep.subr.mxu0 0.0
    %5991 = vmatpush1.msra.mxu0 0.0
    %5992 = vmatprep.subr.mxu0 0.0
    %5993 = vmatpush1.msra.mxu0 0.0
    %5994 = vmatprep.subr.mxu0 0.0
    %5995 = vmatpush1.msra.mxu0 0.0
    %5996 = vmatprep.subr.mxu0 0.0
    %5997 = vmatpush1.msra.mxu0 0.0
    %5998 = vmatprep.subr.mxu0 0.0
    %5999 = vmatpush1.msra.mxu0 0.0
    %6000 = vmatprep.subr.mxu0 0.0
    %6001 = vmatpush1.msra.mxu0 0.0
    %6002 = vmatprep.subr.mxu0 0.0
    %6003 = vmatpush1.msra.mxu0 0.0
    %6004 = vmatprep.subr.mxu0 0.0
    %6005 = vmatpush1.msra.mxu0 0.0
    %6006 = vmatprep.subr.mxu0 0.0
    %6007 = vmatpush1.msra.mxu0 0.0
    %6008 = vmatprep.subr.mxu0 0.0
    %6009 = vmatpush1.msra.mxu0 0.0
    %6010 = vmatprep.subr.mxu0 0.0
    %6011 = vmatpush1.msra.mxu0 0.0
    %6012 = vmatprep.subr.mxu0 0.0
    %6013 = vmatpush1.msra.mxu0 0.0
    %6014 = vmatprep.subr.mxu0 0.0
    %6015 = vmatpush1.msra.mxu0 0.0
    %6016 = vmatprep.subr.mxu0 0.0
    %6017 = vmatpush1.msra.mxu0 0.0
    %6018 = vmatprep.subr.mxu0 0.0
    %6019 = vmatpush1.msra.mxu0 0.0
    %6020 = vmatprep.subr.mxu0 0.0
    %6021 = vmatpush1.msra.mxu0 %v5661
    %6022 = vmatprep.subr.mxu0 0.0
    %6023 = vmatpush2.msra.mxu0 0.0
    %6024 = vmatprep.subr.mxu0 0.0
    %6025 = vmatpush2.msra.mxu0 0.0
    %6026 = vmatprep.subr.mxu0 0.0
    %6027 = vmatpush2.msra.mxu0 0.0
    %6028 = vmatprep.subr.mxu0 0.0
    %6029 = vmatpush2.msra.mxu0 0.0
    %6030 = vmatprep.subr.mxu0 0.0
    %6031 = vmatpush2.msra.mxu0 0.0
    %6032 = vmatprep.subr.mxu0 0.0
    %6033 = vmatpush2.msra.mxu0 0.0
    %6034 = vmatprep.subr.mxu0 0.0
    %6035 = vmatpush2.msra.mxu0 0.0
    %6036 = vmatprep.subr.mxu0 0.0
    %6037 = vmatpush2.msra.mxu0 0.0
    %6038 = vmatprep.subr.mxu0 0.0
    %6039 = vmatpush2.msra.mxu0 0.0
    %6040 = vmatprep.subr.mxu0 0.0
    %6041 = vmatpush2.msra.mxu0 0.0
    %6042 = vmatprep.subr.mxu0 0.0
    %6043 = vmatpush2.msra.mxu0 0.0
    %6044 = vmatprep.subr.mxu0 0.0
    %6045 = vmatpush2.msra.mxu0 0.0
    %6046 = vmatprep.subr.mxu0 0.0
    %6047 = vmatpush2.msra.mxu0 0.0
    %6048 = vmatprep.subr.mxu0 0.0
    %6049 = vmatpush2.msra.mxu0 0.0
    %6050 = vmatprep.subr.mxu0 0.0
    %6051 = vmatpush2.msra.mxu0 0.0
    %6052 = vmatprep.subr.mxu0 0.0
    %6053 = vmatpush2.msra.mxu0 0.0
    %6054 = vmatprep.mubr.f32.mxu0 0.0
    %6055 = vmatmul.mubr.f32.gmra.mxu0 %v5988
    %v6056 = vpop.f32.mrf.mxu0
    %v6057 = vadd.f32 0.0, %v6056
    %v6058 = vpop.f32.mrf.mxu0
    %6059 = vdwg.mxu0
    %s6060 = scalar_lea.vmem [#allocation16], 256
    %v6061 = vld [vmem:[%s6060] sm:$0xff]
    %v6062 = vld [vmem:[%s6060 + $0x8] sm:$0xff]
    %v6063 = vld [vmem:[%s6060 + $0x10] sm:$0xff]
    %v6064 = vld [vmem:[%s6060 + $0x18] sm:$0xff]
    %v6065 = vld [vmem:[%s6060 + $0x20] sm:$0xff]
    %v6066 = vld [vmem:[%s6060 + $0x28] sm:$0xff]
    %v6067 = vld [vmem:[%s6060 + $0x30] sm:$0xff]
    %v6068 = vld [vmem:[%s6060 + $0x38] sm:$0xff]
    %v6069 = vld [vmem:[%s6060 + $0x40] sm:$0xff]
    %v6070 = vld [vmem:[%s6060 + $0x48] sm:$0xff]
    %v6071 = vld [vmem:[%s6060 + $0x50] sm:$0xff]
    %v6072 = vld [vmem:[%s6060 + $0x58] sm:$0xff]
    %v6073 = vld [vmem:[%s6060 + $0x60] sm:$0xff]
    %v6074 = vld [vmem:[%s6060 + $0x68] sm:$0xff]
    %v6075 = vld [vmem:[%s6060 + $0x70] sm:$0xff]
    %v6076 = vld [vmem:[%s6060 + $0x78] sm:$0xff]
    %6077 = vmatprep.subr.mxu0 0.0
    %6078 = vmatpush1.msra.mxu0 %v6076
    %6079 = vmatprep.subr.mxu0 0.0
    %6080 = vmatpush1.msra.mxu0 %v6075
    %6081 = vmatprep.subr.mxu0 0.0
    %6082 = vmatpush1.msra.mxu0 %v6074
    %6083 = vmatprep.subr.mxu0 0.0
    %6084 = vmatpush1.msra.mxu0 %v6073
    %6085 = vmatprep.subr.mxu0 0.0
    %6086 = vmatpush1.msra.mxu0 %v6072
    %6087 = vmatprep.subr.mxu0 0.0
    %6088 = vmatpush1.msra.mxu0 %v6071
    %6089 = vmatprep.subr.mxu0 0.0
    %6090 = vmatpush1.msra.mxu0 %v6070
    %6091 = vmatprep.subr.mxu0 0.0
    %6092 = vmatpush1.msra.mxu0 %v6069
    %6093 = vmatprep.subr.mxu0 0.0
    %6094 = vmatpush1.msra.mxu0 %v6068
    %6095 = vmatprep.subr.mxu0 0.0
    %6096 = vmatpush1.msra.mxu0 %v6067
    %6097 = vmatprep.subr.mxu0 0.0
    %6098 = vmatpush1.msra.mxu0 %v6066
    %6099 = vmatprep.subr.mxu0 0.0
    %6100 = vmatpush1.msra.mxu0 %v6065
    %6101 = vmatprep.subr.mxu0 0.0
    %6102 = vmatpush1.msra.mxu0 %v6064
    %6103 = vmatprep.subr.mxu0 0.0
    %6104 = vmatpush1.msra.mxu0 %v6063
    %6105 = vmatprep.subr.mxu0 0.0
    %6106 = vmatpush1.msra.mxu0 %v6062
    %6107 = vmatprep.subr.mxu0 0.0
    %6108 = vmatpush1.msra.mxu0 %v6061
    %6109 = vmatprep.subr.mxu0 0.0
    %6110 = vmatpush2.msra.mxu0 0.0
    %6111 = vmatprep.subr.mxu0 0.0
    %6112 = vmatpush2.msra.mxu0 0.0
    %6113 = vmatprep.subr.mxu0 0.0
    %6114 = vmatpush2.msra.mxu0 0.0
    %6115 = vmatprep.subr.mxu0 0.0
    %6116 = vmatpush2.msra.mxu0 0.0
    %6117 = vmatprep.subr.mxu0 0.0
    %6118 = vmatpush2.msra.mxu0 0.0
    %6119 = vmatprep.subr.mxu0 0.0
    %6120 = vmatpush2.msra.mxu0 0.0
    %6121 = vmatprep.subr.mxu0 0.0
    %6122 = vmatpush2.msra.mxu0 0.0
    %6123 = vmatprep.subr.mxu0 0.0
    %6124 = vmatpush2.msra.mxu0 0.0
    %6125 = vmatprep.subr.mxu0 0.0
    %6126 = vmatpush2.msra.mxu0 0.0
    %6127 = vmatprep.subr.mxu0 0.0
    %6128 = vmatpush2.msra.mxu0 0.0
    %6129 = vmatprep.subr.mxu0 0.0
    %6130 = vmatpush2.msra.mxu0 0.0
    %6131 = vmatprep.subr.mxu0 0.0
    %6132 = vmatpush2.msra.mxu0 0.0
    %6133 = vmatprep.subr.mxu0 0.0
    %6134 = vmatpush2.msra.mxu0 0.0
    %6135 = vmatprep.subr.mxu0 0.0
    %6136 = vmatpush2.msra.mxu0 0.0
    %6137 = vmatprep.subr.mxu0 0.0
    %6138 = vmatpush2.msra.mxu0 0.0
    %6139 = vmatprep.subr.mxu0 0.0
    %6140 = vmatpush2.msra.mxu0 0.0
    %6141 = vmatprep.mubr.f32.mxu0 0.0
    %6142 = vmatmul.mubr.f32.gmra.mxu0 %v6057
    %v6143 = vpop.f32.mrf.mxu0
    %v6144 = vadd.f32 0.0, %v6143
    %v6145 = vpop.f32.mrf.mxu0
    %6146 = vdwg.mxu0
    %v6147 = vadd.f32 %v5982, %v6144
    %v6148 = vld [vmem:[%s13] sm:$0x1]
    %v6150 = vlaneseq
    %v6151 = vshrl.u32 %v6150, 7
    %v6152 = vsub.s32 0, %v6151
    %v6153 = vrot.slane %v6148, %v6152
    %v6155 = vadd.f32 %v6147, %v6153
    %v6156 = vmax.f32 %v6155, 0.0
    %v6157 = vld [vmem:[#allocation2] sm:$0x3]
    %v6158 = vld [vmem:[#allocation20] sm:$0x1f]
    %v6159 = vld [vmem:[#allocation20 + $0x8] sm:$0x1f]
    %v6160 = vld [vmem:[%s17] sm:$0x3]
    %v6162 = vlaneseq
    %v6163 = vshrl.u32 %v6162, 7
    %v6164 = vsub.s32 0, %v6163
    %v6165 = vrot.slane %v6160, %v6164
    %v6166 = vlaneseq
    %v6167 = vshrl.u32 %v6166, 7
    %v6168 = vsub.s32 1, %v6167
    %v6169 = vrot.slane %v6160, %v6168
    %vm6172 = vcmask 39936
    %v6174 = vsel %vm6172, %v6157, 0
    %vm6176 = vcmask 1044480
    %v6178 = vsel %vm6176, %v6158, 0
    %v6181 = vsel %vm6176, %v6159, 0
    %6183 = vmatprep.subr.mxu0 0.0
    %6184 = vmatpush1.msra.mxu0 0.0
    %6185 = vmatprep.subr.mxu0 0.0
    %6186 = vmatpush1.msra.mxu0 0.0
    %6187 = vmatprep.subr.mxu0 0.0
    %6188 = vmatpush1.msra.mxu0 0.0
    %6189 = vmatprep.subr.mxu0 0.0
    %6190 = vmatpush1.msra.mxu0 0.0
    %6191 = vmatprep.subr.mxu0 0.0
    %6192 = vmatpush1.msra.mxu0 0.0
    %6193 = vmatprep.subr.mxu0 0.0
    %6194 = vmatpush1.msra.mxu0 0.0
    %6195 = vmatprep.subr.mxu0 0.0
    %6196 = vmatpush1.msra.mxu0 0.0
    %6197 = vmatprep.subr.mxu0 0.0
    %6198 = vmatpush1.msra.mxu0 0.0
    %6199 = vmatprep.subr.mxu0 0.0
    %6200 = vmatpush1.msra.mxu0 0.0
    %6201 = vmatprep.subr.mxu0 0.0
    %6202 = vmatpush1.msra.mxu0 0.0
    %6203 = vmatprep.subr.mxu0 0.0
    %6204 = vmatpush1.msra.mxu0 0.0
    %6205 = vmatprep.subr.mxu0 0.0
    %6206 = vmatpush1.msra.mxu0 0.0
    %6207 = vmatprep.subr.mxu0 0.0
    %6208 = vmatpush1.msra.mxu0 0.0
    %6209 = vmatprep.subr.mxu0 0.0
    %6210 = vmatpush1.msra.mxu0 0.0
    %6211 = vmatprep.subr.mxu0 0.0
    %6212 = vmatpush1.msra.mxu0 0.0
    %6213 = vmatprep.subr.mxu0 %v6181
    %6214 = vmatpush1.msra.mxu0 %v6178
    %6215 = vmatprep.subr.mxu0 0.0
    %6216 = vmatpush2.msra.mxu0 0.0
    %6217 = vmatprep.subr.mxu0 0.0
    %6218 = vmatpush2.msra.mxu0 0.0
    %6219 = vmatprep.subr.mxu0 0.0
    %6220 = vmatpush2.msra.mxu0 0.0
    %6221 = vmatprep.subr.mxu0 0.0
    %6222 = vmatpush2.msra.mxu0 0.0
    %6223 = vmatprep.subr.mxu0 0.0
    %6224 = vmatpush2.msra.mxu0 0.0
    %6225 = vmatprep.subr.mxu0 0.0
    %6226 = vmatpush2.msra.mxu0 0.0
    %6227 = vmatprep.subr.mxu0 0.0
    %6228 = vmatpush2.msra.mxu0 0.0
    %6229 = vmatprep.subr.mxu0 0.0
    %6230 = vmatpush2.msra.mxu0 0.0
    %6231 = vmatprep.subr.mxu0 0.0
    %6232 = vmatpush2.msra.mxu0 0.0
    %6233 = vmatprep.subr.mxu0 0.0
    %6234 = vmatpush2.msra.mxu0 0.0
    %6235 = vmatprep.subr.mxu0 0.0
    %6236 = vmatpush2.msra.mxu0 0.0
    %6237 = vmatprep.subr.mxu0 0.0
    %6238 = vmatpush2.msra.mxu0 0.0
    %6239 = vmatprep.subr.mxu0 0.0
    %6240 = vmatpush2.msra.mxu0 0.0
    %6241 = vmatprep.subr.mxu0 0.0
    %6242 = vmatpush2.msra.mxu0 0.0
    %6243 = vmatprep.subr.mxu0 0.0
    %6244 = vmatpush2.msra.mxu0 0.0
    %6245 = vmatprep.subr.mxu0 0.0
    %6246 = vmatpush2.msra.mxu0 0.0
    %6247 = vmatprep.mubr.f32.mxu0 0.0
    %6248 = vmatmul.mubr.f32.gmra.mxu0 %v6174
    %v6249 = vpop.f32.mrf.mxu0
    %v6250 = vadd.f32 %v6165, %v6249
    %v6251 = vpop.f32.mrf.mxu0
    %v6252 = vadd.f32 %v6169, %v6251
    %6253 = vdwg.mxu0
    %v6254 = vld [vmem:[#allocation17] sm:$0x3]
    %vm6255 = vcmask 31744
    %v6257 = vsel %vm6255, %v6254, 0
    %vm6259 = vcmask 1043456
    %v6261 = vsel %vm6259, %v6156, 0
    %6263 = vmatprep.subr.mxu0 0.0
    %6264 = vmatpush1.msra.mxu0 0.0
    %6265 = vmatprep.subr.mxu0 0.0
    %6266 = vmatpush1.msra.mxu0 0.0
    %6267 = vmatprep.subr.mxu0 0.0
    %6268 = vmatpush1.msra.mxu0 0.0
    %6269 = vmatprep.subr.mxu0 0.0
    %6270 = vmatpush1.msra.mxu0 0.0
    %6271 = vmatprep.subr.mxu0 0.0
    %6272 = vmatpush1.msra.mxu0 0.0
    %6273 = vmatprep.subr.mxu0 0.0
    %6274 = vmatpush1.msra.mxu0 0.0
    %6275 = vmatprep.subr.mxu0 0.0
    %6276 = vmatpush1.msra.mxu0 0.0
    %6277 = vmatprep.subr.mxu0 0.0
    %6278 = vmatpush1.msra.mxu0 0.0
    %6279 = vmatprep.subr.mxu0 0.0
    %6280 = vmatpush1.msra.mxu0 0.0
    %6281 = vmatprep.subr.mxu0 0.0
    %6282 = vmatpush1.msra.mxu0 0.0
    %6283 = vmatprep.subr.mxu0 0.0
    %6284 = vmatpush1.msra.mxu0 0.0
    %6285 = vmatprep.subr.mxu0 0.0
    %6286 = vmatpush1.msra.mxu0 0.0
    %6287 = vmatprep.subr.mxu0 0.0
    %6288 = vmatpush1.msra.mxu0 0.0
    %6289 = vmatprep.subr.mxu0 0.0
    %6290 = vmatpush1.msra.mxu0 0.0
    %6291 = vmatprep.subr.mxu0 0.0
    %6292 = vmatpush1.msra.mxu0 0.0
    %6293 = vmatprep.subr.mxu0 0.0
    %6294 = vmatpush1.msra.mxu0 %v6261
    %6295 = vmatprep.subr.mxu0 0.0
    %6296 = vmatpush2.msra.mxu0 0.0
    %6297 = vmatprep.subr.mxu0 0.0
    %6298 = vmatpush2.msra.mxu0 0.0
    %6299 = vmatprep.subr.mxu0 0.0
    %6300 = vmatpush2.msra.mxu0 0.0
    %6301 = vmatprep.subr.mxu0 0.0
    %6302 = vmatpush2.msra.mxu0 0.0
    %6303 = vmatprep.subr.mxu0 0.0
    %6304 = vmatpush2.msra.mxu0 0.0
    %6305 = vmatprep.subr.mxu0 0.0
    %6306 = vmatpush2.msra.mxu0 0.0
    %6307 = vmatprep.subr.mxu0 0.0
    %6308 = vmatpush2.msra.mxu0 0.0
    %6309 = vmatprep.subr.mxu0 0.0
    %6310 = vmatpush2.msra.mxu0 0.0
    %6311 = vmatprep.subr.mxu0 0.0
    %6312 = vmatpush2.msra.mxu0 0.0
    %6313 = vmatprep.subr.mxu0 0.0
    %6314 = vmatpush2.msra.mxu0 0.0
    %6315 = vmatprep.subr.mxu0 0.0
    %6316 = vmatpush2.msra.mxu0 0.0
    %6317 = vmatprep.subr.mxu0 0.0
    %6318 = vmatpush2.msra.mxu0 0.0
    %6319 = vmatprep.subr.mxu0 0.0
    %6320 = vmatpush2.msra.mxu0 0.0
    %6321 = vmatprep.subr.mxu0 0.0
    %6322 = vmatpush2.msra.mxu0 0.0
    %6323 = vmatprep.subr.mxu0 0.0
    %6324 = vmatpush2.msra.mxu0 0.0
    %6325 = vmatprep.subr.mxu0 0.0
    %6326 = vmatpush2.msra.mxu0 0.0
    %6327 = vmatprep.mubr.f32.mxu0 0.0
    %6328 = vmatmul.mubr.f32.gmra.mxu0 %v6257
    %v6329 = vpop.f32.mrf.mxu0
    %v6330 = vadd.f32 0.0, %v6329
    %v6331 = vpop.f32.mrf.mxu0
    %6332 = vdwg.mxu0
    %v6333 = vld [vmem:[#allocation19] sm:$0xff]
    %v6334 = vld [vmem:[#allocation19 + $0x8] sm:$0xff]
    %v6335 = vld [vmem:[#allocation19 + $0x10] sm:$0xff]
    %v6336 = vld [vmem:[#allocation19 + $0x18] sm:$0xff]
    %v6337 = vld [vmem:[#allocation19 + $0x20] sm:$0xff]
    %v6338 = vld [vmem:[#allocation19 + $0x28] sm:$0xff]
    %v6339 = vld [vmem:[#allocation19 + $0x30] sm:$0xff]
    %v6340 = vld [vmem:[#allocation19 + $0x38] sm:$0xff]
    %v6341 = vld [vmem:[#allocation19 + $0x40] sm:$0xff]
    %v6342 = vld [vmem:[#allocation19 + $0x48] sm:$0xff]
    %v6343 = vld [vmem:[#allocation19 + $0x50] sm:$0xff]
    %v6344 = vld [vmem:[#allocation19 + $0x58] sm:$0xff]
    %v6345 = vld [vmem:[#allocation19 + $0x60] sm:$0xff]
    %v6346 = vld [vmem:[#allocation19 + $0x68] sm:$0xff]
    %v6347 = vld [vmem:[#allocation19 + $0x70] sm:$0xff]
    %v6348 = vld [vmem:[#allocation19 + $0x78] sm:$0xff]
    %vm6349 = vcmask 523264
    %v6351 = vsel %vm6349, %v6330, 0
    %6353 = vmatprep.subr.mxu0 0.0
    %6354 = vmatpush1.msra.mxu0 0.0
    %6355 = vmatprep.subr.mxu0 0.0
    %6356 = vmatpush1.msra.mxu0 0.0
    %6357 = vmatprep.subr.mxu0 0.0
    %6358 = vmatpush1.msra.mxu0 0.0
    %6359 = vmatprep.subr.mxu0 0.0
    %6360 = vmatpush1.msra.mxu0 0.0
    %6361 = vmatprep.subr.mxu0 0.0
    %6362 = vmatpush1.msra.mxu0 0.0
    %6363 = vmatprep.subr.mxu0 0.0
    %6364 = vmatpush1.msra.mxu0 0.0
    %6365 = vmatprep.subr.mxu0 0.0
    %6366 = vmatpush1.msra.mxu0 0.0
    %6367 = vmatprep.subr.mxu0 0.0
    %6368 = vmatpush1.msra.mxu0 0.0
    %6369 = vmatprep.subr.mxu0 %v6348
    %6370 = vmatpush1.msra.mxu0 %v6347
    %6371 = vmatprep.subr.mxu0 %v6346
    %6372 = vmatpush1.msra.mxu0 %v6345
    %6373 = vmatprep.subr.mxu0 %v6344
    %6374 = vmatpush1.msra.mxu0 %v6343
    %6375 = vmatprep.subr.mxu0 %v6342
    %6376 = vmatpush1.msra.mxu0 %v6341
    %6377 = vmatprep.subr.mxu0 %v6340
    %6378 = vmatpush1.msra.mxu0 %v6339
    %6379 = vmatprep.subr.mxu0 %v6338
    %6380 = vmatpush1.msra.mxu0 %v6337
    %6381 = vmatprep.subr.mxu0 %v6336
    %6382 = vmatpush1.msra.mxu0 %v6335
    %6383 = vmatprep.subr.mxu0 %v6334
    %6384 = vmatpush1.msra.mxu0 %v6333
    %6385 = vmatprep.subr.mxu0 0.0
    %6386 = vmatpush2.msra.mxu0 0.0
    %6387 = vmatprep.subr.mxu0 0.0
    %6388 = vmatpush2.msra.mxu0 0.0
    %6389 = vmatprep.subr.mxu0 0.0
    %6390 = vmatpush2.msra.mxu0 0.0
    %6391 = vmatprep.subr.mxu0 0.0
    %6392 = vmatpush2.msra.mxu0 0.0
    %6393 = vmatprep.subr.mxu0 0.0
    %6394 = vmatpush2.msra.mxu0 0.0
    %6395 = vmatprep.subr.mxu0 0.0
    %6396 = vmatpush2.msra.mxu0 0.0
    %6397 = vmatprep.subr.mxu0 0.0
    %6398 = vmatpush2.msra.mxu0 0.0
    %6399 = vmatprep.subr.mxu0 0.0
    %6400 = vmatpush2.msra.mxu0 0.0
    %6401 = vmatprep.subr.mxu0 0.0
    %6402 = vmatpush2.msra.mxu0 0.0
    %6403 = vmatprep.subr.mxu0 0.0
    %6404 = vmatpush2.msra.mxu0 0.0
    %6405 = vmatprep.subr.mxu0 0.0
    %6406 = vmatpush2.msra.mxu0 0.0
    %6407 = vmatprep.subr.mxu0 0.0
    %6408 = vmatpush2.msra.mxu0 0.0
    %6409 = vmatprep.subr.mxu0 0.0
    %6410 = vmatpush2.msra.mxu0 0.0
    %6411 = vmatprep.subr.mxu0 0.0
    %6412 = vmatpush2.msra.mxu0 0.0
    %6413 = vmatprep.subr.mxu0 0.0
    %6414 = vmatpush2.msra.mxu0 0.0
    %6415 = vmatprep.subr.mxu0 0.0
    %6416 = vmatpush2.msra.mxu0 0.0
    %6417 = vmatprep.mubr.f32.mxu0 0.0
    %6418 = vmatmul.mubr.f32.gmra.mxu0 %v6351
    %v6419 = vpop.f32.mrf.mxu0
    %v6420 = vadd.f32 0.0, %v6419
    %v6421 = vpop.f32.mrf.mxu0
    %v6422 = vadd.f32 0.0, %v6421
    %6423 = vdwg.mxu0
    %v6424 = vadd.f32 %v6250, %v6420
    %v6425 = vadd.f32 %v6252, %v6422
    %s6426 = scalar_lea.vmem [#allocation17], 2
    %v6427 = vld [vmem:[%s6426] sm:$0x3]
    %v6429 = vsel %vm6255, %v6427, 0
    %6431 = vmatprep.subr.mxu0 0.0
    %6432 = vmatpush1.msra.mxu0 0.0
    %6433 = vmatprep.subr.mxu0 0.0
    %6434 = vmatpush1.msra.mxu0 0.0
    %6435 = vmatprep.subr.mxu0 0.0
    %6436 = vmatpush1.msra.mxu0 0.0
    %6437 = vmatprep.subr.mxu0 0.0
    %6438 = vmatpush1.msra.mxu0 0.0
    %6439 = vmatprep.subr.mxu0 0.0
    %6440 = vmatpush1.msra.mxu0 0.0
    %6441 = vmatprep.subr.mxu0 0.0
    %6442 = vmatpush1.msra.mxu0 0.0
    %6443 = vmatprep.subr.mxu0 0.0
    %6444 = vmatpush1.msra.mxu0 0.0
    %6445 = vmatprep.subr.mxu0 0.0
    %6446 = vmatpush1.msra.mxu0 0.0
    %6447 = vmatprep.subr.mxu0 0.0
    %6448 = vmatpush1.msra.mxu0 0.0
    %6449 = vmatprep.subr.mxu0 0.0
    %6450 = vmatpush1.msra.mxu0 0.0
    %6451 = vmatprep.subr.mxu0 0.0
    %6452 = vmatpush1.msra.mxu0 0.0
    %6453 = vmatprep.subr.mxu0 0.0
    %6454 = vmatpush1.msra.mxu0 0.0
    %6455 = vmatprep.subr.mxu0 0.0
    %6456 = vmatpush1.msra.mxu0 0.0
    %6457 = vmatprep.subr.mxu0 0.0
    %6458 = vmatpush1.msra.mxu0 0.0
    %6459 = vmatprep.subr.mxu0 0.0
    %6460 = vmatpush1.msra.mxu0 0.0
    %6461 = vmatprep.subr.mxu0 0.0
    %6462 = vmatpush1.msra.mxu0 %v6261
    %6463 = vmatprep.subr.mxu0 0.0
    %6464 = vmatpush2.msra.mxu0 0.0
    %6465 = vmatprep.subr.mxu0 0.0
    %6466 = vmatpush2.msra.mxu0 0.0
    %6467 = vmatprep.subr.mxu0 0.0
    %6468 = vmatpush2.msra.mxu0 0.0
    %6469 = vmatprep.subr.mxu0 0.0
    %6470 = vmatpush2.msra.mxu0 0.0
    %6471 = vmatprep.subr.mxu0 0.0
    %6472 = vmatpush2.msra.mxu0 0.0
    %6473 = vmatprep.subr.mxu0 0.0
    %6474 = vmatpush2.msra.mxu0 0.0
    %6475 = vmatprep.subr.mxu0 0.0
    %6476 = vmatpush2.msra.mxu0 0.0
    %6477 = vmatprep.subr.mxu0 0.0
    %6478 = vmatpush2.msra.mxu0 0.0
    %6479 = vmatprep.subr.mxu0 0.0
    %6480 = vmatpush2.msra.mxu0 0.0
    %6481 = vmatprep.subr.mxu0 0.0
    %6482 = vmatpush2.msra.mxu0 0.0
    %6483 = vmatprep.subr.mxu0 0.0
    %6484 = vmatpush2.msra.mxu0 0.0
    %6485 = vmatprep.subr.mxu0 0.0
    %6486 = vmatpush2.msra.mxu0 0.0
    %6487 = vmatprep.subr.mxu0 0.0
    %6488 = vmatpush2.msra.mxu0 0.0
    %6489 = vmatprep.subr.mxu0 0.0
    %6490 = vmatpush2.msra.mxu0 0.0
    %6491 = vmatprep.subr.mxu0 0.0
    %6492 = vmatpush2.msra.mxu0 0.0
    %6493 = vmatprep.subr.mxu0 0.0
    %6494 = vmatpush2.msra.mxu0 0.0
    %6495 = vmatprep.mubr.f32.mxu0 0.0
    %6496 = vmatmul.mubr.f32.gmra.mxu0 %v6429
    %v6497 = vpop.f32.mrf.mxu0
    %v6498 = vadd.f32 0.0, %v6497
    %v6499 = vpop.f32.mrf.mxu0
    %6500 = vdwg.mxu0
    %s6501 = scalar_lea.vmem [#allocation19], 128
    %v6502 = vld [vmem:[%s6501] sm:$0xff]
    %v6503 = vld [vmem:[%s6501 + $0x8] sm:$0xff]
    %v6504 = vld [vmem:[%s6501 + $0x10] sm:$0xff]
    %v6505 = vld [vmem:[%s6501 + $0x18] sm:$0xff]
    %v6506 = vld [vmem:[%s6501 + $0x20] sm:$0xff]
    %v6507 = vld [vmem:[%s6501 + $0x28] sm:$0xff]
    %v6508 = vld [vmem:[%s6501 + $0x30] sm:$0xff]
    %v6509 = vld [vmem:[%s6501 + $0x38] sm:$0xff]
    %v6510 = vld [vmem:[%s6501 + $0x40] sm:$0xff]
    %v6511 = vld [vmem:[%s6501 + $0x48] sm:$0xff]
    %v6512 = vld [vmem:[%s6501 + $0x50] sm:$0xff]
    %v6513 = vld [vmem:[%s6501 + $0x58] sm:$0xff]
    %v6514 = vld [vmem:[%s6501 + $0x60] sm:$0xff]
    %v6515 = vld [vmem:[%s6501 + $0x68] sm:$0xff]
    %v6516 = vld [vmem:[%s6501 + $0x70] sm:$0xff]
    %v6517 = vld [vmem:[%s6501 + $0x78] sm:$0xff]
    %v6519 = vsel %vm6349, %v6498, 0
    %6521 = vmatprep.subr.mxu0 0.0
    %6522 = vmatpush1.msra.mxu0 0.0
    %6523 = vmatprep.subr.mxu0 0.0
    %6524 = vmatpush1.msra.mxu0 0.0
    %6525 = vmatprep.subr.mxu0 0.0
    %6526 = vmatpush1.msra.mxu0 0.0
    %6527 = vmatprep.subr.mxu0 0.0
    %6528 = vmatpush1.msra.mxu0 0.0
    %6529 = vmatprep.subr.mxu0 0.0
    %6530 = vmatpush1.msra.mxu0 0.0
    %6531 = vmatprep.subr.mxu0 0.0
    %6532 = vmatpush1.msra.mxu0 0.0
    %6533 = vmatprep.subr.mxu0 0.0
    %6534 = vmatpush1.msra.mxu0 0.0
    %6535 = vmatprep.subr.mxu0 0.0
    %6536 = vmatpush1.msra.mxu0 0.0
    %6537 = vmatprep.subr.mxu0 %v6517
    %6538 = vmatpush1.msra.mxu0 %v6516
    %6539 = vmatprep.subr.mxu0 %v6515
    %6540 = vmatpush1.msra.mxu0 %v6514
    %6541 = vmatprep.subr.mxu0 %v6513
    %6542 = vmatpush1.msra.mxu0 %v6512
    %6543 = vmatprep.subr.mxu0 %v6511
    %6544 = vmatpush1.msra.mxu0 %v6510
    %6545 = vmatprep.subr.mxu0 %v6509
    %6546 = vmatpush1.msra.mxu0 %v6508
    %6547 = vmatprep.subr.mxu0 %v6507
    %6548 = vmatpush1.msra.mxu0 %v6506
    %6549 = vmatprep.subr.mxu0 %v6505
    %6550 = vmatpush1.msra.mxu0 %v6504
    %6551 = vmatprep.subr.mxu0 %v6503
    %6552 = vmatpush1.msra.mxu0 %v6502
    %6553 = vmatprep.subr.mxu0 0.0
    %6554 = vmatpush2.msra.mxu0 0.0
    %6555 = vmatprep.subr.mxu0 0.0
    %6556 = vmatpush2.msra.mxu0 0.0
    %6557 = vmatprep.subr.mxu0 0.0
    %6558 = vmatpush2.msra.mxu0 0.0
    %6559 = vmatprep.subr.mxu0 0.0
    %6560 = vmatpush2.msra.mxu0 0.0
    %6561 = vmatprep.subr.mxu0 0.0
    %6562 = vmatpush2.msra.mxu0 0.0
    %6563 = vmatprep.subr.mxu0 0.0
    %6564 = vmatpush2.msra.mxu0 0.0
    %6565 = vmatprep.subr.mxu0 0.0
    %6566 = vmatpush2.msra.mxu0 0.0
    %6567 = vmatprep.subr.mxu0 0.0
    %6568 = vmatpush2.msra.mxu0 0.0
    %6569 = vmatprep.subr.mxu0 0.0
    %6570 = vmatpush2.msra.mxu0 0.0
    %6571 = vmatprep.subr.mxu0 0.0
    %6572 = vmatpush2.msra.mxu0 0.0
    %6573 = vmatprep.subr.mxu0 0.0
    %6574 = vmatpush2.msra.mxu0 0.0
    %6575 = vmatprep.subr.mxu0 0.0
    %6576 = vmatpush2.msra.mxu0 0.0
    %6577 = vmatprep.subr.mxu0 0.0
    %6578 = vmatpush2.msra.mxu0 0.0
    %6579 = vmatprep.subr.mxu0 0.0
    %6580 = vmatpush2.msra.mxu0 0.0
    %6581 = vmatprep.subr.mxu0 0.0
    %6582 = vmatpush2.msra.mxu0 0.0
    %6583 = vmatprep.subr.mxu0 0.0
    %6584 = vmatpush2.msra.mxu0 0.0
    %6585 = vmatprep.mubr.f32.mxu0 0.0
    %6586 = vmatmul.mubr.f32.gmra.mxu0 %v6519
    %v6587 = vpop.f32.mrf.mxu0
    %v6588 = vadd.f32 0.0, %v6587
    %v6589 = vpop.f32.mrf.mxu0
    %v6590 = vadd.f32 0.0, %v6589
    %6591 = vdwg.mxu0
    %v6592 = vadd.f32 %v6424, %v6588
    %v6593 = vadd.f32 %v6425, %v6590
    %v6594 = vld [vmem:[#allocation22] sm:$0xff]
    %v6595 = vld [vmem:[#allocation22 + $0x8] sm:$0xff]
    %v6596 = vld [vmem:[#allocation22 + $0x10] sm:$0xff]
    %v6597 = vld [vmem:[#allocation22 + $0x18] sm:$0xff]
    %v6598 = vld [vmem:[#allocation22 + $0x20] sm:$0xff]
    %v6599 = vld [vmem:[#allocation22 + $0x28] sm:$0xff]
    %v6600 = vld [vmem:[#allocation22 + $0x30] sm:$0xff]
    %v6601 = vld [vmem:[#allocation22 + $0x38] sm:$0xff]
    %v6602 = vld [vmem:[#allocation22 + $0x40] sm:$0xff]
    %v6603 = vld [vmem:[#allocation22 + $0x48] sm:$0xff]
    %v6604 = vld [vmem:[#allocation22 + $0x50] sm:$0xff]
    %v6605 = vld [vmem:[#allocation22 + $0x58] sm:$0xff]
    %v6606 = vld [vmem:[#allocation22 + $0x60] sm:$0xff]
    %v6607 = vld [vmem:[#allocation22 + $0x68] sm:$0xff]
    %v6608 = vld [vmem:[#allocation22 + $0x70] sm:$0xff]
    %v6609 = vld [vmem:[#allocation22 + $0x78] sm:$0xff]
    %v6610 = vld [vmem:[#allocation22 + $0x80] sm:$0x1f]
    %v6611 = vld [vmem:[%s19] sm:$0x1]
    %v6613 = vlaneseq
    %v6614 = vshrl.u32 %v6613, 7
    %v6615 = vsub.s32 0, %v6614
    %v6616 = vrot.slane %v6611, %v6615
    %v6619 = vsel %vm6172, %v6593, 0
    %v6622 = vsel %vm6176, %v6610, 0
    %6624 = vmatprep.subr.mxu0 0.0
    %6625 = vmatpush1.msra.mxu0 %v6609
    %6626 = vmatprep.subr.mxu0 0.0
    %6627 = vmatpush1.msra.mxu0 %v6608
    %6628 = vmatprep.subr.mxu0 0.0
    %6629 = vmatpush1.msra.mxu0 %v6607
    %6630 = vmatprep.subr.mxu0 0.0
    %6631 = vmatpush1.msra.mxu0 %v6606
    %6632 = vmatprep.subr.mxu0 0.0
    %6633 = vmatpush1.msra.mxu0 %v6605
    %6634 = vmatprep.subr.mxu0 0.0
    %6635 = vmatpush1.msra.mxu0 %v6604
    %6636 = vmatprep.subr.mxu0 0.0
    %6637 = vmatpush1.msra.mxu0 %v6603
    %6638 = vmatprep.subr.mxu0 0.0
    %6639 = vmatpush1.msra.mxu0 %v6602
    %6640 = vmatprep.subr.mxu0 0.0
    %6641 = vmatpush1.msra.mxu0 %v6601
    %6642 = vmatprep.subr.mxu0 0.0
    %6643 = vmatpush1.msra.mxu0 %v6600
    %6644 = vmatprep.subr.mxu0 0.0
    %6645 = vmatpush1.msra.mxu0 %v6599
    %6646 = vmatprep.subr.mxu0 0.0
    %6647 = vmatpush1.msra.mxu0 %v6598
    %6648 = vmatprep.subr.mxu0 0.0
    %6649 = vmatpush1.msra.mxu0 %v6597
    %6650 = vmatprep.subr.mxu0 0.0
    %6651 = vmatpush1.msra.mxu0 %v6596
    %6652 = vmatprep.subr.mxu0 0.0
    %6653 = vmatpush1.msra.mxu0 %v6595
    %6654 = vmatprep.subr.mxu0 0.0
    %6655 = vmatpush1.msra.mxu0 %v6594
    %6656 = vmatprep.subr.mxu0 0.0
    %6657 = vmatpush2.msra.mxu0 0.0
    %6658 = vmatprep.subr.mxu0 0.0
    %6659 = vmatpush2.msra.mxu0 0.0
    %6660 = vmatprep.subr.mxu0 0.0
    %6661 = vmatpush2.msra.mxu0 0.0
    %6662 = vmatprep.subr.mxu0 0.0
    %6663 = vmatpush2.msra.mxu0 0.0
    %6664 = vmatprep.subr.mxu0 0.0
    %6665 = vmatpush2.msra.mxu0 0.0
    %6666 = vmatprep.subr.mxu0 0.0
    %6667 = vmatpush2.msra.mxu0 0.0
    %6668 = vmatprep.subr.mxu0 0.0
    %6669 = vmatpush2.msra.mxu0 0.0
    %6670 = vmatprep.subr.mxu0 0.0
    %6671 = vmatpush2.msra.mxu0 0.0
    %6672 = vmatprep.subr.mxu0 0.0
    %6673 = vmatpush2.msra.mxu0 0.0
    %6674 = vmatprep.subr.mxu0 0.0
    %6675 = vmatpush2.msra.mxu0 0.0
    %6676 = vmatprep.subr.mxu0 0.0
    %6677 = vmatpush2.msra.mxu0 0.0
    %6678 = vmatprep.subr.mxu0 0.0
    %6679 = vmatpush2.msra.mxu0 0.0
    %6680 = vmatprep.subr.mxu0 0.0
    %6681 = vmatpush2.msra.mxu0 0.0
    %6682 = vmatprep.subr.mxu0 0.0
    %6683 = vmatpush2.msra.mxu0 0.0
    %6684 = vmatprep.subr.mxu0 0.0
    %6685 = vmatpush2.msra.mxu0 0.0
    %6686 = vmatprep.subr.mxu0 0.0
    %6687 = vmatpush2.msra.mxu0 %v6622
    %6688 = vmatprep.mubr.f32.mxu0 %v6619
    %6689 = vmatmul.mubr.f32.gmra.mxu0 %v6592
    %v6690 = vpop.f32.mrf.mxu0
    %v6691 = vadd.f32 %v6616, %v6690
    %v6692 = vpop.f32.mrf.mxu0
    %6693 = vdwg.mxu0
    %vm6694 = vcmask 123904
    %6695 = vst.msk [vmem:[#allocation23] sm:$0x3] %vm6694, %v6691
    // Predicated region
    $region134: #{goal_encoder_forward.1} parent=1 // pred_check
      _
    $region135: #{goal_encoder_forward.1} parent=1 // pred_check_branch
      %6697 = sbr.rel (0) target = $region137
    $region136: #{goal_encoder_forward.1} parent=1 // pred_region
      %s6699 = ssub.s32 32, 32
      %6700 = vsyncadd [#allocation4], %s6699
      %s6702 = sshll.u32 [#allocation23], 4
      %s6703 = int_to_ptr.vmem [resolvable:$true] %s6702
      %6705 = dma.vmem_to_hbm [thread:$0]  %s6703, 32, %s20, [#allocation4]
    $region137: #{goal_encoder_forward.1} parent=1 // pred_fallthru
      _
    // Predicated region
    $region138: #{goal_encoder_forward.1} parent=1 // pred_check
      _
    $region139: #{goal_encoder_forward.1} parent=1 // pred_check_branch
      %6707 = sbr.rel (0) target = $region141
    $region140: #{goal_encoder_forward.1} parent=1 // pred_region
      %6708 = dma.done [#allocation4], 32
    $region141: #{goal_encoder_forward.1} parent=1 // pred_fallthru
      _
    %6709 = vsyncpa [#allocation3], 1
    %6710 = vsyncpa [#allocation6], 1
    %6711 = vsyncpa [#allocation9], 1
    %6712 = vsyncpa [#allocation12], 1
    %6713 = vsyncpa [#allocation15], 1
    %6714 = vsyncpa [#allocation18], 1
    %6715 = vsyncpa [#allocation21], 1
    %6716 = vsyncpa [#allocation4], 1

</llo_original>
